<compile_context>
chip_gen: v7x
topology: tpu7x:2x2x1
jax: 0.10.0
libtpu: 0.0.40
codegen_flags: <defaults>
</compile_context>

<pallas_src>
import functools

import jax
import jax.numpy as jnp
from jax.experimental import pallas as pl
from jax.experimental.pallas import tpu as pltpu

_NEG_SLOPE = 0.2
_WEIGHT_DTYPE = jnp.bfloat16   # bf16 weights/activations into the MXU, f32 accumulation
_ROW_ALIGN = 16                # bf16 sublane packing -> keep row tiles 16-aligned
_LANE = 128


# --------------------------- tiling helpers ---------------------------------

def _round_up(x, m):
    return (x + m - 1) // m * m


@functools.lru_cache(maxsize=None)
def _hw_config():
    """(row_tile_target, vmem_limit_bytes). Conservative default fits v7x (64 MiB VMEM/TC)."""
    tile, vmem = 512, 48 * 1024 * 1024
    try:
        kind = jax.devices()[0].device_kind.lower()
        if ('v4' in kind) or ('v5' in kind) or ('v6' in kind):
            tile, vmem = 1024, 96 * 1024 * 1024       # 128 MiB VMEM parts: bigger tiles
    except Exception:
        pass
    return tile, vmem


def _row_tiling(m_rows, target):
    """16-aligned row tile <= target and padded row count; prefer >= 2 tiles (v7x megacore)."""
    tile = min(target, _round_up(m_rows, _ROW_ALIGN))
    if m_rows > _ROW_ALIGN and _round_up(m_rows, tile) // tile < 2:
        tile = _round_up((m_rows + 1) // 2, _ROW_ALIGN)
    return tile, _round_up(m_rows, tile)


def _pad_rows(x, mp):
    m = x.shape[1]
    return x if mp == m else jnp.pad(x, ((0, 0), (0, mp - m), (0, 0)))


def _pad_cols(a, cp):
    c = a.shape[-1]
    return a if cp == c else jnp.pad(a, ((0, 0), (0, cp - c)))


# --------------------------- Pallas kernels ---------------------------------

def _mlp_chain_kernel(*refs, n_layers, act_last, neg_slope, has_gbias):
    """Fused chain of 1x1 convs: h = [leaky](h @ W_l + b_l); intermediates stay in VMEM/vregs.

    If has_gbias, a per-batch (1, C1) vector (the collapsed global columns of the
    first layer) is added after the first matmul."""
    x_ref = refs[0]
    pos = 1
    g_ref = None
    if has_gbias:
        g_ref = refs[pos]
        pos += 1
    o_ref = refs[-1]
    wb = refs[pos:-1]

    h = x_ref[...]                                         # bf16 (tile_m, Cin)
    for l in range(n_layers):
        w = wb[2 * l][...]                                 # bf16 (Cin_l, Cout_l)
        b = wb[2 * l + 1][...]                             # f32  (1, Cout_l)
        h = jnp.dot(h.astype(w.dtype), w, preferred_element_type=jnp.float32)
        if has_gbias and l == 0:
            h = h + g_ref[...]                             # per-batch global term
        h = h + b
        if act_last or l < n_layers - 1:
            h = jnp.where(h >= 0, h, neg_slope * h)        # element-wise math stays f32
    o_ref[...] = h


def mlp_chain(x, layers, *, act_last, gbias=None, neg_slope=_NEG_SLOPE, tile_rows=None):
    """x: (B, M, Cin); layers: list of (w (Ci,Co) bf16, b (1,Co) f32); gbias: (B,1,C1) or None.

    All layers fused in one pallas_call; grid = (B, row tiles)."""
    B, M, Cin = x.shape
    tile_cfg, vmem = _hw_config()
    if tile_rows is None:
        tile_rows = tile_cfg
    tile_m, Mp = _row_tiling(M, tile_rows)

    x = _pad_rows(x.astype(_WEIGHT_DTYPE), Mp)

    # Lane-pad the final layer so its stores are full-width vst (not masked).
    Cout = layers[-1][0].shape[1]
    Cout_p = _round_up(Cout, _LANE)
    layers = list(layers)
    if Cout_p != Cout:
        w_last, b_last = layers[-1]
        layers[-1] = (_pad_cols(w_last, Cout_p), _pad_cols(b_last, Cout_p))
        if gbias is not None and len(layers) == 1:
            gbias = jnp.pad(gbias, ((0, 0), (0, 0), (0, Cout_p - Cout)))

    in_specs = [pl.BlockSpec((None, tile_m, Cin), lambda bi, i: (bi, i, 0))]
    args = [x]
    if gbias is not None:
        C1 = gbias.shape[-1]
        in_specs.append(pl.BlockSpec((None, 1, C1), lambda bi, i: (bi, 0, 0)))
        args.append(gbias.astype(jnp.float32))
    for (w, bvec) in layers:
        ci, co = w.shape
        in_specs.append(pl.BlockSpec((ci, co), lambda bi, i: (0, 0)))
        in_specs.append(pl.BlockSpec((1, co), lambda bi, i: (0, 0)))
        args.extend([w.astype(_WEIGHT_DTYPE), bvec.astype(jnp.float32)])

    kern = functools.partial(_mlp_chain_kernel, n_layers=len(layers),
                             act_last=act_last, neg_slope=neg_slope,
                             has_gbias=gbias is not None)
    out = pl.pallas_call(
        kern,
        out_shape=jax.ShapeDtypeStruct((B, Mp, Cout_p), jnp.float32),
        grid=(B, Mp // tile_m),
        in_specs=in_specs,
        out_specs=pl.BlockSpec((None, tile_m, Cout_p), lambda bi, i: (bi, i, 0)),
        compiler_params=pltpu.CompilerParams(
            dimension_semantics=("parallel", "parallel"),
            vmem_limit_bytes=vmem),
    )(*args)
    return out[:, :M, :Cout]


def _edge_proj_kernel(x_ref, w1_ref, wd_ref, b_ref, p1_ref, p2_ref):
    """EdgeConv linear split: p1 = x @ W1 (gathered later), p2 = x @ (W2-W1) + b (k-invariant)."""
    x = x_ref[...]                                                     # bf16 (tile_m, C)
    p1 = jnp.dot(x, w1_ref[...], preferred_element_type=jnp.float32)
    p2 = jnp.dot(x, wd_ref[...], preferred_element_type=jnp.float32) + b_ref[...]
    p1_ref[...] = p1.astype(p1_ref.dtype)
    p2_ref[...] = p2


def edge_proj(x, w1, wd, b):
    """x:(B,M,C)  w1,wd:(C,Cout)  b:(1,Cout)  ->  p1 (bf16), p2 (f32), each (B,M,Cout)."""
    B, M, C = x.shape
    Cout = w1.shape[1]
    tile_cfg, vmem = _hw_config()
    tile_m, Mp = _row_tiling(M, tile_cfg)
    Cp = _round_up(Cout, _LANE)                                        # lane-dense stores
    w1 = _pad_cols(w1, Cp)
    wd = _pad_cols(wd, Cp)
    b = _pad_cols(b, Cp)
    x = _pad_rows(x.astype(_WEIGHT_DTYPE), Mp)

    p1, p2 = pl.pallas_call(
        _edge_proj_kernel,
        out_shape=(jax.ShapeDtypeStruct((B, Mp, Cp), jnp.bfloat16),
                   jax.ShapeDtypeStruct((B, Mp, Cp), jnp.float32)),
        grid=(B, Mp // tile_m),
        in_specs=[pl.BlockSpec((None, tile_m, C), lambda bi, i: (bi, i, 0)),
                  pl.BlockSpec((C, Cp), lambda bi, i: (0, 0)),
                  pl.BlockSpec((C, Cp), lambda bi, i: (0, 0)),
                  pl.BlockSpec((1, Cp), lambda bi, i: (0, 0))],
        out_specs=(pl.BlockSpec((None, tile_m, Cp), lambda bi, i: (bi, i, 0)),
                   pl.BlockSpec((None, tile_m, Cp), lambda bi, i: (bi, i, 0))),
        compiler_params=pltpu.CompilerParams(
            dimension_semantics=("parallel", "parallel"),
            vmem_limit_bytes=vmem),
    )(x, w1.astype(_WEIGHT_DTYPE), wd.astype(_WEIGHT_DTYPE), b.astype(jnp.float32))
    return p1[:, :M, :Cout], p2[:, :M, :Cout]


def _bmm_norm_kernel(w_ref, v_ref, o_ref, num_acc, den_acc):
    n = pl.program_id(1)

    @pl.when(n == 0)
    def _():
        num_acc[...] = jnp.zeros_like(num_acc)
        den_acc[...] = jnp.zeros_like(den_acc)

    w = w_ref[...]                                         # bf16 (J, tn)
    v = v_ref[...]                                         # bf16 (tn, C)
    num_acc[...] += jnp.dot(w, v, preferred_element_type=jnp.float32)
    den_acc[...] += jnp.sum(w.astype(jnp.float32), axis=-1, keepdims=True)

    @pl.when(n == pl.num_programs(1) - 1)
    def _():
        o_ref[...] = num_acc[...] / (den_acc[...] + 1e-5)  # exact divide: tensor is tiny


def bmm_norm(W, V):
    """torch.bmm(W, V) followed by /= (W.sum(-1)+1e-5), tiled over N with VMEM accumulators."""
    B, J, N = W.shape
    C = V.shape[-1]
    _, vmem = _hw_config()
    tn = min(2048, _round_up(N, _LANE))
    Np = _round_up(N, tn)
    if Np != N:
        W = jnp.pad(W, ((0, 0), (0, 0), (0, Np - N)))      # zero pads do not affect num/den
        V = jnp.pad(V, ((0, 0), (0, Np - N), (0, 0)))
    return pl.pallas_call(
        _bmm_norm_kernel,
        out_shape=jax.ShapeDtypeStruct((B, J, C), jnp.float32),
        grid=(B, Np // tn),
        in_specs=[pl.BlockSpec((None, J, tn), lambda bi, n: (bi, 0, n)),
                  pl.BlockSpec((None, tn, C), lambda bi, n: (bi, n, 0))],
        out_specs=pl.BlockSpec((None, J, C), lambda bi, n: (bi, 0, 0)),
        scratch_shapes=[pltpu.VMEM((J, C), jnp.float32),
                        pltpu.VMEM((J, 1), jnp.float32)],
        compiler_params=pltpu.CompilerParams(
            dimension_semantics=("parallel", "arbitrary"),
            vmem_limit_bytes=vmem),
    )(W.astype(_WEIGHT_DTYPE), V.astype(_WEIGHT_DTYPE))


# --------------------------- model building blocks --------------------------

def gather_neighbors(x, idx):
    # x: (B, M, C), idx: (B, M, K) int32 -> (B, M, K, C)
    # TODO(synk): data-dependent gather stays in XLA glue (in-kernel DMA gather
    # from a VMEM-resident feature block not implemented).
    return jax.vmap(lambda xb, ib: xb[ib])(x, idx)


def edge_conv(x, idx, w1, wd, b, *, neg_slope=_NEG_SLOPE):
    """DGCNN EdgeConv via the linear split: project once, gather projected features,
    max over K, add the k-invariant term, LeakyReLU (monotone act hoisted past max)."""
    p1, p2 = edge_proj(x, w1, wd, b)                       # (B, M, Cout) bf16 / f32
    pj = gather_neighbors(p1, idx)                         # (B, M, K, Cout)
    m = jnp.max(pj, axis=2).astype(jnp.float32) + p2       # max over neighbors + (xi-term + bias)
    return jnp.where(m >= 0, m, neg_slope * m)


def dgcnn(x, idx, layer_params):
    feats = [x]
    h = x
    for (w1, wd, b) in layer_params:
        h = edge_conv(h, idx, w1, wd, b)
        feats.append(h)
    return jnp.concatenate(feats, axis=-1)                 # (B, M, 3 + sum(layers))


def weight_net_forward(V, faces_idx, p):
    local = dgcnn(V, faces_idx, p['geo'])                  # (B, N, 3+sum) f32
    local_bf = local.astype(_WEIGHT_DTYPE)                 # read twice below -> store once as bf16
    g = mlp_chain(local_bf, [p['glob']], act_last=True)    # (B, N, 512)
    gmax = jnp.max(g, axis=1)                              # (B, 512) global pooling (tiny glue)
    gmean = jnp.mean(g, axis=1)                            # (B, 512)
    # wm1's global columns collapse to a per-batch bias: no (B, N, 1024+feat) concat.
    gbias = gmax @ p['wm1_gmax'] + gmean @ p['wm1_gmean']  # (B, 1024) f32, tiny glue matmul
    # wm1(local part) -> wm2 -> wm3 -> wm4 fused in one pallas_call.
    att = mlp_chain(local_bf, [p['wm1_loc'], p['wm2'], p['wm3'], p['wm4']],
                    gbias=gbias[:, None, :], act_last=False)
    return att                                             # (B, N, jointNum)


def joint_net_forward(V, W, faces_idx, skel_idx, p):
    # TODO(synk): the whole post-pooling path (sk1-sk3 + jm1-jm3, ~B*J rows) could be
    # fused into a single pallas_call with skel_idx gathered in-kernel; kept as separate
    # small calls for clarity.
    feat = dgcnn(V, faces_idx, p['geo'])                   # (B, N, 3+sum)
    Vj = bmm_norm(W, feat)                                 # (B, J, 3+sum)
    V1 = edge_conv(Vj, skel_idx, *p['sk1'])                # (B, J, 256)
    V2 = edge_conv(V1, skel_idx, *p['sk2'])                # (B, J, 128)
    V3 = edge_conv(V2, skel_idx, *p['sk3'])                # (B, J, 64)
    j = jnp.concatenate([V1, V2, V3], axis=-1)             # (B, J, 448)
    joints = mlp_chain(j, [p['jm1'], p['jm2'], p['jm3']], act_last=False)
    return joints                                          # (B, J, 3)


def skinning_net_forward(V, faces_idx, skel_idx, params, W=None):
    att = weight_net_forward(V, faces_idx, params['weightNet'])      # (B, N, J)
    if W is None:
        # Matches torch: (W == W.max(dim=joint, keepdim=True)).float()  (ties keep multiple 1s).
        one_hot = (att == jnp.max(att, axis=-1, keepdims=True)).astype(jnp.float32)
        W = jnp.transpose(one_hot, (0, 2, 1))                        # (B, J, N)
    skel_idx = jnp.broadcast_to(skel_idx, (V.shape[0],) + skel_idx.shape[1:])
    joints = joint_net_forward(V, W, faces_idx, skel_idx, params['jointNet'])
    attentions = jnp.transpose(att, (0, 2, 1))                       # (B, J, N) torch Conv1d layout
    return joints, attentions


# --------------------------- parameter init ---------------------------------

class KeyGen:
    def __init__(self, seed):
        self._key = jax.random.PRNGKey(seed)

    def __call__(self):
        self._key, sub = jax.random.split(self._key)
        return sub


def init_linear_f32(kg, cin, cout, bias=True):
    lim = 1.0 / float(cin) ** 0.5
    w = jax.random.uniform(kg(), (cin, cout), jnp.float32, -lim, lim)
    if bias:
        b = jax.random.uniform(kg(), (1, cout), jnp.float32, -lim, lim)
    else:
        b = jnp.zeros((1, cout), jnp.float32)
    return w, b


def init_linear_bn_f32(kg, cin, cout):
    # Conv(bias=False) + BatchNorm (eval mode) folded into an affine matmul.
    lim = 1.0 / float(cin) ** 0.5
    w = jax.random.uniform(kg(), (cin, cout), jnp.float32, -lim, lim)
    gamma = jax.random.uniform(kg(), (cout,), jnp.float32, 0.9, 1.1)
    beta = jax.random.uniform(kg(), (cout,), jnp.float32, -0.1, 0.1)
    mean = jax.random.uniform(kg(), (cout,), jnp.float32, -0.1, 0.1)
    var = jax.random.uniform(kg(), (cout,), jnp.float32, 0.9, 1.1)
    scale = gamma / jnp.sqrt(var + 1e-5)
    shift = beta - mean * scale
    return w * scale[None, :], shift[None, :]


def _as_layer(wb):
    w, b = wb
    return w.astype(_WEIGHT_DTYPE), b.astype(jnp.float32)


def _as_edge(wb):
    """Split an edge-conv weight (2C, Cout) into the linear-split form (W1, W2-W1, b)."""
    w, b = wb
    C = w.shape[0] // 2
    w1 = w[:C]                                 # applied to (xj - xi) -> gathered projection
    wd = w[C:] - w[:C]                         # applied to xi        -> k-invariant projection
    return w1.astype(_WEIGHT_DTYPE), wd.astype(_WEIGHT_DTYPE), b.astype(jnp.float32)


def init_params(kg, dgcnn_layers, joint_num):
    feat_dim = 3 + sum(dgcnn_layers)

    # WeightBindingNet: DGCNN with BN (bias=False), globleConv/weightMlp with BN.
    wn = {}
    geo, cin = [], 3
    for cout in dgcnn_layers:
        geo.append(_as_edge(init_linear_bn_f32(kg, 2 * cin, cout)))
        cin = cout
    wn['geo'] = geo
    wn['glob'] = _as_layer(init_linear_bn_f32(kg, feat_dim, 512))
    # weightMlp first conv, split into (gmax cols, gmean cols, local cols).
    w_wm1, b_wm1 = init_linear_bn_f32(kg, 1024 + feat_dim, 1024)
    wn['wm1_gmax'] = w_wm1[:512]                               # f32 (512, 1024) — tiny glue matmul
    wn['wm1_gmean'] = w_wm1[512:1024]                          # f32 (512, 1024)
    wn['wm1_loc'] = (w_wm1[1024:].astype(_WEIGHT_DTYPE), b_wm1.astype(jnp.float32))
    wn['wm2'] = _as_layer(init_linear_bn_f32(kg, 1024, 256))
    wn['wm3'] = _as_layer(init_linear_bn_f32(kg, 256, 64))
    wn['wm4'] = _as_layer(init_linear_f32(kg, 64, joint_num, bias=True))

    # JointNet: DGCNN with norm='None', bias=True; skeleton edge-convs; jointMLP.
    jn = {}
    geo, cin = [], 3
    for cout in dgcnn_layers:
        geo.append(_as_edge(init_linear_f32(kg, 2 * cin, cout, bias=True)))
        cin = cout
    jn['geo'] = geo
    jn['sk1'] = _as_edge(init_linear_f32(kg, 2 * feat_dim, 256, bias=True))
    jn['sk2'] = _as_edge(init_linear_f32(kg, 2 * 256, 128, bias=True))
    jn['sk3'] = _as_edge(init_linear_f32(kg, 2 * 128, 64, bias=True))
    jn['jm1'] = _as_layer(init_linear_f32(kg, 256 + 128 + 64, 512, bias=True))
    jn['jm2'] = _as_layer(init_linear_f32(kg, 512, 256, bias=True))
    jn['jm3'] = _as_layer(init_linear_f32(kg, 256, 3, bias=True))
    return {'weightNet': wn, 'jointNet': jn}


# --------------------------- main --------------------------------------------

if __name__ == "__main__":
    B, N, K = 2, 64, 8            # batch, mesh points, face one-ring size
    J, K_SKEL = 16, 4             # jointNum, skeleton one-ring size
    dgcnn_layers = [16, 32, 64]   # small dgcnnLayers (constructor parameter)

    kg = KeyGen(0)
    params = init_params(kg, dgcnn_layers, J)

    key = jax.random.PRNGKey(0)
    k_v, k_idx = jax.random.split(key)
    V = jax.random.normal(k_v, (B, N, 3), jnp.float32)
    faces_idx = jax.random.randint(k_idx, (B, N, K), 0, N, dtype=jnp.int32)

    # TODO(synk): getSkeletonOneRingIdx table is unavailable; use a deterministic ring graph.
    j_ar = jnp.arange(J)
    skel_idx = jnp.stack([(j_ar - 1) % J, (j_ar + 1) % J,
                          (j_ar - 2) % J, (j_ar + 2) % J], axis=-1)
    skel_idx = skel_idx[None].astype(jnp.int32)        # (1, J, K_SKEL)

    fwd = jax.jit(skinning_net_forward)
    joints, attentions = fwd(V, faces_idx, skel_idx, params)
    jax.block_until_ready((joints, attentions))

    assert joints.shape == (B, J, 3)
    assert attentions.shape == (B, J, N)
    assert jnp.all(jnp.isfinite(joints)) and jnp.all(jnp.isfinite(attentions))
    print("KERNEL_OK")
</pallas_src>

<mosaic_0001>
module attributes {stable_mosaic.version = 11 : i64} {
  func.func @_edge_proj_kernel(%arg0: i32, %arg1: i32, %arg2: memref<1x32x16xbf16, #tpu.memory_space<vmem>>, %arg3: memref<16x128xbf16, #tpu.memory_space<vmem>>, %arg4: memref<16x128xbf16, #tpu.memory_space<vmem>>, %arg5: memref<1x128xf32, #tpu.memory_space<vmem>>, %arg6: memref<1x32x128xbf16, #tpu.memory_space<vmem>>, %arg7: memref<1x32x128xf32, #tpu.memory_space<vmem>>) attributes {dimension_semantics = [#tpu.dimension_semantics<parallel>, #tpu.dimension_semantics<parallel>], iteration_bounds = array<i64: 2, 2>, scalar_prefetch = 0 : i64, scratch_operands = 0 : i64, tpu.core_type = #tpu.core_type<tc>, window_params = [{transform_indices = @transform_0, window_bounds = array<i64: 1, 32, 16>}, {pipeline_mode = #tpu.pipeline_mode<synchronous>, transform_indices = @transform_1, window_bounds = array<i64: 16, 128>}, {pipeline_mode = #tpu.pipeline_mode<synchronous>, transform_indices = @transform_2, window_bounds = array<i64: 16, 128>}, {pipeline_mode = #tpu.pipeline_mode<synchronous>, transform_indices = @transform_3, window_bounds = array<i64: 1, 128>}, {transform_indices = @transform_4, window_bounds = array<i64: 1, 32, 128>}, {transform_indices = @transform_5, window_bounds = array<i64: 1, 32, 128>}]} {
    %c0 = arith.constant 0 : index
    %c0_0 = arith.constant 0 : index
    %c0_1 = arith.constant 0 : index
    %0 = vector.load %arg2[%c0, %c0_0, %c0_1] : memref<1x32x16xbf16, #tpu.memory_space<vmem>>, vector<1x32x16xbf16>
    %1 = vector.shape_cast %0 : vector<1x32x16xbf16> to vector<32x16xbf16>
    %c0_2 = arith.constant 0 : index
    %c0_3 = arith.constant 0 : index
    %2 = vector.load %arg3[%c0_2, %c0_3] : memref<16x128xbf16, #tpu.memory_space<vmem>>, vector<16x128xbf16>
    %cst = arith.constant dense<0.000000e+00> : vector<32x128xf32>
    %3 = tpu.matmul %1, %2, %cst {dimension_numbers = #tpu.dot_dimension_numbers<[1], [0], [0], [1], [0, 0, 1, 1], [], []>} : vector<32x16xbf16>, vector<16x128xbf16>, vector<32x128xf32> -> vector<32x128xf32>
    %c0_4 = arith.constant 0 : index
    %c0_5 = arith.constant 0 : index
    %4 = vector.load %arg4[%c0_4, %c0_5] : memref<16x128xbf16, #tpu.memory_space<vmem>>, vector<16x128xbf16>
    %cst_6 = arith.constant dense<0.000000e+00> : vector<32x128xf32>
    %5 = tpu.matmul %1, %4, %cst_6 {dimension_numbers = #tpu.dot_dimension_numbers<[1], [0], [0], [1], [0, 0, 1, 1], [], []>} : vector<32x16xbf16>, vector<16x128xbf16>, vector<32x128xf32> -> vector<32x128xf32>
    %c0_7 = arith.constant 0 : index
    %c0_8 = arith.constant 0 : index
    %6 = vector.load %arg5[%c0_7, %c0_8] : memref<1x128xf32, #tpu.memory_space<vmem>>, vector<1x128xf32>
    %7 = vector.broadcast %6 : vector<1x128xf32> to vector<32x128xf32>
    %8 = arith.addf %5, %7 : vector<32x128xf32>
    %9 = arith.truncf %3 : vector<32x128xf32> to vector<32x128xbf16>
    %c0_9 = arith.constant 0 : index
    %c0_10 = arith.constant 0 : index
    %c0_11 = arith.constant 0 : index
    %10 = vector.load %arg6[%c0_9, %c0_10, %c0_11] : memref<1x32x128xbf16, #tpu.memory_space<vmem>>, vector<1x32x128xbf16>
    %11 = vector.shape_cast %10 : vector<1x32x128xbf16> to vector<32x128xbf16>
    %12 = vector.shape_cast %9 : vector<32x128xbf16> to vector<1x32x128xbf16>
    tpu.vector_store %arg6[%c0_9, %c0_10, %c0_11], %12 {strides = array<i32>} : memref<1x32x128xbf16, #tpu.memory_space<vmem>>, vector<1x32x128xbf16>,
    %c0_12 = arith.constant 0 : index
    %c0_13 = arith.constant 0 : index
    %c0_14 = arith.constant 0 : index
    %13 = vector.load %arg7[%c0_12, %c0_13, %c0_14] : memref<1x32x128xf32, #tpu.memory_space<vmem>>, vector<1x32x128xf32>
    %14 = vector.shape_cast %13 : vector<1x32x128xf32> to vector<32x128xf32>
    %15 = vector.shape_cast %8 : vector<32x128xf32> to vector<1x32x128xf32>
    tpu.vector_store %arg7[%c0_12, %c0_13, %c0_14], %15 {strides = array<i32>} : memref<1x32x128xf32, #tpu.memory_space<vmem>>, vector<1x32x128xf32>,
    return
  }
  func.func @transform_0(%arg0: i32, %arg1: i32) -> (i32, i32, i32) {
    %c0_i32 = arith.constant 0 : i32
    %c0_i32_0 = arith.constant 0 : i32
    return %arg0, %arg1, %c0_i32 : i32, i32, i32
  }
  func.func @transform_1(%arg0: i32, %arg1: i32) -> (i32, i32) {
    %c0_i32 = arith.constant 0 : i32
    %c0_i32_0 = arith.constant 0 : i32
    %c0_i32_1 = arith.constant 0 : i32
    return %c0_i32, %c0_i32_0 : i32, i32
  }
  func.func @transform_2(%arg0: i32, %arg1: i32) -> (i32, i32) {
    %c0_i32 = arith.constant 0 : i32
    %c0_i32_0 = arith.constant 0 : i32
    %c0_i32_1 = arith.constant 0 : i32
    return %c0_i32, %c0_i32_0 : i32, i32
  }
  func.func @transform_3(%arg0: i32, %arg1: i32) -> (i32, i32) {
    %c0_i32 = arith.constant 0 : i32
    %c0_i32_0 = arith.constant 0 : i32
    %c0_i32_1 = arith.constant 0 : i32
    return %c0_i32, %c0_i32_0 : i32, i32
  }
  func.func @transform_4(%arg0: i32, %arg1: i32) -> (i32, i32, i32) {
    %c0_i32 = arith.constant 0 : i32
    %c0_i32_0 = arith.constant 0 : i32
    return %arg0, %arg1, %c0_i32 : i32, i32, i32
  }
  func.func @transform_5(%arg0: i32, %arg1: i32) -> (i32, i32, i32) {
    %c0_i32 = arith.constant 0 : i32
    %c0_i32_0 = arith.constant 0 : i32
    return %arg0, %arg1, %c0_i32 : i32, i32, i32
  }
}

module attributes {stable_mosaic.version = 11 : i64} {
  func.func @_edge_proj_kernel(%arg0: i32, %arg1: i32, %arg2: memref<1x32x3xbf16, #tpu.memory_space<vmem>>, %arg3: memref<3x128xbf16, #tpu.memory_space<vmem>>, %arg4: memref<3x128xbf16, #tpu.memory_space<vmem>>, %arg5: memref<1x128xf32, #tpu.memory_space<vmem>>, %arg6: memref<1x32x128xbf16, #tpu.memory_space<vmem>>, %arg7: memref<1x32x128xf32, #tpu.memory_space<vmem>>) attributes {dimension_semantics = [#tpu.dimension_semantics<parallel>, #tpu.dimension_semantics<parallel>], iteration_bounds = array<i64: 2, 2>, scalar_prefetch = 0 : i64, scratch_operands = 0 : i64, tpu.core_type = #tpu.core_type<tc>, window_params = [{transform_indices = @transform_0, window_bounds = array<i64: 1, 32, 3>}, {pipeline_mode = #tpu.pipeline_mode<synchronous>, transform_indices = @transform_1, window_bounds = array<i64: 3, 128>}, {pipeline_mode = #tpu.pipeline_mode<synchronous>, transform_indices = @transform_2, window_bounds = array<i64: 3, 128>}, {pipeline_mode = #tpu.pipeline_mode<synchronous>, transform_indices = @transform_3, window_bounds = array<i64: 1, 128>}, {transform_indices = @transform_4, window_bounds = array<i64: 1, 32, 128>}, {transform_indices = @transform_5, window_bounds = array<i64: 1, 32, 128>}]} {
    %c0 = arith.constant 0 : index
    %c0_0 = arith.constant 0 : index
    %c0_1 = arith.constant 0 : index
    %0 = vector.load %arg2[%c0, %c0_0, %c0_1] : memref<1x32x3xbf16, #tpu.memory_space<vmem>>, vector<1x32x3xbf16>
    %1 = vector.shape_cast %0 : vector<1x32x3xbf16> to vector<32x3xbf16>
    %c0_2 = arith.constant 0 : index
    %c0_3 = arith.constant 0 : index
    %2 = vector.load %arg3[%c0_2, %c0_3] : memref<3x128xbf16, #tpu.memory_space<vmem>>, vector<3x128xbf16>
    %cst = arith.constant dense<0.000000e+00> : vector<32x128xf32>
    %3 = tpu.matmul %1, %2, %cst {dimension_numbers = #tpu.dot_dimension_numbers<[1], [0], [0], [1], [0, 0, 1, 1], [], []>} : vector<32x3xbf16>, vector<3x128xbf16>, vector<32x128xf32> -> vector<32x128xf32>
    %c0_4 = arith.constant 0 : index
    %c0_5 = arith.constant 0 : index
    %4 = vector.load %arg4[%c0_4, %c0_5] : memref<3x128xbf16, #tpu.memory_space<vmem>>, vector<3x128xbf16>
    %cst_6 = arith.constant dense<0.000000e+00> : vector<32x128xf32>
    %5 = tpu.matmul %1, %4, %cst_6 {dimension_numbers = #tpu.dot_dimension_numbers<[1], [0], [0], [1], [0, 0, 1, 1], [], []>} : vector<32x3xbf16>, vector<3x128xbf16>, vector<32x128xf32> -> vector<32x128xf32>
    %c0_7 = arith.constant 0 : index
    %c0_8 = arith.constant 0 : index
    %6 = vector.load %arg5[%c0_7, %c0_8] : memref<1x128xf32, #tpu.memory_space<vmem>>, vector<1x128xf32>
    %7 = vector.broadcast %6 : vector<1x128xf32> to vector<32x128xf32>
    %8 = arith.addf %5, %7 : vector<32x128xf32>
    %9 = arith.truncf %3 : vector<32x128xf32> to vector<32x128xbf16>
    %c0_9 = arith.constant 0 : index
    %c0_10 = arith.constant 0 : index
    %c0_11 = arith.constant 0 : index
    %10 = vector.load %arg6[%c0_9, %c0_10, %c0_11] : memref<1x32x128xbf16, #tpu.memory_space<vmem>>, vector<1x32x128xbf16>
    %11 = vector.shape_cast %10 : vector<1x32x128xbf16> to vector<32x128xbf16>
    %12 = vector.shape_cast %9 : vector<32x128xbf16> to vector<1x32x128xbf16>
    tpu.vector_store %arg6[%c0_9, %c0_10, %c0_11], %12 {strides = array<i32>} : memref<1x32x128xbf16, #tpu.memory_space<vmem>>, vector<1x32x128xbf16>,
    %c0_12 = arith.constant 0 : index
    %c0_13 = arith.constant 0 : index
    %c0_14 = arith.constant 0 : index
    %13 = vector.load %arg7[%c0_12, %c0_13, %c0_14] : memref<1x32x128xf32, #tpu.memory_space<vmem>>, vector<1x32x128xf32>
    %14 = vector.shape_cast %13 : vector<1x32x128xf32> to vector<32x128xf32>
    %15 = vector.shape_cast %8 : vector<32x128xf32> to vector<1x32x128xf32>
    tpu.vector_store %arg7[%c0_12, %c0_13, %c0_14], %15 {strides = array<i32>} : memref<1x32x128xf32, #tpu.memory_space<vmem>>, vector<1x32x128xf32>,
    return
  }
  func.func @transform_0(%arg0: i32, %arg1: i32) -> (i32, i32, i32) {
    %c0_i32 = arith.constant 0 : i32
    %c0_i32_0 = arith.constant 0 : i32
    return %arg0, %arg1, %c0_i32 : i32, i32, i32
  }
  func.func @transform_1(%arg0: i32, %arg1: i32) -> (i32, i32) {
    %c0_i32 = arith.constant 0 : i32
    %c0_i32_0 = arith.constant 0 : i32
    %c0_i32_1 = arith.constant 0 : i32
    return %c0_i32, %c0_i32_0 : i32, i32
  }
  func.func @transform_2(%arg0: i32, %arg1: i32) -> (i32, i32) {
    %c0_i32 = arith.constant 0 : i32
    %c0_i32_0 = arith.constant 0 : i32
    %c0_i32_1 = arith.constant 0 : i32
    return %c0_i32, %c0_i32_0 : i32, i32
  }
  func.func @transform_3(%arg0: i32, %arg1: i32) -> (i32, i32) {
    %c0_i32 = arith.constant 0 : i32
    %c0_i32_0 = arith.constant 0 : i32
    %c0_i32_1 = arith.constant 0 : i32
    return %c0_i32, %c0_i32_0 : i32, i32
  }
  func.func @transform_4(%arg0: i32, %arg1: i32) -> (i32, i32, i32) {
    %c0_i32 = arith.constant 0 : i32
    %c0_i32_0 = arith.constant 0 : i32
    return %arg0, %arg1, %c0_i32 : i32, i32, i32
  }
  func.func @transform_5(%arg0: i32, %arg1: i32) -> (i32, i32, i32) {
    %c0_i32 = arith.constant 0 : i32
    %c0_i32_0 = arith.constant 0 : i32
    return %arg0, %arg1, %c0_i32 : i32, i32, i32
  }
}

module attributes {stable_mosaic.version = 11 : i64} {
  func.func @_edge_proj_kernel(%arg0: i32, %arg1: i32, %arg2: memref<1x32x32xbf16, #tpu.memory_space<vmem>>, %arg3: memref<32x128xbf16, #tpu.memory_space<vmem>>, %arg4: memref<32x128xbf16, #tpu.memory_space<vmem>>, %arg5: memref<1x128xf32, #tpu.memory_space<vmem>>, %arg6: memref<1x32x128xbf16, #tpu.memory_space<vmem>>, %arg7: memref<1x32x128xf32, #tpu.memory_space<vmem>>) attributes {dimension_semantics = [#tpu.dimension_semantics<parallel>, #tpu.dimension_semantics<parallel>], iteration_bounds = array<i64: 2, 2>, scalar_prefetch = 0 : i64, scratch_operands = 0 : i64, tpu.core_type = #tpu.core_type<tc>, window_params = [{transform_indices = @transform_0, window_bounds = array<i64: 1, 32, 32>}, {pipeline_mode = #tpu.pipeline_mode<synchronous>, transform_indices = @transform_1, window_bounds = array<i64: 32, 128>}, {pipeline_mode = #tpu.pipeline_mode<synchronous>, transform_indices = @transform_2, window_bounds = array<i64: 32, 128>}, {pipeline_mode = #tpu.pipeline_mode<synchronous>, transform_indices = @transform_3, window_bounds = array<i64: 1, 128>}, {transform_indices = @transform_4, window_bounds = array<i64: 1, 32, 128>}, {transform_indices = @transform_5, window_bounds = array<i64: 1, 32, 128>}]} {
    %c0 = arith.constant 0 : index
    %c0_0 = arith.constant 0 : index
    %c0_1 = arith.constant 0 : index
    %0 = vector.load %arg2[%c0, %c0_0, %c0_1] : memref<1x32x32xbf16, #tpu.memory_space<vmem>>, vector<1x32x32xbf16>
    %1 = vector.shape_cast %0 : vector<1x32x32xbf16> to vector<32x32xbf16>
    %c0_2 = arith.constant 0 : index
    %c0_3 = arith.constant 0 : index
    %2 = vector.load %arg3[%c0_2, %c0_3] : memref<32x128xbf16, #tpu.memory_space<vmem>>, vector<32x128xbf16>
    %cst = arith.constant dense<0.000000e+00> : vector<32x128xf32>
    %3 = tpu.matmul %1, %2, %cst {dimension_numbers = #tpu.dot_dimension_numbers<[1], [0], [0], [1], [0, 0, 1, 1], [], []>} : vector<32x32xbf16>, vector<32x128xbf16>, vector<32x128xf32> -> vector<32x128xf32>
    %c0_4 = arith.constant 0 : index
    %c0_5 = arith.constant 0 : index
    %4 = vector.load %arg4[%c0_4, %c0_5] : memref<32x128xbf16, #tpu.memory_space<vmem>>, vector<32x128xbf16>
    %cst_6 = arith.constant dense<0.000000e+00> : vector<32x128xf32>
    %5 = tpu.matmul %1, %4, %cst_6 {dimension_numbers = #tpu.dot_dimension_numbers<[1], [0], [0], [1], [0, 0, 1, 1], [], []>} : vector<32x32xbf16>, vector<32x128xbf16>, vector<32x128xf32> -> vector<32x128xf32>
    %c0_7 = arith.constant 0 : index
    %c0_8 = arith.constant 0 : index
    %6 = vector.load %arg5[%c0_7, %c0_8] : memref<1x128xf32, #tpu.memory_space<vmem>>, vector<1x128xf32>
    %7 = vector.broadcast %6 : vector<1x128xf32> to vector<32x128xf32>
    %8 = arith.addf %5, %7 : vector<32x128xf32>
    %9 = arith.truncf %3 : vector<32x128xf32> to vector<32x128xbf16>
    %c0_9 = arith.constant 0 : index
    %c0_10 = arith.constant 0 : index
    %c0_11 = arith.constant 0 : index
    %10 = vector.load %arg6[%c0_9, %c0_10, %c0_11] : memref<1x32x128xbf16, #tpu.memory_space<vmem>>, vector<1x32x128xbf16>
    %11 = vector.shape_cast %10 : vector<1x32x128xbf16> to vector<32x128xbf16>
    %12 = vector.shape_cast %9 : vector<32x128xbf16> to vector<1x32x128xbf16>
    tpu.vector_store %arg6[%c0_9, %c0_10, %c0_11], %12 {strides = array<i32>} : memref<1x32x128xbf16, #tpu.memory_space<vmem>>, vector<1x32x128xbf16>,
    %c0_12 = arith.constant 0 : index
    %c0_13 = arith.constant 0 : index
    %c0_14 = arith.constant 0 : index
    %13 = vector.load %arg7[%c0_12, %c0_13, %c0_14] : memref<1x32x128xf32, #tpu.memory_space<vmem>>, vector<1x32x128xf32>
    %14 = vector.shape_cast %13 : vector<1x32x128xf32> to vector<32x128xf32>
    %15 = vector.shape_cast %8 : vector<32x128xf32> to vector<1x32x128xf32>
    tpu.vector_store %arg7[%c0_12, %c0_13, %c0_14], %15 {strides = array<i32>} : memref<1x32x128xf32, #tpu.memory_space<vmem>>, vector<1x32x128xf32>,
    return
  }
  func.func @transform_0(%arg0: i32, %arg1: i32) -> (i32, i32, i32) {
    %c0_i32 = arith.constant 0 : i32
    %c0_i32_0 = arith.constant 0 : i32
    return %arg0, %arg1, %c0_i32 : i32, i32, i32
  }
  func.func @transform_1(%arg0: i32, %arg1: i32) -> (i32, i32) {
    %c0_i32 = arith.constant 0 : i32
    %c0_i32_0 = arith.constant 0 : i32
    %c0_i32_1 = arith.constant 0 : i32
    return %c0_i32, %c0_i32_0 : i32, i32
  }
  func.func @transform_2(%arg0: i32, %arg1: i32) -> (i32, i32) {
    %c0_i32 = arith.constant 0 : i32
    %c0_i32_0 = arith.constant 0 : i32
    %c0_i32_1 = arith.constant 0 : i32
    return %c0_i32, %c0_i32_0 : i32, i32
  }
  func.func @transform_3(%arg0: i32, %arg1: i32) -> (i32, i32) {
    %c0_i32 = arith.constant 0 : i32
    %c0_i32_0 = arith.constant 0 : i32
    %c0_i32_1 = arith.constant 0 : i32
    return %c0_i32, %c0_i32_0 : i32, i32
  }
  func.func @transform_4(%arg0: i32, %arg1: i32) -> (i32, i32, i32) {
    %c0_i32 = arith.constant 0 : i32
    %c0_i32_0 = arith.constant 0 : i32
    return %arg0, %arg1, %c0_i32 : i32, i32, i32
  }
  func.func @transform_5(%arg0: i32, %arg1: i32) -> (i32, i32, i32) {
    %c0_i32 = arith.constant 0 : i32
    %c0_i32_0 = arith.constant 0 : i32
    return %arg0, %arg1, %c0_i32 : i32, i32, i32
  }
}

module attributes {stable_mosaic.version = 11 : i64} {
  func.func @_mlp_chain_kernel(%arg0: i32, %arg1: i32, %arg2: memref<1x32x115xbf16, #tpu.memory_space<vmem>>, %arg3: memref<115x512xbf16, #tpu.memory_space<vmem>>, %arg4: memref<1x512xf32, #tpu.memory_space<vmem>>, %arg5: memref<1x32x512xf32, #tpu.memory_space<vmem>>) attributes {dimension_semantics = [#tpu.dimension_semantics<parallel>, #tpu.dimension_semantics<parallel>], iteration_bounds = array<i64: 2, 2>, scalar_prefetch = 0 : i64, scratch_operands = 0 : i64, tpu.core_type = #tpu.core_type<tc>, window_params = [{transform_indices = @transform_0, window_bounds = array<i64: 1, 32, 115>}, {pipeline_mode = #tpu.pipeline_mode<synchronous>, transform_indices = @transform_1, window_bounds = array<i64: 115, 512>}, {pipeline_mode = #tpu.pipeline_mode<synchronous>, transform_indices = @transform_2, window_bounds = array<i64: 1, 512>}, {transform_indices = @transform_3, window_bounds = array<i64: 1, 32, 512>}]} {
    %c0 = arith.constant 0 : index
    %c0_0 = arith.constant 0 : index
    %c0_1 = arith.constant 0 : index
    %0 = vector.load %arg2[%c0, %c0_0, %c0_1] : memref<1x32x115xbf16, #tpu.memory_space<vmem>>, vector<1x32x115xbf16>
    %1 = vector.shape_cast %0 : vector<1x32x115xbf16> to vector<32x115xbf16>
    %c0_2 = arith.constant 0 : index
    %c0_3 = arith.constant 0 : index
    %2 = vector.load %arg3[%c0_2, %c0_3] : memref<115x512xbf16, #tpu.memory_space<vmem>>, vector<115x512xbf16>
    %c0_4 = arith.constant 0 : index
    %c0_5 = arith.constant 0 : index
    %3 = vector.load %arg4[%c0_4, %c0_5] : memref<1x512xf32, #tpu.memory_space<vmem>>, vector<1x512xf32>
    %cst = arith.constant dense<0.000000e+00> : vector<32x512xf32>
    %4 = tpu.matmul %1, %2, %cst {dimension_numbers = #tpu.dot_dimension_numbers<[1], [0], [0], [1], [0, 0, 1, 1], [], []>} : vector<32x115xbf16>, vector<115x512xbf16>, vector<32x512xf32> -> vector<32x512xf32>
    %5 = vector.broadcast %3 : vector<1x512xf32> to vector<32x512xf32>
    %6 = arith.addf %4, %5 : vector<32x512xf32>
    %cst_6 = arith.constant 0.000000e+00 : f32
    %7 = vector.broadcast %cst_6 : f32 to vector<32x512xf32>
    %8 = arith.cmpf oge, %6, %7 : vector<32x512xf32>
    %cst_7 = arith.constant 2.000000e-01 : f32
    %9 = vector.broadcast %cst_7 : f32 to vector<32x512xf32>
    %10 = arith.mulf %9, %6 : vector<32x512xf32>
    %11 = arith.select %8, %6, %10 : vector<32x512xi1>, vector<32x512xf32>
    %c0_8 = arith.constant 0 : index
    %c0_9 = arith.constant 0 : index
    %c0_10 = arith.constant 0 : index
    %12 = vector.load %arg5[%c0_8, %c0_9, %c0_10] : memref<1x32x512xf32, #tpu.memory_space<vmem>>, vector<1x32x512xf32>
    %13 = vector.shape_cast %12 : vector<1x32x512xf32> to vector<32x512xf32>
    %14 = vector.shape_cast %11 : vector<32x512xf32> to vector<1x32x512xf32>
    tpu.vector_store %arg5[%c0_8, %c0_9, %c0_10], %14 {strides = array<i32>} : memref<1x32x512xf32, #tpu.memory_space<vmem>>, vector<1x32x512xf32>,
    return
  }
  func.func @transform_0(%arg0: i32, %arg1: i32) -> (i32, i32, i32) {
    %c0_i32 = arith.constant 0 : i32
    %c0_i32_0 = arith.constant 0 : i32
    return %arg0, %arg1, %c0_i32 : i32, i32, i32
  }
  func.func @transform_1(%arg0: i32, %arg1: i32) -> (i32, i32) {
    %c0_i32 = arith.constant 0 : i32
    %c0_i32_0 = arith.constant 0 : i32
    %c0_i32_1 = arith.constant 0 : i32
    return %c0_i32, %c0_i32_0 : i32, i32
  }
  func.func @transform_2(%arg0: i32, %arg1: i32) -> (i32, i32) {
    %c0_i32 = arith.constant 0 : i32
    %c0_i32_0 = arith.constant 0 : i32
    %c0_i32_1 = arith.constant 0 : i32
    return %c0_i32, %c0_i32_0 : i32, i32
  }
  func.func @transform_3(%arg0: i32, %arg1: i32) -> (i32, i32, i32) {
    %c0_i32 = arith.constant 0 : i32
    %c0_i32_0 = arith.constant 0 : i32
    return %arg0, %arg1, %c0_i32 : i32, i32, i32
  }
}

module attributes {stable_mosaic.version = 11 : i64} {
  func.func @_mlp_chain_kernel(%arg0: i32, %arg1: i32, %arg2: memref<1x32x115xbf16, #tpu.memory_space<vmem>>, %arg3: memref<1x1x1024xf32, #tpu.memory_space<vmem>>, %arg4: memref<115x1024xbf16, #tpu.memory_space<vmem>>, %arg5: memref<1x1024xf32, #tpu.memory_space<vmem>>, %arg6: memref<1024x256xbf16, #tpu.memory_space<vmem>>, %arg7: memref<1x256xf32, #tpu.memory_space<vmem>>, %arg8: memref<256x64xbf16, #tpu.memory_space<vmem>>, %arg9: memref<1x64xf32, #tpu.memory_space<vmem>>, %arg10: memref<64x128xbf16, #tpu.memory_space<vmem>>, %arg11: memref<1x128xf32, #tpu.memory_space<vmem>>, %arg12: memref<1x32x128xf32, #tpu.memory_space<vmem>>) attributes {dimension_semantics = [#tpu.dimension_semantics<parallel>, #tpu.dimension_semantics<parallel>], iteration_bounds = array<i64: 2, 2>, scalar_prefetch = 0 : i64, scratch_operands = 0 : i64, tpu.core_type = #tpu.core_type<tc>, window_params = [{transform_indices = @transform_0, window_bounds = array<i64: 1, 32, 115>}, {transform_indices = @transform_1, window_bounds = array<i64: 1, 1, 1024>}, {pipeline_mode = #tpu.pipeline_mode<synchronous>, transform_indices = @transform_2, window_bounds = array<i64: 115, 1024>}, {pipeline_mode = #tpu.pipeline_mode<synchronous>, transform_indices = @transform_3, window_bounds = array<i64: 1, 1024>}, {pipeline_mode = #tpu.pipeline_mode<synchronous>, transform_indices = @transform_4, window_bounds = array<i64: 1024, 256>}, {pipeline_mode = #tpu.pipeline_mode<synchronous>, transform_indices = @transform_5, window_bounds = array<i64: 1, 256>}, {pipeline_mode = #tpu.pipeline_mode<synchronous>, transform_indices = @transform_6, window_bounds = array<i64: 256, 64>}, {pipeline_mode = #tpu.pipeline_mode<synchronous>, transform_indices = @transform_7, window_bounds = array<i64: 1, 64>}, {pipeline_mode = #tpu.pipeline_mode<synchronous>, transform_indices = @transform_8, window_bounds = array<i64: 64, 128>}, {pipeline_mode = #tpu.pipeline_mode<synchronous>, transform_indices = @transform_9, window_bounds = array<i64: 1, 128>}, {transform_indices = @transform_10, window_bounds = array<i64: 1, 32, 128>}]} {
    %c0 = arith.constant 0 : index
    %c0_0 = arith.constant 0 : index
    %c0_1 = arith.constant 0 : index
    %0 = vector.load %arg2[%c0, %c0_0, %c0_1] : memref<1x32x115xbf16, #tpu.memory_space<vmem>>, vector<1x32x115xbf16>
    %1 = vector.shape_cast %0 : vector<1x32x115xbf16> to vector<32x115xbf16>
    %c0_2 = arith.constant 0 : index
    %c0_3 = arith.constant 0 : index
    %2 = vector.load %arg4[%c0_2, %c0_3] : memref<115x1024xbf16, #tpu.memory_space<vmem>>, vector<115x1024xbf16>
    %c0_4 = arith.constant 0 : index
    %c0_5 = arith.constant 0 : index
    %3 = vector.load %arg5[%c0_4, %c0_5] : memref<1x1024xf32, #tpu.memory_space<vmem>>, vector<1x1024xf32>
    %cst = arith.constant dense<0.000000e+00> : vector<32x1024xf32>
    %4 = tpu.matmul %1, %2, %cst {dimension_numbers = #tpu.dot_dimension_numbers<[1], [0], [0], [1], [0, 0, 1, 1], [], []>} : vector<32x115xbf16>, vector<115x1024xbf16>, vector<32x1024xf32> -> vector<32x1024xf32>
    %c0_6 = arith.constant 0 : index
    %c0_7 = arith.constant 0 : index
    %c0_8 = arith.constant 0 : index
    %5 = vector.load %arg3[%c0_6, %c0_7, %c0_8] : memref<1x1x1024xf32, #tpu.memory_space<vmem>>, vector<1x1x1024xf32>
    %6 = vector.shape_cast %5 : vector<1x1x1024xf32> to vector<1x1024xf32>
    %7 = vector.broadcast %6 : vector<1x1024xf32> to vector<32x1024xf32>
    %8 = arith.addf %4, %7 : vector<32x1024xf32>
    %9 = vector.broadcast %3 : vector<1x1024xf32> to vector<32x1024xf32>
    %10 = arith.addf %8, %9 : vector<32x1024xf32>
    %cst_9 = arith.constant 0.000000e+00 : f32
    %11 = vector.broadcast %cst_9 : f32 to vector<32x1024xf32>
    %12 = arith.cmpf oge, %10, %11 : vector<32x1024xf32>
    %cst_10 = arith.constant 2.000000e-01 : f32
    %13 = vector.broadcast %cst_10 : f32 to vector<32x1024xf32>
    %14 = arith.mulf %13, %10 : vector<32x1024xf32>
    %15 = arith.select %12, %10, %14 : vector<32x1024xi1>, vector<32x1024xf32>
    %c0_11 = arith.constant 0 : index
    %c0_12 = arith.constant 0 : index
    %16 = vector.load %arg6[%c0_11, %c0_12] : memref<1024x256xbf16, #tpu.memory_space<vmem>>, vector<1024x256xbf16>
    %c0_13 = arith.constant 0 : index
    %c0_14 = arith.constant 0 : index
    %17 = vector.load %arg7[%c0_13, %c0_14] : memref<1x256xf32, #tpu.memory_space<vmem>>, vector<1x256xf32>
    %18 = arith.truncf %15 : vector<32x1024xf32> to vector<32x1024xbf16>
    %cst_15 = arith.constant dense<0.000000e+00> : vector<32x256xf32>
    %19 = tpu.matmul %18, %16, %cst_15 {dimension_numbers = #tpu.dot_dimension_numbers<[1], [0], [0], [1], [0, 0, 1, 1], [], []>} : vector<32x1024xbf16>, vector<1024x256xbf16>, vector<32x256xf32> -> vector<32x256xf32>
    %20 = vector.broadcast %17 : vector<1x256xf32> to vector<32x256xf32>
    %21 = arith.addf %19, %20 : vector<32x256xf32>
    %cst_16 = arith.constant 0.000000e+00 : f32
    %22 = vector.broadcast %cst_16 : f32 to vector<32x256xf32>
    %23 = arith.cmpf oge, %21, %22 : vector<32x256xf32>
    %cst_17 = arith.constant 2.000000e-01 : f32
    %24 = vector.broadcast %cst_17 : f32 to vector<32x256xf32>
    %25 = arith.mulf %24, %21 : vector<32x256xf32>
    %26 = arith.select %23, %21, %25 : vector<32x256xi1>, vector<32x256xf32>
    %c0_18 = arith.constant 0 : index
    %c0_19 = arith.constant 0 : index
    %27 = vector.load %arg8[%c0_18, %c0_19] : memref<256x64xbf16, #tpu.memory_space<vmem>>, vector<256x64xbf16>
    %c0_20 = arith.constant 0 : index
    %c0_21 = arith.constant 0 : index
    %28 = vector.load %arg9[%c0_20, %c0_21] : memref<1x64xf32, #tpu.memory_space<vmem>>, vector<1x64xf32>
    %29 = arith.truncf %26 : vector<32x256xf32> to vector<32x256xbf16>
    %cst_22 = arith.constant dense<0.000000e+00> : vector<32x64xf32>
    %30 = tpu.matmul %29, %27, %cst_22 {dimension_numbers = #tpu.dot_dimension_numbers<[1], [0], [0], [1], [0, 0, 1, 1], [], []>} : vector<32x256xbf16>, vector<256x64xbf16>, vector<32x64xf32> -> vector<32x64xf32>
    %31 = vector.broadcast %28 : vector<1x64xf32> to vector<32x64xf32>
    %32 = arith.addf %30, %31 : vector<32x64xf32>
    %cst_23 = arith.constant 0.000000e+00 : f32
    %33 = vector.broadcast %cst_23 : f32 to vector<32x64xf32>
    %34 = arith.cmpf oge, %32, %33 : vector<32x64xf32>
    %cst_24 = arith.constant 2.000000e-01 : f32
    %35 = vector.broadcast %cst_24 : f32 to vector<32x64xf32>
    %36 = arith.mulf %35, %32 : vector<32x64xf32>
    %37 = arith.select %34, %32, %36 : vector<32x64xi1>, vector<32x64xf32>
    %c0_25 = arith.constant 0 : index
    %c0_26 = arith.constant 0 : index
    %38 = vector.load %arg10[%c0_25, %c0_26] : memref<64x128xbf16, #tpu.memory_space<vmem>>, vector<64x128xbf16>
    %c0_27 = arith.constant 0 : index
    %c0_28 = arith.constant 0 : index
    %39 = vector.load %arg11[%c0_27, %c0_28] : memref<1x128xf32, #tpu.memory_space<vmem>>, vector<1x128xf32>
    %40 = arith.truncf %37 : vector<32x64xf32> to vector<32x64xbf16>
    %cst_29 = arith.constant dense<0.000000e+00> : vector<32x128xf32>
    %41 = tpu.matmul %40, %38, %cst_29 {dimension_numbers = #tpu.dot_dimension_numbers<[1], [0], [0], [1], [0, 0, 1, 1], [], []>} : vector<32x64xbf16>, vector<64x128xbf16>, vector<32x128xf32> -> vector<32x128xf32>
    %42 = vector.broadcast %39 : vector<1x128xf32> to vector<32x128xf32>
    %43 = arith.addf %41, %42 : vector<32x128xf32>
    %c0_30 = arith.constant 0 : index
    %c0_31 = arith.constant 0 : index
    %c0_32 = arith.constant 0 : index
    %44 = vector.load %arg12[%c0_30, %c0_31, %c0_32] : memref<1x32x128xf32, #tpu.memory_space<vmem>>, vector<1x32x128xf32>
    %45 = vector.shape_cast %44 : vector<1x32x128xf32> to vector<32x128xf32>
    %46 = vector.shape_cast %43 : vector<32x128xf32> to vector<1x32x128xf32>
    tpu.vector_store %arg12[%c0_30, %c0_31, %c0_32], %46 {strides = array<i32>} : memref<1x32x128xf32, #tpu.memory_space<vmem>>, vector<1x32x128xf32>,
    return
  }
  func.func @transform_0(%arg0: i32, %arg1: i32) -> (i32, i32, i32) {
    %c0_i32 = arith.constant 0 : i32
    %c0_i32_0 = arith.constant 0 : i32
    return %arg0, %arg1, %c0_i32 : i32, i32, i32
  }
  func.func @transform_1(%arg0: i32, %arg1: i32) -> (i32, i32, i32) {
    %c0_i32 = arith.constant 0 : i32
    %c0_i32_0 = arith.constant 0 : i32
    %c0_i32_1 = arith.constant 0 : i32
    return %arg0, %c0_i32, %c0_i32_0 : i32, i32, i32
  }
  func.func @transform_2(%arg0: i32, %arg1: i32) -> (i32, i32) {
    %c0_i32 = arith.constant 0 : i32
    %c0_i32_0 = arith.constant 0 : i32
    %c0_i32_1 = arith.constant 0 : i32
    return %c0_i32, %c0_i32_0 : i32, i32
  }
  func.func @transform_3(%arg0: i32, %arg1: i32) -> (i32, i32) {
    %c0_i32 = arith.constant 0 : i32
    %c0_i32_0 = arith.constant 0 : i32
    %c0_i32_1 = arith.constant 0 : i32
    return %c0_i32, %c0_i32_0 : i32, i32
  }
  func.func @transform_4(%arg0: i32, %arg1: i32) -> (i32, i32) {
    %c0_i32 = arith.constant 0 : i32
    %c0_i32_0 = arith.constant 0 : i32
    %c0_i32_1 = arith.constant 0 : i32
    return %c0_i32, %c0_i32_0 : i32, i32
  }
  func.func @transform_5(%arg0: i32, %arg1: i32) -> (i32, i32) {
    %c0_i32 = arith.constant 0 : i32
    %c0_i32_0 = arith.constant 0 : i32
    %c0_i32_1 = arith.constant 0 : i32
    return %c0_i32, %c0_i32_0 : i32, i32
  }
  func.func @transform_6(%arg0: i32, %arg1: i32) -> (i32, i32) {
    %c0_i32 = arith.constant 0 : i32
    %c0_i32_0 = arith.constant 0 : i32
    %c0_i32_1 = arith.constant 0 : i32
    return %c0_i32, %c0_i32_0 : i32, i32
  }
  func.func @transform_7(%arg0: i32, %arg1: i32) -> (i32, i32) {
    %c0_i32 = arith.constant 0 : i32
    %c0_i32_0 = arith.constant 0 : i32
    %c0_i32_1 = arith.constant 0 : i32
    return %c0_i32, %c0_i32_0 : i32, i32
  }
  func.func @transform_8(%arg0: i32, %arg1: i32) -> (i32, i32) {
    %c0_i32 = arith.constant 0 : i32
    %c0_i32_0 = arith.constant 0 : i32
    %c0_i32_1 = arith.constant 0 : i32
    return %c0_i32, %c0_i32_0 : i32, i32
  }
  func.func @transform_9(%arg0: i32, %arg1: i32) -> (i32, i32) {
    %c0_i32 = arith.constant 0 : i32
    %c0_i32_0 = arith.constant 0 : i32
    %c0_i32_1 = arith.constant 0 : i32
    return %c0_i32, %c0_i32_0 : i32, i32
  }
  func.func @transform_10(%arg0: i32, %arg1: i32) -> (i32, i32, i32) {
    %c0_i32 = arith.constant 0 : i32
    %c0_i32_0 = arith.constant 0 : i32
    return %arg0, %arg1, %c0_i32 : i32, i32, i32
  }
}

module attributes {stable_mosaic.version = 11 : i64} {
  func.func @_bmm_norm_kernel(%arg0: i32, %arg1: i32, %arg2: memref<1x16x128xbf16, #tpu.memory_space<vmem>>, %arg3: memref<1x128x115xbf16, #tpu.memory_space<vmem>>, %arg4: memref<1x16x115xf32, #tpu.memory_space<vmem>>, %arg5: memref<16x115xf32, #tpu.memory_space<vmem>>, %arg6: memref<16x1xf32, #tpu.memory_space<vmem>>) attributes {dimension_semantics = [#tpu.dimension_semantics<parallel>, #tpu.dimension_semantics<arbitrary>], iteration_bounds = array<i64: 2, 1>, scalar_prefetch = 0 : i64, scratch_operands = 2 : i64, tpu.core_type = #tpu.core_type<tc>, window_params = [{transform_indices = @transform_0, window_bounds = array<i64: 1, 16, 128>}, {transform_indices = @transform_1, window_bounds = array<i64: 1, 128, 115>}, {transform_indices = @transform_2, window_bounds = array<i64: 1, 16, 115>}]} {
    %c0_i32 = arith.constant 0 : i32
    %0 = arith.cmpi eq, %arg1, %c0_i32 : i32
    %1 = arith.extui %0 : i1 to i32
    %c0_i32_0 = arith.constant 0 : i32
    %2 = arith.cmpi ne, %1, %c0_i32_0 : i32
    scf.if %2 {
      %cst_17 = arith.constant 0.000000e+00 : f32
      %20 = vector.broadcast %cst_17 : f32 to vector<16x115xf32>
      %c0_18 = arith.constant 0 : index
      %c0_19 = arith.constant 0 : index
      %21 = vector.load %arg5[%c0_18, %c0_19] : memref<16x115xf32, #tpu.memory_space<vmem>>, vector<16x115xf32>
      tpu.vector_store %arg5[%c0_18, %c0_19], %20 {strides = array<i32>} : memref<16x115xf32, #tpu.memory_space<vmem>>, vector<16x115xf32>,
      %cst_20 = arith.constant 0.000000e+00 : f32
      %22 = vector.broadcast %cst_20 : f32 to vector<16x1xf32>
      %c0_21 = arith.constant 0 : index
      %c0_22 = arith.constant 0 : index
      %23 = vector.load %arg6[%c0_21, %c0_22] : memref<16x1xf32, #tpu.memory_space<vmem>>, vector<16x1xf32>
      tpu.vector_store %arg6[%c0_21, %c0_22], %22 {strides = array<i32>} : memref<16x1xf32, #tpu.memory_space<vmem>>, vector<16x1xf32>,
    } else {
    }
    %c0 = arith.constant 0 : index
    %c0_1 = arith.constant 0 : index
    %c0_2 = arith.constant 0 : index
    %3 = vector.load %arg2[%c0, %c0_1, %c0_2] : memref<1x16x128xbf16, #tpu.memory_space<vmem>>, vector<1x16x128xbf16>
    %4 = vector.shape_cast %3 : vector<1x16x128xbf16> to vector<16x128xbf16>
    %c0_3 = arith.constant 0 : index
    %c0_4 = arith.constant 0 : index
    %c0_5 = arith.constant 0 : index
    %5 = vector.load %arg3[%c0_3, %c0_4, %c0_5] : memref<1x128x115xbf16, #tpu.memory_space<vmem>>, vector<1x128x115xbf16>
    %6 = vector.shape_cast %5 : vector<1x128x115xbf16> to vector<128x115xbf16>
    %c0_6 = arith.constant 0 : index
    %c0_7 = arith.constant 0 : index
    %7 = vector.load %arg5[%c0_6, %c0_7] : memref<16x115xf32, #tpu.memory_space<vmem>>, vector<16x115xf32>
    %cst = arith.constant dense<0.000000e+00> : vector<16x115xf32>
    %8 = tpu.matmul %4, %6, %cst {dimension_numbers = #tpu.dot_dimension_numbers<[1], [0], [0], [1], [0, 0, 1, 1], [], []>} : vector<16x128xbf16>, vector<128x115xbf16>, vector<16x115xf32> -> vector<16x115xf32>
    %9 = arith.addf %7, %8 : vector<16x115xf32>
    %c0_8 = arith.constant 0 : index
    %c0_9 = arith.constant 0 : index
    %10 = vector.load %arg5[%c0_8, %c0_9] : memref<16x115xf32, #tpu.memory_space<vmem>>, vector<16x115xf32>
    tpu.vector_store %arg5[%c0_8, %c0_9], %9 {strides = array<i32>} : memref<16x115xf32, #tpu.memory_space<vmem>>, vector<16x115xf32>,
    %c0_10 = arith.constant 0 : index
    %c0_11 = arith.constant 0 : index
    %11 = vector.load %arg6[%c0_10, %c0_11] : memref<16x1xf32, #tpu.memory_space<vmem>>, vector<16x1xf32>
    %12 = arith.extf %4 : vector<16x128xbf16> to vector<16x128xf32>
    %cst_12 = arith.constant dense<0.000000e+00> : vector<16xf32>
    %13 = vector.multi_reduction <add>, %12, %cst_12 [1] : vector<16x128xf32> to vector<16xf32>
    %14 = vector.shape_cast %13 : vector<16xf32> to vector<16x1xf32>
    %15 = arith.addf %11, %14 : vector<16x1xf32>
    %c0_13 = arith.constant 0 : index
    %c0_14 = arith.constant 0 : index
    %16 = vector.load %arg6[%c0_13, %c0_14] : memref<16x1xf32, #tpu.memory_space<vmem>>, vector<16x1xf32>
    tpu.vector_store %arg6[%c0_13, %c0_14], %15 {strides = array<i32>} : memref<16x1xf32, #tpu.memory_space<vmem>>, vector<16x1xf32>,
    %c0_i32_15 = arith.constant 0 : i32
    %17 = arith.cmpi eq, %arg1, %c0_i32_15 : i32
    %18 = arith.extui %17 : i1 to i32
    %c0_i32_16 = arith.constant 0 : i32
    %19 = arith.cmpi ne, %18, %c0_i32_16 : i32
    scf.if %19 {
      %c0_17 = arith.constant 0 : index
      %c0_18 = arith.constant 0 : index
      %20 = vector.load %arg5[%c0_17, %c0_18] : memref<16x115xf32, #tpu.memory_space<vmem>>, vector<16x115xf32>
      %c0_19 = arith.constant 0 : index
      %c0_20 = arith.constant 0 : index
      %21 = vector.load %arg6[%c0_19, %c0_20] : memref<16x1xf32, #tpu.memory_space<vmem>>, vector<16x1xf32>
      %cst_21 = arith.constant 9.99999974E-6 : f32
      %22 = vector.broadcast %cst_21 : f32 to vector<16x1xf32>
      %23 = arith.addf %21, %22 : vector<16x1xf32>
      %24 = vector.broadcast %23 : vector<16x1xf32> to vector<16x115xf32>
      %25 = arith.divf %20, %24 : vector<16x115xf32>
      %c0_22 = arith.constant 0 : index
      %c0_23 = arith.constant 0 : index
      %c0_24 = arith.constant 0 : index
      %26 = vector.load %arg4[%c0_22, %c0_23, %c0_24] : memref<1x16x115xf32, #tpu.memory_space<vmem>>, vector<1x16x115xf32>
      %27 = vector.shape_cast %26 : vector<1x16x115xf32> to vector<16x115xf32>
      %28 = vector.shape_cast %25 : vector<16x115xf32> to vector<1x16x115xf32>
      tpu.vector_store %arg4[%c0_22, %c0_23, %c0_24], %28 {strides = array<i32>} : memref<1x16x115xf32, #tpu.memory_space<vmem>>, vector<1x16x115xf32>,
    } else {
    }
    return
  }
  func.func @transform_0(%arg0: i32, %arg1: i32) -> (i32, i32, i32) {
    %c0_i32 = arith.constant 0 : i32
    %c0_i32_0 = arith.constant 0 : i32
    return %arg0, %c0_i32, %arg1 : i32, i32, i32
  }
  func.func @transform_1(%arg0: i32, %arg1: i32) -> (i32, i32, i32) {
    %c0_i32 = arith.constant 0 : i32
    %c0_i32_0 = arith.constant 0 : i32
    return %arg0, %arg1, %c0_i32 : i32, i32, i32
  }
  func.func @transform_2(%arg0: i32, %arg1: i32) -> (i32, i32, i32) {
    %c0_i32 = arith.constant 0 : i32
    %c0_i32_0 = arith.constant 0 : i32
    %c0_i32_1 = arith.constant 0 : i32
    return %arg0, %c0_i32, %c0_i32_0 : i32, i32, i32
  }
}

module attributes {stable_mosaic.version = 11 : i64} {
  func.func @_edge_proj_kernel(%arg0: i32, %arg1: i32, %arg2: memref<1x16x115xbf16, #tpu.memory_space<vmem>>, %arg3: memref<115x256xbf16, #tpu.memory_space<vmem>>, %arg4: memref<115x256xbf16, #tpu.memory_space<vmem>>, %arg5: memref<1x256xf32, #tpu.memory_space<vmem>>, %arg6: memref<1x16x256xbf16, #tpu.memory_space<vmem>>, %arg7: memref<1x16x256xf32, #tpu.memory_space<vmem>>) attributes {dimension_semantics = [#tpu.dimension_semantics<parallel>, #tpu.dimension_semantics<parallel>], iteration_bounds = array<i64: 2, 1>, scalar_prefetch = 0 : i64, scratch_operands = 0 : i64, tpu.core_type = #tpu.core_type<tc>, window_params = [{transform_indices = @transform_0, window_bounds = array<i64: 1, 16, 115>}, {pipeline_mode = #tpu.pipeline_mode<synchronous>, transform_indices = @transform_1, window_bounds = array<i64: 115, 256>}, {pipeline_mode = #tpu.pipeline_mode<synchronous>, transform_indices = @transform_2, window_bounds = array<i64: 115, 256>}, {pipeline_mode = #tpu.pipeline_mode<synchronous>, transform_indices = @transform_3, window_bounds = array<i64: 1, 256>}, {transform_indices = @transform_4, window_bounds = array<i64: 1, 16, 256>}, {transform_indices = @transform_5, window_bounds = array<i64: 1, 16, 256>}]} {
    %c0 = arith.constant 0 : index
    %c0_0 = arith.constant 0 : index
    %c0_1 = arith.constant 0 : index
    %0 = vector.load %arg2[%c0, %c0_0, %c0_1] : memref<1x16x115xbf16, #tpu.memory_space<vmem>>, vector<1x16x115xbf16>
    %1 = vector.shape_cast %0 : vector<1x16x115xbf16> to vector<16x115xbf16>
    %c0_2 = arith.constant 0 : index
    %c0_3 = arith.constant 0 : index
    %2 = vector.load %arg3[%c0_2, %c0_3] : memref<115x256xbf16, #tpu.memory_space<vmem>>, vector<115x256xbf16>
    %cst = arith.constant dense<0.000000e+00> : vector<16x256xf32>
    %3 = tpu.matmul %1, %2, %cst {dimension_numbers = #tpu.dot_dimension_numbers<[1], [0], [0], [1], [0, 0, 1, 1], [], []>} : vector<16x115xbf16>, vector<115x256xbf16>, vector<16x256xf32> -> vector<16x256xf32>
    %c0_4 = arith.constant 0 : index
    %c0_5 = arith.constant 0 : index
    %4 = vector.load %arg4[%c0_4, %c0_5] : memref<115x256xbf16, #tpu.memory_space<vmem>>, vector<115x256xbf16>
    %cst_6 = arith.constant dense<0.000000e+00> : vector<16x256xf32>
    %5 = tpu.matmul %1, %4, %cst_6 {dimension_numbers = #tpu.dot_dimension_numbers<[1], [0], [0], [1], [0, 0, 1, 1], [], []>} : vector<16x115xbf16>, vector<115x256xbf16>, vector<16x256xf32> -> vector<16x256xf32>
    %c0_7 = arith.constant 0 : index
    %c0_8 = arith.constant 0 : index
    %6 = vector.load %arg5[%c0_7, %c0_8] : memref<1x256xf32, #tpu.memory_space<vmem>>, vector<1x256xf32>
    %7 = vector.broadcast %6 : vector<1x256xf32> to vector<16x256xf32>
    %8 = arith.addf %5, %7 : vector<16x256xf32>
    %9 = arith.truncf %3 : vector<16x256xf32> to vector<16x256xbf16>
    %c0_9 = arith.constant 0 : index
    %c0_10 = arith.constant 0 : index
    %c0_11 = arith.constant 0 : index
    %10 = vector.load %arg6[%c0_9, %c0_10, %c0_11] : memref<1x16x256xbf16, #tpu.memory_space<vmem>>, vector<1x16x256xbf16>
    %11 = vector.shape_cast %10 : vector<1x16x256xbf16> to vector<16x256xbf16>
    %12 = vector.shape_cast %9 : vector<16x256xbf16> to vector<1x16x256xbf16>
    tpu.vector_store %arg6[%c0_9, %c0_10, %c0_11], %12 {strides = array<i32>} : memref<1x16x256xbf16, #tpu.memory_space<vmem>>, vector<1x16x256xbf16>,
    %c0_12 = arith.constant 0 : index
    %c0_13 = arith.constant 0 : index
    %c0_14 = arith.constant 0 : index
    %13 = vector.load %arg7[%c0_12, %c0_13, %c0_14] : memref<1x16x256xf32, #tpu.memory_space<vmem>>, vector<1x16x256xf32>
    %14 = vector.shape_cast %13 : vector<1x16x256xf32> to vector<16x256xf32>
    %15 = vector.shape_cast %8 : vector<16x256xf32> to vector<1x16x256xf32>
    tpu.vector_store %arg7[%c0_12, %c0_13, %c0_14], %15 {strides = array<i32>} : memref<1x16x256xf32, #tpu.memory_space<vmem>>, vector<1x16x256xf32>,
    return
  }
  func.func @transform_0(%arg0: i32, %arg1: i32) -> (i32, i32, i32) {
    %c0_i32 = arith.constant 0 : i32
    %c0_i32_0 = arith.constant 0 : i32
    return %arg0, %arg1, %c0_i32 : i32, i32, i32
  }
  func.func @transform_1(%arg0: i32, %arg1: i32) -> (i32, i32) {
    %c0_i32 = arith.constant 0 : i32
    %c0_i32_0 = arith.constant 0 : i32
    %c0_i32_1 = arith.constant 0 : i32
    return %c0_i32, %c0_i32_0 : i32, i32
  }
  func.func @transform_2(%arg0: i32, %arg1: i32) -> (i32, i32) {
    %c0_i32 = arith.constant 0 : i32
    %c0_i32_0 = arith.constant 0 : i32
    %c0_i32_1 = arith.constant 0 : i32
    return %c0_i32, %c0_i32_0 : i32, i32
  }
  func.func @transform_3(%arg0: i32, %arg1: i32) -> (i32, i32) {
    %c0_i32 = arith.constant 0 : i32
    %c0_i32_0 = arith.constant 0 : i32
    %c0_i32_1 = arith.constant 0 : i32
    return %c0_i32, %c0_i32_0 : i32, i32
  }
  func.func @transform_4(%arg0: i32, %arg1: i32) -> (i32, i32, i32) {
    %c0_i32 = arith.constant 0 : i32
    %c0_i32_0 = arith.constant 0 : i32
    return %arg0, %arg1, %c0_i32 : i32, i32, i32
  }
  func.func @transform_5(%arg0: i32, %arg1: i32) -> (i32, i32, i32) {
    %c0_i32 = arith.constant 0 : i32
    %c0_i32_0 = arith.constant 0 : i32
    return %arg0, %arg1, %c0_i32 : i32, i32, i32
  }
}

module attributes {stable_mosaic.version = 11 : i64} {
  func.func @_edge_proj_kernel(%arg0: i32, %arg1: i32, %arg2: memref<1x16x256xbf16, #tpu.memory_space<vmem>>, %arg3: memref<256x128xbf16, #tpu.memory_space<vmem>>, %arg4: memref<256x128xbf16, #tpu.memory_space<vmem>>, %arg5: memref<1x128xf32, #tpu.memory_space<vmem>>, %arg6: memref<1x16x128xbf16, #tpu.memory_space<vmem>>, %arg7: memref<1x16x128xf32, #tpu.memory_space<vmem>>) attributes {dimension_semantics = [#tpu.dimension_semantics<parallel>, #tpu.dimension_semantics<parallel>], iteration_bounds = array<i64: 2, 1>, scalar_prefetch = 0 : i64, scratch_operands = 0 : i64, tpu.core_type = #tpu.core_type<tc>, window_params = [{transform_indices = @transform_0, window_bounds = array<i64: 1, 16, 256>}, {pipeline_mode = #tpu.pipeline_mode<synchronous>, transform_indices = @transform_1, window_bounds = array<i64: 256, 128>}, {pipeline_mode = #tpu.pipeline_mode<synchronous>, transform_indices = @transform_2, window_bounds = array<i64: 256, 128>}, {pipeline_mode = #tpu.pipeline_mode<synchronous>, transform_indices = @transform_3, window_bounds = array<i64: 1, 128>}, {transform_indices = @transform_4, window_bounds = array<i64: 1, 16, 128>}, {transform_indices = @transform_5, window_bounds = array<i64: 1, 16, 128>}]} {
    %c0 = arith.constant 0 : index
    %c0_0 = arith.constant 0 : index
    %c0_1 = arith.constant 0 : index
    %0 = vector.load %arg2[%c0, %c0_0, %c0_1] : memref<1x16x256xbf16, #tpu.memory_space<vmem>>, vector<1x16x256xbf16>
    %1 = vector.shape_cast %0 : vector<1x16x256xbf16> to vector<16x256xbf16>
    %c0_2 = arith.constant 0 : index
    %c0_3 = arith.constant 0 : index
    %2 = vector.load %arg3[%c0_2, %c0_3] : memref<256x128xbf16, #tpu.memory_space<vmem>>, vector<256x128xbf16>
    %cst = arith.constant dense<0.000000e+00> : vector<16x128xf32>
    %3 = tpu.matmul %1, %2, %cst {dimension_numbers = #tpu.dot_dimension_numbers<[1], [0], [0], [1], [0, 0, 1, 1], [], []>} : vector<16x256xbf16>, vector<256x128xbf16>, vector<16x128xf32> -> vector<16x128xf32>
    %c0_4 = arith.constant 0 : index
    %c0_5 = arith.constant 0 : index
    %4 = vector.load %arg4[%c0_4, %c0_5] : memref<256x128xbf16, #tpu.memory_space<vmem>>, vector<256x128xbf16>
    %cst_6 = arith.constant dense<0.000000e+00> : vector<16x128xf32>
    %5 = tpu.matmul %1, %4, %cst_6 {dimension_numbers = #tpu.dot_dimension_numbers<[1], [0], [0], [1], [0, 0, 1, 1], [], []>} : vector<16x256xbf16>, vector<256x128xbf16>, vector<16x128xf32> -> vector<16x128xf32>
    %c0_7 = arith.constant 0 : index
    %c0_8 = arith.constant 0 : index
    %6 = vector.load %arg5[%c0_7, %c0_8] : memref<1x128xf32, #tpu.memory_space<vmem>>, vector<1x128xf32>
    %7 = vector.broadcast %6 : vector<1x128xf32> to vector<16x128xf32>
    %8 = arith.addf %5, %7 : vector<16x128xf32>
    %9 = arith.truncf %3 : vector<16x128xf32> to vector<16x128xbf16>
    %c0_9 = arith.constant 0 : index
    %c0_10 = arith.constant 0 : index
    %c0_11 = arith.constant 0 : index
    %10 = vector.load %arg6[%c0_9, %c0_10, %c0_11] : memref<1x16x128xbf16, #tpu.memory_space<vmem>>, vector<1x16x128xbf16>
    %11 = vector.shape_cast %10 : vector<1x16x128xbf16> to vector<16x128xbf16>
    %12 = vector.shape_cast %9 : vector<16x128xbf16> to vector<1x16x128xbf16>
    tpu.vector_store %arg6[%c0_9, %c0_10, %c0_11], %12 {strides = array<i32>} : memref<1x16x128xbf16, #tpu.memory_space<vmem>>, vector<1x16x128xbf16>,
    %c0_12 = arith.constant 0 : index
    %c0_13 = arith.constant 0 : index
    %c0_14 = arith.constant 0 : index
    %13 = vector.load %arg7[%c0_12, %c0_13, %c0_14] : memref<1x16x128xf32, #tpu.memory_space<vmem>>, vector<1x16x128xf32>
    %14 = vector.shape_cast %13 : vector<1x16x128xf32> to vector<16x128xf32>
    %15 = vector.shape_cast %8 : vector<16x128xf32> to vector<1x16x128xf32>
    tpu.vector_store %arg7[%c0_12, %c0_13, %c0_14], %15 {strides = array<i32>} : memref<1x16x128xf32, #tpu.memory_space<vmem>>, vector<1x16x128xf32>,
    return
  }
  func.func @transform_0(%arg0: i32, %arg1: i32) -> (i32, i32, i32) {
    %c0_i32 = arith.constant 0 : i32
    %c0_i32_0 = arith.constant 0 : i32
    return %arg0, %arg1, %c0_i32 : i32, i32, i32
  }
  func.func @transform_1(%arg0: i32, %arg1: i32) -> (i32, i32) {
    %c0_i32 = arith.constant 0 : i32
    %c0_i32_0 = arith.constant 0 : i32
    %c0_i32_1 = arith.constant 0 : i32
    return %c0_i32, %c0_i32_0 : i32, i32
  }
  func.func @transform_2(%arg0: i32, %arg1: i32) -> (i32, i32) {
    %c0_i32 = arith.constant 0 : i32
    %c0_i32_0 = arith.constant 0 : i32
    %c0_i32_1 = arith.constant 0 : i32
    return %c0_i32, %c0_i32_0 : i32, i32
  }
  func.func @transform_3(%arg0: i32, %arg1: i32) -> (i32, i32) {
    %c0_i32 = arith.constant 0 : i32
    %c0_i32_0 = arith.constant 0 : i32
    %c0_i32_1 = arith.constant 0 : i32
    return %c0_i32, %c0_i32_0 : i32, i32
  }
  func.func @transform_4(%arg0: i32, %arg1: i32) -> (i32, i32, i32) {
    %c0_i32 = arith.constant 0 : i32
    %c0_i32_0 = arith.constant 0 : i32
    return %arg0, %arg1, %c0_i32 : i32, i32, i32
  }
  func.func @transform_5(%arg0: i32, %arg1: i32) -> (i32, i32, i32) {
    %c0_i32 = arith.constant 0 : i32
    %c0_i32_0 = arith.constant 0 : i32
    return %arg0, %arg1, %c0_i32 : i32, i32, i32
  }
}

module attributes {stable_mosaic.version = 11 : i64} {
  func.func @_edge_proj_kernel(%arg0: i32, %arg1: i32, %arg2: memref<1x16x128xbf16, #tpu.memory_space<vmem>>, %arg3: memref<128x128xbf16, #tpu.memory_space<vmem>>, %arg4: memref<128x128xbf16, #tpu.memory_space<vmem>>, %arg5: memref<1x128xf32, #tpu.memory_space<vmem>>, %arg6: memref<1x16x128xbf16, #tpu.memory_space<vmem>>, %arg7: memref<1x16x128xf32, #tpu.memory_space<vmem>>) attributes {dimension_semantics = [#tpu.dimension_semantics<parallel>, #tpu.dimension_semantics<parallel>], iteration_bounds = array<i64: 2, 1>, scalar_prefetch = 0 : i64, scratch_operands = 0 : i64, tpu.core_type = #tpu.core_type<tc>, window_params = [{transform_indices = @transform_0, window_bounds = array<i64: 1, 16, 128>}, {pipeline_mode = #tpu.pipeline_mode<synchronous>, transform_indices = @transform_1, window_bounds = array<i64: 128, 128>}, {pipeline_mode = #tpu.pipeline_mode<synchronous>, transform_indices = @transform_2, window_bounds = array<i64: 128, 128>}, {pipeline_mode = #tpu.pipeline_mode<synchronous>, transform_indices = @transform_3, window_bounds = array<i64: 1, 128>}, {transform_indices = @transform_4, window_bounds = array<i64: 1, 16, 128>}, {transform_indices = @transform_5, window_bounds = array<i64: 1, 16, 128>}]} {
    %c0 = arith.constant 0 : index
    %c0_0 = arith.constant 0 : index
    %c0_1 = arith.constant 0 : index
    %0 = vector.load %arg2[%c0, %c0_0, %c0_1] : memref<1x16x128xbf16, #tpu.memory_space<vmem>>, vector<1x16x128xbf16>
    %1 = vector.shape_cast %0 : vector<1x16x128xbf16> to vector<16x128xbf16>
    %c0_2 = arith.constant 0 : index
    %c0_3 = arith.constant 0 : index
    %2 = vector.load %arg3[%c0_2, %c0_3] : memref<128x128xbf16, #tpu.memory_space<vmem>>, vector<128x128xbf16>
    %cst = arith.constant dense<0.000000e+00> : vector<16x128xf32>
    %3 = tpu.matmul %1, %2, %cst {dimension_numbers = #tpu.dot_dimension_numbers<[1], [0], [0], [1], [0, 0, 1, 1], [], []>} : vector<16x128xbf16>, vector<128x128xbf16>, vector<16x128xf32> -> vector<16x128xf32>
    %c0_4 = arith.constant 0 : index
    %c0_5 = arith.constant 0 : index
    %4 = vector.load %arg4[%c0_4, %c0_5] : memref<128x128xbf16, #tpu.memory_space<vmem>>, vector<128x128xbf16>
    %cst_6 = arith.constant dense<0.000000e+00> : vector<16x128xf32>
    %5 = tpu.matmul %1, %4, %cst_6 {dimension_numbers = #tpu.dot_dimension_numbers<[1], [0], [0], [1], [0, 0, 1, 1], [], []>} : vector<16x128xbf16>, vector<128x128xbf16>, vector<16x128xf32> -> vector<16x128xf32>
    %c0_7 = arith.constant 0 : index
    %c0_8 = arith.constant 0 : index
    %6 = vector.load %arg5[%c0_7, %c0_8] : memref<1x128xf32, #tpu.memory_space<vmem>>, vector<1x128xf32>
    %7 = vector.broadcast %6 : vector<1x128xf32> to vector<16x128xf32>
    %8 = arith.addf %5, %7 : vector<16x128xf32>
    %9 = arith.truncf %3 : vector<16x128xf32> to vector<16x128xbf16>
    %c0_9 = arith.constant 0 : index
    %c0_10 = arith.constant 0 : index
    %c0_11 = arith.constant 0 : index
    %10 = vector.load %arg6[%c0_9, %c0_10, %c0_11] : memref<1x16x128xbf16, #tpu.memory_space<vmem>>, vector<1x16x128xbf16>
    %11 = vector.shape_cast %10 : vector<1x16x128xbf16> to vector<16x128xbf16>
    %12 = vector.shape_cast %9 : vector<16x128xbf16> to vector<1x16x128xbf16>
    tpu.vector_store %arg6[%c0_9, %c0_10, %c0_11], %12 {strides = array<i32>} : memref<1x16x128xbf16, #tpu.memory_space<vmem>>, vector<1x16x128xbf16>,
    %c0_12 = arith.constant 0 : index
    %c0_13 = arith.constant 0 : index
    %c0_14 = arith.constant 0 : index
    %13 = vector.load %arg7[%c0_12, %c0_13, %c0_14] : memref<1x16x128xf32, #tpu.memory_space<vmem>>, vector<1x16x128xf32>
    %14 = vector.shape_cast %13 : vector<1x16x128xf32> to vector<16x128xf32>
    %15 = vector.shape_cast %8 : vector<16x128xf32> to vector<1x16x128xf32>
    tpu.vector_store %arg7[%c0_12, %c0_13, %c0_14], %15 {strides = array<i32>} : memref<1x16x128xf32, #tpu.memory_space<vmem>>, vector<1x16x128xf32>,
    return
  }
  func.func @transform_0(%arg0: i32, %arg1: i32) -> (i32, i32, i32) {
    %c0_i32 = arith.constant 0 : i32
    %c0_i32_0 = arith.constant 0 : i32
    return %arg0, %arg1, %c0_i32 : i32, i32, i32
  }
  func.func @transform_1(%arg0: i32, %arg1: i32) -> (i32, i32) {
    %c0_i32 = arith.constant 0 : i32
    %c0_i32_0 = arith.constant 0 : i32
    %c0_i32_1 = arith.constant 0 : i32
    return %c0_i32, %c0_i32_0 : i32, i32
  }
  func.func @transform_2(%arg0: i32, %arg1: i32) -> (i32, i32) {
    %c0_i32 = arith.constant 0 : i32
    %c0_i32_0 = arith.constant 0 : i32
    %c0_i32_1 = arith.constant 0 : i32
    return %c0_i32, %c0_i32_0 : i32, i32
  }
  func.func @transform_3(%arg0: i32, %arg1: i32) -> (i32, i32) {
    %c0_i32 = arith.constant 0 : i32
    %c0_i32_0 = arith.constant 0 : i32
    %c0_i32_1 = arith.constant 0 : i32
    return %c0_i32, %c0_i32_0 : i32, i32
  }
  func.func @transform_4(%arg0: i32, %arg1: i32) -> (i32, i32, i32) {
    %c0_i32 = arith.constant 0 : i32
    %c0_i32_0 = arith.constant 0 : i32
    return %arg0, %arg1, %c0_i32 : i32, i32, i32
  }
  func.func @transform_5(%arg0: i32, %arg1: i32) -> (i32, i32, i32) {
    %c0_i32 = arith.constant 0 : i32
    %c0_i32_0 = arith.constant 0 : i32
    return %arg0, %arg1, %c0_i32 : i32, i32, i32
  }
}

module attributes {stable_mosaic.version = 11 : i64} {
  func.func @_mlp_chain_kernel(%arg0: i32, %arg1: i32, %arg2: memref<1x16x448xbf16, #tpu.memory_space<vmem>>, %arg3: memref<448x512xbf16, #tpu.memory_space<vmem>>, %arg4: memref<1x512xf32, #tpu.memory_space<vmem>>, %arg5: memref<512x256xbf16, #tpu.memory_space<vmem>>, %arg6: memref<1x256xf32, #tpu.memory_space<vmem>>, %arg7: memref<256x128xbf16, #tpu.memory_space<vmem>>, %arg8: memref<1x128xf32, #tpu.memory_space<vmem>>, %arg9: memref<1x16x128xf32, #tpu.memory_space<vmem>>) attributes {dimension_semantics = [#tpu.dimension_semantics<parallel>, #tpu.dimension_semantics<parallel>], iteration_bounds = array<i64: 2, 1>, scalar_prefetch = 0 : i64, scratch_operands = 0 : i64, tpu.core_type = #tpu.core_type<tc>, window_params = [{transform_indices = @transform_0, window_bounds = array<i64: 1, 16, 448>}, {pipeline_mode = #tpu.pipeline_mode<synchronous>, transform_indices = @transform_1, window_bounds = array<i64: 448, 512>}, {pipeline_mode = #tpu.pipeline_mode<synchronous>, transform_indices = @transform_2, window_bounds = array<i64: 1, 512>}, {pipeline_mode = #tpu.pipeline_mode<synchronous>, transform_indices = @transform_3, window_bounds = array<i64: 512, 256>}, {pipeline_mode = #tpu.pipeline_mode<synchronous>, transform_indices = @transform_4, window_bounds = array<i64: 1, 256>}, {pipeline_mode = #tpu.pipeline_mode<synchronous>, transform_indices = @transform_5, window_bounds = array<i64: 256, 128>}, {pipeline_mode = #tpu.pipeline_mode<synchronous>, transform_indices = @transform_6, window_bounds = array<i64: 1, 128>}, {transform_indices = @transform_7, window_bounds = array<i64: 1, 16, 128>}]} {
    %c0 = arith.constant 0 : index
    %c0_0 = arith.constant 0 : index
    %c0_1 = arith.constant 0 : index
    %0 = vector.load %arg2[%c0, %c0_0, %c0_1] : memref<1x16x448xbf16, #tpu.memory_space<vmem>>, vector<1x16x448xbf16>
    %1 = vector.shape_cast %0 : vector<1x16x448xbf16> to vector<16x448xbf16>
    %c0_2 = arith.constant 0 : index
    %c0_3 = arith.constant 0 : index
    %2 = vector.load %arg3[%c0_2, %c0_3] : memref<448x512xbf16, #tpu.memory_space<vmem>>, vector<448x512xbf16>
    %c0_4 = arith.constant 0 : index
    %c0_5 = arith.constant 0 : index
    %3 = vector.load %arg4[%c0_4, %c0_5] : memref<1x512xf32, #tpu.memory_space<vmem>>, vector<1x512xf32>
    %cst = arith.constant dense<0.000000e+00> : vector<16x512xf32>
    %4 = tpu.matmul %1, %2, %cst {dimension_numbers = #tpu.dot_dimension_numbers<[1], [0], [0], [1], [0, 0, 1, 1], [], []>} : vector<16x448xbf16>, vector<448x512xbf16>, vector<16x512xf32> -> vector<16x512xf32>
    %5 = vector.broadcast %3 : vector<1x512xf32> to vector<16x512xf32>
    %6 = arith.addf %4, %5 : vector<16x512xf32>
    %cst_6 = arith.constant 0.000000e+00 : f32
    %7 = vector.broadcast %cst_6 : f32 to vector<16x512xf32>
    %8 = arith.cmpf oge, %6, %7 : vector<16x512xf32>
    %cst_7 = arith.constant 2.000000e-01 : f32
    %9 = vector.broadcast %cst_7 : f32 to vector<16x512xf32>
    %10 = arith.mulf %9, %6 : vector<16x512xf32>
    %11 = arith.select %8, %6, %10 : vector<16x512xi1>, vector<16x512xf32>
    %c0_8 = arith.constant 0 : index
    %c0_9 = arith.constant 0 : index
    %12 = vector.load %arg5[%c0_8, %c0_9] : memref<512x256xbf16, #tpu.memory_space<vmem>>, vector<512x256xbf16>
    %c0_10 = arith.constant 0 : index
    %c0_11 = arith.constant 0 : index
    %13 = vector.load %arg6[%c0_10, %c0_11] : memref<1x256xf32, #tpu.memory_space<vmem>>, vector<1x256xf32>
    %14 = arith.truncf %11 : vector<16x512xf32> to vector<16x512xbf16>
    %cst_12 = arith.constant dense<0.000000e+00> : vector<16x256xf32>
    %15 = tpu.matmul %14, %12, %cst_12 {dimension_numbers = #tpu.dot_dimension_numbers<[1], [0], [0], [1], [0, 0, 1, 1], [], []>} : vector<16x512xbf16>, vector<512x256xbf16>, vector<16x256xf32> -> vector<16x256xf32>
    %16 = vector.broadcast %13 : vector<1x256xf32> to vector<16x256xf32>
    %17 = arith.addf %15, %16 : vector<16x256xf32>
    %cst_13 = arith.constant 0.000000e+00 : f32
    %18 = vector.broadcast %cst_13 : f32 to vector<16x256xf32>
    %19 = arith.cmpf oge, %17, %18 : vector<16x256xf32>
    %cst_14 = arith.constant 2.000000e-01 : f32
    %20 = vector.broadcast %cst_14 : f32 to vector<16x256xf32>
    %21 = arith.mulf %20, %17 : vector<16x256xf32>
    %22 = arith.select %19, %17, %21 : vector<16x256xi1>, vector<16x256xf32>
    %c0_15 = arith.constant 0 : index
    %c0_16 = arith.constant 0 : index
    %23 = vector.load %arg7[%c0_15, %c0_16] : memref<256x128xbf16, #tpu.memory_space<vmem>>, vector<256x128xbf16>
    %c0_17 = arith.constant 0 : index
    %c0_18 = arith.constant 0 : index
    %24 = vector.load %arg8[%c0_17, %c0_18] : memref<1x128xf32, #tpu.memory_space<vmem>>, vector<1x128xf32>
    %25 = arith.truncf %22 : vector<16x256xf32> to vector<16x256xbf16>
    %cst_19 = arith.constant dense<0.000000e+00> : vector<16x128xf32>
    %26 = tpu.matmul %25, %23, %cst_19 {dimension_numbers = #tpu.dot_dimension_numbers<[1], [0], [0], [1], [0, 0, 1, 1], [], []>} : vector<16x256xbf16>, vector<256x128xbf16>, vector<16x128xf32> -> vector<16x128xf32>
    %27 = vector.broadcast %24 : vector<1x128xf32> to vector<16x128xf32>
    %28 = arith.addf %26, %27 : vector<16x128xf32>
    %c0_20 = arith.constant 0 : index
    %c0_21 = arith.constant 0 : index
    %c0_22 = arith.constant 0 : index
    %29 = vector.load %arg9[%c0_20, %c0_21, %c0_22] : memref<1x16x128xf32, #tpu.memory_space<vmem>>, vector<1x16x128xf32>
    %30 = vector.shape_cast %29 : vector<1x16x128xf32> to vector<16x128xf32>
    %31 = vector.shape_cast %28 : vector<16x128xf32> to vector<1x16x128xf32>
    tpu.vector_store %arg9[%c0_20, %c0_21, %c0_22], %31 {strides = array<i32>} : memref<1x16x128xf32, #tpu.memory_space<vmem>>, vector<1x16x128xf32>,
    return
  }
  func.func @transform_0(%arg0: i32, %arg1: i32) -> (i32, i32, i32) {
    %c0_i32 = arith.constant 0 : i32
    %c0_i32_0 = arith.constant 0 : i32
    return %arg0, %arg1, %c0_i32 : i32, i32, i32
  }
  func.func @transform_1(%arg0: i32, %arg1: i32) -> (i32, i32) {
    %c0_i32 = arith.constant 0 : i32
    %c0_i32_0 = arith.constant 0 : i32
    %c0_i32_1 = arith.constant 0 : i32
    return %c0_i32, %c0_i32_0 : i32, i32
  }
  func.func @transform_2(%arg0: i32, %arg1: i32) -> (i32, i32) {
    %c0_i32 = arith.constant 0 : i32
    %c0_i32_0 = arith.constant 0 : i32
    %c0_i32_1 = arith.constant 0 : i32
    return %c0_i32, %c0_i32_0 : i32, i32
  }
  func.func @transform_3(%arg0: i32, %arg1: i32) -> (i32, i32) {
    %c0_i32 = arith.constant 0 : i32
    %c0_i32_0 = arith.constant 0 : i32
    %c0_i32_1 = arith.constant 0 : i32
    return %c0_i32, %c0_i32_0 : i32, i32
  }
  func.func @transform_4(%arg0: i32, %arg1: i32) -> (i32, i32) {
    %c0_i32 = arith.constant 0 : i32
    %c0_i32_0 = arith.constant 0 : i32
    %c0_i32_1 = arith.constant 0 : i32
    return %c0_i32, %c0_i32_0 : i32, i32
  }
  func.func @transform_5(%arg0: i32, %arg1: i32) -> (i32, i32) {
    %c0_i32 = arith.constant 0 : i32
    %c0_i32_0 = arith.constant 0 : i32
    %c0_i32_1 = arith.constant 0 : i32
    return %c0_i32, %c0_i32_0 : i32, i32
  }
  func.func @transform_6(%arg0: i32, %arg1: i32) -> (i32, i32) {
    %c0_i32 = arith.constant 0 : i32
    %c0_i32_0 = arith.constant 0 : i32
    %c0_i32_1 = arith.constant 0 : i32
    return %c0_i32, %c0_i32_0 : i32, i32
  }
  func.func @transform_7(%arg0: i32, %arg1: i32) -> (i32, i32, i32) {
    %c0_i32 = arith.constant 0 : i32
    %c0_i32_0 = arith.constant 0 : i32
    return %arg0, %arg1, %c0_i32 : i32, i32, i32
  }
}

</mosaic_0001>

<llo_original>
// kernel: skinning_net_forward.13
$region0: #{skinning_net_forward.13}
  #allocation0 [shape = 'u32[]', space=smem, size = 0x4, offset = 0x4, fixed_abs, tag = 'smem constant byte address 0x4 - core index']
  #allocation1 [shape = 'u32[144,128]{1,0:T(1,128)}', space=vmem, size = 0x12000, scoped, tag = 'internal scratch']
  %s0 = inlined_call_operand.vmem [shape: bf16[2,64,3], index: 0, kind: input, shape index: {}]
  %s1 = inlined_call_operand.vmem [shape: bf16[3,128], index: 1, kind: input, shape index: {}]
  %s2 = inlined_call_operand.vmem [shape: bf16[3,128], index: 2, kind: input, shape index: {}]
  %s3 = inlined_call_operand.vmem [shape: f32[1,128], index: 3, kind: input, shape index: {}]
  %s4 = inlined_call_operand.vmem [shape: bf16[2,64,128], index: 4, kind: output, shape index: {0}]
  %s5 = inlined_call_operand.vmem [shape: f32[2,64,128], index: 5, kind: output, shape index: {1}]
  %6 = xla_tuple %s4, %s5
  %s7 = sld [smem:[#allocation0]]
  $region57: #{skinning_net_forward.13} parent=0
    _
  %s9 = ssub.s32 1, %s7
  %s10 = scalar_select 0, %s9, %s7
  loop: start=0, step=1, limit=6
  $region2: #{skinning_net_forward.13} parent=0 // loop_pre_header
    _
  $region3: #{skinning_net_forward.13} parent=0 // loop_header
    %s12 = sphi 0, %s16
    %p13 = scmp.ge.s32.totalorder %s12, 6
    %s19 = sphi 0, %s31
    %s20 = sphi 0, %s27
    %s21 = sphi 0, %s19
    %s22 = sphi 0, %s20
    %s23 = sphi 0, %s21
    %s24 = sphi 0, %s22
    %s36 = sphi 0, %s38
    %s39 = sphi 0, %s36
    %s40 = sphi 0, %s39
    %s56 = sphi 0, %s40
    %s60 = sphi 0, %s60
    %s62 = sphi 0, %s60
    %s63 = sphi 0, %s62
    %s77 = sphi 0, %s63
    %s81 = sphi 0, %s81
    %s83 = sphi 0, %s81
    %s84 = sphi 0, %s83
    %s98 = sphi 0, %s84
    %s102 = sphi 0, %s102
    %s104 = sphi 0, %s102
    %s105 = sphi 0, %s104
    %s119 = sphi 0, %s105
    %s127 = sphi 0, %s129
    %s130 = sphi 0, %s127
    %s131 = sphi 0, %s130
    %s147 = sphi 0, %s131
    %s155 = sphi 0, %s157
    %s158 = sphi 0, %s155
    %s159 = sphi 0, %s158
    %s175 = sphi 0, %s159
  $region4: #{skinning_net_forward.13} parent=0 // loop_header_branch
    %15 = sbr.rel (%p13) target = $region8
  $region5: #{skinning_net_forward.13} parent=0 // loop_body
    %s17 = ssub.s32 %s12, 1
    %s18 = ssub.s32 %s12, 2
    %s25 = sadd.s32 1, %s20
    %p26 = scmp.ge.s32.totalorder %s25, 2
    %s27 = scalar_select %p26, 0, %s25
    %s28 = sadd.s32 1, %s19
    %s29 = scalar_select %p26, %s28, %s19
    %p30 = scmp.ge.s32.totalorder %s29, 2
    %s31 = scalar_select %p30, 0, %s29
    %s32 = ssub.s32 %s19, %s31
    %s33 = ssub.s32 %s20, %s27
    %s34 = sor.u32 %s32, %s33
    %p35 = scmp.eq.s32.totalorder %s34, 0
    %s37 = sadd.s32 %s36, 1
    %s38 = scalar_select %p35, %s36, %s37
    %p41 = pneg %p35
    %p42 = scmp.eq.s32.totalorder %s12, 3
    %p43 = por %p41, %p42
    %p44 = scmp.ne.s32.totalorder %s36, %s39
    %p45 = scmp.eq.s32.totalorder %s12, 0
    %p46 = por %p44, %p45
    %p47 = scmp.ne.s32.totalorder %s36, %s39
    %p48 = scmp.eq.s32.totalorder %s17, 3
    %p49 = por %p47, %p48
    %p50 = scmp.ne.s32.totalorder %s39, %s40
    %p51 = scmp.eq.s32.totalorder %s17, 0
    %p52 = por %p50, %p51
    %p53 = scmp.ne.s32.totalorder %s39, %s40
    %p54 = scmp.eq.s32.totalorder %s18, 3
    %p55 = por %p53, %p54
    %p57 = scmp.ne.s32.totalorder %s40, %s56
    %p58 = scmp.eq.s32.totalorder %s18, 0
    %p59 = por %p57, %p58
    %s61 = sadd.s32 %s60, 1
    %p64 = scmp.eq.s32.totalorder %s12, 3
    %p65 = scmp.ne.s32.totalorder %s60, %s62
    %p66 = scmp.eq.s32.totalorder %s12, 0
    %p67 = por %p65, %p66
    %p68 = scmp.ne.s32.totalorder %s60, %s62
    %p69 = scmp.eq.s32.totalorder %s17, 3
    %p70 = por %p68, %p69
    %p71 = scmp.ne.s32.totalorder %s62, %s63
    %p72 = scmp.eq.s32.totalorder %s17, 0
    %p73 = por %p71, %p72
    %p74 = scmp.ne.s32.totalorder %s62, %s63
    %p75 = scmp.eq.s32.totalorder %s18, 3
    %p76 = por %p74, %p75
    %p78 = scmp.ne.s32.totalorder %s63, %s77
    %p79 = scmp.eq.s32.totalorder %s18, 0
    %p80 = por %p78, %p79
    %s82 = sadd.s32 %s81, 1
    %p85 = scmp.eq.s32.totalorder %s12, 3
    %p86 = scmp.ne.s32.totalorder %s81, %s83
    %p87 = scmp.eq.s32.totalorder %s12, 0
    %p88 = por %p86, %p87
    %p89 = scmp.ne.s32.totalorder %s81, %s83
    %p90 = scmp.eq.s32.totalorder %s17, 3
    %p91 = por %p89, %p90
    %p92 = scmp.ne.s32.totalorder %s83, %s84
    %p93 = scmp.eq.s32.totalorder %s17, 0
    %p94 = por %p92, %p93
    %p95 = scmp.ne.s32.totalorder %s83, %s84
    %p96 = scmp.eq.s32.totalorder %s18, 3
    %p97 = por %p95, %p96
    %p99 = scmp.ne.s32.totalorder %s84, %s98
    %p100 = scmp.eq.s32.totalorder %s18, 0
    %p101 = por %p99, %p100
    %s103 = sadd.s32 %s102, 1
    %p106 = scmp.eq.s32.totalorder %s12, 3
    %p107 = scmp.ne.s32.totalorder %s102, %s104
    %p108 = scmp.eq.s32.totalorder %s12, 0
    %p109 = por %p107, %p108
    %p110 = scmp.ne.s32.totalorder %s102, %s104
    %p111 = scmp.eq.s32.totalorder %s17, 3
    %p112 = por %p110, %p111
    %p113 = scmp.ne.s32.totalorder %s104, %s105
    %p114 = scmp.eq.s32.totalorder %s17, 0
    %p115 = por %p113, %p114
    %p116 = scmp.ne.s32.totalorder %s104, %s105
    %p117 = scmp.eq.s32.totalorder %s18, 3
    %p118 = por %p116, %p117
    %p120 = scmp.ne.s32.totalorder %s105, %s119
    %p121 = scmp.eq.s32.totalorder %s18, 0
    %p122 = por %p120, %p121
    %s123 = ssub.s32 %s19, %s31
    %s124 = ssub.s32 %s20, %s27
    %s125 = sor.u32 %s123, %s124
    %p126 = scmp.eq.s32.totalorder %s125, 0
    %s128 = sadd.s32 %s127, 1
    %s129 = scalar_select %p126, %s127, %s128
    %p132 = pneg %p126
    %p133 = scmp.eq.s32.totalorder %s12, 3
    %p134 = por %p132, %p133
    %p135 = scmp.ne.s32.totalorder %s127, %s130
    %p136 = scmp.eq.s32.totalorder %s12, 0
    %p137 = por %p135, %p136
    %p138 = scmp.ne.s32.totalorder %s127, %s130
    %p139 = scmp.eq.s32.totalorder %s17, 3
    %p140 = por %p138, %p139
    %p141 = scmp.ne.s32.totalorder %s130, %s131
    %p142 = scmp.eq.s32.totalorder %s17, 0
    %p143 = por %p141, %p142
    %p144 = scmp.ne.s32.totalorder %s130, %s131
    %p145 = scmp.eq.s32.totalorder %s18, 3
    %p146 = por %p144, %p145
    %p148 = scmp.ne.s32.totalorder %s131, %s147
    %p149 = scmp.eq.s32.totalorder %s18, 0
    %p150 = por %p148, %p149
    %s151 = ssub.s32 %s19, %s31
    %s152 = ssub.s32 %s20, %s27
    %s153 = sor.u32 %s151, %s152
    %p154 = scmp.eq.s32.totalorder %s153, 0
    %s156 = sadd.s32 %s155, 1
    %s157 = scalar_select %p154, %s155, %s156
    %p160 = pneg %p154
    %p161 = scmp.eq.s32.totalorder %s12, 3
    %p162 = por %p160, %p161
    %p163 = scmp.ne.s32.totalorder %s155, %s158
    %p164 = scmp.eq.s32.totalorder %s12, 0
    %p165 = por %p163, %p164
    %p166 = scmp.ne.s32.totalorder %s155, %s158
    %p167 = scmp.eq.s32.totalorder %s17, 3
    %p168 = por %p166, %p167
    %p169 = scmp.ne.s32.totalorder %s158, %s159
    %p170 = scmp.eq.s32.totalorder %s17, 0
    %p171 = por %p169, %p170
    %p172 = scmp.ne.s32.totalorder %s158, %s159
    %p173 = scmp.eq.s32.totalorder %s18, 3
    %p174 = por %p172, %p173
    %p176 = scmp.ne.s32.totalorder %s159, %s175
    %p177 = scmp.eq.s32.totalorder %s18, 0
    %p178 = por %p176, %p177
    %p179 = scmp.le.s32.totalorder 1, %s12
    %p180 = scmp.lt.s32.totalorder %s12, 5
    %p181 = pnand %p179, %p180
    %p182 = pneg %p181
    // Predicated region
    $region9: #{skinning_net_forward.13} parent=5 // pred_check
      _
    $region10: #{skinning_net_forward.13} parent=5 // pred_check_branch
      %184 = sbr.rel (%p181) target = $region12
    $region11: #{skinning_net_forward.13} parent=5 // pred_region
      %s185 = ssub.s32 %s12, 1
      // Predicated region
      $region13: #{skinning_net_forward.13} parent=11 // pred_check
        %p186 = pneg %p73
      $region14: #{skinning_net_forward.13} parent=11 // pred_check_branch
        %188 = sbr.rel (%p186) target = $region16
      $region15: #{skinning_net_forward.13} parent=11 // pred_region
        _
      $region16: #{skinning_net_forward.13} parent=11 // pred_fallthru
        _
      // Predicated region
      $region17: #{skinning_net_forward.13} parent=11 // pred_check
        %p189 = pneg %p94
      $region18: #{skinning_net_forward.13} parent=11 // pred_check_branch
        %191 = sbr.rel (%p189) target = $region20
      $region19: #{skinning_net_forward.13} parent=11 // pred_region
        _
      $region20: #{skinning_net_forward.13} parent=11 // pred_fallthru
        _
      // Predicated region
      $region21: #{skinning_net_forward.13} parent=11 // pred_check
        %p192 = pneg %p115
      $region22: #{skinning_net_forward.13} parent=11 // pred_check_branch
        %194 = sbr.rel (%p192) target = $region24
      $region23: #{skinning_net_forward.13} parent=11 // pred_region
        _
      $region24: #{skinning_net_forward.13} parent=11 // pred_fallthru
        _
    $region12: #{skinning_net_forward.13} parent=5 // pred_fallthru
      _
    %p195 = scmp.lt.s32.totalorder %s12, 4
    // Predicated region
    $region25: #{skinning_net_forward.13} parent=5 // pred_check
      %p196 = pneg %p195
    $region26: #{skinning_net_forward.13} parent=5 // pred_check_branch
      %198 = sbr.rel (%p196) target = $region28
    $region27: #{skinning_net_forward.13} parent=5 // pred_region
      // Predicated region
      $region29: #{skinning_net_forward.13} parent=27 // pred_check
        %p199 = pneg %p46
      $region30: #{skinning_net_forward.13} parent=27 // pred_check_branch
        %201 = sbr.rel (%p199) target = $region32
      $region31: #{skinning_net_forward.13} parent=27 // pred_region
        %s202 = smul.u32 4, %s20
        %p203 = scmp.lt.s32.totalorder %s19, 1
        %s204 = scalar_select %p203, %s19, 1
        %p205 = scmp.lt.s32.totalorder %s202, 7
        %s206 = scalar_select %p205, %s202, 7
        %s207 = smul.addr %s204, 8
        %s208 = sadd.s32 %s206, %s207
        %s209 = smul.addr %s208, 4
        %s210 = scalar_lea.vmem %s0, %s209
        %s211 = smul.u32 4, %s20
      $region32: #{skinning_net_forward.13} parent=27 // pred_fallthru
        _
    $region28: #{skinning_net_forward.13} parent=5 // pred_fallthru
      _
    %p212 = scmp.le.s32.totalorder 1, %s12
    %p213 = scmp.lt.s32.totalorder %s12, 5
    %p214 = pnand %p212, %p213
    %p215 = pneg %p214
    // Predicated region
    $region33: #{skinning_net_forward.13} parent=5 // pred_check
      _
    $region34: #{skinning_net_forward.13} parent=5 // pred_check_branch
      %217 = sbr.rel (%p214) target = $region36
    $region35: #{skinning_net_forward.13} parent=5 // pred_region
      %s218 = ssub.s32 %s12, 1
      %s219 = smul.u32 4, %s22
      %p220 = scmp.lt.s32.totalorder %s21, 1
      %s221 = scalar_select %p220, %s21, 1
      %p222 = scmp.lt.s32.totalorder %s219, 7
      %s223 = scalar_select %p222, %s219, 7
      %s224 = smul.addr %s221, 8
      %s225 = sadd.s32 %s223, %s224
      %s226 = smul.addr %s225, 4
      %s227 = scalar_lea.vmem %s0, %s226
      %p228 = pneg %p52
      %p229 = pneg %p49
      %p230 = pneg %p73
      %p231 = pneg %p70
      %p232 = pneg %p94
      %p233 = pneg %p91
      %p234 = pneg %p115
      %p235 = pneg %p112
      %p236 = pneg %p143
      %p237 = pneg %p140
      %s238 = smul.u32 4, %s22
      %p239 = scmp.lt.s32.totalorder %s21, 1
      %s240 = scalar_select %p239, %s21, 1
      %p241 = scmp.lt.s32.totalorder %s238, 7
      %s242 = scalar_select %p241, %s238, 7
      %s243 = smul.addr %s240, 8
      %s244 = sadd.s32 %s242, %s243
      %s245 = smul.addr %s244, 4
      %s246 = scalar_lea.vmem %s4, %s245
      %p247 = pneg %p171
      %p248 = pneg %p168
      %s249 = smul.u32 4, %s22
      %p250 = scmp.lt.s32.totalorder %s21, 1
      %s251 = scalar_select %p250, %s21, 1
      %p252 = scmp.lt.s32.totalorder %s249, 7
      %s253 = scalar_select %p252, %s249, 7
      %s254 = smul.addr %s251, 8
      %s255 = sadd.s32 %s253, %s254
      %s256 = smul.addr %s255, 8
      %s257 = scalar_lea.vmem %s5, %s256
      %s258 = smul.u32 4, %s22
      %p259 = scmp.lt.s32.totalorder %s21, 1
      %s260 = scalar_select %p259, %s21, 1
      %p261 = scmp.lt.s32.totalorder %s258, 7
      %s262 = scalar_select %p261, %s258, 7
      %s263 = smul.addr %s260, 8
      %s264 = sadd.s32 %s262, %s263
      %s265 = smul.addr %s264, 4
      %s266 = scalar_lea.vmem %s0, %s265
      %s267 = smul.u32 4, %s22
      %s268 = smul.u32 4, %s22
      %p269 = scmp.lt.s32.totalorder %s21, 1
      %s270 = scalar_select %p269, %s21, 1
      %p271 = scmp.lt.s32.totalorder %s268, 7
      %s272 = scalar_select %p271, %s268, 7
      %s273 = smul.addr %s270, 8
      %s274 = sadd.s32 %s272, %s273
      %s275 = smul.addr %s274, 4
      %s276 = scalar_lea.vmem %s4, %s275
      %s277 = smul.u32 4, %s22
      %s278 = smul.u32 4, %s22
      %p279 = scmp.lt.s32.totalorder %s21, 1
      %s280 = scalar_select %p279, %s21, 1
      %p281 = scmp.lt.s32.totalorder %s278, 7
      %s282 = scalar_select %p281, %s278, 7
      %s283 = smul.addr %s280, 8
      %s284 = sadd.s32 %s282, %s283
      %s285 = smul.addr %s284, 8
      %s286 = scalar_lea.vmem %s5, %s285
      %s287 = smul.u32 4, %s22
      %v289 = vld [vmem:[%s266] sm:$0xf]
      %v290 = vld [vmem:[%s266 + $0x4] sm:$0xf]
      %v291 = vld [vmem:[%s266 + $0x8] sm:$0xf]
      %v292 = vld [vmem:[%s266 + $0xc] sm:$0xf]
      %v293 = vld [vmem:[%s1] sm:$0x3]
      %v298 = vunpack.c.l.b16 %v289
      %v299 = vunpack.c.l.b16 %v290
      %v300 = vunpack.c.l.b16 %v291
      %v301 = vunpack.c.l.b16 %v292
      %v302 = vpack.c.b16 %v299, %v298
      %v303 = vpack.c.b16 %v301, %v300
      %vm304 = vcmask 23552
      %v306 = vsel %vm304, %v302, 0
      %v309 = vsel %vm304, %v303, 0
      %vm311 = vcmask 1040384
      %vm312 = vcmask 1041408
      %v313 = vsel %vm311, 4294967295, 65535
      %v314 = vsel %vm312, %v313, 0
      %v316 = vand.u32 %v293, %v314
      %318 = vmatprep.subr.bf16.mxu0 0
      %319 = vmatpush1.bf16.msra.mxu0 %v316
      %320 = vmatprep.subr.bf16.mxu0 0
      %321 = vmatpush1.bf16.msra.mxu0 0
      %322 = vmatprep.subr.bf16.mxu0 0
      %323 = vmatpush1.bf16.msra.mxu0 0
      %324 = vmatprep.subr.bf16.mxu0 0
      %325 = vmatpush1.bf16.msra.mxu0 0
      %326 = vmatprep.subr.bf16.mxu0 0
      %327 = vmatpush1.bf16.msra.mxu0 0
      %328 = vmatprep.subr.bf16.mxu0 0
      %329 = vmatpush1.bf16.msra.mxu0 0
      %330 = vmatprep.subr.bf16.mxu0 0
      %331 = vmatpush1.bf16.msra.mxu0 0
      %332 = vmatprep.subr.bf16.mxu0 0
      %333 = vmatpush1.bf16.msra.mxu0 0
      %334 = vmatprep.subr.bf16.mxu0 0
      %335 = vmatpush1.bf16.msra.mxu0 0
      %336 = vmatprep.subr.bf16.mxu0 0
      %337 = vmatpush1.bf16.msra.mxu0 0
      %338 = vmatprep.subr.bf16.mxu0 0
      %339 = vmatpush1.bf16.msra.mxu0 0
      %340 = vmatprep.subr.bf16.mxu0 0
      %341 = vmatpush1.bf16.msra.mxu0 0
      %342 = vmatprep.subr.bf16.mxu0 0
      %343 = vmatpush1.bf16.msra.mxu0 0
      %344 = vmatprep.subr.bf16.mxu0 0
      %345 = vmatpush1.bf16.msra.mxu0 0
      %346 = vmatprep.subr.bf16.mxu0 0
      %347 = vmatpush1.bf16.msra.mxu0 0
      %348 = vmatprep.subr.bf16.mxu0 0
      %349 = vmatpush1.bf16.msra.mxu0 0
      %350 = vmatprep.mubr.bf16.mxu0 0
      %351 = vmatmul.mubr.bf16.gmra.mrb[0].mxu0 %v306
      %v352 = vpop.f32.mrb[0].mxu0
      %v353 = vadd.f32 0.0, %v352
      %v354 = vpop.f32.mrb[0].mxu0
      %v355 = vpop.f32.mrb[0].mxu0
      %v356 = vadd.f32 0.0, %v355
      %v357 = vpop.f32.mrb[0].mxu0
      %358 = vmatprep.mubr.bf16.mxu0 0
      %359 = vmatmul.mubr.bf16.gmra.mrb[0].mxu0 %v309
      %v360 = vpop.f32.mrb[0].mxu0
      %v361 = vadd.f32 0.0, %v360
      %v362 = vpop.f32.mrb[0].mxu0
      %v363 = vpop.f32.mrb[0].mxu0
      %v364 = vadd.f32 0.0, %v363
      %v365 = vpop.f32.mrb[0].mxu0
      %366 = vdwg.mxu0
      %v367 = vld [vmem:[%s2] sm:$0x3]
      %v368 = vld [vmem:[%s3] sm:$0x1]
      %v370 = vlaneseq
      %v371 = vshrl.u32 %v370, 7
      %v372 = vsub.s32 0, %v371
      %v373 = vrot.slane %v368, %v372
      %v376 = vand.u32 %v367, %v314
      %378 = vmatprep.subr.bf16.mxu0 0
      %379 = vmatpush1.bf16.msra.mxu0 %v376
      %380 = vmatprep.subr.bf16.mxu0 0
      %381 = vmatpush1.bf16.msra.mxu0 0
      %382 = vmatprep.subr.bf16.mxu0 0
      %383 = vmatpush1.bf16.msra.mxu0 0
      %384 = vmatprep.subr.bf16.mxu0 0
      %385 = vmatpush1.bf16.msra.mxu0 0
      %386 = vmatprep.subr.bf16.mxu0 0
      %387 = vmatpush1.bf16.msra.mxu0 0
      %388 = vmatprep.subr.bf16.mxu0 0
      %389 = vmatpush1.bf16.msra.mxu0 0
      %390 = vmatprep.subr.bf16.mxu0 0
      %391 = vmatpush1.bf16.msra.mxu0 0
      %392 = vmatprep.subr.bf16.mxu0 0
      %393 = vmatpush1.bf16.msra.mxu0 0
      %394 = vmatprep.subr.bf16.mxu0 0
      %395 = vmatpush1.bf16.msra.mxu0 0
      %396 = vmatprep.subr.bf16.mxu0 0
      %397 = vmatpush1.bf16.msra.mxu0 0
      %398 = vmatprep.subr.bf16.mxu0 0
      %399 = vmatpush1.bf16.msra.mxu0 0
      %400 = vmatprep.subr.bf16.mxu0 0
      %401 = vmatpush1.bf16.msra.mxu0 0
      %402 = vmatprep.subr.bf16.mxu0 0
      %403 = vmatpush1.bf16.msra.mxu0 0
      %404 = vmatprep.subr.bf16.mxu0 0
      %405 = vmatpush1.bf16.msra.mxu0 0
      %406 = vmatprep.subr.bf16.mxu0 0
      %407 = vmatpush1.bf16.msra.mxu0 0
      %408 = vmatprep.subr.bf16.mxu0 0
      %409 = vmatpush1.bf16.msra.mxu0 0
      %410 = vmatprep.mubr.bf16.mxu0 0
      %411 = vmatmul.mubr.bf16.gmra.mrb[0].mxu0 %v306
      %v412 = vpop.f32.mrb[0].mxu0
      %v413 = vadd.f32 %v373, %v412
      %v414 = vpop.f32.mrb[0].mxu0
      %v415 = vpop.f32.mrb[0].mxu0
      %v416 = vadd.f32 %v373, %v415
      %v417 = vpop.f32.mrb[0].mxu0
      %418 = vmatprep.mubr.bf16.mxu0 0
      %419 = vmatmul.mubr.bf16.gmra.mrb[0].mxu0 %v309
      %v420 = vpop.f32.mrb[0].mxu0
      %v421 = vadd.f32 %v373, %v420
      %v422 = vpop.f32.mrb[0].mxu0
      %v423 = vpop.f32.mrb[0].mxu0
      %v424 = vadd.f32 %v373, %v423
      %v425 = vpop.f32.mrb[0].mxu0
      %426 = vdwg.mxu0
      %v427 = vpack.c.bf16 %v356, %v353
      %v428 = vpack.c.bf16 %v364, %v361
      %v431 = vunpack.c.l.b16 %v427
      %v432 = vunpack.c.h.b16 %v427
      %v433 = vunpack.c.l.b16 %v428
      %v434 = vunpack.c.h.b16 %v428
      %v435 = vpack.c.b16 %v431, %v431
      %v436 = vpack.c.b16 %v432, %v432
      %v437 = vpack.c.b16 %v433, %v433
      %v438 = vpack.c.b16 %v434, %v434
      %443 = vst [vmem:[%s276] sm:$0xf] %v435
      %444 = vst [vmem:[%s276 + $0x4] sm:$0xf] %v436
      %445 = vst [vmem:[%s276 + $0x8] sm:$0xf] %v437
      %446 = vst [vmem:[%s276 + $0xc] sm:$0xf] %v438
      %447 = vst [vmem:[%s286] sm:$0xff] %v413
      %448 = vst [vmem:[%s286 + $0x8] sm:$0xff] %v416
      %449 = vst [vmem:[%s286 + $0x10] sm:$0xff] %v421
      %450 = vst [vmem:[%s286 + $0x18] sm:$0xff] %v424
      %s451 = smul.u32 4, %s22
      %p452 = scmp.lt.s32.totalorder %s21, 1
      %s453 = scalar_select %p452, %s21, 1
      %p454 = scmp.lt.s32.totalorder %s451, 7
      %s455 = scalar_select %p454, %s451, 7
      %s456 = smul.addr %s453, 8
      %s457 = sadd.s32 %s455, %s456
      %s458 = smul.addr %s457, 4
      %s459 = scalar_lea.vmem %s4, %s458
      %s460 = smul.u32 4, %s22
      %p461 = scmp.lt.s32.totalorder %s21, 1
      %s462 = scalar_select %p461, %s21, 1
      %p463 = scmp.lt.s32.totalorder %s460, 7
      %s464 = scalar_select %p463, %s460, 7
      %s465 = smul.addr %s462, 8
      %s466 = sadd.s32 %s464, %s465
      %s467 = smul.addr %s466, 8
      %s468 = scalar_lea.vmem %s5, %s467
      // Predicated region
      $region37: #{skinning_net_forward.13} parent=35 // pred_check
        %p469 = pneg %p140
      $region38: #{skinning_net_forward.13} parent=35 // pred_check_branch
        %471 = sbr.rel (%p469) target = $region40
      $region39: #{skinning_net_forward.13} parent=35 // pred_region
        %s472 = smul.u32 4, %s22
      $region40: #{skinning_net_forward.13} parent=35 // pred_fallthru
        _
      // Predicated region
      $region41: #{skinning_net_forward.13} parent=35 // pred_check
        %p473 = pneg %p168
      $region42: #{skinning_net_forward.13} parent=35 // pred_check_branch
        %475 = sbr.rel (%p473) target = $region44
      $region43: #{skinning_net_forward.13} parent=35 // pred_region
        %s476 = smul.u32 4, %s22
      $region44: #{skinning_net_forward.13} parent=35 // pred_fallthru
        _
    $region36: #{skinning_net_forward.13} parent=5 // pred_fallthru
      _
    %p477 = scmp.le.s32.totalorder 2, %s12
    // Predicated region
    $region45: #{skinning_net_forward.13} parent=5 // pred_check
      %p478 = pneg %p477
    $region46: #{skinning_net_forward.13} parent=5 // pred_check_branch
      %480 = sbr.rel (%p478) target = $region48
    $region47: #{skinning_net_forward.13} parent=5 // pred_region
      %s481 = ssub.s32 %s12, 2
      // Predicated region
      $region49: #{skinning_net_forward.13} parent=47 // pred_check
        %p482 = pneg %p146
      $region50: #{skinning_net_forward.13} parent=47 // pred_check_branch
        %484 = sbr.rel (%p482) target = $region52
      $region51: #{skinning_net_forward.13} parent=47 // pred_region
        %s485 = smul.u32 4, %s24
        %p486 = scmp.lt.s32.totalorder %s23, 1
        %s487 = scalar_select %p486, %s23, 1
        %p488 = scmp.lt.s32.totalorder %s485, 7
        %s489 = scalar_select %p488, %s485, 7
        %s490 = smul.addr %s487, 8
        %s491 = sadd.s32 %s489, %s490
        %s492 = smul.addr %s491, 4
        %s493 = scalar_lea.vmem %s4, %s492
      $region52: #{skinning_net_forward.13} parent=47 // pred_fallthru
        _
      // Predicated region
      $region53: #{skinning_net_forward.13} parent=47 // pred_check
        %p494 = pneg %p174
      $region54: #{skinning_net_forward.13} parent=47 // pred_check_branch
        %496 = sbr.rel (%p494) target = $region56
      $region55: #{skinning_net_forward.13} parent=47 // pred_region
        %s497 = smul.u32 4, %s24
        %p498 = scmp.lt.s32.totalorder %s23, 1
        %s499 = scalar_select %p498, %s23, 1
        %p500 = scmp.lt.s32.totalorder %s497, 7
        %s501 = scalar_select %p500, %s497, 7
        %s502 = smul.addr %s499, 8
        %s503 = sadd.s32 %s501, %s502
        %s504 = smul.addr %s503, 8
        %s505 = scalar_lea.vmem %s5, %s504
      $region56: #{skinning_net_forward.13} parent=47 // pred_fallthru
        _
    $region48: #{skinning_net_forward.13} parent=5 // pred_fallthru
      _
  $region6: #{skinning_net_forward.13} parent=0 // loop_footer
    %s16 = sadd.s32 1, %s12
  $region7: #{skinning_net_forward.13} parent=0 // loop_footer_branch
    %11 = sbr.rel target = $region3
  $region8: #{skinning_net_forward.13} parent=0 // loop_exit
    _

// kernel: skinning_net_forward.14
$region0: #{skinning_net_forward.14}
  #allocation0 [shape = 'u32[]', space=smem, size = 0x4, offset = 0x4, fixed_abs, tag = 'smem constant byte address 0x4 - core index']
  #allocation1 [shape = 'u32[144,128]{1,0:T(1,128)}', space=vmem, size = 0x12000, scoped, tag = 'internal scratch']
  %s0 = inlined_call_operand.vmem [shape: bf16[2,64,16], index: 0, kind: input, shape index: {}]
  %s1 = inlined_call_operand.vmem [shape: bf16[16,128], index: 1, kind: input, shape index: {}]
  %s2 = inlined_call_operand.vmem [shape: bf16[16,128], index: 2, kind: input, shape index: {}]
  %s3 = inlined_call_operand.vmem [shape: f32[1,128], index: 3, kind: input, shape index: {}]
  %s4 = inlined_call_operand.vmem [shape: bf16[2,64,128], index: 4, kind: output, shape index: {0}]
  %s5 = inlined_call_operand.vmem [shape: f32[2,64,128], index: 5, kind: output, shape index: {1}]
  %6 = xla_tuple %s4, %s5
  %s7 = sld [smem:[#allocation0]]
  $region57: #{skinning_net_forward.14} parent=0
    _
  %s9 = ssub.s32 1, %s7
  %s10 = scalar_select 0, %s9, %s7
  loop: start=0, step=1, limit=6
  $region2: #{skinning_net_forward.14} parent=0 // loop_pre_header
    _
  $region3: #{skinning_net_forward.14} parent=0 // loop_header
    %s12 = sphi 0, %s16
    %p13 = scmp.ge.s32.totalorder %s12, 6
    %s19 = sphi 0, %s31
    %s20 = sphi 0, %s27
    %s21 = sphi 0, %s19
    %s22 = sphi 0, %s20
    %s23 = sphi 0, %s21
    %s24 = sphi 0, %s22
    %s36 = sphi 0, %s38
    %s39 = sphi 0, %s36
    %s40 = sphi 0, %s39
    %s56 = sphi 0, %s40
    %s60 = sphi 0, %s60
    %s62 = sphi 0, %s60
    %s63 = sphi 0, %s62
    %s77 = sphi 0, %s63
    %s81 = sphi 0, %s81
    %s83 = sphi 0, %s81
    %s84 = sphi 0, %s83
    %s98 = sphi 0, %s84
    %s102 = sphi 0, %s102
    %s104 = sphi 0, %s102
    %s105 = sphi 0, %s104
    %s119 = sphi 0, %s105
    %s127 = sphi 0, %s129
    %s130 = sphi 0, %s127
    %s131 = sphi 0, %s130
    %s147 = sphi 0, %s131
    %s155 = sphi 0, %s157
    %s158 = sphi 0, %s155
    %s159 = sphi 0, %s158
    %s175 = sphi 0, %s159
  $region4: #{skinning_net_forward.14} parent=0 // loop_header_branch
    %15 = sbr.rel (%p13) target = $region8
  $region5: #{skinning_net_forward.14} parent=0 // loop_body
    %s17 = ssub.s32 %s12, 1
    %s18 = ssub.s32 %s12, 2
    %s25 = sadd.s32 1, %s20
    %p26 = scmp.ge.s32.totalorder %s25, 2
    %s27 = scalar_select %p26, 0, %s25
    %s28 = sadd.s32 1, %s19
    %s29 = scalar_select %p26, %s28, %s19
    %p30 = scmp.ge.s32.totalorder %s29, 2
    %s31 = scalar_select %p30, 0, %s29
    %s32 = ssub.s32 %s19, %s31
    %s33 = ssub.s32 %s20, %s27
    %s34 = sor.u32 %s32, %s33
    %p35 = scmp.eq.s32.totalorder %s34, 0
    %s37 = sadd.s32 %s36, 1
    %s38 = scalar_select %p35, %s36, %s37
    %p41 = pneg %p35
    %p42 = scmp.eq.s32.totalorder %s12, 3
    %p43 = por %p41, %p42
    %p44 = scmp.ne.s32.totalorder %s36, %s39
    %p45 = scmp.eq.s32.totalorder %s12, 0
    %p46 = por %p44, %p45
    %p47 = scmp.ne.s32.totalorder %s36, %s39
    %p48 = scmp.eq.s32.totalorder %s17, 3
    %p49 = por %p47, %p48
    %p50 = scmp.ne.s32.totalorder %s39, %s40
    %p51 = scmp.eq.s32.totalorder %s17, 0
    %p52 = por %p50, %p51
    %p53 = scmp.ne.s32.totalorder %s39, %s40
    %p54 = scmp.eq.s32.totalorder %s18, 3
    %p55 = por %p53, %p54
    %p57 = scmp.ne.s32.totalorder %s40, %s56
    %p58 = scmp.eq.s32.totalorder %s18, 0
    %p59 = por %p57, %p58
    %s61 = sadd.s32 %s60, 1
    %p64 = scmp.eq.s32.totalorder %s12, 3
    %p65 = scmp.ne.s32.totalorder %s60, %s62
    %p66 = scmp.eq.s32.totalorder %s12, 0
    %p67 = por %p65, %p66
    %p68 = scmp.ne.s32.totalorder %s60, %s62
    %p69 = scmp.eq.s32.totalorder %s17, 3
    %p70 = por %p68, %p69
    %p71 = scmp.ne.s32.totalorder %s62, %s63
    %p72 = scmp.eq.s32.totalorder %s17, 0
    %p73 = por %p71, %p72
    %p74 = scmp.ne.s32.totalorder %s62, %s63
    %p75 = scmp.eq.s32.totalorder %s18, 3
    %p76 = por %p74, %p75
    %p78 = scmp.ne.s32.totalorder %s63, %s77
    %p79 = scmp.eq.s32.totalorder %s18, 0
    %p80 = por %p78, %p79
    %s82 = sadd.s32 %s81, 1
    %p85 = scmp.eq.s32.totalorder %s12, 3
    %p86 = scmp.ne.s32.totalorder %s81, %s83
    %p87 = scmp.eq.s32.totalorder %s12, 0
    %p88 = por %p86, %p87
    %p89 = scmp.ne.s32.totalorder %s81, %s83
    %p90 = scmp.eq.s32.totalorder %s17, 3
    %p91 = por %p89, %p90
    %p92 = scmp.ne.s32.totalorder %s83, %s84
    %p93 = scmp.eq.s32.totalorder %s17, 0
    %p94 = por %p92, %p93
    %p95 = scmp.ne.s32.totalorder %s83, %s84
    %p96 = scmp.eq.s32.totalorder %s18, 3
    %p97 = por %p95, %p96
    %p99 = scmp.ne.s32.totalorder %s84, %s98
    %p100 = scmp.eq.s32.totalorder %s18, 0
    %p101 = por %p99, %p100
    %s103 = sadd.s32 %s102, 1
    %p106 = scmp.eq.s32.totalorder %s12, 3
    %p107 = scmp.ne.s32.totalorder %s102, %s104
    %p108 = scmp.eq.s32.totalorder %s12, 0
    %p109 = por %p107, %p108
    %p110 = scmp.ne.s32.totalorder %s102, %s104
    %p111 = scmp.eq.s32.totalorder %s17, 3
    %p112 = por %p110, %p111
    %p113 = scmp.ne.s32.totalorder %s104, %s105
    %p114 = scmp.eq.s32.totalorder %s17, 0
    %p115 = por %p113, %p114
    %p116 = scmp.ne.s32.totalorder %s104, %s105
    %p117 = scmp.eq.s32.totalorder %s18, 3
    %p118 = por %p116, %p117
    %p120 = scmp.ne.s32.totalorder %s105, %s119
    %p121 = scmp.eq.s32.totalorder %s18, 0
    %p122 = por %p120, %p121
    %s123 = ssub.s32 %s19, %s31
    %s124 = ssub.s32 %s20, %s27
    %s125 = sor.u32 %s123, %s124
    %p126 = scmp.eq.s32.totalorder %s125, 0
    %s128 = sadd.s32 %s127, 1
    %s129 = scalar_select %p126, %s127, %s128
    %p132 = pneg %p126
    %p133 = scmp.eq.s32.totalorder %s12, 3
    %p134 = por %p132, %p133
    %p135 = scmp.ne.s32.totalorder %s127, %s130
    %p136 = scmp.eq.s32.totalorder %s12, 0
    %p137 = por %p135, %p136
    %p138 = scmp.ne.s32.totalorder %s127, %s130
    %p139 = scmp.eq.s32.totalorder %s17, 3
    %p140 = por %p138, %p139
    %p141 = scmp.ne.s32.totalorder %s130, %s131
    %p142 = scmp.eq.s32.totalorder %s17, 0
    %p143 = por %p141, %p142
    %p144 = scmp.ne.s32.totalorder %s130, %s131
    %p145 = scmp.eq.s32.totalorder %s18, 3
    %p146 = por %p144, %p145
    %p148 = scmp.ne.s32.totalorder %s131, %s147
    %p149 = scmp.eq.s32.totalorder %s18, 0
    %p150 = por %p148, %p149
    %s151 = ssub.s32 %s19, %s31
    %s152 = ssub.s32 %s20, %s27
    %s153 = sor.u32 %s151, %s152
    %p154 = scmp.eq.s32.totalorder %s153, 0
    %s156 = sadd.s32 %s155, 1
    %s157 = scalar_select %p154, %s155, %s156
    %p160 = pneg %p154
    %p161 = scmp.eq.s32.totalorder %s12, 3
    %p162 = por %p160, %p161
    %p163 = scmp.ne.s32.totalorder %s155, %s158
    %p164 = scmp.eq.s32.totalorder %s12, 0
    %p165 = por %p163, %p164
    %p166 = scmp.ne.s32.totalorder %s155, %s158
    %p167 = scmp.eq.s32.totalorder %s17, 3
    %p168 = por %p166, %p167
    %p169 = scmp.ne.s32.totalorder %s158, %s159
    %p170 = scmp.eq.s32.totalorder %s17, 0
    %p171 = por %p169, %p170
    %p172 = scmp.ne.s32.totalorder %s158, %s159
    %p173 = scmp.eq.s32.totalorder %s18, 3
    %p174 = por %p172, %p173
    %p176 = scmp.ne.s32.totalorder %s159, %s175
    %p177 = scmp.eq.s32.totalorder %s18, 0
    %p178 = por %p176, %p177
    %p179 = scmp.le.s32.totalorder 1, %s12
    %p180 = scmp.lt.s32.totalorder %s12, 5
    %p181 = pnand %p179, %p180
    %p182 = pneg %p181
    // Predicated region
    $region9: #{skinning_net_forward.14} parent=5 // pred_check
      _
    $region10: #{skinning_net_forward.14} parent=5 // pred_check_branch
      %184 = sbr.rel (%p181) target = $region12
    $region11: #{skinning_net_forward.14} parent=5 // pred_region
      %s185 = ssub.s32 %s12, 1
      // Predicated region
      $region13: #{skinning_net_forward.14} parent=11 // pred_check
        %p186 = pneg %p73
      $region14: #{skinning_net_forward.14} parent=11 // pred_check_branch
        %188 = sbr.rel (%p186) target = $region16
      $region15: #{skinning_net_forward.14} parent=11 // pred_region
        _
      $region16: #{skinning_net_forward.14} parent=11 // pred_fallthru
        _
      // Predicated region
      $region17: #{skinning_net_forward.14} parent=11 // pred_check
        %p189 = pneg %p94
      $region18: #{skinning_net_forward.14} parent=11 // pred_check_branch
        %191 = sbr.rel (%p189) target = $region20
      $region19: #{skinning_net_forward.14} parent=11 // pred_region
        _
      $region20: #{skinning_net_forward.14} parent=11 // pred_fallthru
        _
      // Predicated region
      $region21: #{skinning_net_forward.14} parent=11 // pred_check
        %p192 = pneg %p115
      $region22: #{skinning_net_forward.14} parent=11 // pred_check_branch
        %194 = sbr.rel (%p192) target = $region24
      $region23: #{skinning_net_forward.14} parent=11 // pred_region
        _
      $region24: #{skinning_net_forward.14} parent=11 // pred_fallthru
        _
    $region12: #{skinning_net_forward.14} parent=5 // pred_fallthru
      _
    %p195 = scmp.lt.s32.totalorder %s12, 4
    // Predicated region
    $region25: #{skinning_net_forward.14} parent=5 // pred_check
      %p196 = pneg %p195
    $region26: #{skinning_net_forward.14} parent=5 // pred_check_branch
      %198 = sbr.rel (%p196) target = $region28
    $region27: #{skinning_net_forward.14} parent=5 // pred_region
      // Predicated region
      $region29: #{skinning_net_forward.14} parent=27 // pred_check
        %p199 = pneg %p46
      $region30: #{skinning_net_forward.14} parent=27 // pred_check_branch
        %201 = sbr.rel (%p199) target = $region32
      $region31: #{skinning_net_forward.14} parent=27 // pred_region
        %s202 = smul.u32 4, %s20
        %p203 = scmp.lt.s32.totalorder %s19, 1
        %s204 = scalar_select %p203, %s19, 1
        %p205 = scmp.lt.s32.totalorder %s202, 7
        %s206 = scalar_select %p205, %s202, 7
        %s207 = smul.addr %s204, 8
        %s208 = sadd.s32 %s206, %s207
        %s209 = smul.addr %s208, 4
        %s210 = scalar_lea.vmem %s0, %s209
        %s211 = smul.u32 4, %s20
      $region32: #{skinning_net_forward.14} parent=27 // pred_fallthru
        _
    $region28: #{skinning_net_forward.14} parent=5 // pred_fallthru
      _
    %p212 = scmp.le.s32.totalorder 1, %s12
    %p213 = scmp.lt.s32.totalorder %s12, 5
    %p214 = pnand %p212, %p213
    %p215 = pneg %p214
    // Predicated region
    $region33: #{skinning_net_forward.14} parent=5 // pred_check
      _
    $region34: #{skinning_net_forward.14} parent=5 // pred_check_branch
      %217 = sbr.rel (%p214) target = $region36
    $region35: #{skinning_net_forward.14} parent=5 // pred_region
      %s218 = ssub.s32 %s12, 1
      %s219 = smul.u32 4, %s22
      %p220 = scmp.lt.s32.totalorder %s21, 1
      %s221 = scalar_select %p220, %s21, 1
      %p222 = scmp.lt.s32.totalorder %s219, 7
      %s223 = scalar_select %p222, %s219, 7
      %s224 = smul.addr %s221, 8
      %s225 = sadd.s32 %s223, %s224
      %s226 = smul.addr %s225, 4
      %s227 = scalar_lea.vmem %s0, %s226
      %p228 = pneg %p52
      %p229 = pneg %p49
      %p230 = pneg %p73
      %p231 = pneg %p70
      %p232 = pneg %p94
      %p233 = pneg %p91
      %p234 = pneg %p115
      %p235 = pneg %p112
      %p236 = pneg %p143
      %p237 = pneg %p140
      %s238 = smul.u32 4, %s22
      %p239 = scmp.lt.s32.totalorder %s21, 1
      %s240 = scalar_select %p239, %s21, 1
      %p241 = scmp.lt.s32.totalorder %s238, 7
      %s242 = scalar_select %p241, %s238, 7
      %s243 = smul.addr %s240, 8
      %s244 = sadd.s32 %s242, %s243
      %s245 = smul.addr %s244, 4
      %s246 = scalar_lea.vmem %s4, %s245
      %p247 = pneg %p171
      %p248 = pneg %p168
      %s249 = smul.u32 4, %s22
      %p250 = scmp.lt.s32.totalorder %s21, 1
      %s251 = scalar_select %p250, %s21, 1
      %p252 = scmp.lt.s32.totalorder %s249, 7
      %s253 = scalar_select %p252, %s249, 7
      %s254 = smul.addr %s251, 8
      %s255 = sadd.s32 %s253, %s254
      %s256 = smul.addr %s255, 8
      %s257 = scalar_lea.vmem %s5, %s256
      %s258 = smul.u32 4, %s22
      %p259 = scmp.lt.s32.totalorder %s21, 1
      %s260 = scalar_select %p259, %s21, 1
      %p261 = scmp.lt.s32.totalorder %s258, 7
      %s262 = scalar_select %p261, %s258, 7
      %s263 = smul.addr %s260, 8
      %s264 = sadd.s32 %s262, %s263
      %s265 = smul.addr %s264, 4
      %s266 = scalar_lea.vmem %s0, %s265
      %s267 = smul.u32 4, %s22
      %s268 = smul.u32 4, %s22
      %p269 = scmp.lt.s32.totalorder %s21, 1
      %s270 = scalar_select %p269, %s21, 1
      %p271 = scmp.lt.s32.totalorder %s268, 7
      %s272 = scalar_select %p271, %s268, 7
      %s273 = smul.addr %s270, 8
      %s274 = sadd.s32 %s272, %s273
      %s275 = smul.addr %s274, 4
      %s276 = scalar_lea.vmem %s4, %s275
      %s277 = smul.u32 4, %s22
      %s278 = smul.u32 4, %s22
      %p279 = scmp.lt.s32.totalorder %s21, 1
      %s280 = scalar_select %p279, %s21, 1
      %p281 = scmp.lt.s32.totalorder %s278, 7
      %s282 = scalar_select %p281, %s278, 7
      %s283 = smul.addr %s280, 8
      %s284 = sadd.s32 %s282, %s283
      %s285 = smul.addr %s284, 8
      %s286 = scalar_lea.vmem %s5, %s285
      %s287 = smul.u32 4, %s22
      %v289 = vld [vmem:[%s266] sm:$0xf]
      %v290 = vld [vmem:[%s266 + $0x4] sm:$0xf]
      %v291 = vld [vmem:[%s266 + $0x8] sm:$0xf]
      %v292 = vld [vmem:[%s266 + $0xc] sm:$0xf]
      %v293 = vld [vmem:[%s1] sm:$0xf]
      %v294 = vld [vmem:[%s1 + $0x4] sm:$0xf]
      %v299 = vunpack.c.l.b16 %v289
      %v300 = vunpack.c.l.b16 %v290
      %v301 = vunpack.c.l.b16 %v291
      %v302 = vunpack.c.l.b16 %v292
      %v303 = vpack.c.b16 %v300, %v299
      %v304 = vpack.c.b16 %v302, %v301
      %v307 = vunpack.c.l.b16 %v293
      %v308 = vunpack.c.l.b16 %v294
      %v309 = vpack.c.b16 %v308, %v307
      %vm311 = vcmask 130048
      %v313 = vsel %vm311, %v303, 0
      %v316 = vsel %vm311, %v304, 0
      %318 = vmatprep.subr.bf16.mxu0 0
      %319 = vmatpush1.bf16.msra.mxu0 %v309
      %320 = vmatprep.subr.bf16.mxu0 0
      %321 = vmatpush1.bf16.msra.mxu0 0
      %322 = vmatprep.subr.bf16.mxu0 0
      %323 = vmatpush1.bf16.msra.mxu0 0
      %324 = vmatprep.subr.bf16.mxu0 0
      %325 = vmatpush1.bf16.msra.mxu0 0
      %326 = vmatprep.subr.bf16.mxu0 0
      %327 = vmatpush1.bf16.msra.mxu0 0
      %328 = vmatprep.subr.bf16.mxu0 0
      %329 = vmatpush1.bf16.msra.mxu0 0
      %330 = vmatprep.subr.bf16.mxu0 0
      %331 = vmatpush1.bf16.msra.mxu0 0
      %332 = vmatprep.subr.bf16.mxu0 0
      %333 = vmatpush1.bf16.msra.mxu0 0
      %334 = vmatprep.subr.bf16.mxu0 0
      %335 = vmatpush1.bf16.msra.mxu0 0
      %336 = vmatprep.subr.bf16.mxu0 0
      %337 = vmatpush1.bf16.msra.mxu0 0
      %338 = vmatprep.subr.bf16.mxu0 0
      %339 = vmatpush1.bf16.msra.mxu0 0
      %340 = vmatprep.subr.bf16.mxu0 0
      %341 = vmatpush1.bf16.msra.mxu0 0
      %342 = vmatprep.subr.bf16.mxu0 0
      %343 = vmatpush1.bf16.msra.mxu0 0
      %344 = vmatprep.subr.bf16.mxu0 0
      %345 = vmatpush1.bf16.msra.mxu0 0
      %346 = vmatprep.subr.bf16.mxu0 0
      %347 = vmatpush1.bf16.msra.mxu0 0
      %348 = vmatprep.subr.bf16.mxu0 0
      %349 = vmatpush1.bf16.msra.mxu0 0
      %350 = vmatprep.mubr.bf16.mxu0 0
      %351 = vmatmul.mubr.bf16.gmra.mrb[0].mxu0 %v313
      %v352 = vpop.f32.mrb[0].mxu0
      %v353 = vadd.f32 0.0, %v352
      %v354 = vpop.f32.mrb[0].mxu0
      %v355 = vpop.f32.mrb[0].mxu0
      %v356 = vadd.f32 0.0, %v355
      %v357 = vpop.f32.mrb[0].mxu0
      %358 = vmatprep.mubr.bf16.mxu0 0
      %359 = vmatmul.mubr.bf16.gmra.mrb[0].mxu0 %v316
      %v360 = vpop.f32.mrb[0].mxu0
      %v361 = vadd.f32 0.0, %v360
      %v362 = vpop.f32.mrb[0].mxu0
      %v363 = vpop.f32.mrb[0].mxu0
      %v364 = vadd.f32 0.0, %v363
      %v365 = vpop.f32.mrb[0].mxu0
      %366 = vdwg.mxu0
      %v367 = vld [vmem:[%s2] sm:$0xf]
      %v368 = vld [vmem:[%s2 + $0x4] sm:$0xf]
      %v369 = vld [vmem:[%s3] sm:$0x1]
      %v371 = vlaneseq
      %v372 = vshrl.u32 %v371, 7
      %v373 = vsub.s32 0, %v372
      %v374 = vrot.slane %v369, %v373
      %v378 = vunpack.c.l.b16 %v367
      %v379 = vunpack.c.l.b16 %v368
      %v380 = vpack.c.b16 %v379, %v378
      %382 = vmatprep.subr.bf16.mxu0 0
      %383 = vmatpush1.bf16.msra.mxu0 %v380
      %384 = vmatprep.subr.bf16.mxu0 0
      %385 = vmatpush1.bf16.msra.mxu0 0
      %386 = vmatprep.subr.bf16.mxu0 0
      %387 = vmatpush1.bf16.msra.mxu0 0
      %388 = vmatprep.subr.bf16.mxu0 0
      %389 = vmatpush1.bf16.msra.mxu0 0
      %390 = vmatprep.subr.bf16.mxu0 0
      %391 = vmatpush1.bf16.msra.mxu0 0
      %392 = vmatprep.subr.bf16.mxu0 0
      %393 = vmatpush1.bf16.msra.mxu0 0
      %394 = vmatprep.subr.bf16.mxu0 0
      %395 = vmatpush1.bf16.msra.mxu0 0
      %396 = vmatprep.subr.bf16.mxu0 0
      %397 = vmatpush1.bf16.msra.mxu0 0
      %398 = vmatprep.subr.bf16.mxu0 0
      %399 = vmatpush1.bf16.msra.mxu0 0
      %400 = vmatprep.subr.bf16.mxu0 0
      %401 = vmatpush1.bf16.msra.mxu0 0
      %402 = vmatprep.subr.bf16.mxu0 0
      %403 = vmatpush1.bf16.msra.mxu0 0
      %404 = vmatprep.subr.bf16.mxu0 0
      %405 = vmatpush1.bf16.msra.mxu0 0
      %406 = vmatprep.subr.bf16.mxu0 0
      %407 = vmatpush1.bf16.msra.mxu0 0
      %408 = vmatprep.subr.bf16.mxu0 0
      %409 = vmatpush1.bf16.msra.mxu0 0
      %410 = vmatprep.subr.bf16.mxu0 0
      %411 = vmatpush1.bf16.msra.mxu0 0
      %412 = vmatprep.subr.bf16.mxu0 0
      %413 = vmatpush1.bf16.msra.mxu0 0
      %414 = vmatprep.mubr.bf16.mxu0 0
      %415 = vmatmul.mubr.bf16.gmra.mrb[0].mxu0 %v313
      %v416 = vpop.f32.mrb[0].mxu0
      %v417 = vadd.f32 %v374, %v416
      %v418 = vpop.f32.mrb[0].mxu0
      %v419 = vpop.f32.mrb[0].mxu0
      %v420 = vadd.f32 %v374, %v419
      %v421 = vpop.f32.mrb[0].mxu0
      %422 = vmatprep.mubr.bf16.mxu0 0
      %423 = vmatmul.mubr.bf16.gmra.mrb[0].mxu0 %v316
      %v424 = vpop.f32.mrb[0].mxu0
      %v425 = vadd.f32 %v374, %v424
      %v426 = vpop.f32.mrb[0].mxu0
      %v427 = vpop.f32.mrb[0].mxu0
      %v428 = vadd.f32 %v374, %v427
      %v429 = vpop.f32.mrb[0].mxu0
      %430 = vdwg.mxu0
      %v431 = vpack.c.bf16 %v356, %v353
      %v432 = vpack.c.bf16 %v364, %v361
      %v435 = vunpack.c.l.b16 %v431
      %v436 = vunpack.c.h.b16 %v431
      %v437 = vunpack.c.l.b16 %v432
      %v438 = vunpack.c.h.b16 %v432
      %v439 = vpack.c.b16 %v435, %v435
      %v440 = vpack.c.b16 %v436, %v436
      %v441 = vpack.c.b16 %v437, %v437
      %v442 = vpack.c.b16 %v438, %v438
      %447 = vst [vmem:[%s276] sm:$0xf] %v439
      %448 = vst [vmem:[%s276 + $0x4] sm:$0xf] %v440
      %449 = vst [vmem:[%s276 + $0x8] sm:$0xf] %v441
      %450 = vst [vmem:[%s276 + $0xc] sm:$0xf] %v442
      %451 = vst [vmem:[%s286] sm:$0xff] %v417
      %452 = vst [vmem:[%s286 + $0x8] sm:$0xff] %v420
      %453 = vst [vmem:[%s286 + $0x10] sm:$0xff] %v425
      %454 = vst [vmem:[%s286 + $0x18] sm:$0xff] %v428
      %s455 = smul.u32 4, %s22
      %p456 = scmp.lt.s32.totalorder %s21, 1
      %s457 = scalar_select %p456, %s21, 1
      %p458 = scmp.lt.s32.totalorder %s455, 7
      %s459 = scalar_select %p458, %s455, 7
      %s460 = smul.addr %s457, 8
      %s461 = sadd.s32 %s459, %s460
      %s462 = smul.addr %s461, 4
      %s463 = scalar_lea.vmem %s4, %s462
      %s464 = smul.u32 4, %s22
      %p465 = scmp.lt.s32.totalorder %s21, 1
      %s466 = scalar_select %p465, %s21, 1
      %p467 = scmp.lt.s32.totalorder %s464, 7
      %s468 = scalar_select %p467, %s464, 7
      %s469 = smul.addr %s466, 8
      %s470 = sadd.s32 %s468, %s469
      %s471 = smul.addr %s470, 8
      %s472 = scalar_lea.vmem %s5, %s471
      // Predicated region
      $region37: #{skinning_net_forward.14} parent=35 // pred_check
        %p473 = pneg %p140
      $region38: #{skinning_net_forward.14} parent=35 // pred_check_branch
        %475 = sbr.rel (%p473) target = $region40
      $region39: #{skinning_net_forward.14} parent=35 // pred_region
        %s476 = smul.u32 4, %s22
      $region40: #{skinning_net_forward.14} parent=35 // pred_fallthru
        _
      // Predicated region
      $region41: #{skinning_net_forward.14} parent=35 // pred_check
        %p477 = pneg %p168
      $region42: #{skinning_net_forward.14} parent=35 // pred_check_branch
        %479 = sbr.rel (%p477) target = $region44
      $region43: #{skinning_net_forward.14} parent=35 // pred_region
        %s480 = smul.u32 4, %s22
      $region44: #{skinning_net_forward.14} parent=35 // pred_fallthru
        _
    $region36: #{skinning_net_forward.14} parent=5 // pred_fallthru
      _
    %p481 = scmp.le.s32.totalorder 2, %s12
    // Predicated region
    $region45: #{skinning_net_forward.14} parent=5 // pred_check
      %p482 = pneg %p481
    $region46: #{skinning_net_forward.14} parent=5 // pred_check_branch
      %484 = sbr.rel (%p482) target = $region48
    $region47: #{skinning_net_forward.14} parent=5 // pred_region
      %s485 = ssub.s32 %s12, 2
      // Predicated region
      $region49: #{skinning_net_forward.14} parent=47 // pred_check
        %p486 = pneg %p146
      $region50: #{skinning_net_forward.14} parent=47 // pred_check_branch
        %488 = sbr.rel (%p486) target = $region52
      $region51: #{skinning_net_forward.14} parent=47 // pred_region
        %s489 = smul.u32 4, %s24
        %p490 = scmp.lt.s32.totalorder %s23, 1
        %s491 = scalar_select %p490, %s23, 1
        %p492 = scmp.lt.s32.totalorder %s489, 7
        %s493 = scalar_select %p492, %s489, 7
        %s494 = smul.addr %s491, 8
        %s495 = sadd.s32 %s493, %s494
        %s496 = smul.addr %s495, 4
        %s497 = scalar_lea.vmem %s4, %s496
      $region52: #{skinning_net_forward.14} parent=47 // pred_fallthru
        _
      // Predicated region
      $region53: #{skinning_net_forward.14} parent=47 // pred_check
        %p498 = pneg %p174
      $region54: #{skinning_net_forward.14} parent=47 // pred_check_branch
        %500 = sbr.rel (%p498) target = $region56
      $region55: #{skinning_net_forward.14} parent=47 // pred_region
        %s501 = smul.u32 4, %s24
        %p502 = scmp.lt.s32.totalorder %s23, 1
        %s503 = scalar_select %p502, %s23, 1
        %p504 = scmp.lt.s32.totalorder %s501, 7
        %s505 = scalar_select %p504, %s501, 7
        %s506 = smul.addr %s503, 8
        %s507 = sadd.s32 %s505, %s506
        %s508 = smul.addr %s507, 8
        %s509 = scalar_lea.vmem %s5, %s508
      $region56: #{skinning_net_forward.14} parent=47 // pred_fallthru
        _
    $region48: #{skinning_net_forward.14} parent=5 // pred_fallthru
      _
  $region6: #{skinning_net_forward.14} parent=0 // loop_footer
    %s16 = sadd.s32 1, %s12
  $region7: #{skinning_net_forward.14} parent=0 // loop_footer_branch
    %11 = sbr.rel target = $region3
  $region8: #{skinning_net_forward.14} parent=0 // loop_exit
    _

// kernel: skinning_net_forward.15
$region0: #{skinning_net_forward.15}
  #allocation0 [shape = 'u32[]', space=smem, size = 0x4, offset = 0x4, fixed_abs, tag = 'smem constant byte address 0x4 - core index']
  #allocation1 [shape = 'u32[144,128]{1,0:T(1,128)}', space=vmem, size = 0x12000, scoped, tag = 'internal scratch']
  %s0 = inlined_call_operand.vmem [shape: bf16[2,64,32], index: 0, kind: input, shape index: {}]
  %s1 = inlined_call_operand.vmem [shape: bf16[32,128], index: 1, kind: input, shape index: {}]
  %s2 = inlined_call_operand.vmem [shape: bf16[32,128], index: 2, kind: input, shape index: {}]
  %s3 = inlined_call_operand.vmem [shape: f32[1,128], index: 3, kind: input, shape index: {}]
  %s4 = inlined_call_operand.vmem [shape: bf16[2,64,128], index: 4, kind: output, shape index: {0}]
  %s5 = inlined_call_operand.vmem [shape: f32[2,64,128], index: 5, kind: output, shape index: {1}]
  %6 = xla_tuple %s4, %s5
  %s7 = sld [smem:[#allocation0]]
  $region57: #{skinning_net_forward.15} parent=0
    _
  %s9 = ssub.s32 1, %s7
  %s10 = scalar_select 0, %s9, %s7
  loop: start=0, step=1, limit=6
  $region2: #{skinning_net_forward.15} parent=0 // loop_pre_header
    _
  $region3: #{skinning_net_forward.15} parent=0 // loop_header
    %s12 = sphi 0, %s16
    %p13 = scmp.ge.s32.totalorder %s12, 6
    %s19 = sphi 0, %s31
    %s20 = sphi 0, %s27
    %s21 = sphi 0, %s19
    %s22 = sphi 0, %s20
    %s23 = sphi 0, %s21
    %s24 = sphi 0, %s22
    %s36 = sphi 0, %s38
    %s39 = sphi 0, %s36
    %s40 = sphi 0, %s39
    %s56 = sphi 0, %s40
    %s60 = sphi 0, %s60
    %s62 = sphi 0, %s60
    %s63 = sphi 0, %s62
    %s77 = sphi 0, %s63
    %s81 = sphi 0, %s81
    %s83 = sphi 0, %s81
    %s84 = sphi 0, %s83
    %s98 = sphi 0, %s84
    %s102 = sphi 0, %s102
    %s104 = sphi 0, %s102
    %s105 = sphi 0, %s104
    %s119 = sphi 0, %s105
    %s127 = sphi 0, %s129
    %s130 = sphi 0, %s127
    %s131 = sphi 0, %s130
    %s147 = sphi 0, %s131
    %s155 = sphi 0, %s157
    %s158 = sphi 0, %s155
    %s159 = sphi 0, %s158
    %s175 = sphi 0, %s159
  $region4: #{skinning_net_forward.15} parent=0 // loop_header_branch
    %15 = sbr.rel (%p13) target = $region8
  $region5: #{skinning_net_forward.15} parent=0 // loop_body
    %s17 = ssub.s32 %s12, 1
    %s18 = ssub.s32 %s12, 2
    %s25 = sadd.s32 1, %s20
    %p26 = scmp.ge.s32.totalorder %s25, 2
    %s27 = scalar_select %p26, 0, %s25
    %s28 = sadd.s32 1, %s19
    %s29 = scalar_select %p26, %s28, %s19
    %p30 = scmp.ge.s32.totalorder %s29, 2
    %s31 = scalar_select %p30, 0, %s29
    %s32 = ssub.s32 %s19, %s31
    %s33 = ssub.s32 %s20, %s27
    %s34 = sor.u32 %s32, %s33
    %p35 = scmp.eq.s32.totalorder %s34, 0
    %s37 = sadd.s32 %s36, 1
    %s38 = scalar_select %p35, %s36, %s37
    %p41 = pneg %p35
    %p42 = scmp.eq.s32.totalorder %s12, 3
    %p43 = por %p41, %p42
    %p44 = scmp.ne.s32.totalorder %s36, %s39
    %p45 = scmp.eq.s32.totalorder %s12, 0
    %p46 = por %p44, %p45
    %p47 = scmp.ne.s32.totalorder %s36, %s39
    %p48 = scmp.eq.s32.totalorder %s17, 3
    %p49 = por %p47, %p48
    %p50 = scmp.ne.s32.totalorder %s39, %s40
    %p51 = scmp.eq.s32.totalorder %s17, 0
    %p52 = por %p50, %p51
    %p53 = scmp.ne.s32.totalorder %s39, %s40
    %p54 = scmp.eq.s32.totalorder %s18, 3
    %p55 = por %p53, %p54
    %p57 = scmp.ne.s32.totalorder %s40, %s56
    %p58 = scmp.eq.s32.totalorder %s18, 0
    %p59 = por %p57, %p58
    %s61 = sadd.s32 %s60, 1
    %p64 = scmp.eq.s32.totalorder %s12, 3
    %p65 = scmp.ne.s32.totalorder %s60, %s62
    %p66 = scmp.eq.s32.totalorder %s12, 0
    %p67 = por %p65, %p66
    %p68 = scmp.ne.s32.totalorder %s60, %s62
    %p69 = scmp.eq.s32.totalorder %s17, 3
    %p70 = por %p68, %p69
    %p71 = scmp.ne.s32.totalorder %s62, %s63
    %p72 = scmp.eq.s32.totalorder %s17, 0
    %p73 = por %p71, %p72
    %p74 = scmp.ne.s32.totalorder %s62, %s63
    %p75 = scmp.eq.s32.totalorder %s18, 3
    %p76 = por %p74, %p75
    %p78 = scmp.ne.s32.totalorder %s63, %s77
    %p79 = scmp.eq.s32.totalorder %s18, 0
    %p80 = por %p78, %p79
    %s82 = sadd.s32 %s81, 1
    %p85 = scmp.eq.s32.totalorder %s12, 3
    %p86 = scmp.ne.s32.totalorder %s81, %s83
    %p87 = scmp.eq.s32.totalorder %s12, 0
    %p88 = por %p86, %p87
    %p89 = scmp.ne.s32.totalorder %s81, %s83
    %p90 = scmp.eq.s32.totalorder %s17, 3
    %p91 = por %p89, %p90
    %p92 = scmp.ne.s32.totalorder %s83, %s84
    %p93 = scmp.eq.s32.totalorder %s17, 0
    %p94 = por %p92, %p93
    %p95 = scmp.ne.s32.totalorder %s83, %s84
    %p96 = scmp.eq.s32.totalorder %s18, 3
    %p97 = por %p95, %p96
    %p99 = scmp.ne.s32.totalorder %s84, %s98
    %p100 = scmp.eq.s32.totalorder %s18, 0
    %p101 = por %p99, %p100
    %s103 = sadd.s32 %s102, 1
    %p106 = scmp.eq.s32.totalorder %s12, 3
    %p107 = scmp.ne.s32.totalorder %s102, %s104
    %p108 = scmp.eq.s32.totalorder %s12, 0
    %p109 = por %p107, %p108
    %p110 = scmp.ne.s32.totalorder %s102, %s104
    %p111 = scmp.eq.s32.totalorder %s17, 3
    %p112 = por %p110, %p111
    %p113 = scmp.ne.s32.totalorder %s104, %s105
    %p114 = scmp.eq.s32.totalorder %s17, 0
    %p115 = por %p113, %p114
    %p116 = scmp.ne.s32.totalorder %s104, %s105
    %p117 = scmp.eq.s32.totalorder %s18, 3
    %p118 = por %p116, %p117
    %p120 = scmp.ne.s32.totalorder %s105, %s119
    %p121 = scmp.eq.s32.totalorder %s18, 0
    %p122 = por %p120, %p121
    %s123 = ssub.s32 %s19, %s31
    %s124 = ssub.s32 %s20, %s27
    %s125 = sor.u32 %s123, %s124
    %p126 = scmp.eq.s32.totalorder %s125, 0
    %s128 = sadd.s32 %s127, 1
    %s129 = scalar_select %p126, %s127, %s128
    %p132 = pneg %p126
    %p133 = scmp.eq.s32.totalorder %s12, 3
    %p134 = por %p132, %p133
    %p135 = scmp.ne.s32.totalorder %s127, %s130
    %p136 = scmp.eq.s32.totalorder %s12, 0
    %p137 = por %p135, %p136
    %p138 = scmp.ne.s32.totalorder %s127, %s130
    %p139 = scmp.eq.s32.totalorder %s17, 3
    %p140 = por %p138, %p139
    %p141 = scmp.ne.s32.totalorder %s130, %s131
    %p142 = scmp.eq.s32.totalorder %s17, 0
    %p143 = por %p141, %p142
    %p144 = scmp.ne.s32.totalorder %s130, %s131
    %p145 = scmp.eq.s32.totalorder %s18, 3
    %p146 = por %p144, %p145
    %p148 = scmp.ne.s32.totalorder %s131, %s147
    %p149 = scmp.eq.s32.totalorder %s18, 0
    %p150 = por %p148, %p149
    %s151 = ssub.s32 %s19, %s31
    %s152 = ssub.s32 %s20, %s27
    %s153 = sor.u32 %s151, %s152
    %p154 = scmp.eq.s32.totalorder %s153, 0
    %s156 = sadd.s32 %s155, 1
    %s157 = scalar_select %p154, %s155, %s156
    %p160 = pneg %p154
    %p161 = scmp.eq.s32.totalorder %s12, 3
    %p162 = por %p160, %p161
    %p163 = scmp.ne.s32.totalorder %s155, %s158
    %p164 = scmp.eq.s32.totalorder %s12, 0
    %p165 = por %p163, %p164
    %p166 = scmp.ne.s32.totalorder %s155, %s158
    %p167 = scmp.eq.s32.totalorder %s17, 3
    %p168 = por %p166, %p167
    %p169 = scmp.ne.s32.totalorder %s158, %s159
    %p170 = scmp.eq.s32.totalorder %s17, 0
    %p171 = por %p169, %p170
    %p172 = scmp.ne.s32.totalorder %s158, %s159
    %p173 = scmp.eq.s32.totalorder %s18, 3
    %p174 = por %p172, %p173
    %p176 = scmp.ne.s32.totalorder %s159, %s175
    %p177 = scmp.eq.s32.totalorder %s18, 0
    %p178 = por %p176, %p177
    %p179 = scmp.le.s32.totalorder 1, %s12
    %p180 = scmp.lt.s32.totalorder %s12, 5
    %p181 = pnand %p179, %p180
    %p182 = pneg %p181
    // Predicated region
    $region9: #{skinning_net_forward.15} parent=5 // pred_check
      _
    $region10: #{skinning_net_forward.15} parent=5 // pred_check_branch
      %184 = sbr.rel (%p181) target = $region12
    $region11: #{skinning_net_forward.15} parent=5 // pred_region
      %s185 = ssub.s32 %s12, 1
      // Predicated region
      $region13: #{skinning_net_forward.15} parent=11 // pred_check
        %p186 = pneg %p73
      $region14: #{skinning_net_forward.15} parent=11 // pred_check_branch
        %188 = sbr.rel (%p186) target = $region16
      $region15: #{skinning_net_forward.15} parent=11 // pred_region
        _
      $region16: #{skinning_net_forward.15} parent=11 // pred_fallthru
        _
      // Predicated region
      $region17: #{skinning_net_forward.15} parent=11 // pred_check
        %p189 = pneg %p94
      $region18: #{skinning_net_forward.15} parent=11 // pred_check_branch
        %191 = sbr.rel (%p189) target = $region20
      $region19: #{skinning_net_forward.15} parent=11 // pred_region
        _
      $region20: #{skinning_net_forward.15} parent=11 // pred_fallthru
        _
      // Predicated region
      $region21: #{skinning_net_forward.15} parent=11 // pred_check
        %p192 = pneg %p115
      $region22: #{skinning_net_forward.15} parent=11 // pred_check_branch
        %194 = sbr.rel (%p192) target = $region24
      $region23: #{skinning_net_forward.15} parent=11 // pred_region
        _
      $region24: #{skinning_net_forward.15} parent=11 // pred_fallthru
        _
    $region12: #{skinning_net_forward.15} parent=5 // pred_fallthru
      _
    %p195 = scmp.lt.s32.totalorder %s12, 4
    // Predicated region
    $region25: #{skinning_net_forward.15} parent=5 // pred_check
      %p196 = pneg %p195
    $region26: #{skinning_net_forward.15} parent=5 // pred_check_branch
      %198 = sbr.rel (%p196) target = $region28
    $region27: #{skinning_net_forward.15} parent=5 // pred_region
      // Predicated region
      $region29: #{skinning_net_forward.15} parent=27 // pred_check
        %p199 = pneg %p46
      $region30: #{skinning_net_forward.15} parent=27 // pred_check_branch
        %201 = sbr.rel (%p199) target = $region32
      $region31: #{skinning_net_forward.15} parent=27 // pred_region
        %s202 = smul.u32 4, %s20
        %p203 = scmp.lt.s32.totalorder %s19, 1
        %s204 = scalar_select %p203, %s19, 1
        %p205 = scmp.lt.s32.totalorder %s202, 7
        %s206 = scalar_select %p205, %s202, 7
        %s207 = smul.addr %s204, 8
        %s208 = sadd.s32 %s206, %s207
        %s209 = smul.addr %s208, 4
        %s210 = scalar_lea.vmem %s0, %s209
        %s211 = smul.u32 4, %s20
      $region32: #{skinning_net_forward.15} parent=27 // pred_fallthru
        _
    $region28: #{skinning_net_forward.15} parent=5 // pred_fallthru
      _
    %p212 = scmp.le.s32.totalorder 1, %s12
    %p213 = scmp.lt.s32.totalorder %s12, 5
    %p214 = pnand %p212, %p213
    %p215 = pneg %p214
    // Predicated region
    $region33: #{skinning_net_forward.15} parent=5 // pred_check
      _
    $region34: #{skinning_net_forward.15} parent=5 // pred_check_branch
      %217 = sbr.rel (%p214) target = $region36
    $region35: #{skinning_net_forward.15} parent=5 // pred_region
      %s218 = ssub.s32 %s12, 1
      %s219 = smul.u32 4, %s22
      %p220 = scmp.lt.s32.totalorder %s21, 1
      %s221 = scalar_select %p220, %s21, 1
      %p222 = scmp.lt.s32.totalorder %s219, 7
      %s223 = scalar_select %p222, %s219, 7
      %s224 = smul.addr %s221, 8
      %s225 = sadd.s32 %s223, %s224
      %s226 = smul.addr %s225, 4
      %s227 = scalar_lea.vmem %s0, %s226
      %p228 = pneg %p52
      %p229 = pneg %p49
      %p230 = pneg %p73
      %p231 = pneg %p70
      %p232 = pneg %p94
      %p233 = pneg %p91
      %p234 = pneg %p115
      %p235 = pneg %p112
      %p236 = pneg %p143
      %p237 = pneg %p140
      %s238 = smul.u32 4, %s22
      %p239 = scmp.lt.s32.totalorder %s21, 1
      %s240 = scalar_select %p239, %s21, 1
      %p241 = scmp.lt.s32.totalorder %s238, 7
      %s242 = scalar_select %p241, %s238, 7
      %s243 = smul.addr %s240, 8
      %s244 = sadd.s32 %s242, %s243
      %s245 = smul.addr %s244, 4
      %s246 = scalar_lea.vmem %s4, %s245
      %p247 = pneg %p171
      %p248 = pneg %p168
      %s249 = smul.u32 4, %s22
      %p250 = scmp.lt.s32.totalorder %s21, 1
      %s251 = scalar_select %p250, %s21, 1
      %p252 = scmp.lt.s32.totalorder %s249, 7
      %s253 = scalar_select %p252, %s249, 7
      %s254 = smul.addr %s251, 8
      %s255 = sadd.s32 %s253, %s254
      %s256 = smul.addr %s255, 8
      %s257 = scalar_lea.vmem %s5, %s256
      %s258 = smul.u32 4, %s22
      %p259 = scmp.lt.s32.totalorder %s21, 1
      %s260 = scalar_select %p259, %s21, 1
      %p261 = scmp.lt.s32.totalorder %s258, 7
      %s262 = scalar_select %p261, %s258, 7
      %s263 = smul.addr %s260, 8
      %s264 = sadd.s32 %s262, %s263
      %s265 = smul.addr %s264, 4
      %s266 = scalar_lea.vmem %s0, %s265
      %s267 = smul.u32 4, %s22
      %s268 = smul.u32 4, %s22
      %p269 = scmp.lt.s32.totalorder %s21, 1
      %s270 = scalar_select %p269, %s21, 1
      %p271 = scmp.lt.s32.totalorder %s268, 7
      %s272 = scalar_select %p271, %s268, 7
      %s273 = smul.addr %s270, 8
      %s274 = sadd.s32 %s272, %s273
      %s275 = smul.addr %s274, 4
      %s276 = scalar_lea.vmem %s4, %s275
      %s277 = smul.u32 4, %s22
      %s278 = smul.u32 4, %s22
      %p279 = scmp.lt.s32.totalorder %s21, 1
      %s280 = scalar_select %p279, %s21, 1
      %p281 = scmp.lt.s32.totalorder %s278, 7
      %s282 = scalar_select %p281, %s278, 7
      %s283 = smul.addr %s280, 8
      %s284 = sadd.s32 %s282, %s283
      %s285 = smul.addr %s284, 8
      %s286 = scalar_lea.vmem %s5, %s285
      %s287 = smul.u32 4, %s22
      %v289 = vld [vmem:[%s266] sm:$0xf]
      %v290 = vld [vmem:[%s266 + $0x4] sm:$0xf]
      %v291 = vld [vmem:[%s266 + $0x8] sm:$0xf]
      %v292 = vld [vmem:[%s266 + $0xc] sm:$0xf]
      %v293 = vld [vmem:[%s1] sm:$0xf]
      %v294 = vld [vmem:[%s1 + $0x4] sm:$0xf]
      %v295 = vld [vmem:[%s1 + $0x8] sm:$0xf]
      %v296 = vld [vmem:[%s1 + $0xc] sm:$0xf]
      %v301 = vunpack.c.l.b16 %v289
      %v302 = vunpack.c.l.b16 %v290
      %v303 = vunpack.c.l.b16 %v291
      %v304 = vunpack.c.l.b16 %v292
      %v305 = vpack.c.b16 %v302, %v301
      %v306 = vpack.c.b16 %v304, %v303
      %v311 = vunpack.c.l.b16 %v293
      %v312 = vunpack.c.l.b16 %v294
      %v313 = vunpack.c.l.b16 %v295
      %v314 = vunpack.c.l.b16 %v296
      %v315 = vpack.c.b16 %v312, %v311
      %v316 = vpack.c.b16 %v314, %v313
      %vm319 = vcmask 261120
      %v321 = vsel %vm319, %v305, 0
      %v324 = vsel %vm319, %v306, 0
      %326 = vmatprep.subr.bf16.mxu0 0
      %327 = vmatpush1.bf16.msra.mxu0 %v315
      %328 = vmatprep.subr.bf16.mxu0 0
      %329 = vmatpush1.bf16.msra.mxu0 %v316
      %330 = vmatprep.subr.bf16.mxu0 0
      %331 = vmatpush1.bf16.msra.mxu0 0
      %332 = vmatprep.subr.bf16.mxu0 0
      %333 = vmatpush1.bf16.msra.mxu0 0
      %334 = vmatprep.subr.bf16.mxu0 0
      %335 = vmatpush1.bf16.msra.mxu0 0
      %336 = vmatprep.subr.bf16.mxu0 0
      %337 = vmatpush1.bf16.msra.mxu0 0
      %338 = vmatprep.subr.bf16.mxu0 0
      %339 = vmatpush1.bf16.msra.mxu0 0
      %340 = vmatprep.subr.bf16.mxu0 0
      %341 = vmatpush1.bf16.msra.mxu0 0
      %342 = vmatprep.subr.bf16.mxu0 0
      %343 = vmatpush1.bf16.msra.mxu0 0
      %344 = vmatprep.subr.bf16.mxu0 0
      %345 = vmatpush1.bf16.msra.mxu0 0
      %346 = vmatprep.subr.bf16.mxu0 0
      %347 = vmatpush1.bf16.msra.mxu0 0
      %348 = vmatprep.subr.bf16.mxu0 0
      %349 = vmatpush1.bf16.msra.mxu0 0
      %350 = vmatprep.subr.bf16.mxu0 0
      %351 = vmatpush1.bf16.msra.mxu0 0
      %352 = vmatprep.subr.bf16.mxu0 0
      %353 = vmatpush1.bf16.msra.mxu0 0
      %354 = vmatprep.subr.bf16.mxu0 0
      %355 = vmatpush1.bf16.msra.mxu0 0
      %356 = vmatprep.subr.bf16.mxu0 0
      %357 = vmatpush1.bf16.msra.mxu0 0
      %358 = vmatprep.mubr.bf16.mxu0 0
      %359 = vmatmul.mubr.bf16.gmra.mrb[0].mxu0 %v321
      %v360 = vpop.f32.mrb[0].mxu0
      %v361 = vadd.f32 0.0, %v360
      %v362 = vpop.f32.mrb[0].mxu0
      %v363 = vpop.f32.mrb[0].mxu0
      %v364 = vadd.f32 0.0, %v363
      %v365 = vpop.f32.mrb[0].mxu0
      %366 = vmatprep.mubr.bf16.mxu0 0
      %367 = vmatmul.mubr.bf16.gmra.mrb[0].mxu0 %v324
      %v368 = vpop.f32.mrb[0].mxu0
      %v369 = vadd.f32 0.0, %v368
      %v370 = vpop.f32.mrb[0].mxu0
      %v371 = vpop.f32.mrb[0].mxu0
      %v372 = vadd.f32 0.0, %v371
      %v373 = vpop.f32.mrb[0].mxu0
      %374 = vdwg.mxu0
      %v375 = vld [vmem:[%s2] sm:$0xf]
      %v376 = vld [vmem:[%s2 + $0x4] sm:$0xf]
      %v377 = vld [vmem:[%s2 + $0x8] sm:$0xf]
      %v378 = vld [vmem:[%s2 + $0xc] sm:$0xf]
      %v379 = vld [vmem:[%s3] sm:$0x1]
      %v381 = vlaneseq
      %v382 = vshrl.u32 %v381, 7
      %v383 = vsub.s32 0, %v382
      %v384 = vrot.slane %v379, %v383
      %v390 = vunpack.c.l.b16 %v375
      %v391 = vunpack.c.l.b16 %v376
      %v392 = vunpack.c.l.b16 %v377
      %v393 = vunpack.c.l.b16 %v378
      %v394 = vpack.c.b16 %v391, %v390
      %v395 = vpack.c.b16 %v393, %v392
      %398 = vmatprep.subr.bf16.mxu0 0
      %399 = vmatpush1.bf16.msra.mxu0 %v394
      %400 = vmatprep.subr.bf16.mxu0 0
      %401 = vmatpush1.bf16.msra.mxu0 %v395
      %402 = vmatprep.subr.bf16.mxu0 0
      %403 = vmatpush1.bf16.msra.mxu0 0
      %404 = vmatprep.subr.bf16.mxu0 0
      %405 = vmatpush1.bf16.msra.mxu0 0
      %406 = vmatprep.subr.bf16.mxu0 0
      %407 = vmatpush1.bf16.msra.mxu0 0
      %408 = vmatprep.subr.bf16.mxu0 0
      %409 = vmatpush1.bf16.msra.mxu0 0
      %410 = vmatprep.subr.bf16.mxu0 0
      %411 = vmatpush1.bf16.msra.mxu0 0
      %412 = vmatprep.subr.bf16.mxu0 0
      %413 = vmatpush1.bf16.msra.mxu0 0
      %414 = vmatprep.subr.bf16.mxu0 0
      %415 = vmatpush1.bf16.msra.mxu0 0
      %416 = vmatprep.subr.bf16.mxu0 0
      %417 = vmatpush1.bf16.msra.mxu0 0
      %418 = vmatprep.subr.bf16.mxu0 0
      %419 = vmatpush1.bf16.msra.mxu0 0
      %420 = vmatprep.subr.bf16.mxu0 0
      %421 = vmatpush1.bf16.msra.mxu0 0
      %422 = vmatprep.subr.bf16.mxu0 0
      %423 = vmatpush1.bf16.msra.mxu0 0
      %424 = vmatprep.subr.bf16.mxu0 0
      %425 = vmatpush1.bf16.msra.mxu0 0
      %426 = vmatprep.subr.bf16.mxu0 0
      %427 = vmatpush1.bf16.msra.mxu0 0
      %428 = vmatprep.subr.bf16.mxu0 0
      %429 = vmatpush1.bf16.msra.mxu0 0
      %430 = vmatprep.mubr.bf16.mxu0 0
      %431 = vmatmul.mubr.bf16.gmra.mrb[0].mxu0 %v321
      %v432 = vpop.f32.mrb[0].mxu0
      %v433 = vadd.f32 %v384, %v432
      %v434 = vpop.f32.mrb[0].mxu0
      %v435 = vpop.f32.mrb[0].mxu0
      %v436 = vadd.f32 %v384, %v435
      %v437 = vpop.f32.mrb[0].mxu0
      %438 = vmatprep.mubr.bf16.mxu0 0
      %439 = vmatmul.mubr.bf16.gmra.mrb[0].mxu0 %v324
      %v440 = vpop.f32.mrb[0].mxu0
      %v441 = vadd.f32 %v384, %v440
      %v442 = vpop.f32.mrb[0].mxu0
      %v443 = vpop.f32.mrb[0].mxu0
      %v444 = vadd.f32 %v384, %v443
      %v445 = vpop.f32.mrb[0].mxu0
      %446 = vdwg.mxu0
      %v447 = vpack.c.bf16 %v364, %v361
      %v448 = vpack.c.bf16 %v372, %v369
      %v451 = vunpack.c.l.b16 %v447
      %v452 = vunpack.c.h.b16 %v447
      %v453 = vunpack.c.l.b16 %v448
      %v454 = vunpack.c.h.b16 %v448
      %v455 = vpack.c.b16 %v451, %v451
      %v456 = vpack.c.b16 %v452, %v452
      %v457 = vpack.c.b16 %v453, %v453
      %v458 = vpack.c.b16 %v454, %v454
      %463 = vst [vmem:[%s276] sm:$0xf] %v455
      %464 = vst [vmem:[%s276 + $0x4] sm:$0xf] %v456
      %465 = vst [vmem:[%s276 + $0x8] sm:$0xf] %v457
      %466 = vst [vmem:[%s276 + $0xc] sm:$0xf] %v458
      %467 = vst [vmem:[%s286] sm:$0xff] %v433
      %468 = vst [vmem:[%s286 + $0x8] sm:$0xff] %v436
      %469 = vst [vmem:[%s286 + $0x10] sm:$0xff] %v441
      %470 = vst [vmem:[%s286 + $0x18] sm:$0xff] %v444
      %s471 = smul.u32 4, %s22
      %p472 = scmp.lt.s32.totalorder %s21, 1
      %s473 = scalar_select %p472, %s21, 1
      %p474 = scmp.lt.s32.totalorder %s471, 7
      %s475 = scalar_select %p474, %s471, 7
      %s476 = smul.addr %s473, 8
      %s477 = sadd.s32 %s475, %s476
      %s478 = smul.addr %s477, 4
      %s479 = scalar_lea.vmem %s4, %s478
      %s480 = smul.u32 4, %s22
      %p481 = scmp.lt.s32.totalorder %s21, 1
      %s482 = scalar_select %p481, %s21, 1
      %p483 = scmp.lt.s32.totalorder %s480, 7
      %s484 = scalar_select %p483, %s480, 7
      %s485 = smul.addr %s482, 8
      %s486 = sadd.s32 %s484, %s485
      %s487 = smul.addr %s486, 8
      %s488 = scalar_lea.vmem %s5, %s487
      // Predicated region
      $region37: #{skinning_net_forward.15} parent=35 // pred_check
        %p489 = pneg %p140
      $region38: #{skinning_net_forward.15} parent=35 // pred_check_branch
        %491 = sbr.rel (%p489) target = $region40
      $region39: #{skinning_net_forward.15} parent=35 // pred_region
        %s492 = smul.u32 4, %s22
      $region40: #{skinning_net_forward.15} parent=35 // pred_fallthru
        _
      // Predicated region
      $region41: #{skinning_net_forward.15} parent=35 // pred_check
        %p493 = pneg %p168
      $region42: #{skinning_net_forward.15} parent=35 // pred_check_branch
        %495 = sbr.rel (%p493) target = $region44
      $region43: #{skinning_net_forward.15} parent=35 // pred_region
        %s496 = smul.u32 4, %s22
      $region44: #{skinning_net_forward.15} parent=35 // pred_fallthru
        _
    $region36: #{skinning_net_forward.15} parent=5 // pred_fallthru
      _
    %p497 = scmp.le.s32.totalorder 2, %s12
    // Predicated region
    $region45: #{skinning_net_forward.15} parent=5 // pred_check
      %p498 = pneg %p497
    $region46: #{skinning_net_forward.15} parent=5 // pred_check_branch
      %500 = sbr.rel (%p498) target = $region48
    $region47: #{skinning_net_forward.15} parent=5 // pred_region
      %s501 = ssub.s32 %s12, 2
      // Predicated region
      $region49: #{skinning_net_forward.15} parent=47 // pred_check
        %p502 = pneg %p146
      $region50: #{skinning_net_forward.15} parent=47 // pred_check_branch
        %504 = sbr.rel (%p502) target = $region52
      $region51: #{skinning_net_forward.15} parent=47 // pred_region
        %s505 = smul.u32 4, %s24
        %p506 = scmp.lt.s32.totalorder %s23, 1
        %s507 = scalar_select %p506, %s23, 1
        %p508 = scmp.lt.s32.totalorder %s505, 7
        %s509 = scalar_select %p508, %s505, 7
        %s510 = smul.addr %s507, 8
        %s511 = sadd.s32 %s509, %s510
        %s512 = smul.addr %s511, 4
        %s513 = scalar_lea.vmem %s4, %s512
      $region52: #{skinning_net_forward.15} parent=47 // pred_fallthru
        _
      // Predicated region
      $region53: #{skinning_net_forward.15} parent=47 // pred_check
        %p514 = pneg %p174
      $region54: #{skinning_net_forward.15} parent=47 // pred_check_branch
        %516 = sbr.rel (%p514) target = $region56
      $region55: #{skinning_net_forward.15} parent=47 // pred_region
        %s517 = smul.u32 4, %s24
        %p518 = scmp.lt.s32.totalorder %s23, 1
        %s519 = scalar_select %p518, %s23, 1
        %p520 = scmp.lt.s32.totalorder %s517, 7
        %s521 = scalar_select %p520, %s517, 7
        %s522 = smul.addr %s519, 8
        %s523 = sadd.s32 %s521, %s522
        %s524 = smul.addr %s523, 8
        %s525 = scalar_lea.vmem %s5, %s524
      $region56: #{skinning_net_forward.15} parent=47 // pred_fallthru
        _
    $region48: #{skinning_net_forward.15} parent=5 // pred_fallthru
      _
  $region6: #{skinning_net_forward.15} parent=0 // loop_footer
    %s16 = sadd.s32 1, %s12
  $region7: #{skinning_net_forward.15} parent=0 // loop_footer_branch
    %11 = sbr.rel target = $region3
  $region8: #{skinning_net_forward.15} parent=0 // loop_exit
    _

// kernel: skinning_net_forward.16
$region0: #{skinning_net_forward.16}
  #allocation0 [shape = 'u32[]', space=smem, size = 0x4, offset = 0x4, fixed_abs, tag = 'smem constant byte address 0x4 - core index']
  #allocation1 [shape = 'u32[144,128]{1,0:T(1,128)}', space=vmem, size = 0x12000, scoped, tag = 'internal scratch']
  %s0 = inlined_call_operand.vmem [shape: bf16[2,64,115], index: 0, kind: input, shape index: {}]
  %s1 = inlined_call_operand.vmem [shape: bf16[115,512], index: 1, kind: input, shape index: {}]
  %s2 = inlined_call_operand.vmem [shape: f32[1,512], index: 2, kind: input, shape index: {}]
  %s3 = inlined_call_operand.vmem [shape: f32[2,64,512], index: 3, kind: output, shape index: {}]
  %s4 = sld [smem:[#allocation0]]
  $region45: #{skinning_net_forward.16} parent=0
    _
  %s6 = ssub.s32 1, %s4
  %s7 = scalar_select 0, %s6, %s4
  loop: start=0, step=1, limit=6
  $region2: #{skinning_net_forward.16} parent=0 // loop_pre_header
    _
  $region3: #{skinning_net_forward.16} parent=0 // loop_header
    %s9 = sphi 0, %s13
    %p10 = scmp.ge.s32.totalorder %s9, 6
    %s16 = sphi 0, %s28
    %s17 = sphi 0, %s24
    %s18 = sphi 0, %s16
    %s19 = sphi 0, %s17
    %s20 = sphi 0, %s18
    %s21 = sphi 0, %s19
    %s33 = sphi 0, %s35
    %s36 = sphi 0, %s33
    %s37 = sphi 0, %s36
    %s53 = sphi 0, %s37
    %s57 = sphi 0, %s57
    %s59 = sphi 0, %s57
    %s60 = sphi 0, %s59
    %s74 = sphi 0, %s60
    %s78 = sphi 0, %s78
    %s80 = sphi 0, %s78
    %s81 = sphi 0, %s80
    %s95 = sphi 0, %s81
    %s103 = sphi 0, %s105
    %s106 = sphi 0, %s103
    %s107 = sphi 0, %s106
    %s123 = sphi 0, %s107
  $region4: #{skinning_net_forward.16} parent=0 // loop_header_branch
    %12 = sbr.rel (%p10) target = $region8
  $region5: #{skinning_net_forward.16} parent=0 // loop_body
    %s14 = ssub.s32 %s9, 1
    %s15 = ssub.s32 %s9, 2
    %s22 = sadd.s32 1, %s17
    %p23 = scmp.ge.s32.totalorder %s22, 2
    %s24 = scalar_select %p23, 0, %s22
    %s25 = sadd.s32 1, %s16
    %s26 = scalar_select %p23, %s25, %s16
    %p27 = scmp.ge.s32.totalorder %s26, 2
    %s28 = scalar_select %p27, 0, %s26
    %s29 = ssub.s32 %s16, %s28
    %s30 = ssub.s32 %s17, %s24
    %s31 = sor.u32 %s29, %s30
    %p32 = scmp.eq.s32.totalorder %s31, 0
    %s34 = sadd.s32 %s33, 1
    %s35 = scalar_select %p32, %s33, %s34
    %p38 = pneg %p32
    %p39 = scmp.eq.s32.totalorder %s9, 3
    %p40 = por %p38, %p39
    %p41 = scmp.ne.s32.totalorder %s33, %s36
    %p42 = scmp.eq.s32.totalorder %s9, 0
    %p43 = por %p41, %p42
    %p44 = scmp.ne.s32.totalorder %s33, %s36
    %p45 = scmp.eq.s32.totalorder %s14, 3
    %p46 = por %p44, %p45
    %p47 = scmp.ne.s32.totalorder %s36, %s37
    %p48 = scmp.eq.s32.totalorder %s14, 0
    %p49 = por %p47, %p48
    %p50 = scmp.ne.s32.totalorder %s36, %s37
    %p51 = scmp.eq.s32.totalorder %s15, 3
    %p52 = por %p50, %p51
    %p54 = scmp.ne.s32.totalorder %s37, %s53
    %p55 = scmp.eq.s32.totalorder %s15, 0
    %p56 = por %p54, %p55
    %s58 = sadd.s32 %s57, 1
    %p61 = scmp.eq.s32.totalorder %s9, 3
    %p62 = scmp.ne.s32.totalorder %s57, %s59
    %p63 = scmp.eq.s32.totalorder %s9, 0
    %p64 = por %p62, %p63
    %p65 = scmp.ne.s32.totalorder %s57, %s59
    %p66 = scmp.eq.s32.totalorder %s14, 3
    %p67 = por %p65, %p66
    %p68 = scmp.ne.s32.totalorder %s59, %s60
    %p69 = scmp.eq.s32.totalorder %s14, 0
    %p70 = por %p68, %p69
    %p71 = scmp.ne.s32.totalorder %s59, %s60
    %p72 = scmp.eq.s32.totalorder %s15, 3
    %p73 = por %p71, %p72
    %p75 = scmp.ne.s32.totalorder %s60, %s74
    %p76 = scmp.eq.s32.totalorder %s15, 0
    %p77 = por %p75, %p76
    %s79 = sadd.s32 %s78, 1
    %p82 = scmp.eq.s32.totalorder %s9, 3
    %p83 = scmp.ne.s32.totalorder %s78, %s80
    %p84 = scmp.eq.s32.totalorder %s9, 0
    %p85 = por %p83, %p84
    %p86 = scmp.ne.s32.totalorder %s78, %s80
    %p87 = scmp.eq.s32.totalorder %s14, 3
    %p88 = por %p86, %p87
    %p89 = scmp.ne.s32.totalorder %s80, %s81
    %p90 = scmp.eq.s32.totalorder %s14, 0
    %p91 = por %p89, %p90
    %p92 = scmp.ne.s32.totalorder %s80, %s81
    %p93 = scmp.eq.s32.totalorder %s15, 3
    %p94 = por %p92, %p93
    %p96 = scmp.ne.s32.totalorder %s81, %s95
    %p97 = scmp.eq.s32.totalorder %s15, 0
    %p98 = por %p96, %p97
    %s99 = ssub.s32 %s16, %s28
    %s100 = ssub.s32 %s17, %s24
    %s101 = sor.u32 %s99, %s100
    %p102 = scmp.eq.s32.totalorder %s101, 0
    %s104 = sadd.s32 %s103, 1
    %s105 = scalar_select %p102, %s103, %s104
    %p108 = pneg %p102
    %p109 = scmp.eq.s32.totalorder %s9, 3
    %p110 = por %p108, %p109
    %p111 = scmp.ne.s32.totalorder %s103, %s106
    %p112 = scmp.eq.s32.totalorder %s9, 0
    %p113 = por %p111, %p112
    %p114 = scmp.ne.s32.totalorder %s103, %s106
    %p115 = scmp.eq.s32.totalorder %s14, 3
    %p116 = por %p114, %p115
    %p117 = scmp.ne.s32.totalorder %s106, %s107
    %p118 = scmp.eq.s32.totalorder %s14, 0
    %p119 = por %p117, %p118
    %p120 = scmp.ne.s32.totalorder %s106, %s107
    %p121 = scmp.eq.s32.totalorder %s15, 3
    %p122 = por %p120, %p121
    %p124 = scmp.ne.s32.totalorder %s107, %s123
    %p125 = scmp.eq.s32.totalorder %s15, 0
    %p126 = por %p124, %p125
    %p127 = scmp.le.s32.totalorder 1, %s9
    %p128 = scmp.lt.s32.totalorder %s9, 5
    %p129 = pnand %p127, %p128
    %p130 = pneg %p129
    // Predicated region
    $region9: #{skinning_net_forward.16} parent=5 // pred_check
      _
    $region10: #{skinning_net_forward.16} parent=5 // pred_check_branch
      %132 = sbr.rel (%p129) target = $region12
    $region11: #{skinning_net_forward.16} parent=5 // pred_region
      %s133 = ssub.s32 %s9, 1
      // Predicated region
      $region13: #{skinning_net_forward.16} parent=11 // pred_check
        %p134 = pneg %p70
      $region14: #{skinning_net_forward.16} parent=11 // pred_check_branch
        %136 = sbr.rel (%p134) target = $region16
      $region15: #{skinning_net_forward.16} parent=11 // pred_region
        _
      $region16: #{skinning_net_forward.16} parent=11 // pred_fallthru
        _
      // Predicated region
      $region17: #{skinning_net_forward.16} parent=11 // pred_check
        %p137 = pneg %p91
      $region18: #{skinning_net_forward.16} parent=11 // pred_check_branch
        %139 = sbr.rel (%p137) target = $region20
      $region19: #{skinning_net_forward.16} parent=11 // pred_region
        _
      $region20: #{skinning_net_forward.16} parent=11 // pred_fallthru
        _
    $region12: #{skinning_net_forward.16} parent=5 // pred_fallthru
      _
    %p140 = scmp.lt.s32.totalorder %s9, 4
    // Predicated region
    $region21: #{skinning_net_forward.16} parent=5 // pred_check
      %p141 = pneg %p140
    $region22: #{skinning_net_forward.16} parent=5 // pred_check_branch
      %143 = sbr.rel (%p141) target = $region24
    $region23: #{skinning_net_forward.16} parent=5 // pred_region
      // Predicated region
      $region25: #{skinning_net_forward.16} parent=23 // pred_check
        %p144 = pneg %p43
      $region26: #{skinning_net_forward.16} parent=23 // pred_check_branch
        %146 = sbr.rel (%p144) target = $region28
      $region27: #{skinning_net_forward.16} parent=23 // pred_region
        %s147 = smul.u32 4, %s17
        %p148 = scmp.lt.s32.totalorder %s16, 1
        %s149 = scalar_select %p148, %s16, 1
        %p150 = scmp.lt.s32.totalorder %s147, 7
        %s151 = scalar_select %p150, %s147, 7
        %s152 = smul.addr %s149, 8
        %s153 = sadd.s32 %s151, %s152
        %s154 = smul.addr %s153, 4
        %s155 = scalar_lea.vmem %s0, %s154
        %s156 = smul.u32 4, %s17
      $region28: #{skinning_net_forward.16} parent=23 // pred_fallthru
        _
    $region24: #{skinning_net_forward.16} parent=5 // pred_fallthru
      _
    %p157 = scmp.le.s32.totalorder 1, %s9
    %p158 = scmp.lt.s32.totalorder %s9, 5
    %p159 = pnand %p157, %p158
    %p160 = pneg %p159
    // Predicated region
    $region29: #{skinning_net_forward.16} parent=5 // pred_check
      _
    $region30: #{skinning_net_forward.16} parent=5 // pred_check_branch
      %162 = sbr.rel (%p159) target = $region32
    $region31: #{skinning_net_forward.16} parent=5 // pred_region
      %s163 = ssub.s32 %s9, 1
      %s164 = smul.u32 4, %s19
      %p165 = scmp.lt.s32.totalorder %s18, 1
      %s166 = scalar_select %p165, %s18, 1
      %p167 = scmp.lt.s32.totalorder %s164, 7
      %s168 = scalar_select %p167, %s164, 7
      %s169 = smul.addr %s166, 8
      %s170 = sadd.s32 %s168, %s169
      %s171 = smul.addr %s170, 4
      %s172 = scalar_lea.vmem %s0, %s171
      %p173 = pneg %p49
      %p174 = pneg %p46
      %p175 = pneg %p70
      %p176 = pneg %p67
      %p177 = pneg %p91
      %p178 = pneg %p88
      %p179 = pneg %p119
      %p180 = pneg %p116
      %s181 = smul.u32 4, %s19
      %p182 = scmp.lt.s32.totalorder %s18, 1
      %s183 = scalar_select %p182, %s18, 1
      %p184 = scmp.lt.s32.totalorder %s181, 7
      %s185 = scalar_select %p184, %s181, 7
      %s186 = smul.addr %s185, 4
      %s187 = smul.addr %s183, 32
      %s188 = sadd.s32 %s186, %s187
      %s189 = smul.addr %s188, 8
      %s190 = scalar_lea.vmem %s3, %s189
      %s191 = smul.u32 4, %s19
      %p192 = scmp.lt.s32.totalorder %s18, 1
      %s193 = scalar_select %p192, %s18, 1
      %p194 = scmp.lt.s32.totalorder %s191, 7
      %s195 = scalar_select %p194, %s191, 7
      %s196 = smul.addr %s193, 8
      %s197 = sadd.s32 %s195, %s196
      %s198 = smul.addr %s197, 4
      %s199 = scalar_lea.vmem %s0, %s198
      %s200 = smul.u32 4, %s19
      %s201 = smul.u32 4, %s19
      %p202 = scmp.lt.s32.totalorder %s18, 1
      %s203 = scalar_select %p202, %s18, 1
      %p204 = scmp.lt.s32.totalorder %s201, 7
      %s205 = scalar_select %p204, %s201, 7
      %s206 = smul.addr %s205, 4
      %s207 = smul.addr %s203, 32
      %s208 = sadd.s32 %s206, %s207
      %s209 = smul.addr %s208, 8
      %s210 = scalar_lea.vmem %s3, %s209
      %s211 = smul.u32 4, %s19
      %v213 = vld [vmem:[%s199] sm:$0xf]
      %v214 = vld [vmem:[%s199 + $0x4] sm:$0xf]
      %v215 = vld [vmem:[%s199 + $0x8] sm:$0xf]
      %v216 = vld [vmem:[%s199 + $0xc] sm:$0xf]
      %v217 = vld [vmem:[%s1] sm:$0xff]
      %v218 = vld [vmem:[%s1 + $0x8] sm:$0xff]
      %v219 = vld [vmem:[%s1 + $0x10] sm:$0xff]
      %v220 = vld [vmem:[%s1 + $0x18] sm:$0xff]
      %v221 = vld [vmem:[%s1 + $0x20] sm:$0xff]
      %v222 = vld [vmem:[%s1 + $0x28] sm:$0xff]
      %v223 = vld [vmem:[%s1 + $0x30] sm:$0xff]
      %v224 = vld [vmem:[%s1 + $0x38] sm:$0xff]
      %v225 = vld [vmem:[%s1 + $0x40] sm:$0xff]
      %v226 = vld [vmem:[%s1 + $0x48] sm:$0xff]
      %v227 = vld [vmem:[%s1 + $0x50] sm:$0xff]
      %v228 = vld [vmem:[%s1 + $0x58] sm:$0xff]
      %v229 = vld [vmem:[%s1 + $0x60] sm:$0xff]
      %v230 = vld [vmem:[%s1 + $0x68] sm:$0xff]
      %v231 = vld [vmem:[%s1 + $0x70] sm:$0xff]
      %v232 = vld [vmem:[%s1 + $0x78] sm:$0xff]
      %v233 = vld [vmem:[%s1 + $0x80] sm:$0xff]
      %v234 = vld [vmem:[%s1 + $0x88] sm:$0xff]
      %v235 = vld [vmem:[%s1 + $0x90] sm:$0xff]
      %v236 = vld [vmem:[%s1 + $0x98] sm:$0xff]
      %v237 = vld [vmem:[%s1 + $0xa0] sm:$0xff]
      %v238 = vld [vmem:[%s1 + $0xa8] sm:$0xff]
      %v239 = vld [vmem:[%s1 + $0xb0] sm:$0xff]
      %v240 = vld [vmem:[%s1 + $0xb8] sm:$0xff]
      %v241 = vld [vmem:[%s1 + $0xc0] sm:$0xff]
      %v242 = vld [vmem:[%s1 + $0xc8] sm:$0xff]
      %v243 = vld [vmem:[%s1 + $0xd0] sm:$0xff]
      %v244 = vld [vmem:[%s1 + $0xd8] sm:$0xff]
      %v245 = vld [vmem:[%s1 + $0xe0] sm:$0x33]
      %v246 = vld [vmem:[%s1 + $0xe8] sm:$0x33]
      %v247 = vld [vmem:[%s2] sm:$0xf]
      %v249 = vlaneseq
      %v250 = vshrl.u32 %v249, 7
      %v251 = vsub.s32 0, %v250
      %v252 = vrot.slane %v247, %v251
      %v253 = vlaneseq
      %v254 = vshrl.u32 %v253, 7
      %v255 = vsub.s32 1, %v254
      %v256 = vrot.slane %v247, %v255
      %v257 = vlaneseq
      %v258 = vshrl.u32 %v257, 7
      %v259 = vsub.s32 2, %v258
      %v260 = vrot.slane %v247, %v259
      %v261 = vlaneseq
      %v262 = vshrl.u32 %v261, 7
      %v263 = vsub.s32 3, %v262
      %v264 = vrot.slane %v247, %v263
      %v273 = vunpack.c.l.b16 %v213
      %v274 = vunpack.c.l.b16 %v214
      %v275 = vunpack.c.l.b16 %v215
      %v276 = vunpack.c.l.b16 %v216
      %v277 = vpack.c.b16 %v274, %v273
      %v278 = vpack.c.b16 %v276, %v275
      %v309 = vunpack.c.l.b16 %v217
      %v310 = vunpack.c.h.b16 %v217
      %v311 = vunpack.c.l.b16 %v218
      %v312 = vunpack.c.h.b16 %v218
      %v313 = vunpack.c.l.b16 %v219
      %v314 = vunpack.c.h.b16 %v219
      %v315 = vunpack.c.l.b16 %v220
      %v316 = vunpack.c.h.b16 %v220
      %v317 = vunpack.c.l.b16 %v221
      %v318 = vunpack.c.h.b16 %v221
      %v319 = vunpack.c.l.b16 %v222
      %v320 = vunpack.c.h.b16 %v222
      %v321 = vunpack.c.l.b16 %v223
      %v322 = vunpack.c.h.b16 %v223
      %v323 = vunpack.c.l.b16 %v224
      %v324 = vunpack.c.h.b16 %v224
      %v325 = vunpack.c.l.b16 %v225
      %v326 = vunpack.c.h.b16 %v225
      %v327 = vunpack.c.l.b16 %v226
      %v328 = vunpack.c.h.b16 %v226
      %v329 = vunpack.c.l.b16 %v227
      %v330 = vunpack.c.h.b16 %v227
      %v331 = vunpack.c.l.b16 %v228
      %v332 = vunpack.c.h.b16 %v228
      %v333 = vunpack.c.l.b16 %v229
      %v334 = vunpack.c.h.b16 %v229
      %v335 = vunpack.c.l.b16 %v230
      %v336 = vunpack.c.h.b16 %v230
      %v337 = vunpack.c.l.b16 %v231
      %v338 = vunpack.c.h.b16 %v231
      %v339 = vunpack.c.l.b16 %v232
      %v340 = vunpack.c.h.b16 %v232
      %v341 = vunpack.c.l.b16 %v233
      %v342 = vunpack.c.h.b16 %v233
      %v343 = vunpack.c.l.b16 %v234
      %v344 = vunpack.c.h.b16 %v234
      %v345 = vunpack.c.l.b16 %v235
      %v346 = vunpack.c.h.b16 %v235
      %v347 = vunpack.c.l.b16 %v236
      %v348 = vunpack.c.h.b16 %v236
      %v349 = vunpack.c.l.b16 %v237
      %v350 = vunpack.c.h.b16 %v237
      %v351 = vunpack.c.l.b16 %v238
      %v352 = vunpack.c.h.b16 %v238
      %v353 = vunpack.c.l.b16 %v239
      %v354 = vunpack.c.h.b16 %v239
      %v355 = vunpack.c.l.b16 %v240
      %v356 = vunpack.c.h.b16 %v240
      %v357 = vunpack.c.l.b16 %v241
      %v358 = vunpack.c.h.b16 %v241
      %v359 = vunpack.c.l.b16 %v242
      %v360 = vunpack.c.h.b16 %v242
      %v361 = vunpack.c.l.b16 %v243
      %v362 = vunpack.c.h.b16 %v243
      %v363 = vunpack.c.l.b16 %v244
      %v364 = vunpack.c.h.b16 %v244
      %v365 = vunpack.c.l.b16 %v245
      %v366 = vunpack.c.h.b16 %v245
      %v367 = vunpack.c.l.b16 %v246
      %v368 = vunpack.c.h.b16 %v246
      %v369 = vpack.c.b16 %v313, %v309
      %v370 = vpack.c.b16 %v314, %v310
      %v371 = vpack.c.b16 %v315, %v311
      %v372 = vpack.c.b16 %v316, %v312
      %v373 = vpack.c.b16 %v321, %v317
      %v374 = vpack.c.b16 %v322, %v318
      %v375 = vpack.c.b16 %v323, %v319
      %v376 = vpack.c.b16 %v324, %v320
      %v377 = vpack.c.b16 %v329, %v325
      %v378 = vpack.c.b16 %v330, %v326
      %v379 = vpack.c.b16 %v331, %v327
      %v380 = vpack.c.b16 %v332, %v328
      %v381 = vpack.c.b16 %v337, %v333
      %v382 = vpack.c.b16 %v338, %v334
      %v383 = vpack.c.b16 %v339, %v335
      %v384 = vpack.c.b16 %v340, %v336
      %v385 = vpack.c.b16 %v345, %v341
      %v386 = vpack.c.b16 %v346, %v342
      %v387 = vpack.c.b16 %v347, %v343
      %v388 = vpack.c.b16 %v348, %v344
      %v389 = vpack.c.b16 %v353, %v349
      %v390 = vpack.c.b16 %v354, %v350
      %v391 = vpack.c.b16 %v355, %v351
      %v392 = vpack.c.b16 %v356, %v352
      %v393 = vpack.c.b16 %v361, %v357
      %v394 = vpack.c.b16 %v362, %v358
      %v395 = vpack.c.b16 %v363, %v359
      %v396 = vpack.c.b16 %v364, %v360
      %v397 = vpack.c.b16 %v365, %v365
      %v398 = vpack.c.b16 %v366, %v366
      %v399 = vpack.c.b16 %v367, %v367
      %v400 = vpack.c.b16 %v368, %v368
      %vm429 = vcmask 941056
      %v431 = vsel %vm429, %v277, 0
      %v434 = vsel %vm429, %v278, 0
      %vm436 = vcmask 1040384
      %vm437 = vcmask 1041408
      %v438 = vsel %vm436, 4294967295, 65535
      %v439 = vsel %vm437, %v438, 0
      %v441 = vand.u32 %v397, %v439
      %v444 = vand.u32 %v398, %v439
      %v447 = vand.u32 %v399, %v439
      %v450 = vand.u32 %v400, %v439
      %452 = vmatprep.subr.bf16.mxu0 %v370
      %453 = vmatpush1.bf16.msra.mxu0 %v369
      %454 = vmatprep.subr.bf16.mxu0 %v374
      %455 = vmatpush1.bf16.msra.mxu0 %v373
      %456 = vmatprep.subr.bf16.mxu0 %v378
      %457 = vmatpush1.bf16.msra.mxu0 %v377
      %458 = vmatprep.subr.bf16.mxu0 %v382
      %459 = vmatpush1.bf16.msra.mxu0 %v381
      %460 = vmatprep.subr.bf16.mxu0 %v386
      %461 = vmatpush1.bf16.msra.mxu0 %v385
      %462 = vmatprep.subr.bf16.mxu0 %v390
      %463 = vmatpush1.bf16.msra.mxu0 %v389
      %464 = vmatprep.subr.bf16.mxu0 %v394
      %465 = vmatpush1.bf16.msra.mxu0 %v393
      %466 = vmatprep.subr.bf16.mxu0 %v444
      %467 = vmatpush1.bf16.msra.mxu0 %v441
      %468 = vmatprep.subr.bf16.mxu0 0
      %469 = vmatpush1.bf16.msra.mxu0 0
      %470 = vmatprep.subr.bf16.mxu0 0
      %471 = vmatpush1.bf16.msra.mxu0 0
      %472 = vmatprep.subr.bf16.mxu0 0
      %473 = vmatpush1.bf16.msra.mxu0 0
      %474 = vmatprep.subr.bf16.mxu0 0
      %475 = vmatpush1.bf16.msra.mxu0 0
      %476 = vmatprep.subr.bf16.mxu0 0
      %477 = vmatpush1.bf16.msra.mxu0 0
      %478 = vmatprep.subr.bf16.mxu0 0
      %479 = vmatpush1.bf16.msra.mxu0 0
      %480 = vmatprep.subr.bf16.mxu0 0
      %481 = vmatpush1.bf16.msra.mxu0 0
      %482 = vmatprep.subr.bf16.mxu0 0
      %483 = vmatpush1.bf16.msra.mxu0 0
      %484 = vmatprep.mubr.bf16.mxu0 0
      %485 = vmatmul.mubr.bf16.gmra.mrb[0].mxu0 %v431
      %v486 = vpop.f32.mrb[0].mxu0
      %v487 = vadd.f32 %v252, %v486
      %v488 = vpop.f32.mrb[0].mxu0
      %v489 = vadd.f32 %v256, %v488
      %v490 = vpop.f32.mrb[0].mxu0
      %v491 = vadd.f32 %v252, %v490
      %v492 = vpop.f32.mrb[0].mxu0
      %v493 = vadd.f32 %v256, %v492
      %494 = vmatprep.mubr.bf16.mxu0 0
      %495 = vmatmul.mubr.bf16.gmra.mrb[0].mxu0 %v434
      %v496 = vpop.f32.mrb[0].mxu0
      %v497 = vadd.f32 %v252, %v496
      %v498 = vpop.f32.mrb[0].mxu0
      %v499 = vadd.f32 %v256, %v498
      %v500 = vpop.f32.mrb[0].mxu0
      %v501 = vadd.f32 %v252, %v500
      %v502 = vpop.f32.mrb[0].mxu0
      %v503 = vadd.f32 %v256, %v502
      %504 = vdwg.mxu0
      %505 = vmatprep.subr.bf16.mxu0 %v372
      %506 = vmatpush1.bf16.msra.mxu0 %v371
      %507 = vmatprep.subr.bf16.mxu0 %v376
      %508 = vmatpush1.bf16.msra.mxu0 %v375
      %509 = vmatprep.subr.bf16.mxu0 %v380
      %510 = vmatpush1.bf16.msra.mxu0 %v379
      %511 = vmatprep.subr.bf16.mxu0 %v384
      %512 = vmatpush1.bf16.msra.mxu0 %v383
      %513 = vmatprep.subr.bf16.mxu0 %v388
      %514 = vmatpush1.bf16.msra.mxu0 %v387
      %515 = vmatprep.subr.bf16.mxu0 %v392
      %516 = vmatpush1.bf16.msra.mxu0 %v391
      %517 = vmatprep.subr.bf16.mxu0 %v396
      %518 = vmatpush1.bf16.msra.mxu0 %v395
      %519 = vmatprep.subr.bf16.mxu0 %v450
      %520 = vmatpush1.bf16.msra.mxu0 %v447
      %521 = vmatprep.subr.bf16.mxu0 0
      %522 = vmatpush1.bf16.msra.mxu0 0
      %523 = vmatprep.subr.bf16.mxu0 0
      %524 = vmatpush1.bf16.msra.mxu0 0
      %525 = vmatprep.subr.bf16.mxu0 0
      %526 = vmatpush1.bf16.msra.mxu0 0
      %527 = vmatprep.subr.bf16.mxu0 0
      %528 = vmatpush1.bf16.msra.mxu0 0
      %529 = vmatprep.subr.bf16.mxu0 0
      %530 = vmatpush1.bf16.msra.mxu0 0
      %531 = vmatprep.subr.bf16.mxu0 0
      %532 = vmatpush1.bf16.msra.mxu0 0
      %533 = vmatprep.subr.bf16.mxu0 0
      %534 = vmatpush1.bf16.msra.mxu0 0
      %535 = vmatprep.subr.bf16.mxu0 0
      %536 = vmatpush1.bf16.msra.mxu0 0
      %537 = vmatprep.mubr.bf16.mxu0 0
      %538 = vmatmul.mubr.bf16.gmra.mrb[0].mxu0 %v431
      %v539 = vpop.f32.mrb[0].mxu0
      %v540 = vadd.f32 %v260, %v539
      %v541 = vpop.f32.mrb[0].mxu0
      %v542 = vadd.f32 %v264, %v541
      %v543 = vpop.f32.mrb[0].mxu0
      %v544 = vadd.f32 %v260, %v543
      %v545 = vpop.f32.mrb[0].mxu0
      %v546 = vadd.f32 %v264, %v545
      %547 = vmatprep.mubr.bf16.mxu0 0
      %548 = vmatmul.mubr.bf16.gmra.mrb[0].mxu0 %v434
      %v549 = vpop.f32.mrb[0].mxu0
      %v550 = vadd.f32 %v260, %v549
      %v551 = vpop.f32.mrb[0].mxu0
      %v552 = vadd.f32 %v264, %v551
      %v553 = vpop.f32.mrb[0].mxu0
      %v554 = vadd.f32 %v260, %v553
      %v555 = vpop.f32.mrb[0].mxu0
      %v556 = vadd.f32 %v264, %v555
      %557 = vdwg.mxu0
      %vm558 = vcmp.ge.f32.partialorder %v487, 0.0
      %vm559 = vcmp.ge.f32.partialorder %v489, 0.0
      %vm560 = vcmp.ge.f32.partialorder %v540, 0.0
      %vm561 = vcmp.ge.f32.partialorder %v542, 0.0
      %vm562 = vcmp.ge.f32.partialorder %v491, 0.0
      %vm563 = vcmp.ge.f32.partialorder %v493, 0.0
      %vm564 = vcmp.ge.f32.partialorder %v544, 0.0
      %vm565 = vcmp.ge.f32.partialorder %v546, 0.0
      %vm566 = vcmp.ge.f32.partialorder %v497, 0.0
      %vm567 = vcmp.ge.f32.partialorder %v499, 0.0
      %vm568 = vcmp.ge.f32.partialorder %v550, 0.0
      %vm569 = vcmp.ge.f32.partialorder %v552, 0.0
      %vm570 = vcmp.ge.f32.partialorder %v501, 0.0
      %vm571 = vcmp.ge.f32.partialorder %v503, 0.0
      %vm572 = vcmp.ge.f32.partialorder %v554, 0.0
      %vm573 = vcmp.ge.f32.partialorder %v556, 0.0
      %v574 = vmul.f32 %v487, 0.2
      %v575 = vmul.f32 %v489, 0.2
      %v576 = vmul.f32 %v540, 0.2
      %v577 = vmul.f32 %v542, 0.2
      %v578 = vmul.f32 %v491, 0.2
      %v579 = vmul.f32 %v493, 0.2
      %v580 = vmul.f32 %v544, 0.2
      %v581 = vmul.f32 %v546, 0.2
      %v582 = vmul.f32 %v497, 0.2
      %v583 = vmul.f32 %v499, 0.2
      %v584 = vmul.f32 %v550, 0.2
      %v585 = vmul.f32 %v552, 0.2
      %v586 = vmul.f32 %v501, 0.2
      %v587 = vmul.f32 %v503, 0.2
      %v588 = vmul.f32 %v554, 0.2
      %v589 = vmul.f32 %v556, 0.2
      %v590 = vsel %vm558, %v487, %v574
      %v591 = vsel %vm559, %v489, %v575
      %v592 = vsel %vm560, %v540, %v576
      %v593 = vsel %vm561, %v542, %v577
      %v594 = vsel %vm562, %v491, %v578
      %v595 = vsel %vm563, %v493, %v579
      %v596 = vsel %vm564, %v544, %v580
      %v597 = vsel %vm565, %v546, %v581
      %v598 = vsel %vm566, %v497, %v582
      %v599 = vsel %vm567, %v499, %v583
      %v600 = vsel %vm568, %v550, %v584
      %v601 = vsel %vm569, %v552, %v585
      %v602 = vsel %vm570, %v501, %v586
      %v603 = vsel %vm571, %v503, %v587
      %v604 = vsel %vm572, %v554, %v588
      %v605 = vsel %vm573, %v556, %v589
      %606 = vst [vmem:[%s210] sm:$0xff] %v590
      %607 = vst [vmem:[%s210 + $0x8] sm:$0xff] %v591
      %608 = vst [vmem:[%s210 + $0x10] sm:$0xff] %v592
      %609 = vst [vmem:[%s210 + $0x18] sm:$0xff] %v593
      %610 = vst [vmem:[%s210 + $0x20] sm:$0xff] %v594
      %611 = vst [vmem:[%s210 + $0x28] sm:$0xff] %v595
      %612 = vst [vmem:[%s210 + $0x30] sm:$0xff] %v596
      %613 = vst [vmem:[%s210 + $0x38] sm:$0xff] %v597
      %614 = vst [vmem:[%s210 + $0x40] sm:$0xff] %v598
      %615 = vst [vmem:[%s210 + $0x48] sm:$0xff] %v599
      %616 = vst [vmem:[%s210 + $0x50] sm:$0xff] %v600
      %617 = vst [vmem:[%s210 + $0x58] sm:$0xff] %v601
      %618 = vst [vmem:[%s210 + $0x60] sm:$0xff] %v602
      %619 = vst [vmem:[%s210 + $0x68] sm:$0xff] %v603
      %620 = vst [vmem:[%s210 + $0x70] sm:$0xff] %v604
      %621 = vst [vmem:[%s210 + $0x78] sm:$0xff] %v605
      %s622 = smul.u32 4, %s19
      %p623 = scmp.lt.s32.totalorder %s18, 1
      %s624 = scalar_select %p623, %s18, 1
      %p625 = scmp.lt.s32.totalorder %s622, 7
      %s626 = scalar_select %p625, %s622, 7
      %s627 = smul.addr %s626, 4
      %s628 = smul.addr %s624, 32
      %s629 = sadd.s32 %s627, %s628
      %s630 = smul.addr %s629, 8
      %s631 = scalar_lea.vmem %s3, %s630
      // Predicated region
      $region33: #{skinning_net_forward.16} parent=31 // pred_check
        %p632 = pneg %p116
      $region34: #{skinning_net_forward.16} parent=31 // pred_check_branch
        %634 = sbr.rel (%p632) target = $region36
      $region35: #{skinning_net_forward.16} parent=31 // pred_region
        %s635 = smul.u32 4, %s19
      $region36: #{skinning_net_forward.16} parent=31 // pred_fallthru
        _
    $region32: #{skinning_net_forward.16} parent=5 // pred_fallthru
      _
    %p636 = scmp.le.s32.totalorder 2, %s9
    // Predicated region
    $region37: #{skinning_net_forward.16} parent=5 // pred_check
      %p637 = pneg %p636
    $region38: #{skinning_net_forward.16} parent=5 // pred_check_branch
      %639 = sbr.rel (%p637) target = $region40
    $region39: #{skinning_net_forward.16} parent=5 // pred_region
      %s640 = ssub.s32 %s9, 2
      // Predicated region
      $region41: #{skinning_net_forward.16} parent=39 // pred_check
        %p641 = pneg %p122
      $region42: #{skinning_net_forward.16} parent=39 // pred_check_branch
        %643 = sbr.rel (%p641) target = $region44
      $region43: #{skinning_net_forward.16} parent=39 // pred_region
        %s644 = smul.u32 4, %s21
        %p645 = scmp.lt.s32.totalorder %s20, 1
        %s646 = scalar_select %p645, %s20, 1
        %p647 = scmp.lt.s32.totalorder %s644, 7
        %s648 = scalar_select %p647, %s644, 7
        %s649 = smul.addr %s648, 4
        %s650 = smul.addr %s646, 32
        %s651 = sadd.s32 %s649, %s650
        %s652 = smul.addr %s651, 8
        %s653 = scalar_lea.vmem %s3, %s652
      $region44: #{skinning_net_forward.16} parent=39 // pred_fallthru
        _
    $region40: #{skinning_net_forward.16} parent=5 // pred_fallthru
      _
  $region6: #{skinning_net_forward.16} parent=0 // loop_footer
    %s13 = sadd.s32 1, %s9
  $region7: #{skinning_net_forward.16} parent=0 // loop_footer_branch
    %8 = sbr.rel target = $region3
  $region8: #{skinning_net_forward.16} parent=0 // loop_exit
    _

// kernel: skinning_net_forward.21
$region0: #{skinning_net_forward.21}
  #allocation0 [shape = 'u32[]', space=smem, size = 0x4, offset = 0x4, fixed_abs, tag = 'smem constant byte address 0x4 - core index']
  #allocation1 [shape = 'u32[144,128]{1,0:T(1,128)}', space=vmem, size = 0x12000, scoped, tag = 'internal scratch']
  #allocation2 [shape = 'f32[16,115]{1,0:T(8,128)}', space=vmem, size = 0x2000, scoped, tag = 'scratch operand']
  #allocation3 [shape = 'f32[16,1]{1,0:T(8,128)}', space=vmem, size = 0x2000, scoped, tag = 'scratch operand']
  %s0 = inlined_call_operand.vmem [shape: bf16[2,16,128], index: 0, kind: input, shape index: {}]
  %s1 = inlined_call_operand.vmem [shape: bf16[2,128,115], index: 1, kind: input, shape index: {}]
  %s2 = inlined_call_operand.vmem [shape: f32[2,16,115], index: 2, kind: output, shape index: {}]
  %s3 = sld [smem:[#allocation0]]
  $region49: #{skinning_net_forward.21} parent=0
    _
  %s5 = ssub.s32 1, %s3
  %s6 = scalar_select 0, %s5, %s3
  loop: start=0, step=1, limit=4
  $region2: #{skinning_net_forward.21} parent=0 // loop_pre_header
    _
  $region3: #{skinning_net_forward.21} parent=0 // loop_header
    %s8 = sphi 0, %s12
    %p9 = scmp.ge.s32.totalorder %s8, 4
    %s15 = sphi 0, %s27
    %s16 = sphi 0, %s23
    %s17 = sphi 0, %s15
    %s18 = sphi 0, %s16
    %s19 = sphi 0, %s17
    %s20 = sphi 0, %s18
    %s32 = sphi 0, %s34
    %s35 = sphi 0, %s32
    %s36 = sphi 0, %s35
    %s52 = sphi 0, %s36
    %s60 = sphi 0, %s62
    %s63 = sphi 0, %s60
    %s64 = sphi 0, %s63
    %s80 = sphi 0, %s64
    %s86 = sphi 0, %s88
    %s89 = sphi 0, %s86
    %s90 = sphi 0, %s89
    %s106 = sphi 0, %s90
  $region4: #{skinning_net_forward.21} parent=0 // loop_header_branch
    %11 = sbr.rel (%p9) target = $region8
  $region5: #{skinning_net_forward.21} parent=0 // loop_body
    %s13 = ssub.s32 %s8, 1
    %s14 = ssub.s32 %s8, 2
    %s21 = sadd.s32 1, %s16
    %p22 = scmp.ge.s32.totalorder %s21, 1
    %s23 = scalar_select %p22, 0, %s21
    %s24 = sadd.s32 1, %s15
    %s25 = scalar_select %p22, %s24, %s15
    %p26 = scmp.ge.s32.totalorder %s25, 2
    %s27 = scalar_select %p26, 0, %s25
    %s28 = ssub.s32 %s15, %s27
    %s29 = ssub.s32 %s16, %s23
    %s30 = sor.u32 %s28, %s29
    %p31 = scmp.eq.s32.totalorder %s30, 0
    %s33 = sadd.s32 %s32, 1
    %s34 = scalar_select %p31, %s32, %s33
    %p37 = pneg %p31
    %p38 = scmp.eq.s32.totalorder %s8, 1
    %p39 = por %p37, %p38
    %p40 = scmp.ne.s32.totalorder %s32, %s35
    %p41 = scmp.eq.s32.totalorder %s8, 0
    %p42 = por %p40, %p41
    %p43 = scmp.ne.s32.totalorder %s32, %s35
    %p44 = scmp.eq.s32.totalorder %s13, 1
    %p45 = por %p43, %p44
    %p46 = scmp.ne.s32.totalorder %s35, %s36
    %p47 = scmp.eq.s32.totalorder %s13, 0
    %p48 = por %p46, %p47
    %p49 = scmp.ne.s32.totalorder %s35, %s36
    %p50 = scmp.eq.s32.totalorder %s14, 1
    %p51 = por %p49, %p50
    %p53 = scmp.ne.s32.totalorder %s36, %s52
    %p54 = scmp.eq.s32.totalorder %s14, 0
    %p55 = por %p53, %p54
    %s56 = ssub.s32 %s15, %s27
    %s57 = ssub.s32 %s16, %s23
    %s58 = sor.u32 %s56, %s57
    %p59 = scmp.eq.s32.totalorder %s58, 0
    %s61 = sadd.s32 %s60, 1
    %s62 = scalar_select %p59, %s60, %s61
    %p65 = pneg %p59
    %p66 = scmp.eq.s32.totalorder %s8, 1
    %p67 = por %p65, %p66
    %p68 = scmp.ne.s32.totalorder %s60, %s63
    %p69 = scmp.eq.s32.totalorder %s8, 0
    %p70 = por %p68, %p69
    %p71 = scmp.ne.s32.totalorder %s60, %s63
    %p72 = scmp.eq.s32.totalorder %s13, 1
    %p73 = por %p71, %p72
    %p74 = scmp.ne.s32.totalorder %s63, %s64
    %p75 = scmp.eq.s32.totalorder %s13, 0
    %p76 = por %p74, %p75
    %p77 = scmp.ne.s32.totalorder %s63, %s64
    %p78 = scmp.eq.s32.totalorder %s14, 1
    %p79 = por %p77, %p78
    %p81 = scmp.ne.s32.totalorder %s64, %s80
    %p82 = scmp.eq.s32.totalorder %s14, 0
    %p83 = por %p81, %p82
    %s84 = ssub.s32 %s15, %s27
    %p85 = scmp.eq.s32.totalorder %s84, 0
    %s87 = sadd.s32 %s86, 1
    %s88 = scalar_select %p85, %s86, %s87
    %p91 = pneg %p85
    %p92 = scmp.eq.s32.totalorder %s8, 1
    %p93 = por %p91, %p92
    %p94 = scmp.ne.s32.totalorder %s86, %s89
    %p95 = scmp.eq.s32.totalorder %s8, 0
    %p96 = por %p94, %p95
    %p97 = scmp.ne.s32.totalorder %s86, %s89
    %p98 = scmp.eq.s32.totalorder %s13, 1
    %p99 = por %p97, %p98
    %p100 = scmp.ne.s32.totalorder %s89, %s90
    %p101 = scmp.eq.s32.totalorder %s13, 0
    %p102 = por %p100, %p101
    %p103 = scmp.ne.s32.totalorder %s89, %s90
    %p104 = scmp.eq.s32.totalorder %s14, 1
    %p105 = por %p103, %p104
    %p107 = scmp.ne.s32.totalorder %s90, %s106
    %p108 = scmp.eq.s32.totalorder %s14, 0
    %p109 = por %p107, %p108
    %p110 = scmp.le.s32.totalorder 1, %s8
    %p111 = scmp.lt.s32.totalorder %s8, 3
    %p112 = pnand %p110, %p111
    %p113 = pneg %p112
    // Predicated region
    $region9: #{skinning_net_forward.21} parent=5 // pred_check
      _
    $region10: #{skinning_net_forward.21} parent=5 // pred_check_branch
      %115 = sbr.rel (%p112) target = $region12
    $region11: #{skinning_net_forward.21} parent=5 // pred_region
      %s116 = ssub.s32 %s8, 1
    $region12: #{skinning_net_forward.21} parent=5 // pred_fallthru
      _
    %p117 = scmp.lt.s32.totalorder %s8, 2
    // Predicated region
    $region13: #{skinning_net_forward.21} parent=5 // pred_check
      %p118 = pneg %p117
    $region14: #{skinning_net_forward.21} parent=5 // pred_check_branch
      %120 = sbr.rel (%p118) target = $region16
    $region15: #{skinning_net_forward.21} parent=5 // pred_region
      // Predicated region
      $region17: #{skinning_net_forward.21} parent=15 // pred_check
        %p121 = pneg %p42
      $region18: #{skinning_net_forward.21} parent=15 // pred_check_branch
        %123 = sbr.rel (%p121) target = $region20
      $region19: #{skinning_net_forward.21} parent=15 // pred_region
        %p124 = scmp.lt.s32.totalorder %s15, 1
        %s125 = scalar_select %p124, %s15, 1
        %p126 = scmp.lt.s32.totalorder %s16, 0
        %s127 = scalar_select %p126, %s16, 0
        %s128 = smul.addr %s125, 2
        %s129 = sadd.s32 %s127, %s128
        %s130 = smul.addr %s129, 4
        %s131 = scalar_lea.vmem %s0, %s130
      $region20: #{skinning_net_forward.21} parent=15 // pred_fallthru
        _
      // Predicated region
      $region21: #{skinning_net_forward.21} parent=15 // pred_check
        %p132 = pneg %p70
      $region22: #{skinning_net_forward.21} parent=15 // pred_check_branch
        %134 = sbr.rel (%p132) target = $region24
      $region23: #{skinning_net_forward.21} parent=15 // pred_region
        %s135 = smul.u32 16, %s16
        %p136 = scmp.lt.s32.totalorder %s15, 1
        %s137 = scalar_select %p136, %s15, 1
        %p138 = scmp.lt.s32.totalorder %s135, 15
        %s139 = scalar_select %p138, %s135, 15
        %s140 = smul.addr %s137, 16
        %s141 = sadd.s32 %s139, %s140
        %s142 = smul.addr %s141, 4
        %s143 = scalar_lea.vmem %s1, %s142
        %s144 = smul.u32 16, %s16
      $region24: #{skinning_net_forward.21} parent=15 // pred_fallthru
        _
    $region16: #{skinning_net_forward.21} parent=5 // pred_fallthru
      _
    %p145 = scmp.le.s32.totalorder 1, %s8
    %p146 = scmp.lt.s32.totalorder %s8, 3
    %p147 = pnand %p145, %p146
    %p148 = pneg %p147
    // Predicated region
    $region25: #{skinning_net_forward.21} parent=5 // pred_check
      _
    $region26: #{skinning_net_forward.21} parent=5 // pred_check_branch
      %150 = sbr.rel (%p147) target = $region28
    $region27: #{skinning_net_forward.21} parent=5 // pred_region
      %s151 = ssub.s32 %s8, 1
      %p152 = scmp.lt.s32.totalorder %s17, 1
      %s153 = scalar_select %p152, %s17, 1
      %p154 = scmp.lt.s32.totalorder %s18, 0
      %s155 = scalar_select %p154, %s18, 0
      %s156 = smul.addr %s153, 2
      %s157 = sadd.s32 %s155, %s156
      %s158 = smul.addr %s157, 4
      %s159 = scalar_lea.vmem %s0, %s158
      %p160 = pneg %p48
      %p161 = pneg %p45
      %s162 = smul.u32 16, %s18
      %p163 = scmp.lt.s32.totalorder %s17, 1
      %s164 = scalar_select %p163, %s17, 1
      %p165 = scmp.lt.s32.totalorder %s162, 15
      %s166 = scalar_select %p165, %s162, 15
      %s167 = smul.addr %s164, 16
      %s168 = sadd.s32 %s166, %s167
      %s169 = smul.addr %s168, 4
      %s170 = scalar_lea.vmem %s1, %s169
      %p171 = pneg %p76
      %p172 = pneg %p73
      %p173 = pneg %p102
      %p174 = pneg %p99
      %p175 = scmp.lt.s32.totalorder %s17, 1
      %s176 = scalar_select %p175, %s17, 1
      %s177 = smul.addr %s176, 2
      %s178 = smul.addr %s177, 8
      %s179 = scalar_lea.vmem %s2, %s178
      %p180 = scmp.lt.s32.totalorder %s17, 1
      %s181 = scalar_select %p180, %s17, 1
      %p182 = scmp.lt.s32.totalorder %s18, 0
      %s183 = scalar_select %p182, %s18, 0
      %s184 = smul.addr %s181, 2
      %s185 = sadd.s32 %s183, %s184
      %s186 = smul.addr %s185, 4
      %s187 = scalar_lea.vmem %s0, %s186
      %s188 = smul.u32 16, %s18
      %p189 = scmp.lt.s32.totalorder %s17, 1
      %s190 = scalar_select %p189, %s17, 1
      %p191 = scmp.lt.s32.totalorder %s188, 15
      %s192 = scalar_select %p191, %s188, 15
      %s193 = smul.addr %s190, 16
      %s194 = sadd.s32 %s192, %s193
      %s195 = smul.addr %s194, 4
      %s196 = scalar_lea.vmem %s1, %s195
      %s197 = smul.u32 16, %s18
      %p198 = scmp.lt.s32.totalorder %s17, 1
      %s199 = scalar_select %p198, %s17, 1
      %s200 = smul.addr %s199, 2
      %s201 = smul.addr %s200, 8
      %s202 = scalar_lea.vmem %s2, %s201
      %p204 = scmp.eq.s32.totalorder %s18, 0
      // Predicated region
      $region29: #{skinning_net_forward.21} parent=27 // pred_check
        %p205 = pneg %p204
      $region30: #{skinning_net_forward.21} parent=27 // pred_check_branch
        %207 = sbr.rel (%p205) target = $region32
      $region31: #{skinning_net_forward.21} parent=27 // pred_region
        %vm208 = vcmask 941056
        %209 = vst.msk [vmem:[#allocation2] sm:$0xff] %vm208, 0.0
        %210 = vst.msk [vmem:[#allocation2 + $0x8] sm:$0xff] %vm208, 0.0
        %vm211 = vcmask 7168
        %212 = vst.msk [vmem:[#allocation3] sm:$0xff] %vm211, 0.0
        %213 = vst.msk [vmem:[#allocation3 + $0x8] sm:$0xff] %vm211, 0.0
      $region32: #{skinning_net_forward.21} parent=27 // pred_fallthru
        _
      %v214 = vld [vmem:[%s187] sm:$0xf]
      %v215 = vld [vmem:[%s187 + $0x4] sm:$0xf]
      %v216 = vld [vmem:[%s196] sm:$0xf]
      %v217 = vld [vmem:[%s196 + $0x4] sm:$0xf]
      %v218 = vld [vmem:[%s196 + $0x8] sm:$0xf]
      %v219 = vld [vmem:[%s196 + $0xc] sm:$0xf]
      %v220 = vld [vmem:[%s196 + $0x10] sm:$0xf]
      %v221 = vld [vmem:[%s196 + $0x14] sm:$0xf]
      %v222 = vld [vmem:[%s196 + $0x18] sm:$0xf]
      %v223 = vld [vmem:[%s196 + $0x1c] sm:$0xf]
      %v224 = vld [vmem:[%s196 + $0x20] sm:$0xf]
      %v225 = vld [vmem:[%s196 + $0x24] sm:$0xf]
      %v226 = vld [vmem:[%s196 + $0x28] sm:$0xf]
      %v227 = vld [vmem:[%s196 + $0x2c] sm:$0xf]
      %v228 = vld [vmem:[%s196 + $0x30] sm:$0xf]
      %v229 = vld [vmem:[%s196 + $0x34] sm:$0xf]
      %v230 = vld [vmem:[%s196 + $0x38] sm:$0xf]
      %v231 = vld [vmem:[%s196 + $0x3c] sm:$0xf]
      %v232 = vld [vmem:[#allocation2] sm:$0xff]
      %v233 = vld [vmem:[#allocation2 + $0x8] sm:$0xff]
      %v236 = vunpack.c.l.b16 %v214
      %v237 = vunpack.c.l.b16 %v215
      %v238 = vpack.c.b16 %v237, %v236
      %v256 = vunpack.c.l.b16 %v216
      %v257 = vunpack.c.l.b16 %v217
      %v258 = vunpack.c.l.b16 %v218
      %v259 = vunpack.c.l.b16 %v219
      %v260 = vunpack.c.l.b16 %v220
      %v261 = vunpack.c.l.b16 %v221
      %v262 = vunpack.c.l.b16 %v222
      %v263 = vunpack.c.l.b16 %v223
      %v264 = vunpack.c.l.b16 %v224
      %v265 = vunpack.c.l.b16 %v225
      %v266 = vunpack.c.l.b16 %v226
      %v267 = vunpack.c.l.b16 %v227
      %v268 = vunpack.c.l.b16 %v228
      %v269 = vunpack.c.l.b16 %v229
      %v270 = vunpack.c.l.b16 %v230
      %v271 = vunpack.c.l.b16 %v231
      %v272 = vpack.c.b16 %v257, %v256
      %v273 = vpack.c.b16 %v259, %v258
      %v274 = vpack.c.b16 %v261, %v260
      %v275 = vpack.c.b16 %v263, %v262
      %v276 = vpack.c.b16 %v265, %v264
      %v277 = vpack.c.b16 %v267, %v266
      %v278 = vpack.c.b16 %v269, %v268
      %v279 = vpack.c.b16 %v271, %v270
      %288 = vmatprep.subr.bf16.mxu0 0
      %289 = vmatpush1.bf16.msra.mxu0 %v272
      %290 = vmatprep.subr.bf16.mxu0 0
      %291 = vmatpush1.bf16.msra.mxu0 %v273
      %292 = vmatprep.subr.bf16.mxu0 0
      %293 = vmatpush1.bf16.msra.mxu0 %v274
      %294 = vmatprep.subr.bf16.mxu0 0
      %295 = vmatpush1.bf16.msra.mxu0 %v275
      %296 = vmatprep.subr.bf16.mxu0 0
      %297 = vmatpush1.bf16.msra.mxu0 %v276
      %298 = vmatprep.subr.bf16.mxu0 0
      %299 = vmatpush1.bf16.msra.mxu0 %v277
      %300 = vmatprep.subr.bf16.mxu0 0
      %301 = vmatpush1.bf16.msra.mxu0 %v278
      %302 = vmatprep.subr.bf16.mxu0 0
      %303 = vmatpush1.bf16.msra.mxu0 %v279
      %304 = vmatprep.subr.bf16.mxu0 0
      %305 = vmatpush1.bf16.msra.mxu0 0
      %306 = vmatprep.subr.bf16.mxu0 0
      %307 = vmatpush1.bf16.msra.mxu0 0
      %308 = vmatprep.subr.bf16.mxu0 0
      %309 = vmatpush1.bf16.msra.mxu0 0
      %310 = vmatprep.subr.bf16.mxu0 0
      %311 = vmatpush1.bf16.msra.mxu0 0
      %312 = vmatprep.subr.bf16.mxu0 0
      %313 = vmatpush1.bf16.msra.mxu0 0
      %314 = vmatprep.subr.bf16.mxu0 0
      %315 = vmatpush1.bf16.msra.mxu0 0
      %316 = vmatprep.subr.bf16.mxu0 0
      %317 = vmatpush1.bf16.msra.mxu0 0
      %318 = vmatprep.subr.bf16.mxu0 0
      %319 = vmatpush1.bf16.msra.mxu0 0
      %320 = vmatprep.mubr.bf16.mxu0 0
      %321 = vmatmul.mubr.bf16.gmra.mrb[0].mxu0 %v238
      %v322 = vpop.f32.mrb[0].mxu0
      %v323 = vadd.f32 0.0, %v322
      %v324 = vpop.f32.mrb[0].mxu0
      %v325 = vpop.f32.mrb[0].mxu0
      %v326 = vadd.f32 0.0, %v325
      %v327 = vpop.f32.mrb[0].mxu0
      %328 = vdwg.mxu0
      %v329 = vadd.f32 %v232, %v323
      %v330 = vadd.f32 %v233, %v326
      %vm331 = vcmask 941056
      %332 = vst.msk [vmem:[#allocation2] sm:$0xff] %vm331, %v329
      %333 = vst.msk [vmem:[#allocation2 + $0x8] sm:$0xff] %vm331, %v330
      %v334 = vld [vmem:[#allocation3] sm:$0xff]
      %v335 = vld [vmem:[#allocation3 + $0x8] sm:$0xff]
      %v336 = vunpack.c.l.bf16 %v214
      %v337 = vunpack.c.l.bf16 %v215
      %338 = vadd.xlane.f32.xlu0 %v336
      %v339 = vpop.xlane.xlu0 %338
      %340 = vadd.xlane.f32.xlu0 %v337
      %v341 = vpop.xlane.xlu0 %340
      %v342 = vadd.f32 %v334, %v339
      %v343 = vadd.f32 %v335, %v341
      %vm344 = vcmask 7168
      %345 = vst.msk [vmem:[#allocation3] sm:$0xff] %vm344, %v342
      %346 = vst.msk [vmem:[#allocation3 + $0x8] sm:$0xff] %vm344, %v343
      // Predicated region
      $region33: #{skinning_net_forward.21} parent=27 // pred_check
        %p347 = pneg %p204
      $region34: #{skinning_net_forward.21} parent=27 // pred_check_branch
        %349 = sbr.rel (%p347) target = $region36
      $region35: #{skinning_net_forward.21} parent=27 // pred_region
        %v350 = vld [vmem:[#allocation2] sm:$0xff]
        %v351 = vld [vmem:[#allocation2 + $0x8] sm:$0xff]
        %v352 = vld [vmem:[#allocation3] sm:$0xff]
        %v353 = vld [vmem:[#allocation3 + $0x8] sm:$0xff]
        %v354 = vadd.f32 %v352, 1e-05
        %v355 = vadd.f32 %v353, 1e-05
        %357 = vset.pattern.permute.xlu0 0
        %358 = vperm.xlu0 %357, %v354
        %v359 = vpop.permute.xlu0 %358
        %362 = vset.pattern.permute.xlu0 0
        %363 = vperm.xlu0 %362, %v355
        %v364 = vpop.permute.xlu0 %363
        %v366 = vrcp.pop %v359
        %v367 = vmul.f32 %v350, %v366
        %v368 = vrcp.pop %v364
        %v369 = vmul.f32 %v351, %v368
        %370 = vst.msk [vmem:[%s202] sm:$0xff] %vm331, %v367
        %371 = vst.msk [vmem:[%s202 + $0x8] sm:$0xff] %vm331, %v369
      $region36: #{skinning_net_forward.21} parent=27 // pred_fallthru
        _
      %p372 = scmp.lt.s32.totalorder %s17, 1
      %s373 = scalar_select %p372, %s17, 1
      %s374 = smul.addr %s373, 2
      %s375 = smul.addr %s374, 8
      %s376 = scalar_lea.vmem %s2, %s375
      // Predicated region
      $region37: #{skinning_net_forward.21} parent=27 // pred_check
        %p377 = pneg %p99
      $region38: #{skinning_net_forward.21} parent=27 // pred_check_branch
        %379 = sbr.rel (%p377) target = $region40
      $region39: #{skinning_net_forward.21} parent=27 // pred_region
        _
      $region40: #{skinning_net_forward.21} parent=27 // pred_fallthru
        _
    $region28: #{skinning_net_forward.21} parent=5 // pred_fallthru
      _
    %p380 = scmp.le.s32.totalorder 2, %s8
    // Predicated region
    $region41: #{skinning_net_forward.21} parent=5 // pred_check
      %p381 = pneg %p380
    $region42: #{skinning_net_forward.21} parent=5 // pred_check_branch
      %383 = sbr.rel (%p381) target = $region44
    $region43: #{skinning_net_forward.21} parent=5 // pred_region
      %s384 = ssub.s32 %s8, 2
      // Predicated region
      $region45: #{skinning_net_forward.21} parent=43 // pred_check
        %p385 = pneg %p105
      $region46: #{skinning_net_forward.21} parent=43 // pred_check_branch
        %387 = sbr.rel (%p385) target = $region48
      $region47: #{skinning_net_forward.21} parent=43 // pred_region
        %p388 = scmp.lt.s32.totalorder %s19, 1
        %s389 = scalar_select %p388, %s19, 1
        %s390 = smul.addr %s389, 2
        %s391 = smul.addr %s390, 8
        %s392 = scalar_lea.vmem %s2, %s391
      $region48: #{skinning_net_forward.21} parent=43 // pred_fallthru
        _
    $region44: #{skinning_net_forward.21} parent=5 // pred_fallthru
      _
  $region6: #{skinning_net_forward.21} parent=0 // loop_footer
    %s12 = sadd.s32 1, %s8
  $region7: #{skinning_net_forward.21} parent=0 // loop_footer_branch
    %7 = sbr.rel target = $region3
  $region8: #{skinning_net_forward.21} parent=0 // loop_exit
    _

// kernel: skinning_net_forward.22
$region0: #{skinning_net_forward.22}
  #allocation0 [shape = 'u32[]', space=smem, size = 0x4, offset = 0x4, fixed_abs, tag = 'smem constant byte address 0x4 - core index']
  #allocation1 [shape = 'u32[144,128]{1,0:T(1,128)}', space=vmem, size = 0x12000, scoped, tag = 'internal scratch']
  %s0 = inlined_call_operand.vmem [shape: bf16[2,16,115], index: 0, kind: input, shape index: {}]
  %s1 = inlined_call_operand.vmem [shape: bf16[115,256], index: 1, kind: input, shape index: {}]
  %s2 = inlined_call_operand.vmem [shape: bf16[115,256], index: 2, kind: input, shape index: {}]
  %s3 = inlined_call_operand.vmem [shape: f32[1,256], index: 3, kind: input, shape index: {}]
  %s4 = inlined_call_operand.vmem [shape: bf16[2,16,256], index: 4, kind: output, shape index: {0}]
  %s5 = inlined_call_operand.vmem [shape: f32[2,16,256], index: 5, kind: output, shape index: {1}]
  %6 = xla_tuple %s4, %s5
  %s7 = sld [smem:[#allocation0]]
  $region57: #{skinning_net_forward.22} parent=0
    _
  %s9 = ssub.s32 1, %s7
  %s10 = scalar_select 0, %s9, %s7
  loop: start=0, step=1, limit=4
  $region2: #{skinning_net_forward.22} parent=0 // loop_pre_header
    _
  $region3: #{skinning_net_forward.22} parent=0 // loop_header
    %s12 = sphi 0, %s16
    %p13 = scmp.ge.s32.totalorder %s12, 4
    %s19 = sphi 0, %s31
    %s20 = sphi 0, %s27
    %s21 = sphi 0, %s19
    %s22 = sphi 0, %s20
    %s23 = sphi 0, %s21
    %s24 = sphi 0, %s22
    %s36 = sphi 0, %s38
    %s39 = sphi 0, %s36
    %s40 = sphi 0, %s39
    %s56 = sphi 0, %s40
    %s60 = sphi 0, %s60
    %s62 = sphi 0, %s60
    %s63 = sphi 0, %s62
    %s77 = sphi 0, %s63
    %s81 = sphi 0, %s81
    %s83 = sphi 0, %s81
    %s84 = sphi 0, %s83
    %s98 = sphi 0, %s84
    %s102 = sphi 0, %s102
    %s104 = sphi 0, %s102
    %s105 = sphi 0, %s104
    %s119 = sphi 0, %s105
    %s127 = sphi 0, %s129
    %s130 = sphi 0, %s127
    %s131 = sphi 0, %s130
    %s147 = sphi 0, %s131
    %s155 = sphi 0, %s157
    %s158 = sphi 0, %s155
    %s159 = sphi 0, %s158
    %s175 = sphi 0, %s159
  $region4: #{skinning_net_forward.22} parent=0 // loop_header_branch
    %15 = sbr.rel (%p13) target = $region8
  $region5: #{skinning_net_forward.22} parent=0 // loop_body
    %s17 = ssub.s32 %s12, 1
    %s18 = ssub.s32 %s12, 2
    %s25 = sadd.s32 1, %s20
    %p26 = scmp.ge.s32.totalorder %s25, 1
    %s27 = scalar_select %p26, 0, %s25
    %s28 = sadd.s32 1, %s19
    %s29 = scalar_select %p26, %s28, %s19
    %p30 = scmp.ge.s32.totalorder %s29, 2
    %s31 = scalar_select %p30, 0, %s29
    %s32 = ssub.s32 %s19, %s31
    %s33 = ssub.s32 %s20, %s27
    %s34 = sor.u32 %s32, %s33
    %p35 = scmp.eq.s32.totalorder %s34, 0
    %s37 = sadd.s32 %s36, 1
    %s38 = scalar_select %p35, %s36, %s37
    %p41 = pneg %p35
    %p42 = scmp.eq.s32.totalorder %s12, 1
    %p43 = por %p41, %p42
    %p44 = scmp.ne.s32.totalorder %s36, %s39
    %p45 = scmp.eq.s32.totalorder %s12, 0
    %p46 = por %p44, %p45
    %p47 = scmp.ne.s32.totalorder %s36, %s39
    %p48 = scmp.eq.s32.totalorder %s17, 1
    %p49 = por %p47, %p48
    %p50 = scmp.ne.s32.totalorder %s39, %s40
    %p51 = scmp.eq.s32.totalorder %s17, 0
    %p52 = por %p50, %p51
    %p53 = scmp.ne.s32.totalorder %s39, %s40
    %p54 = scmp.eq.s32.totalorder %s18, 1
    %p55 = por %p53, %p54
    %p57 = scmp.ne.s32.totalorder %s40, %s56
    %p58 = scmp.eq.s32.totalorder %s18, 0
    %p59 = por %p57, %p58
    %s61 = sadd.s32 %s60, 1
    %p64 = scmp.eq.s32.totalorder %s12, 1
    %p65 = scmp.ne.s32.totalorder %s60, %s62
    %p66 = scmp.eq.s32.totalorder %s12, 0
    %p67 = por %p65, %p66
    %p68 = scmp.ne.s32.totalorder %s60, %s62
    %p69 = scmp.eq.s32.totalorder %s17, 1
    %p70 = por %p68, %p69
    %p71 = scmp.ne.s32.totalorder %s62, %s63
    %p72 = scmp.eq.s32.totalorder %s17, 0
    %p73 = por %p71, %p72
    %p74 = scmp.ne.s32.totalorder %s62, %s63
    %p75 = scmp.eq.s32.totalorder %s18, 1
    %p76 = por %p74, %p75
    %p78 = scmp.ne.s32.totalorder %s63, %s77
    %p79 = scmp.eq.s32.totalorder %s18, 0
    %p80 = por %p78, %p79
    %s82 = sadd.s32 %s81, 1
    %p85 = scmp.eq.s32.totalorder %s12, 1
    %p86 = scmp.ne.s32.totalorder %s81, %s83
    %p87 = scmp.eq.s32.totalorder %s12, 0
    %p88 = por %p86, %p87
    %p89 = scmp.ne.s32.totalorder %s81, %s83
    %p90 = scmp.eq.s32.totalorder %s17, 1
    %p91 = por %p89, %p90
    %p92 = scmp.ne.s32.totalorder %s83, %s84
    %p93 = scmp.eq.s32.totalorder %s17, 0
    %p94 = por %p92, %p93
    %p95 = scmp.ne.s32.totalorder %s83, %s84
    %p96 = scmp.eq.s32.totalorder %s18, 1
    %p97 = por %p95, %p96
    %p99 = scmp.ne.s32.totalorder %s84, %s98
    %p100 = scmp.eq.s32.totalorder %s18, 0
    %p101 = por %p99, %p100
    %s103 = sadd.s32 %s102, 1
    %p106 = scmp.eq.s32.totalorder %s12, 1
    %p107 = scmp.ne.s32.totalorder %s102, %s104
    %p108 = scmp.eq.s32.totalorder %s12, 0
    %p109 = por %p107, %p108
    %p110 = scmp.ne.s32.totalorder %s102, %s104
    %p111 = scmp.eq.s32.totalorder %s17, 1
    %p112 = por %p110, %p111
    %p113 = scmp.ne.s32.totalorder %s104, %s105
    %p114 = scmp.eq.s32.totalorder %s17, 0
    %p115 = por %p113, %p114
    %p116 = scmp.ne.s32.totalorder %s104, %s105
    %p117 = scmp.eq.s32.totalorder %s18, 1
    %p118 = por %p116, %p117
    %p120 = scmp.ne.s32.totalorder %s105, %s119
    %p121 = scmp.eq.s32.totalorder %s18, 0
    %p122 = por %p120, %p121
    %s123 = ssub.s32 %s19, %s31
    %s124 = ssub.s32 %s20, %s27
    %s125 = sor.u32 %s123, %s124
    %p126 = scmp.eq.s32.totalorder %s125, 0
    %s128 = sadd.s32 %s127, 1
    %s129 = scalar_select %p126, %s127, %s128
    %p132 = pneg %p126
    %p133 = scmp.eq.s32.totalorder %s12, 1
    %p134 = por %p132, %p133
    %p135 = scmp.ne.s32.totalorder %s127, %s130
    %p136 = scmp.eq.s32.totalorder %s12, 0
    %p137 = por %p135, %p136
    %p138 = scmp.ne.s32.totalorder %s127, %s130
    %p139 = scmp.eq.s32.totalorder %s17, 1
    %p140 = por %p138, %p139
    %p141 = scmp.ne.s32.totalorder %s130, %s131
    %p142 = scmp.eq.s32.totalorder %s17, 0
    %p143 = por %p141, %p142
    %p144 = scmp.ne.s32.totalorder %s130, %s131
    %p145 = scmp.eq.s32.totalorder %s18, 1
    %p146 = por %p144, %p145
    %p148 = scmp.ne.s32.totalorder %s131, %s147
    %p149 = scmp.eq.s32.totalorder %s18, 0
    %p150 = por %p148, %p149
    %s151 = ssub.s32 %s19, %s31
    %s152 = ssub.s32 %s20, %s27
    %s153 = sor.u32 %s151, %s152
    %p154 = scmp.eq.s32.totalorder %s153, 0
    %s156 = sadd.s32 %s155, 1
    %s157 = scalar_select %p154, %s155, %s156
    %p160 = pneg %p154
    %p161 = scmp.eq.s32.totalorder %s12, 1
    %p162 = por %p160, %p161
    %p163 = scmp.ne.s32.totalorder %s155, %s158
    %p164 = scmp.eq.s32.totalorder %s12, 0
    %p165 = por %p163, %p164
    %p166 = scmp.ne.s32.totalorder %s155, %s158
    %p167 = scmp.eq.s32.totalorder %s17, 1
    %p168 = por %p166, %p167
    %p169 = scmp.ne.s32.totalorder %s158, %s159
    %p170 = scmp.eq.s32.totalorder %s17, 0
    %p171 = por %p169, %p170
    %p172 = scmp.ne.s32.totalorder %s158, %s159
    %p173 = scmp.eq.s32.totalorder %s18, 1
    %p174 = por %p172, %p173
    %p176 = scmp.ne.s32.totalorder %s159, %s175
    %p177 = scmp.eq.s32.totalorder %s18, 0
    %p178 = por %p176, %p177
    %p179 = scmp.le.s32.totalorder 1, %s12
    %p180 = scmp.lt.s32.totalorder %s12, 3
    %p181 = pnand %p179, %p180
    %p182 = pneg %p181
    // Predicated region
    $region9: #{skinning_net_forward.22} parent=5 // pred_check
      _
    $region10: #{skinning_net_forward.22} parent=5 // pred_check_branch
      %184 = sbr.rel (%p181) target = $region12
    $region11: #{skinning_net_forward.22} parent=5 // pred_region
      %s185 = ssub.s32 %s12, 1
      // Predicated region
      $region13: #{skinning_net_forward.22} parent=11 // pred_check
        %p186 = pneg %p73
      $region14: #{skinning_net_forward.22} parent=11 // pred_check_branch
        %188 = sbr.rel (%p186) target = $region16
      $region15: #{skinning_net_forward.22} parent=11 // pred_region
        _
      $region16: #{skinning_net_forward.22} parent=11 // pred_fallthru
        _
      // Predicated region
      $region17: #{skinning_net_forward.22} parent=11 // pred_check
        %p189 = pneg %p94
      $region18: #{skinning_net_forward.22} parent=11 // pred_check_branch
        %191 = sbr.rel (%p189) target = $region20
      $region19: #{skinning_net_forward.22} parent=11 // pred_region
        _
      $region20: #{skinning_net_forward.22} parent=11 // pred_fallthru
        _
      // Predicated region
      $region21: #{skinning_net_forward.22} parent=11 // pred_check
        %p192 = pneg %p115
      $region22: #{skinning_net_forward.22} parent=11 // pred_check_branch
        %194 = sbr.rel (%p192) target = $region24
      $region23: #{skinning_net_forward.22} parent=11 // pred_region
        _
      $region24: #{skinning_net_forward.22} parent=11 // pred_fallthru
        _
    $region12: #{skinning_net_forward.22} parent=5 // pred_fallthru
      _
    %p195 = scmp.lt.s32.totalorder %s12, 2
    // Predicated region
    $region25: #{skinning_net_forward.22} parent=5 // pred_check
      %p196 = pneg %p195
    $region26: #{skinning_net_forward.22} parent=5 // pred_check_branch
      %198 = sbr.rel (%p196) target = $region28
    $region27: #{skinning_net_forward.22} parent=5 // pred_region
      // Predicated region
      $region29: #{skinning_net_forward.22} parent=27 // pred_check
        %p199 = pneg %p46
      $region30: #{skinning_net_forward.22} parent=27 // pred_check_branch
        %201 = sbr.rel (%p199) target = $region32
      $region31: #{skinning_net_forward.22} parent=27 // pred_region
        %s202 = smul.u32 2, %s20
        %p203 = scmp.lt.s32.totalorder %s19, 1
        %s204 = scalar_select %p203, %s19, 1
        %p205 = scmp.lt.s32.totalorder %s202, 1
        %s206 = scalar_select %p205, %s202, 1
        %s207 = smul.addr %s204, 2
        %s208 = sadd.s32 %s206, %s207
        %s209 = smul.addr %s208, 4
        %s210 = scalar_lea.vmem %s0, %s209
        %s211 = smul.u32 2, %s20
      $region32: #{skinning_net_forward.22} parent=27 // pred_fallthru
        _
    $region28: #{skinning_net_forward.22} parent=5 // pred_fallthru
      _
    %p212 = scmp.le.s32.totalorder 1, %s12
    %p213 = scmp.lt.s32.totalorder %s12, 3
    %p214 = pnand %p212, %p213
    %p215 = pneg %p214
    // Predicated region
    $region33: #{skinning_net_forward.22} parent=5 // pred_check
      _
    $region34: #{skinning_net_forward.22} parent=5 // pred_check_branch
      %217 = sbr.rel (%p214) target = $region36
    $region35: #{skinning_net_forward.22} parent=5 // pred_region
      %s218 = ssub.s32 %s12, 1
      %s219 = smul.u32 2, %s22
      %p220 = scmp.lt.s32.totalorder %s21, 1
      %s221 = scalar_select %p220, %s21, 1
      %p222 = scmp.lt.s32.totalorder %s219, 1
      %s223 = scalar_select %p222, %s219, 1
      %s224 = smul.addr %s221, 2
      %s225 = sadd.s32 %s223, %s224
      %s226 = smul.addr %s225, 4
      %s227 = scalar_lea.vmem %s0, %s226
      %p228 = pneg %p52
      %p229 = pneg %p49
      %p230 = pneg %p73
      %p231 = pneg %p70
      %p232 = pneg %p94
      %p233 = pneg %p91
      %p234 = pneg %p115
      %p235 = pneg %p112
      %p236 = pneg %p143
      %p237 = pneg %p140
      %s238 = smul.u32 2, %s22
      %p239 = scmp.lt.s32.totalorder %s21, 1
      %s240 = scalar_select %p239, %s21, 1
      %p241 = scmp.lt.s32.totalorder %s238, 1
      %s242 = scalar_select %p241, %s238, 1
      %s243 = smul.addr %s242, 2
      %s244 = smul.addr %s240, 4
      %s245 = sadd.s32 %s243, %s244
      %s246 = smul.addr %s245, 4
      %s247 = scalar_lea.vmem %s4, %s246
      %p248 = pneg %p171
      %p249 = pneg %p168
      %s250 = smul.u32 2, %s22
      %p251 = scmp.lt.s32.totalorder %s21, 1
      %s252 = scalar_select %p251, %s21, 1
      %p253 = scmp.lt.s32.totalorder %s250, 1
      %s254 = scalar_select %p253, %s250, 1
      %s255 = smul.addr %s254, 2
      %s256 = smul.addr %s252, 4
      %s257 = sadd.s32 %s255, %s256
      %s258 = smul.addr %s257, 8
      %s259 = scalar_lea.vmem %s5, %s258
      %s260 = smul.u32 2, %s22
      %p261 = scmp.lt.s32.totalorder %s21, 1
      %s262 = scalar_select %p261, %s21, 1
      %p263 = scmp.lt.s32.totalorder %s260, 1
      %s264 = scalar_select %p263, %s260, 1
      %s265 = smul.addr %s262, 2
      %s266 = sadd.s32 %s264, %s265
      %s267 = smul.addr %s266, 4
      %s268 = scalar_lea.vmem %s0, %s267
      %s269 = smul.u32 2, %s22
      %s270 = smul.u32 2, %s22
      %p271 = scmp.lt.s32.totalorder %s21, 1
      %s272 = scalar_select %p271, %s21, 1
      %p273 = scmp.lt.s32.totalorder %s270, 1
      %s274 = scalar_select %p273, %s270, 1
      %s275 = smul.addr %s274, 2
      %s276 = smul.addr %s272, 4
      %s277 = sadd.s32 %s275, %s276
      %s278 = smul.addr %s277, 4
      %s279 = scalar_lea.vmem %s4, %s278
      %s280 = smul.u32 2, %s22
      %s281 = smul.u32 2, %s22
      %p282 = scmp.lt.s32.totalorder %s21, 1
      %s283 = scalar_select %p282, %s21, 1
      %p284 = scmp.lt.s32.totalorder %s281, 1
      %s285 = scalar_select %p284, %s281, 1
      %s286 = smul.addr %s285, 2
      %s287 = smul.addr %s283, 4
      %s288 = sadd.s32 %s286, %s287
      %s289 = smul.addr %s288, 8
      %s290 = scalar_lea.vmem %s5, %s289
      %s291 = smul.u32 2, %s22
      %v293 = vld [vmem:[%s268] sm:$0xf]
      %v294 = vld [vmem:[%s268 + $0x4] sm:$0xf]
      %v295 = vld [vmem:[%s1] sm:$0xff]
      %v296 = vld [vmem:[%s1 + $0x8] sm:$0xff]
      %v297 = vld [vmem:[%s1 + $0x10] sm:$0xff]
      %v298 = vld [vmem:[%s1 + $0x18] sm:$0xff]
      %v299 = vld [vmem:[%s1 + $0x20] sm:$0xff]
      %v300 = vld [vmem:[%s1 + $0x28] sm:$0xff]
      %v301 = vld [vmem:[%s1 + $0x30] sm:$0xff]
      %v302 = vld [vmem:[%s1 + $0x38] sm:$0xff]
      %v303 = vld [vmem:[%s1 + $0x40] sm:$0xff]
      %v304 = vld [vmem:[%s1 + $0x48] sm:$0xff]
      %v305 = vld [vmem:[%s1 + $0x50] sm:$0xff]
      %v306 = vld [vmem:[%s1 + $0x58] sm:$0xff]
      %v307 = vld [vmem:[%s1 + $0x60] sm:$0xff]
      %v308 = vld [vmem:[%s1 + $0x68] sm:$0xff]
      %v309 = vld [vmem:[%s1 + $0x70] sm:$0x33]
      %v312 = vunpack.c.l.b16 %v293
      %v313 = vunpack.c.l.b16 %v294
      %v314 = vpack.c.b16 %v313, %v312
      %v330 = vunpack.c.l.b16 %v295
      %v331 = vunpack.c.h.b16 %v295
      %v332 = vunpack.c.l.b16 %v296
      %v333 = vunpack.c.h.b16 %v296
      %v334 = vunpack.c.l.b16 %v297
      %v335 = vunpack.c.h.b16 %v297
      %v336 = vunpack.c.l.b16 %v298
      %v337 = vunpack.c.h.b16 %v298
      %v338 = vunpack.c.l.b16 %v299
      %v339 = vunpack.c.h.b16 %v299
      %v340 = vunpack.c.l.b16 %v300
      %v341 = vunpack.c.h.b16 %v300
      %v342 = vunpack.c.l.b16 %v301
      %v343 = vunpack.c.h.b16 %v301
      %v344 = vunpack.c.l.b16 %v302
      %v345 = vunpack.c.h.b16 %v302
      %v346 = vunpack.c.l.b16 %v303
      %v347 = vunpack.c.h.b16 %v303
      %v348 = vunpack.c.l.b16 %v304
      %v349 = vunpack.c.h.b16 %v304
      %v350 = vunpack.c.l.b16 %v305
      %v351 = vunpack.c.h.b16 %v305
      %v352 = vunpack.c.l.b16 %v306
      %v353 = vunpack.c.h.b16 %v306
      %v354 = vunpack.c.l.b16 %v307
      %v355 = vunpack.c.h.b16 %v307
      %v356 = vunpack.c.l.b16 %v308
      %v357 = vunpack.c.h.b16 %v308
      %v358 = vunpack.c.l.b16 %v309
      %v359 = vunpack.c.h.b16 %v309
      %v360 = vpack.c.b16 %v332, %v330
      %v361 = vpack.c.b16 %v333, %v331
      %v362 = vpack.c.b16 %v336, %v334
      %v363 = vpack.c.b16 %v337, %v335
      %v364 = vpack.c.b16 %v340, %v338
      %v365 = vpack.c.b16 %v341, %v339
      %v366 = vpack.c.b16 %v344, %v342
      %v367 = vpack.c.b16 %v345, %v343
      %v368 = vpack.c.b16 %v348, %v346
      %v369 = vpack.c.b16 %v349, %v347
      %v370 = vpack.c.b16 %v352, %v350
      %v371 = vpack.c.b16 %v353, %v351
      %v372 = vpack.c.b16 %v356, %v354
      %v373 = vpack.c.b16 %v357, %v355
      %v374 = vpack.c.b16 %v358, %v358
      %v375 = vpack.c.b16 %v359, %v359
      %vm390 = vcmask 941056
      %v392 = vsel %vm390, %v314, 0
      %vm394 = vcmask 1040384
      %vm395 = vcmask 1041408
      %v396 = vsel %vm394, 4294967295, 65535
      %v397 = vsel %vm395, %v396, 0
      %v399 = vand.u32 %v374, %v397
      %v402 = vand.u32 %v375, %v397
      %404 = vmatprep.subr.bf16.mxu0 %v361
      %405 = vmatpush1.bf16.msra.mxu0 %v360
      %406 = vmatprep.subr.bf16.mxu0 %v363
      %407 = vmatpush1.bf16.msra.mxu0 %v362
      %408 = vmatprep.subr.bf16.mxu0 %v365
      %409 = vmatpush1.bf16.msra.mxu0 %v364
      %410 = vmatprep.subr.bf16.mxu0 %v367
      %411 = vmatpush1.bf16.msra.mxu0 %v366
      %412 = vmatprep.subr.bf16.mxu0 %v369
      %413 = vmatpush1.bf16.msra.mxu0 %v368
      %414 = vmatprep.subr.bf16.mxu0 %v371
      %415 = vmatpush1.bf16.msra.mxu0 %v370
      %416 = vmatprep.subr.bf16.mxu0 %v373
      %417 = vmatpush1.bf16.msra.mxu0 %v372
      %418 = vmatprep.subr.bf16.mxu0 %v402
      %419 = vmatpush1.bf16.msra.mxu0 %v399
      %420 = vmatprep.subr.bf16.mxu0 0
      %421 = vmatpush1.bf16.msra.mxu0 0
      %422 = vmatprep.subr.bf16.mxu0 0
      %423 = vmatpush1.bf16.msra.mxu0 0
      %424 = vmatprep.subr.bf16.mxu0 0
      %425 = vmatpush1.bf16.msra.mxu0 0
      %426 = vmatprep.subr.bf16.mxu0 0
      %427 = vmatpush1.bf16.msra.mxu0 0
      %428 = vmatprep.subr.bf16.mxu0 0
      %429 = vmatpush1.bf16.msra.mxu0 0
      %430 = vmatprep.subr.bf16.mxu0 0
      %431 = vmatpush1.bf16.msra.mxu0 0
      %432 = vmatprep.subr.bf16.mxu0 0
      %433 = vmatpush1.bf16.msra.mxu0 0
      %434 = vmatprep.subr.bf16.mxu0 0
      %435 = vmatpush1.bf16.msra.mxu0 0
      %436 = vmatprep.mubr.bf16.mxu0 0
      %437 = vmatmul.mubr.bf16.gmra.mrb[0].mxu0 %v392
      %v438 = vpop.f32.mrb[0].mxu0
      %v439 = vadd.f32 0.0, %v438
      %v440 = vpop.f32.mrb[0].mxu0
      %v441 = vadd.f32 0.0, %v440
      %v442 = vpop.f32.mrb[0].mxu0
      %v443 = vadd.f32 0.0, %v442
      %v444 = vpop.f32.mrb[0].mxu0
      %v445 = vadd.f32 0.0, %v444
      %446 = vdwg.mxu0
      %v447 = vld [vmem:[%s2] sm:$0xff]
      %v448 = vld [vmem:[%s2 + $0x8] sm:$0xff]
      %v449 = vld [vmem:[%s2 + $0x10] sm:$0xff]
      %v450 = vld [vmem:[%s2 + $0x18] sm:$0xff]
      %v451 = vld [vmem:[%s2 + $0x20] sm:$0xff]
      %v452 = vld [vmem:[%s2 + $0x28] sm:$0xff]
      %v453 = vld [vmem:[%s2 + $0x30] sm:$0xff]
      %v454 = vld [vmem:[%s2 + $0x38] sm:$0xff]
      %v455 = vld [vmem:[%s2 + $0x40] sm:$0xff]
      %v456 = vld [vmem:[%s2 + $0x48] sm:$0xff]
      %v457 = vld [vmem:[%s2 + $0x50] sm:$0xff]
      %v458 = vld [vmem:[%s2 + $0x58] sm:$0xff]
      %v459 = vld [vmem:[%s2 + $0x60] sm:$0xff]
      %v460 = vld [vmem:[%s2 + $0x68] sm:$0xff]
      %v461 = vld [vmem:[%s2 + $0x70] sm:$0x33]
      %v462 = vld [vmem:[%s3] sm:$0x3]
      %v464 = vlaneseq
      %v465 = vshrl.u32 %v464, 7
      %v466 = vsub.s32 0, %v465
      %v467 = vrot.slane %v462, %v466
      %v468 = vlaneseq
      %v469 = vshrl.u32 %v468, 7
      %v470 = vsub.s32 1, %v469
      %v471 = vrot.slane %v462, %v470
      %v489 = vunpack.c.l.b16 %v447
      %v490 = vunpack.c.h.b16 %v447
      %v491 = vunpack.c.l.b16 %v448
      %v492 = vunpack.c.h.b16 %v448
      %v493 = vunpack.c.l.b16 %v449
      %v494 = vunpack.c.h.b16 %v449
      %v495 = vunpack.c.l.b16 %v450
      %v496 = vunpack.c.h.b16 %v450
      %v497 = vunpack.c.l.b16 %v451
      %v498 = vunpack.c.h.b16 %v451
      %v499 = vunpack.c.l.b16 %v452
      %v500 = vunpack.c.h.b16 %v452
      %v501 = vunpack.c.l.b16 %v453
      %v502 = vunpack.c.h.b16 %v453
      %v503 = vunpack.c.l.b16 %v454
      %v504 = vunpack.c.h.b16 %v454
      %v505 = vunpack.c.l.b16 %v455
      %v506 = vunpack.c.h.b16 %v455
      %v507 = vunpack.c.l.b16 %v456
      %v508 = vunpack.c.h.b16 %v456
      %v509 = vunpack.c.l.b16 %v457
      %v510 = vunpack.c.h.b16 %v457
      %v511 = vunpack.c.l.b16 %v458
      %v512 = vunpack.c.h.b16 %v458
      %v513 = vunpack.c.l.b16 %v459
      %v514 = vunpack.c.h.b16 %v459
      %v515 = vunpack.c.l.b16 %v460
      %v516 = vunpack.c.h.b16 %v460
      %v517 = vunpack.c.l.b16 %v461
      %v518 = vunpack.c.h.b16 %v461
      %v519 = vpack.c.b16 %v491, %v489
      %v520 = vpack.c.b16 %v492, %v490
      %v521 = vpack.c.b16 %v495, %v493
      %v522 = vpack.c.b16 %v496, %v494
      %v523 = vpack.c.b16 %v499, %v497
      %v524 = vpack.c.b16 %v500, %v498
      %v525 = vpack.c.b16 %v503, %v501
      %v526 = vpack.c.b16 %v504, %v502
      %v527 = vpack.c.b16 %v507, %v505
      %v528 = vpack.c.b16 %v508, %v506
      %v529 = vpack.c.b16 %v511, %v509
      %v530 = vpack.c.b16 %v512, %v510
      %v531 = vpack.c.b16 %v515, %v513
      %v532 = vpack.c.b16 %v516, %v514
      %v533 = vpack.c.b16 %v517, %v517
      %v534 = vpack.c.b16 %v518, %v518
      %v550 = vand.u32 %v533, %v397
      %v553 = vand.u32 %v534, %v397
      %555 = vmatprep.subr.bf16.mxu0 %v520
      %556 = vmatpush1.bf16.msra.mxu0 %v519
      %557 = vmatprep.subr.bf16.mxu0 %v522
      %558 = vmatpush1.bf16.msra.mxu0 %v521
      %559 = vmatprep.subr.bf16.mxu0 %v524
      %560 = vmatpush1.bf16.msra.mxu0 %v523
      %561 = vmatprep.subr.bf16.mxu0 %v526
      %562 = vmatpush1.bf16.msra.mxu0 %v525
      %563 = vmatprep.subr.bf16.mxu0 %v528
      %564 = vmatpush1.bf16.msra.mxu0 %v527
      %565 = vmatprep.subr.bf16.mxu0 %v530
      %566 = vmatpush1.bf16.msra.mxu0 %v529
      %567 = vmatprep.subr.bf16.mxu0 %v532
      %568 = vmatpush1.bf16.msra.mxu0 %v531
      %569 = vmatprep.subr.bf16.mxu0 %v553
      %570 = vmatpush1.bf16.msra.mxu0 %v550
      %571 = vmatprep.subr.bf16.mxu0 0
      %572 = vmatpush1.bf16.msra.mxu0 0
      %573 = vmatprep.subr.bf16.mxu0 0
      %574 = vmatpush1.bf16.msra.mxu0 0
      %575 = vmatprep.subr.bf16.mxu0 0
      %576 = vmatpush1.bf16.msra.mxu0 0
      %577 = vmatprep.subr.bf16.mxu0 0
      %578 = vmatpush1.bf16.msra.mxu0 0
      %579 = vmatprep.subr.bf16.mxu0 0
      %580 = vmatpush1.bf16.msra.mxu0 0
      %581 = vmatprep.subr.bf16.mxu0 0
      %582 = vmatpush1.bf16.msra.mxu0 0
      %583 = vmatprep.subr.bf16.mxu0 0
      %584 = vmatpush1.bf16.msra.mxu0 0
      %585 = vmatprep.subr.bf16.mxu0 0
      %586 = vmatpush1.bf16.msra.mxu0 0
      %587 = vmatprep.mubr.bf16.mxu0 0
      %588 = vmatmul.mubr.bf16.gmra.mrb[0].mxu0 %v392
      %v589 = vpop.f32.mrb[0].mxu0
      %v590 = vadd.f32 %v467, %v589
      %v591 = vpop.f32.mrb[0].mxu0
      %v592 = vadd.f32 %v471, %v591
      %v593 = vpop.f32.mrb[0].mxu0
      %v594 = vadd.f32 %v467, %v593
      %v595 = vpop.f32.mrb[0].mxu0
      %v596 = vadd.f32 %v471, %v595
      %597 = vdwg.mxu0
      %v598 = vpack.c.bf16 %v443, %v439
      %v599 = vpack.c.bf16 %v445, %v441
      %v602 = vunpack.c.l.b16 %v598
      %v603 = vunpack.c.l.b16 %v599
      %v604 = vunpack.c.h.b16 %v598
      %v605 = vunpack.c.h.b16 %v599
      %v606 = vpack.c.b16 %v603, %v602
      %v607 = vpack.c.b16 %v605, %v604
      %610 = vst [vmem:[%s279] sm:$0xff] %v606
      %611 = vst [vmem:[%s279 + $0x8] sm:$0xff] %v607
      %612 = vst [vmem:[%s290] sm:$0xff] %v590
      %613 = vst [vmem:[%s290 + $0x8] sm:$0xff] %v592
      %614 = vst [vmem:[%s290 + $0x10] sm:$0xff] %v594
      %615 = vst [vmem:[%s290 + $0x18] sm:$0xff] %v596
      %s616 = smul.u32 2, %s22
      %p617 = scmp.lt.s32.totalorder %s21, 1
      %s618 = scalar_select %p617, %s21, 1
      %p619 = scmp.lt.s32.totalorder %s616, 1
      %s620 = scalar_select %p619, %s616, 1
      %s621 = smul.addr %s620, 2
      %s622 = smul.addr %s618, 4
      %s623 = sadd.s32 %s621, %s622
      %s624 = smul.addr %s623, 4
      %s625 = scalar_lea.vmem %s4, %s624
      %s626 = smul.u32 2, %s22
      %p627 = scmp.lt.s32.totalorder %s21, 1
      %s628 = scalar_select %p627, %s21, 1
      %p629 = scmp.lt.s32.totalorder %s626, 1
      %s630 = scalar_select %p629, %s626, 1
      %s631 = smul.addr %s630, 2
      %s632 = smul.addr %s628, 4
      %s633 = sadd.s32 %s631, %s632
      %s634 = smul.addr %s633, 8
      %s635 = scalar_lea.vmem %s5, %s634
      // Predicated region
      $region37: #{skinning_net_forward.22} parent=35 // pred_check
        %p636 = pneg %p140
      $region38: #{skinning_net_forward.22} parent=35 // pred_check_branch
        %638 = sbr.rel (%p636) target = $region40
      $region39: #{skinning_net_forward.22} parent=35 // pred_region
        %s639 = smul.u32 2, %s22
      $region40: #{skinning_net_forward.22} parent=35 // pred_fallthru
        _
      // Predicated region
      $region41: #{skinning_net_forward.22} parent=35 // pred_check
        %p640 = pneg %p168
      $region42: #{skinning_net_forward.22} parent=35 // pred_check_branch
        %642 = sbr.rel (%p640) target = $region44
      $region43: #{skinning_net_forward.22} parent=35 // pred_region
        %s643 = smul.u32 2, %s22
      $region44: #{skinning_net_forward.22} parent=35 // pred_fallthru
        _
    $region36: #{skinning_net_forward.22} parent=5 // pred_fallthru
      _
    %p644 = scmp.le.s32.totalorder 2, %s12
    // Predicated region
    $region45: #{skinning_net_forward.22} parent=5 // pred_check
      %p645 = pneg %p644
    $region46: #{skinning_net_forward.22} parent=5 // pred_check_branch
      %647 = sbr.rel (%p645) target = $region48
    $region47: #{skinning_net_forward.22} parent=5 // pred_region
      %s648 = ssub.s32 %s12, 2
      // Predicated region
      $region49: #{skinning_net_forward.22} parent=47 // pred_check
        %p649 = pneg %p146
      $region50: #{skinning_net_forward.22} parent=47 // pred_check_branch
        %651 = sbr.rel (%p649) target = $region52
      $region51: #{skinning_net_forward.22} parent=47 // pred_region
        %s652 = smul.u32 2, %s24
        %p653 = scmp.lt.s32.totalorder %s23, 1
        %s654 = scalar_select %p653, %s23, 1
        %p655 = scmp.lt.s32.totalorder %s652, 1
        %s656 = scalar_select %p655, %s652, 1
        %s657 = smul.addr %s656, 2
        %s658 = smul.addr %s654, 4
        %s659 = sadd.s32 %s657, %s658
        %s660 = smul.addr %s659, 4
        %s661 = scalar_lea.vmem %s4, %s660
      $region52: #{skinning_net_forward.22} parent=47 // pred_fallthru
        _
      // Predicated region
      $region53: #{skinning_net_forward.22} parent=47 // pred_check
        %p662 = pneg %p174
      $region54: #{skinning_net_forward.22} parent=47 // pred_check_branch
        %664 = sbr.rel (%p662) target = $region56
      $region55: #{skinning_net_forward.22} parent=47 // pred_region
        %s665 = smul.u32 2, %s24
        %p666 = scmp.lt.s32.totalorder %s23, 1
        %s667 = scalar_select %p666, %s23, 1
        %p668 = scmp.lt.s32.totalorder %s665, 1
        %s669 = scalar_select %p668, %s665, 1
        %s670 = smul.addr %s669, 2
        %s671 = smul.addr %s667, 4
        %s672 = sadd.s32 %s670, %s671
        %s673 = smul.addr %s672, 8
        %s674 = scalar_lea.vmem %s5, %s673
      $region56: #{skinning_net_forward.22} parent=47 // pred_fallthru
        _
    $region48: #{skinning_net_forward.22} parent=5 // pred_fallthru
      _
  $region6: #{skinning_net_forward.22} parent=0 // loop_footer
    %s16 = sadd.s32 1, %s12
  $region7: #{skinning_net_forward.22} parent=0 // loop_footer_branch
    %11 = sbr.rel target = $region3
  $region8: #{skinning_net_forward.22} parent=0 // loop_exit
    _

// kernel: skinning_net_forward.17
$region0: #{skinning_net_forward.17}
  #allocation0 [shape = 'u32[]', space=smem, size = 0x4, offset = 0x4, fixed_abs, tag = 'smem constant byte address 0x4 - core index']
  #allocation1 [shape = 'u32[144,128]{1,0:T(1,128)}', space=vmem, size = 0x12000, scoped, tag = 'internal scratch']
  %s0 = inlined_call_operand.vmem [shape: bf16[2,64,115], index: 0, kind: input, shape index: {}]
  %s1 = inlined_call_operand.vmem [shape: f32[2,1,1024], index: 1, kind: input, shape index: {}]
  %s2 = inlined_call_operand.vmem [shape: bf16[115,1024], index: 2, kind: input, shape index: {}]
  %s3 = inlined_call_operand.vmem [shape: f32[1,1024], index: 3, kind: input, shape index: {}]
  %s4 = inlined_call_operand.vmem [shape: bf16[1024,256], index: 4, kind: input, shape index: {}]
  %s5 = inlined_call_operand.vmem [shape: f32[1,256], index: 5, kind: input, shape index: {}]
  %s6 = inlined_call_operand.vmem [shape: bf16[256,64], index: 6, kind: input, shape index: {}]
  %s7 = inlined_call_operand.vmem [shape: f32[1,64], index: 7, kind: input, shape index: {}]
  %s8 = inlined_call_operand.vmem [shape: bf16[64,128], index: 8, kind: input, shape index: {}]
  %s9 = inlined_call_operand.vmem [shape: f32[1,128], index: 9, kind: input, shape index: {}]
  %s10 = inlined_call_operand.vmem [shape: f32[2,64,128], index: 10, kind: output, shape index: {}]
  %s11 = sld [smem:[#allocation0]]
  $region73: #{skinning_net_forward.17} parent=0
    _
  %s13 = ssub.s32 1, %s11
  %s14 = scalar_select 0, %s13, %s11
  loop: start=0, step=1, limit=6
  $region2: #{skinning_net_forward.17} parent=0 // loop_pre_header
    _
  $region3: #{skinning_net_forward.17} parent=0 // loop_header
    %s16 = sphi 0, %s20
    %p17 = scmp.ge.s32.totalorder %s16, 6
    %s23 = sphi 0, %s35
    %s24 = sphi 0, %s31
    %s25 = sphi 0, %s23
    %s26 = sphi 0, %s24
    %s27 = sphi 0, %s25
    %s28 = sphi 0, %s26
    %s40 = sphi 0, %s42
    %s43 = sphi 0, %s40
    %s44 = sphi 0, %s43
    %s60 = sphi 0, %s44
    %s66 = sphi 0, %s68
    %s69 = sphi 0, %s66
    %s70 = sphi 0, %s69
    %s86 = sphi 0, %s70
    %s90 = sphi 0, %s90
    %s92 = sphi 0, %s90
    %s93 = sphi 0, %s92
    %s107 = sphi 0, %s93
    %s111 = sphi 0, %s111
    %s113 = sphi 0, %s111
    %s114 = sphi 0, %s113
    %s128 = sphi 0, %s114
    %s132 = sphi 0, %s132
    %s134 = sphi 0, %s132
    %s135 = sphi 0, %s134
    %s149 = sphi 0, %s135
    %s153 = sphi 0, %s153
    %s155 = sphi 0, %s153
    %s156 = sphi 0, %s155
    %s170 = sphi 0, %s156
    %s174 = sphi 0, %s174
    %s176 = sphi 0, %s174
    %s177 = sphi 0, %s176
    %s191 = sphi 0, %s177
    %s195 = sphi 0, %s195
    %s197 = sphi 0, %s195
    %s198 = sphi 0, %s197
    %s212 = sphi 0, %s198
    %s216 = sphi 0, %s216
    %s218 = sphi 0, %s216
    %s219 = sphi 0, %s218
    %s233 = sphi 0, %s219
    %s237 = sphi 0, %s237
    %s239 = sphi 0, %s237
    %s240 = sphi 0, %s239
    %s254 = sphi 0, %s240
    %s262 = sphi 0, %s264
    %s265 = sphi 0, %s262
    %s266 = sphi 0, %s265
    %s282 = sphi 0, %s266
  $region4: #{skinning_net_forward.17} parent=0 // loop_header_branch
    %19 = sbr.rel (%p17) target = $region8
  $region5: #{skinning_net_forward.17} parent=0 // loop_body
    %s21 = ssub.s32 %s16, 1
    %s22 = ssub.s32 %s16, 2
    %s29 = sadd.s32 1, %s24
    %p30 = scmp.ge.s32.totalorder %s29, 2
    %s31 = scalar_select %p30, 0, %s29
    %s32 = sadd.s32 1, %s23
    %s33 = scalar_select %p30, %s32, %s23
    %p34 = scmp.ge.s32.totalorder %s33, 2
    %s35 = scalar_select %p34, 0, %s33
    %s36 = ssub.s32 %s23, %s35
    %s37 = ssub.s32 %s24, %s31
    %s38 = sor.u32 %s36, %s37
    %p39 = scmp.eq.s32.totalorder %s38, 0
    %s41 = sadd.s32 %s40, 1
    %s42 = scalar_select %p39, %s40, %s41
    %p45 = pneg %p39
    %p46 = scmp.eq.s32.totalorder %s16, 3
    %p47 = por %p45, %p46
    %p48 = scmp.ne.s32.totalorder %s40, %s43
    %p49 = scmp.eq.s32.totalorder %s16, 0
    %p50 = por %p48, %p49
    %p51 = scmp.ne.s32.totalorder %s40, %s43
    %p52 = scmp.eq.s32.totalorder %s21, 3
    %p53 = por %p51, %p52
    %p54 = scmp.ne.s32.totalorder %s43, %s44
    %p55 = scmp.eq.s32.totalorder %s21, 0
    %p56 = por %p54, %p55
    %p57 = scmp.ne.s32.totalorder %s43, %s44
    %p58 = scmp.eq.s32.totalorder %s22, 3
    %p59 = por %p57, %p58
    %p61 = scmp.ne.s32.totalorder %s44, %s60
    %p62 = scmp.eq.s32.totalorder %s22, 0
    %p63 = por %p61, %p62
    %s64 = ssub.s32 %s23, %s35
    %p65 = scmp.eq.s32.totalorder %s64, 0
    %s67 = sadd.s32 %s66, 1
    %s68 = scalar_select %p65, %s66, %s67
    %p71 = pneg %p65
    %p72 = scmp.eq.s32.totalorder %s16, 3
    %p73 = por %p71, %p72
    %p74 = scmp.ne.s32.totalorder %s66, %s69
    %p75 = scmp.eq.s32.totalorder %s16, 0
    %p76 = por %p74, %p75
    %p77 = scmp.ne.s32.totalorder %s66, %s69
    %p78 = scmp.eq.s32.totalorder %s21, 3
    %p79 = por %p77, %p78
    %p80 = scmp.ne.s32.totalorder %s69, %s70
    %p81 = scmp.eq.s32.totalorder %s21, 0
    %p82 = por %p80, %p81
    %p83 = scmp.ne.s32.totalorder %s69, %s70
    %p84 = scmp.eq.s32.totalorder %s22, 3
    %p85 = por %p83, %p84
    %p87 = scmp.ne.s32.totalorder %s70, %s86
    %p88 = scmp.eq.s32.totalorder %s22, 0
    %p89 = por %p87, %p88
    %s91 = sadd.s32 %s90, 1
    %p94 = scmp.eq.s32.totalorder %s16, 3
    %p95 = scmp.ne.s32.totalorder %s90, %s92
    %p96 = scmp.eq.s32.totalorder %s16, 0
    %p97 = por %p95, %p96
    %p98 = scmp.ne.s32.totalorder %s90, %s92
    %p99 = scmp.eq.s32.totalorder %s21, 3
    %p100 = por %p98, %p99
    %p101 = scmp.ne.s32.totalorder %s92, %s93
    %p102 = scmp.eq.s32.totalorder %s21, 0
    %p103 = por %p101, %p102
    %p104 = scmp.ne.s32.totalorder %s92, %s93
    %p105 = scmp.eq.s32.totalorder %s22, 3
    %p106 = por %p104, %p105
    %p108 = scmp.ne.s32.totalorder %s93, %s107
    %p109 = scmp.eq.s32.totalorder %s22, 0
    %p110 = por %p108, %p109
    %s112 = sadd.s32 %s111, 1
    %p115 = scmp.eq.s32.totalorder %s16, 3
    %p116 = scmp.ne.s32.totalorder %s111, %s113
    %p117 = scmp.eq.s32.totalorder %s16, 0
    %p118 = por %p116, %p117
    %p119 = scmp.ne.s32.totalorder %s111, %s113
    %p120 = scmp.eq.s32.totalorder %s21, 3
    %p121 = por %p119, %p120
    %p122 = scmp.ne.s32.totalorder %s113, %s114
    %p123 = scmp.eq.s32.totalorder %s21, 0
    %p124 = por %p122, %p123
    %p125 = scmp.ne.s32.totalorder %s113, %s114
    %p126 = scmp.eq.s32.totalorder %s22, 3
    %p127 = por %p125, %p126
    %p129 = scmp.ne.s32.totalorder %s114, %s128
    %p130 = scmp.eq.s32.totalorder %s22, 0
    %p131 = por %p129, %p130
    %s133 = sadd.s32 %s132, 1
    %p136 = scmp.eq.s32.totalorder %s16, 3
    %p137 = scmp.ne.s32.totalorder %s132, %s134
    %p138 = scmp.eq.s32.totalorder %s16, 0
    %p139 = por %p137, %p138
    %p140 = scmp.ne.s32.totalorder %s132, %s134
    %p141 = scmp.eq.s32.totalorder %s21, 3
    %p142 = por %p140, %p141
    %p143 = scmp.ne.s32.totalorder %s134, %s135
    %p144 = scmp.eq.s32.totalorder %s21, 0
    %p145 = por %p143, %p144
    %p146 = scmp.ne.s32.totalorder %s134, %s135
    %p147 = scmp.eq.s32.totalorder %s22, 3
    %p148 = por %p146, %p147
    %p150 = scmp.ne.s32.totalorder %s135, %s149
    %p151 = scmp.eq.s32.totalorder %s22, 0
    %p152 = por %p150, %p151
    %s154 = sadd.s32 %s153, 1
    %p157 = scmp.eq.s32.totalorder %s16, 3
    %p158 = scmp.ne.s32.totalorder %s153, %s155
    %p159 = scmp.eq.s32.totalorder %s16, 0
    %p160 = por %p158, %p159
    %p161 = scmp.ne.s32.totalorder %s153, %s155
    %p162 = scmp.eq.s32.totalorder %s21, 3
    %p163 = por %p161, %p162
    %p164 = scmp.ne.s32.totalorder %s155, %s156
    %p165 = scmp.eq.s32.totalorder %s21, 0
    %p166 = por %p164, %p165
    %p167 = scmp.ne.s32.totalorder %s155, %s156
    %p168 = scmp.eq.s32.totalorder %s22, 3
    %p169 = por %p167, %p168
    %p171 = scmp.ne.s32.totalorder %s156, %s170
    %p172 = scmp.eq.s32.totalorder %s22, 0
    %p173 = por %p171, %p172
    %s175 = sadd.s32 %s174, 1
    %p178 = scmp.eq.s32.totalorder %s16, 3
    %p179 = scmp.ne.s32.totalorder %s174, %s176
    %p180 = scmp.eq.s32.totalorder %s16, 0
    %p181 = por %p179, %p180
    %p182 = scmp.ne.s32.totalorder %s174, %s176
    %p183 = scmp.eq.s32.totalorder %s21, 3
    %p184 = por %p182, %p183
    %p185 = scmp.ne.s32.totalorder %s176, %s177
    %p186 = scmp.eq.s32.totalorder %s21, 0
    %p187 = por %p185, %p186
    %p188 = scmp.ne.s32.totalorder %s176, %s177
    %p189 = scmp.eq.s32.totalorder %s22, 3
    %p190 = por %p188, %p189
    %p192 = scmp.ne.s32.totalorder %s177, %s191
    %p193 = scmp.eq.s32.totalorder %s22, 0
    %p194 = por %p192, %p193
    %s196 = sadd.s32 %s195, 1
    %p199 = scmp.eq.s32.totalorder %s16, 3
    %p200 = scmp.ne.s32.totalorder %s195, %s197
    %p201 = scmp.eq.s32.totalorder %s16, 0
    %p202 = por %p200, %p201
    %p203 = scmp.ne.s32.totalorder %s195, %s197
    %p204 = scmp.eq.s32.totalorder %s21, 3
    %p205 = por %p203, %p204
    %p206 = scmp.ne.s32.totalorder %s197, %s198
    %p207 = scmp.eq.s32.totalorder %s21, 0
    %p208 = por %p206, %p207
    %p209 = scmp.ne.s32.totalorder %s197, %s198
    %p210 = scmp.eq.s32.totalorder %s22, 3
    %p211 = por %p209, %p210
    %p213 = scmp.ne.s32.totalorder %s198, %s212
    %p214 = scmp.eq.s32.totalorder %s22, 0
    %p215 = por %p213, %p214
    %s217 = sadd.s32 %s216, 1
    %p220 = scmp.eq.s32.totalorder %s16, 3
    %p221 = scmp.ne.s32.totalorder %s216, %s218
    %p222 = scmp.eq.s32.totalorder %s16, 0
    %p223 = por %p221, %p222
    %p224 = scmp.ne.s32.totalorder %s216, %s218
    %p225 = scmp.eq.s32.totalorder %s21, 3
    %p226 = por %p224, %p225
    %p227 = scmp.ne.s32.totalorder %s218, %s219
    %p228 = scmp.eq.s32.totalorder %s21, 0
    %p229 = por %p227, %p228
    %p230 = scmp.ne.s32.totalorder %s218, %s219
    %p231 = scmp.eq.s32.totalorder %s22, 3
    %p232 = por %p230, %p231
    %p234 = scmp.ne.s32.totalorder %s219, %s233
    %p235 = scmp.eq.s32.totalorder %s22, 0
    %p236 = por %p234, %p235
    %s238 = sadd.s32 %s237, 1
    %p241 = scmp.eq.s32.totalorder %s16, 3
    %p242 = scmp.ne.s32.totalorder %s237, %s239
    %p243 = scmp.eq.s32.totalorder %s16, 0
    %p244 = por %p242, %p243
    %p245 = scmp.ne.s32.totalorder %s237, %s239
    %p246 = scmp.eq.s32.totalorder %s21, 3
    %p247 = por %p245, %p246
    %p248 = scmp.ne.s32.totalorder %s239, %s240
    %p249 = scmp.eq.s32.totalorder %s21, 0
    %p250 = por %p248, %p249
    %p251 = scmp.ne.s32.totalorder %s239, %s240
    %p252 = scmp.eq.s32.totalorder %s22, 3
    %p253 = por %p251, %p252
    %p255 = scmp.ne.s32.totalorder %s240, %s254
    %p256 = scmp.eq.s32.totalorder %s22, 0
    %p257 = por %p255, %p256
    %s258 = ssub.s32 %s23, %s35
    %s259 = ssub.s32 %s24, %s31
    %s260 = sor.u32 %s258, %s259
    %p261 = scmp.eq.s32.totalorder %s260, 0
    %s263 = sadd.s32 %s262, 1
    %s264 = scalar_select %p261, %s262, %s263
    %p267 = pneg %p261
    %p268 = scmp.eq.s32.totalorder %s16, 3
    %p269 = por %p267, %p268
    %p270 = scmp.ne.s32.totalorder %s262, %s265
    %p271 = scmp.eq.s32.totalorder %s16, 0
    %p272 = por %p270, %p271
    %p273 = scmp.ne.s32.totalorder %s262, %s265
    %p274 = scmp.eq.s32.totalorder %s21, 3
    %p275 = por %p273, %p274
    %p276 = scmp.ne.s32.totalorder %s265, %s266
    %p277 = scmp.eq.s32.totalorder %s21, 0
    %p278 = por %p276, %p277
    %p279 = scmp.ne.s32.totalorder %s265, %s266
    %p280 = scmp.eq.s32.totalorder %s22, 3
    %p281 = por %p279, %p280
    %p283 = scmp.ne.s32.totalorder %s266, %s282
    %p284 = scmp.eq.s32.totalorder %s22, 0
    %p285 = por %p283, %p284
    %p286 = scmp.le.s32.totalorder 1, %s16
    %p287 = scmp.lt.s32.totalorder %s16, 5
    %p288 = pnand %p286, %p287
    %p289 = pneg %p288
    // Predicated region
    $region9: #{skinning_net_forward.17} parent=5 // pred_check
      _
    $region10: #{skinning_net_forward.17} parent=5 // pred_check_branch
      %291 = sbr.rel (%p288) target = $region12
    $region11: #{skinning_net_forward.17} parent=5 // pred_region
      %s292 = ssub.s32 %s16, 1
      // Predicated region
      $region13: #{skinning_net_forward.17} parent=11 // pred_check
        %p293 = pneg %p103
      $region14: #{skinning_net_forward.17} parent=11 // pred_check_branch
        %295 = sbr.rel (%p293) target = $region16
      $region15: #{skinning_net_forward.17} parent=11 // pred_region
        _
      $region16: #{skinning_net_forward.17} parent=11 // pred_fallthru
        _
      // Predicated region
      $region17: #{skinning_net_forward.17} parent=11 // pred_check
        %p296 = pneg %p124
      $region18: #{skinning_net_forward.17} parent=11 // pred_check_branch
        %298 = sbr.rel (%p296) target = $region20
      $region19: #{skinning_net_forward.17} parent=11 // pred_region
        _
      $region20: #{skinning_net_forward.17} parent=11 // pred_fallthru
        _
      // Predicated region
      $region21: #{skinning_net_forward.17} parent=11 // pred_check
        %p299 = pneg %p145
      $region22: #{skinning_net_forward.17} parent=11 // pred_check_branch
        %301 = sbr.rel (%p299) target = $region24
      $region23: #{skinning_net_forward.17} parent=11 // pred_region
        _
      $region24: #{skinning_net_forward.17} parent=11 // pred_fallthru
        _
      // Predicated region
      $region25: #{skinning_net_forward.17} parent=11 // pred_check
        %p302 = pneg %p166
      $region26: #{skinning_net_forward.17} parent=11 // pred_check_branch
        %304 = sbr.rel (%p302) target = $region28
      $region27: #{skinning_net_forward.17} parent=11 // pred_region
        _
      $region28: #{skinning_net_forward.17} parent=11 // pred_fallthru
        _
      // Predicated region
      $region29: #{skinning_net_forward.17} parent=11 // pred_check
        %p305 = pneg %p187
      $region30: #{skinning_net_forward.17} parent=11 // pred_check_branch
        %307 = sbr.rel (%p305) target = $region32
      $region31: #{skinning_net_forward.17} parent=11 // pred_region
        _
      $region32: #{skinning_net_forward.17} parent=11 // pred_fallthru
        _
      // Predicated region
      $region33: #{skinning_net_forward.17} parent=11 // pred_check
        %p308 = pneg %p208
      $region34: #{skinning_net_forward.17} parent=11 // pred_check_branch
        %310 = sbr.rel (%p308) target = $region36
      $region35: #{skinning_net_forward.17} parent=11 // pred_region
        _
      $region36: #{skinning_net_forward.17} parent=11 // pred_fallthru
        _
      // Predicated region
      $region37: #{skinning_net_forward.17} parent=11 // pred_check
        %p311 = pneg %p229
      $region38: #{skinning_net_forward.17} parent=11 // pred_check_branch
        %313 = sbr.rel (%p311) target = $region40
      $region39: #{skinning_net_forward.17} parent=11 // pred_region
        _
      $region40: #{skinning_net_forward.17} parent=11 // pred_fallthru
        _
      // Predicated region
      $region41: #{skinning_net_forward.17} parent=11 // pred_check
        %p314 = pneg %p250
      $region42: #{skinning_net_forward.17} parent=11 // pred_check_branch
        %316 = sbr.rel (%p314) target = $region44
      $region43: #{skinning_net_forward.17} parent=11 // pred_region
        _
      $region44: #{skinning_net_forward.17} parent=11 // pred_fallthru
        _
    $region12: #{skinning_net_forward.17} parent=5 // pred_fallthru
      _
    %p317 = scmp.lt.s32.totalorder %s16, 4
    // Predicated region
    $region45: #{skinning_net_forward.17} parent=5 // pred_check
      %p318 = pneg %p317
    $region46: #{skinning_net_forward.17} parent=5 // pred_check_branch
      %320 = sbr.rel (%p318) target = $region48
    $region47: #{skinning_net_forward.17} parent=5 // pred_region
      // Predicated region
      $region49: #{skinning_net_forward.17} parent=47 // pred_check
        %p321 = pneg %p50
      $region50: #{skinning_net_forward.17} parent=47 // pred_check_branch
        %323 = sbr.rel (%p321) target = $region52
      $region51: #{skinning_net_forward.17} parent=47 // pred_region
        %s324 = smul.u32 4, %s24
        %p325 = scmp.lt.s32.totalorder %s23, 1
        %s326 = scalar_select %p325, %s23, 1
        %p327 = scmp.lt.s32.totalorder %s324, 7
        %s328 = scalar_select %p327, %s324, 7
        %s329 = smul.addr %s326, 8
        %s330 = sadd.s32 %s328, %s329
        %s331 = smul.addr %s330, 4
        %s332 = scalar_lea.vmem %s0, %s331
        %s333 = smul.u32 4, %s24
      $region52: #{skinning_net_forward.17} parent=47 // pred_fallthru
        _
      // Predicated region
      $region53: #{skinning_net_forward.17} parent=47 // pred_check
        %p334 = pneg %p76
      $region54: #{skinning_net_forward.17} parent=47 // pred_check_branch
        %336 = sbr.rel (%p334) target = $region56
      $region55: #{skinning_net_forward.17} parent=47 // pred_region
        %p337 = scmp.lt.s32.totalorder %s23, 1
        %s338 = scalar_select %p337, %s23, 1
        %s339 = smul.addr %s338, 8
        %s340 = scalar_lea.vmem %s1, %s339
      $region56: #{skinning_net_forward.17} parent=47 // pred_fallthru
        _
    $region48: #{skinning_net_forward.17} parent=5 // pred_fallthru
      _
    %p341 = scmp.le.s32.totalorder 1, %s16
    %p342 = scmp.lt.s32.totalorder %s16, 5
    %p343 = pnand %p341, %p342
    %p344 = pneg %p343
    // Predicated region
    $region57: #{skinning_net_forward.17} parent=5 // pred_check
      _
    $region58: #{skinning_net_forward.17} parent=5 // pred_check_branch
      %346 = sbr.rel (%p343) target = $region60
    $region59: #{skinning_net_forward.17} parent=5 // pred_region
      %s347 = ssub.s32 %s16, 1
      %s348 = smul.u32 4, %s26
      %p349 = scmp.lt.s32.totalorder %s25, 1
      %s350 = scalar_select %p349, %s25, 1
      %p351 = scmp.lt.s32.totalorder %s348, 7
      %s352 = scalar_select %p351, %s348, 7
      %s353 = smul.addr %s350, 8
      %s354 = sadd.s32 %s352, %s353
      %s355 = smul.addr %s354, 4
      %s356 = scalar_lea.vmem %s0, %s355
      %p357 = pneg %p56
      %p358 = pneg %p53
      %p359 = scmp.lt.s32.totalorder %s25, 1
      %s360 = scalar_select %p359, %s25, 1
      %s361 = smul.addr %s360, 8
      %s362 = scalar_lea.vmem %s1, %s361
      %p363 = pneg %p82
      %p364 = pneg %p79
      %p365 = pneg %p103
      %p366 = pneg %p100
      %p367 = pneg %p124
      %p368 = pneg %p121
      %p369 = pneg %p145
      %p370 = pneg %p142
      %p371 = pneg %p166
      %p372 = pneg %p163
      %p373 = pneg %p187
      %p374 = pneg %p184
      %p375 = pneg %p208
      %p376 = pneg %p205
      %p377 = pneg %p229
      %p378 = pneg %p226
      %p379 = pneg %p250
      %p380 = pneg %p247
      %p381 = pneg %p278
      %p382 = pneg %p275
      %s383 = smul.u32 4, %s26
      %p384 = scmp.lt.s32.totalorder %s25, 1
      %s385 = scalar_select %p384, %s25, 1
      %p386 = scmp.lt.s32.totalorder %s383, 7
      %s387 = scalar_select %p386, %s383, 7
      %s388 = smul.addr %s385, 8
      %s389 = sadd.s32 %s387, %s388
      %s390 = smul.addr %s389, 8
      %s391 = scalar_lea.vmem %s10, %s390
      %s392 = smul.u32 4, %s26
      %p393 = scmp.lt.s32.totalorder %s25, 1
      %s394 = scalar_select %p393, %s25, 1
      %p395 = scmp.lt.s32.totalorder %s392, 7
      %s396 = scalar_select %p395, %s392, 7
      %s397 = smul.addr %s394, 8
      %s398 = sadd.s32 %s396, %s397
      %s399 = smul.addr %s398, 4
      %s400 = scalar_lea.vmem %s0, %s399
      %s401 = smul.u32 4, %s26
      %p402 = scmp.lt.s32.totalorder %s25, 1
      %s403 = scalar_select %p402, %s25, 1
      %s404 = smul.addr %s403, 8
      %s405 = scalar_lea.vmem %s1, %s404
      %s406 = smul.u32 4, %s26
      %p407 = scmp.lt.s32.totalorder %s25, 1
      %s408 = scalar_select %p407, %s25, 1
      %p409 = scmp.lt.s32.totalorder %s406, 7
      %s410 = scalar_select %p409, %s406, 7
      %s411 = smul.addr %s408, 8
      %s412 = sadd.s32 %s410, %s411
      %s413 = smul.addr %s412, 8
      %s414 = scalar_lea.vmem %s10, %s413
      %s415 = smul.u32 4, %s26
      %v417 = vld [vmem:[%s400] sm:$0xf]
      %v418 = vld [vmem:[%s400 + $0x4] sm:$0xf]
      %v419 = vld [vmem:[%s400 + $0x8] sm:$0xf]
      %v420 = vld [vmem:[%s400 + $0xc] sm:$0xf]
      %v421 = vld [vmem:[%s2] sm:$0xff]
      %v422 = vld [vmem:[%s2 + $0x8] sm:$0xff]
      %v423 = vld [vmem:[%s2 + $0x10] sm:$0xff]
      %v424 = vld [vmem:[%s2 + $0x18] sm:$0xff]
      %v425 = vld [vmem:[%s2 + $0x20] sm:$0xff]
      %v426 = vld [vmem:[%s2 + $0x28] sm:$0xff]
      %v427 = vld [vmem:[%s2 + $0x30] sm:$0xff]
      %v428 = vld [vmem:[%s2 + $0x38] sm:$0xff]
      %v429 = vld [vmem:[%s2 + $0x40] sm:$0xff]
      %v430 = vld [vmem:[%s2 + $0x48] sm:$0xff]
      %v431 = vld [vmem:[%s2 + $0x50] sm:$0xff]
      %v432 = vld [vmem:[%s2 + $0x58] sm:$0xff]
      %v433 = vld [vmem:[%s2 + $0x60] sm:$0xff]
      %v434 = vld [vmem:[%s2 + $0x68] sm:$0xff]
      %v435 = vld [vmem:[%s2 + $0x70] sm:$0xff]
      %v436 = vld [vmem:[%s2 + $0x78] sm:$0xff]
      %v437 = vld [vmem:[%s2 + $0x80] sm:$0xff]
      %v438 = vld [vmem:[%s2 + $0x88] sm:$0xff]
      %v439 = vld [vmem:[%s2 + $0x90] sm:$0xff]
      %v440 = vld [vmem:[%s2 + $0x98] sm:$0xff]
      %v441 = vld [vmem:[%s2 + $0xa0] sm:$0xff]
      %v442 = vld [vmem:[%s2 + $0xa8] sm:$0xff]
      %v443 = vld [vmem:[%s2 + $0xb0] sm:$0xff]
      %v444 = vld [vmem:[%s2 + $0xb8] sm:$0xff]
      %v445 = vld [vmem:[%s2 + $0xc0] sm:$0xff]
      %v446 = vld [vmem:[%s2 + $0xc8] sm:$0xff]
      %v447 = vld [vmem:[%s2 + $0xd0] sm:$0xff]
      %v448 = vld [vmem:[%s2 + $0xd8] sm:$0xff]
      %v449 = vld [vmem:[%s2 + $0xe0] sm:$0xff]
      %v450 = vld [vmem:[%s2 + $0xe8] sm:$0xff]
      %v451 = vld [vmem:[%s2 + $0xf0] sm:$0xff]
      %v452 = vld [vmem:[%s2 + $0xf8] sm:$0xff]
      %v453 = vld [vmem:[%s2 + $0x100] sm:$0xff]
      %v454 = vld [vmem:[%s2 + $0x108] sm:$0xff]
      %v455 = vld [vmem:[%s2 + $0x110] sm:$0xff]
      %v456 = vld [vmem:[%s2 + $0x118] sm:$0xff]
      %v457 = vld [vmem:[%s2 + $0x120] sm:$0xff]
      %v458 = vld [vmem:[%s2 + $0x128] sm:$0xff]
      %v459 = vld [vmem:[%s2 + $0x130] sm:$0xff]
      %v460 = vld [vmem:[%s2 + $0x138] sm:$0xff]
      %v461 = vld [vmem:[%s2 + $0x140] sm:$0xff]
      %v462 = vld [vmem:[%s2 + $0x148] sm:$0xff]
      %v463 = vld [vmem:[%s2 + $0x150] sm:$0xff]
      %v464 = vld [vmem:[%s2 + $0x158] sm:$0xff]
      %v465 = vld [vmem:[%s2 + $0x160] sm:$0xff]
      %v466 = vld [vmem:[%s2 + $0x168] sm:$0xff]
      %v467 = vld [vmem:[%s2 + $0x170] sm:$0xff]
      %v468 = vld [vmem:[%s2 + $0x178] sm:$0xff]
      %v469 = vld [vmem:[%s2 + $0x180] sm:$0xff]
      %v470 = vld [vmem:[%s2 + $0x188] sm:$0xff]
      %v471 = vld [vmem:[%s2 + $0x190] sm:$0xff]
      %v472 = vld [vmem:[%s2 + $0x198] sm:$0xff]
      %v473 = vld [vmem:[%s2 + $0x1a0] sm:$0xff]
      %v474 = vld [vmem:[%s2 + $0x1a8] sm:$0xff]
      %v475 = vld [vmem:[%s2 + $0x1b0] sm:$0xff]
      %v476 = vld [vmem:[%s2 + $0x1b8] sm:$0xff]
      %v477 = vld [vmem:[%s2 + $0x1c0] sm:$0x33]
      %v478 = vld [vmem:[%s2 + $0x1c8] sm:$0x33]
      %v479 = vld [vmem:[%s2 + $0x1d0] sm:$0x33]
      %v480 = vld [vmem:[%s2 + $0x1d8] sm:$0x33]
      %v481 = vld [vmem:[%s3] sm:$0xff]
      %v482 = vld [vmem:[%s405] sm:$0xff]
      %v484 = vlaneseq
      %v485 = vshrl.u32 %v484, 7
      %v486 = vsub.s32 0, %v485
      %v487 = vrot.slane %v482, %v486
      %v488 = vlaneseq
      %v489 = vshrl.u32 %v488, 7
      %v490 = vsub.s32 1, %v489
      %v491 = vrot.slane %v482, %v490
      %v492 = vlaneseq
      %v493 = vshrl.u32 %v492, 7
      %v494 = vsub.s32 2, %v493
      %v495 = vrot.slane %v482, %v494
      %v496 = vlaneseq
      %v497 = vshrl.u32 %v496, 7
      %v498 = vsub.s32 3, %v497
      %v499 = vrot.slane %v482, %v498
      %v500 = vlaneseq
      %v501 = vshrl.u32 %v500, 7
      %v502 = vsub.s32 4, %v501
      %v503 = vrot.slane %v482, %v502
      %v504 = vlaneseq
      %v505 = vshrl.u32 %v504, 7
      %v506 = vsub.s32 5, %v505
      %v507 = vrot.slane %v482, %v506
      %v508 = vlaneseq
      %v509 = vshrl.u32 %v508, 7
      %v510 = vsub.s32 6, %v509
      %v511 = vrot.slane %v482, %v510
      %v512 = vlaneseq
      %v513 = vshrl.u32 %v512, 7
      %v514 = vsub.s32 7, %v513
      %v515 = vrot.slane %v482, %v514
      %v528 = vunpack.c.l.b16 %v417
      %v529 = vunpack.c.l.b16 %v418
      %v530 = vunpack.c.l.b16 %v419
      %v531 = vunpack.c.l.b16 %v420
      %v532 = vpack.c.b16 %v529, %v528
      %v533 = vpack.c.b16 %v531, %v530
      %v594 = vunpack.c.l.b16 %v421
      %v595 = vunpack.c.h.b16 %v421
      %v596 = vunpack.c.l.b16 %v422
      %v597 = vunpack.c.h.b16 %v422
      %v598 = vunpack.c.l.b16 %v423
      %v599 = vunpack.c.h.b16 %v423
      %v600 = vunpack.c.l.b16 %v424
      %v601 = vunpack.c.h.b16 %v424
      %v602 = vunpack.c.l.b16 %v425
      %v603 = vunpack.c.h.b16 %v425
      %v604 = vunpack.c.l.b16 %v426
      %v605 = vunpack.c.h.b16 %v426
      %v606 = vunpack.c.l.b16 %v427
      %v607 = vunpack.c.h.b16 %v427
      %v608 = vunpack.c.l.b16 %v428
      %v609 = vunpack.c.h.b16 %v428
      %v610 = vunpack.c.l.b16 %v429
      %v611 = vunpack.c.h.b16 %v429
      %v612 = vunpack.c.l.b16 %v430
      %v613 = vunpack.c.h.b16 %v430
      %v614 = vunpack.c.l.b16 %v431
      %v615 = vunpack.c.h.b16 %v431
      %v616 = vunpack.c.l.b16 %v432
      %v617 = vunpack.c.h.b16 %v432
      %v618 = vunpack.c.l.b16 %v433
      %v619 = vunpack.c.h.b16 %v433
      %v620 = vunpack.c.l.b16 %v434
      %v621 = vunpack.c.h.b16 %v434
      %v622 = vunpack.c.l.b16 %v435
      %v623 = vunpack.c.h.b16 %v435
      %v624 = vunpack.c.l.b16 %v436
      %v625 = vunpack.c.h.b16 %v436
      %v626 = vunpack.c.l.b16 %v437
      %v627 = vunpack.c.h.b16 %v437
      %v628 = vunpack.c.l.b16 %v438
      %v629 = vunpack.c.h.b16 %v438
      %v630 = vunpack.c.l.b16 %v439
      %v631 = vunpack.c.h.b16 %v439
      %v632 = vunpack.c.l.b16 %v440
      %v633 = vunpack.c.h.b16 %v440
      %v634 = vunpack.c.l.b16 %v441
      %v635 = vunpack.c.h.b16 %v441
      %v636 = vunpack.c.l.b16 %v442
      %v637 = vunpack.c.h.b16 %v442
      %v638 = vunpack.c.l.b16 %v443
      %v639 = vunpack.c.h.b16 %v443
      %v640 = vunpack.c.l.b16 %v444
      %v641 = vunpack.c.h.b16 %v444
      %v642 = vunpack.c.l.b16 %v445
      %v643 = vunpack.c.h.b16 %v445
      %v644 = vunpack.c.l.b16 %v446
      %v645 = vunpack.c.h.b16 %v446
      %v646 = vunpack.c.l.b16 %v447
      %v647 = vunpack.c.h.b16 %v447
      %v648 = vunpack.c.l.b16 %v448
      %v649 = vunpack.c.h.b16 %v448
      %v650 = vunpack.c.l.b16 %v449
      %v651 = vunpack.c.h.b16 %v449
      %v652 = vunpack.c.l.b16 %v450
      %v653 = vunpack.c.h.b16 %v450
      %v654 = vunpack.c.l.b16 %v451
      %v655 = vunpack.c.h.b16 %v451
      %v656 = vunpack.c.l.b16 %v452
      %v657 = vunpack.c.h.b16 %v452
      %v658 = vunpack.c.l.b16 %v453
      %v659 = vunpack.c.h.b16 %v453
      %v660 = vunpack.c.l.b16 %v454
      %v661 = vunpack.c.h.b16 %v454
      %v662 = vunpack.c.l.b16 %v455
      %v663 = vunpack.c.h.b16 %v455
      %v664 = vunpack.c.l.b16 %v456
      %v665 = vunpack.c.h.b16 %v456
      %v666 = vunpack.c.l.b16 %v457
      %v667 = vunpack.c.h.b16 %v457
      %v668 = vunpack.c.l.b16 %v458
      %v669 = vunpack.c.h.b16 %v458
      %v670 = vunpack.c.l.b16 %v459
      %v671 = vunpack.c.h.b16 %v459
      %v672 = vunpack.c.l.b16 %v460
      %v673 = vunpack.c.h.b16 %v460
      %v674 = vunpack.c.l.b16 %v461
      %v675 = vunpack.c.h.b16 %v461
      %v676 = vunpack.c.l.b16 %v462
      %v677 = vunpack.c.h.b16 %v462
      %v678 = vunpack.c.l.b16 %v463
      %v679 = vunpack.c.h.b16 %v463
      %v680 = vunpack.c.l.b16 %v464
      %v681 = vunpack.c.h.b16 %v464
      %v682 = vunpack.c.l.b16 %v465
      %v683 = vunpack.c.h.b16 %v465
      %v684 = vunpack.c.l.b16 %v466
      %v685 = vunpack.c.h.b16 %v466
      %v686 = vunpack.c.l.b16 %v467
      %v687 = vunpack.c.h.b16 %v467
      %v688 = vunpack.c.l.b16 %v468
      %v689 = vunpack.c.h.b16 %v468
      %v690 = vunpack.c.l.b16 %v469
      %v691 = vunpack.c.h.b16 %v469
      %v692 = vunpack.c.l.b16 %v470
      %v693 = vunpack.c.h.b16 %v470
      %v694 = vunpack.c.l.b16 %v471
      %v695 = vunpack.c.h.b16 %v471
      %v696 = vunpack.c.l.b16 %v472
      %v697 = vunpack.c.h.b16 %v472
      %v698 = vunpack.c.l.b16 %v473
      %v699 = vunpack.c.h.b16 %v473
      %v700 = vunpack.c.l.b16 %v474
      %v701 = vunpack.c.h.b16 %v474
      %v702 = vunpack.c.l.b16 %v475
      %v703 = vunpack.c.h.b16 %v475
      %v704 = vunpack.c.l.b16 %v476
      %v705 = vunpack.c.h.b16 %v476
      %v706 = vunpack.c.l.b16 %v477
      %v707 = vunpack.c.h.b16 %v477
      %v708 = vunpack.c.l.b16 %v478
      %v709 = vunpack.c.h.b16 %v478
      %v710 = vunpack.c.l.b16 %v479
      %v711 = vunpack.c.h.b16 %v479
      %v712 = vunpack.c.l.b16 %v480
      %v713 = vunpack.c.h.b16 %v480
      %v714 = vpack.c.b16 %v602, %v594
      %v715 = vpack.c.b16 %v603, %v595
      %v716 = vpack.c.b16 %v604, %v596
      %v717 = vpack.c.b16 %v605, %v597
      %v718 = vpack.c.b16 %v606, %v598
      %v719 = vpack.c.b16 %v607, %v599
      %v720 = vpack.c.b16 %v608, %v600
      %v721 = vpack.c.b16 %v609, %v601
      %v722 = vpack.c.b16 %v618, %v610
      %v723 = vpack.c.b16 %v619, %v611
      %v724 = vpack.c.b16 %v620, %v612
      %v725 = vpack.c.b16 %v621, %v613
      %v726 = vpack.c.b16 %v622, %v614
      %v727 = vpack.c.b16 %v623, %v615
      %v728 = vpack.c.b16 %v624, %v616
      %v729 = vpack.c.b16 %v625, %v617
      %v730 = vpack.c.b16 %v634, %v626
      %v731 = vpack.c.b16 %v635, %v627
      %v732 = vpack.c.b16 %v636, %v628
      %v733 = vpack.c.b16 %v637, %v629
      %v734 = vpack.c.b16 %v638, %v630
      %v735 = vpack.c.b16 %v639, %v631
      %v736 = vpack.c.b16 %v640, %v632
      %v737 = vpack.c.b16 %v641, %v633
      %v738 = vpack.c.b16 %v650, %v642
      %v739 = vpack.c.b16 %v651, %v643
      %v740 = vpack.c.b16 %v652, %v644
      %v741 = vpack.c.b16 %v653, %v645
      %v742 = vpack.c.b16 %v654, %v646
      %v743 = vpack.c.b16 %v655, %v647
      %v744 = vpack.c.b16 %v656, %v648
      %v745 = vpack.c.b16 %v657, %v649
      %v746 = vpack.c.b16 %v666, %v658
      %v747 = vpack.c.b16 %v667, %v659
      %v748 = vpack.c.b16 %v668, %v660
      %v749 = vpack.c.b16 %v669, %v661
      %v750 = vpack.c.b16 %v670, %v662
      %v751 = vpack.c.b16 %v671, %v663
      %v752 = vpack.c.b16 %v672, %v664
      %v753 = vpack.c.b16 %v673, %v665
      %v754 = vpack.c.b16 %v682, %v674
      %v755 = vpack.c.b16 %v683, %v675
      %v756 = vpack.c.b16 %v684, %v676
      %v757 = vpack.c.b16 %v685, %v677
      %v758 = vpack.c.b16 %v686, %v678
      %v759 = vpack.c.b16 %v687, %v679
      %v760 = vpack.c.b16 %v688, %v680
      %v761 = vpack.c.b16 %v689, %v681
      %v762 = vpack.c.b16 %v698, %v690
      %v763 = vpack.c.b16 %v699, %v691
      %v764 = vpack.c.b16 %v700, %v692
      %v765 = vpack.c.b16 %v701, %v693
      %v766 = vpack.c.b16 %v702, %v694
      %v767 = vpack.c.b16 %v703, %v695
      %v768 = vpack.c.b16 %v704, %v696
      %v769 = vpack.c.b16 %v705, %v697
      %v770 = vpack.c.b16 %v706, %v706
      %v771 = vpack.c.b16 %v707, %v707
      %v772 = vpack.c.b16 %v708, %v708
      %v773 = vpack.c.b16 %v709, %v709
      %v774 = vpack.c.b16 %v710, %v710
      %v775 = vpack.c.b16 %v711, %v711
      %v776 = vpack.c.b16 %v712, %v712
      %v777 = vpack.c.b16 %v713, %v713
      %vm834 = vcmask 941056
      %v836 = vsel %vm834, %v532, 0
      %v839 = vsel %vm834, %v533, 0
      %vm841 = vcmask 1040384
      %vm842 = vcmask 1041408
      %v843 = vsel %vm841, 4294967295, 65535
      %v844 = vsel %vm842, %v843, 0
      %v846 = vand.u32 %v770, %v844
      %v849 = vand.u32 %v771, %v844
      %v852 = vand.u32 %v772, %v844
      %v855 = vand.u32 %v773, %v844
      %v858 = vand.u32 %v774, %v844
      %v861 = vand.u32 %v775, %v844
      %v864 = vand.u32 %v776, %v844
      %v867 = vand.u32 %v777, %v844
      %869 = vmatprep.subr.bf16.mxu0 %v715
      %870 = vmatpush1.bf16.msra.mxu0 %v714
      %871 = vmatprep.subr.bf16.mxu0 %v723
      %872 = vmatpush1.bf16.msra.mxu0 %v722
      %873 = vmatprep.subr.bf16.mxu0 %v731
      %874 = vmatpush1.bf16.msra.mxu0 %v730
      %875 = vmatprep.subr.bf16.mxu0 %v739
      %876 = vmatpush1.bf16.msra.mxu0 %v738
      %877 = vmatprep.subr.bf16.mxu0 %v747
      %878 = vmatpush1.bf16.msra.mxu0 %v746
      %879 = vmatprep.subr.bf16.mxu0 %v755
      %880 = vmatpush1.bf16.msra.mxu0 %v754
      %881 = vmatprep.subr.bf16.mxu0 %v763
      %882 = vmatpush1.bf16.msra.mxu0 %v762
      %883 = vmatprep.subr.bf16.mxu0 %v849
      %884 = vmatpush1.bf16.msra.mxu0 %v846
      %885 = vmatprep.subr.bf16.mxu0 0
      %886 = vmatpush1.bf16.msra.mxu0 0
      %887 = vmatprep.subr.bf16.mxu0 0
      %888 = vmatpush1.bf16.msra.mxu0 0
      %889 = vmatprep.subr.bf16.mxu0 0
      %890 = vmatpush1.bf16.msra.mxu0 0
      %891 = vmatprep.subr.bf16.mxu0 0
      %892 = vmatpush1.bf16.msra.mxu0 0
      %893 = vmatprep.subr.bf16.mxu0 0
      %894 = vmatpush1.bf16.msra.mxu0 0
      %895 = vmatprep.subr.bf16.mxu0 0
      %896 = vmatpush1.bf16.msra.mxu0 0
      %897 = vmatprep.subr.bf16.mxu0 0
      %898 = vmatpush1.bf16.msra.mxu0 0
      %899 = vmatprep.subr.bf16.mxu0 0
      %900 = vmatpush1.bf16.msra.mxu0 0
      %901 = vmatprep.mubr.bf16.mxu0 0
      %902 = vmatmul.mubr.bf16.gmra.mrb[0].mxu0 %v836
      %v903 = vpop.f32.mrb[0].mxu0
      %v904 = vadd.f32 %v487, %v903
      %v905 = vpop.f32.mrb[0].mxu0
      %v906 = vadd.f32 %v491, %v905
      %v907 = vpop.f32.mrb[0].mxu0
      %v908 = vadd.f32 %v487, %v907
      %v909 = vpop.f32.mrb[0].mxu0
      %v910 = vadd.f32 %v491, %v909
      %911 = vmatprep.mubr.bf16.mxu0 0
      %912 = vmatmul.mubr.bf16.gmra.mrb[0].mxu0 %v839
      %v913 = vpop.f32.mrb[0].mxu0
      %v914 = vadd.f32 %v487, %v913
      %v915 = vpop.f32.mrb[0].mxu0
      %v916 = vadd.f32 %v491, %v915
      %v917 = vpop.f32.mrb[0].mxu0
      %v918 = vadd.f32 %v487, %v917
      %v919 = vpop.f32.mrb[0].mxu0
      %v920 = vadd.f32 %v491, %v919
      %921 = vdwg.mxu0
      %922 = vmatprep.subr.bf16.mxu0 %v717
      %923 = vmatpush1.bf16.msra.mxu0 %v716
      %924 = vmatprep.subr.bf16.mxu0 %v725
      %925 = vmatpush1.bf16.msra.mxu0 %v724
      %926 = vmatprep.subr.bf16.mxu0 %v733
      %927 = vmatpush1.bf16.msra.mxu0 %v732
      %928 = vmatprep.subr.bf16.mxu0 %v741
      %929 = vmatpush1.bf16.msra.mxu0 %v740
      %930 = vmatprep.subr.bf16.mxu0 %v749
      %931 = vmatpush1.bf16.msra.mxu0 %v748
      %932 = vmatprep.subr.bf16.mxu0 %v757
      %933 = vmatpush1.bf16.msra.mxu0 %v756
      %934 = vmatprep.subr.bf16.mxu0 %v765
      %935 = vmatpush1.bf16.msra.mxu0 %v764
      %936 = vmatprep.subr.bf16.mxu0 %v855
      %937 = vmatpush1.bf16.msra.mxu0 %v852
      %938 = vmatprep.subr.bf16.mxu0 0
      %939 = vmatpush1.bf16.msra.mxu0 0
      %940 = vmatprep.subr.bf16.mxu0 0
      %941 = vmatpush1.bf16.msra.mxu0 0
      %942 = vmatprep.subr.bf16.mxu0 0
      %943 = vmatpush1.bf16.msra.mxu0 0
      %944 = vmatprep.subr.bf16.mxu0 0
      %945 = vmatpush1.bf16.msra.mxu0 0
      %946 = vmatprep.subr.bf16.mxu0 0
      %947 = vmatpush1.bf16.msra.mxu0 0
      %948 = vmatprep.subr.bf16.mxu0 0
      %949 = vmatpush1.bf16.msra.mxu0 0
      %950 = vmatprep.subr.bf16.mxu0 0
      %951 = vmatpush1.bf16.msra.mxu0 0
      %952 = vmatprep.subr.bf16.mxu0 0
      %953 = vmatpush1.bf16.msra.mxu0 0
      %954 = vmatprep.mubr.bf16.mxu0 0
      %955 = vmatmul.mubr.bf16.gmra.mrb[0].mxu0 %v836
      %v956 = vpop.f32.mrb[0].mxu0
      %v957 = vadd.f32 %v495, %v956
      %v958 = vpop.f32.mrb[0].mxu0
      %v959 = vadd.f32 %v499, %v958
      %v960 = vpop.f32.mrb[0].mxu0
      %v961 = vadd.f32 %v495, %v960
      %v962 = vpop.f32.mrb[0].mxu0
      %v963 = vadd.f32 %v499, %v962
      %964 = vmatprep.mubr.bf16.mxu0 0
      %965 = vmatmul.mubr.bf16.gmra.mrb[0].mxu0 %v839
      %v966 = vpop.f32.mrb[0].mxu0
      %v967 = vadd.f32 %v495, %v966
      %v968 = vpop.f32.mrb[0].mxu0
      %v969 = vadd.f32 %v499, %v968
      %v970 = vpop.f32.mrb[0].mxu0
      %v971 = vadd.f32 %v495, %v970
      %v972 = vpop.f32.mrb[0].mxu0
      %v973 = vadd.f32 %v499, %v972
      %974 = vdwg.mxu0
      %975 = vmatprep.subr.bf16.mxu0 %v719
      %976 = vmatpush1.bf16.msra.mxu0 %v718
      %977 = vmatprep.subr.bf16.mxu0 %v727
      %978 = vmatpush1.bf16.msra.mxu0 %v726
      %979 = vmatprep.subr.bf16.mxu0 %v735
      %980 = vmatpush1.bf16.msra.mxu0 %v734
      %981 = vmatprep.subr.bf16.mxu0 %v743
      %982 = vmatpush1.bf16.msra.mxu0 %v742
      %983 = vmatprep.subr.bf16.mxu0 %v751
      %984 = vmatpush1.bf16.msra.mxu0 %v750
      %985 = vmatprep.subr.bf16.mxu0 %v759
      %986 = vmatpush1.bf16.msra.mxu0 %v758
      %987 = vmatprep.subr.bf16.mxu0 %v767
      %988 = vmatpush1.bf16.msra.mxu0 %v766
      %989 = vmatprep.subr.bf16.mxu0 %v861
      %990 = vmatpush1.bf16.msra.mxu0 %v858
      %991 = vmatprep.subr.bf16.mxu0 0
      %992 = vmatpush1.bf16.msra.mxu0 0
      %993 = vmatprep.subr.bf16.mxu0 0
      %994 = vmatpush1.bf16.msra.mxu0 0
      %995 = vmatprep.subr.bf16.mxu0 0
      %996 = vmatpush1.bf16.msra.mxu0 0
      %997 = vmatprep.subr.bf16.mxu0 0
      %998 = vmatpush1.bf16.msra.mxu0 0
      %999 = vmatprep.subr.bf16.mxu0 0
      %1000 = vmatpush1.bf16.msra.mxu0 0
      %1001 = vmatprep.subr.bf16.mxu0 0
      %1002 = vmatpush1.bf16.msra.mxu0 0
      %1003 = vmatprep.subr.bf16.mxu0 0
      %1004 = vmatpush1.bf16.msra.mxu0 0
      %1005 = vmatprep.subr.bf16.mxu0 0
      %1006 = vmatpush1.bf16.msra.mxu0 0
      %1007 = vmatprep.mubr.bf16.mxu0 0
      %1008 = vmatmul.mubr.bf16.gmra.mrb[0].mxu0 %v836
      %v1009 = vpop.f32.mrb[0].mxu0
      %v1010 = vadd.f32 %v503, %v1009
      %v1011 = vpop.f32.mrb[0].mxu0
      %v1012 = vadd.f32 %v507, %v1011
      %v1013 = vpop.f32.mrb[0].mxu0
      %v1014 = vadd.f32 %v503, %v1013
      %v1015 = vpop.f32.mrb[0].mxu0
      %v1016 = vadd.f32 %v507, %v1015
      %1017 = vmatprep.mubr.bf16.mxu0 0
      %1018 = vmatmul.mubr.bf16.gmra.mrb[0].mxu0 %v839
      %v1019 = vpop.f32.mrb[0].mxu0
      %v1020 = vadd.f32 %v503, %v1019
      %v1021 = vpop.f32.mrb[0].mxu0
      %v1022 = vadd.f32 %v507, %v1021
      %v1023 = vpop.f32.mrb[0].mxu0
      %v1024 = vadd.f32 %v503, %v1023
      %v1025 = vpop.f32.mrb[0].mxu0
      %v1026 = vadd.f32 %v507, %v1025
      %1027 = vdwg.mxu0
      %1028 = vmatprep.subr.bf16.mxu0 %v721
      %1029 = vmatpush1.bf16.msra.mxu0 %v720
      %1030 = vmatprep.subr.bf16.mxu0 %v729
      %1031 = vmatpush1.bf16.msra.mxu0 %v728
      %1032 = vmatprep.subr.bf16.mxu0 %v737
      %1033 = vmatpush1.bf16.msra.mxu0 %v736
      %1034 = vmatprep.subr.bf16.mxu0 %v745
      %1035 = vmatpush1.bf16.msra.mxu0 %v744
      %1036 = vmatprep.subr.bf16.mxu0 %v753
      %1037 = vmatpush1.bf16.msra.mxu0 %v752
      %1038 = vmatprep.subr.bf16.mxu0 %v761
      %1039 = vmatpush1.bf16.msra.mxu0 %v760
      %1040 = vmatprep.subr.bf16.mxu0 %v769
      %1041 = vmatpush1.bf16.msra.mxu0 %v768
      %1042 = vmatprep.subr.bf16.mxu0 %v867
      %1043 = vmatpush1.bf16.msra.mxu0 %v864
      %1044 = vmatprep.subr.bf16.mxu0 0
      %1045 = vmatpush1.bf16.msra.mxu0 0
      %1046 = vmatprep.subr.bf16.mxu0 0
      %1047 = vmatpush1.bf16.msra.mxu0 0
      %1048 = vmatprep.subr.bf16.mxu0 0
      %1049 = vmatpush1.bf16.msra.mxu0 0
      %1050 = vmatprep.subr.bf16.mxu0 0
      %1051 = vmatpush1.bf16.msra.mxu0 0
      %1052 = vmatprep.subr.bf16.mxu0 0
      %1053 = vmatpush1.bf16.msra.mxu0 0
      %1054 = vmatprep.subr.bf16.mxu0 0
      %1055 = vmatpush1.bf16.msra.mxu0 0
      %1056 = vmatprep.subr.bf16.mxu0 0
      %1057 = vmatpush1.bf16.msra.mxu0 0
      %1058 = vmatprep.subr.bf16.mxu0 0
      %1059 = vmatpush1.bf16.msra.mxu0 0
      %1060 = vmatprep.mubr.bf16.mxu0 0
      %1061 = vmatmul.mubr.bf16.gmra.mrb[0].mxu0 %v836
      %v1062 = vpop.f32.mrb[0].mxu0
      %v1063 = vadd.f32 %v511, %v1062
      %v1064 = vpop.f32.mrb[0].mxu0
      %v1065 = vadd.f32 %v515, %v1064
      %v1066 = vpop.f32.mrb[0].mxu0
      %v1067 = vadd.f32 %v511, %v1066
      %v1068 = vpop.f32.mrb[0].mxu0
      %v1069 = vadd.f32 %v515, %v1068
      %1070 = vmatprep.mubr.bf16.mxu0 0
      %1071 = vmatmul.mubr.bf16.gmra.mrb[0].mxu0 %v839
      %v1072 = vpop.f32.mrb[0].mxu0
      %v1073 = vadd.f32 %v511, %v1072
      %v1074 = vpop.f32.mrb[0].mxu0
      %v1075 = vadd.f32 %v515, %v1074
      %v1076 = vpop.f32.mrb[0].mxu0
      %v1077 = vadd.f32 %v511, %v1076
      %v1078 = vpop.f32.mrb[0].mxu0
      %v1079 = vadd.f32 %v515, %v1078
      %1080 = vdwg.mxu0
      %v1082 = vlaneseq
      %v1083 = vshrl.u32 %v1082, 7
      %v1084 = vsub.s32 0, %v1083
      %v1085 = vrot.slane %v481, %v1084
      %v1086 = vlaneseq
      %v1087 = vshrl.u32 %v1086, 7
      %v1088 = vsub.s32 1, %v1087
      %v1089 = vrot.slane %v481, %v1088
      %v1090 = vlaneseq
      %v1091 = vshrl.u32 %v1090, 7
      %v1092 = vsub.s32 2, %v1091
      %v1093 = vrot.slane %v481, %v1092
      %v1094 = vlaneseq
      %v1095 = vshrl.u32 %v1094, 7
      %v1096 = vsub.s32 3, %v1095
      %v1097 = vrot.slane %v481, %v1096
      %v1098 = vlaneseq
      %v1099 = vshrl.u32 %v1098, 7
      %v1100 = vsub.s32 4, %v1099
      %v1101 = vrot.slane %v481, %v1100
      %v1102 = vlaneseq
      %v1103 = vshrl.u32 %v1102, 7
      %v1104 = vsub.s32 5, %v1103
      %v1105 = vrot.slane %v481, %v1104
      %v1106 = vlaneseq
      %v1107 = vshrl.u32 %v1106, 7
      %v1108 = vsub.s32 6, %v1107
      %v1109 = vrot.slane %v481, %v1108
      %v1110 = vlaneseq
      %v1111 = vshrl.u32 %v1110, 7
      %v1112 = vsub.s32 7, %v1111
      %v1113 = vrot.slane %v481, %v1112
      %v1122 = vadd.f32 %v904, %v1085
      %v1123 = vadd.f32 %v906, %v1089
      %v1124 = vadd.f32 %v957, %v1093
      %v1125 = vadd.f32 %v959, %v1097
      %v1126 = vadd.f32 %v1010, %v1101
      %v1127 = vadd.f32 %v1012, %v1105
      %v1128 = vadd.f32 %v1063, %v1109
      %v1129 = vadd.f32 %v1065, %v1113
      %v1130 = vadd.f32 %v908, %v1085
      %v1131 = vadd.f32 %v910, %v1089
      %v1132 = vadd.f32 %v961, %v1093
      %v1133 = vadd.f32 %v963, %v1097
      %v1134 = vadd.f32 %v1014, %v1101
      %v1135 = vadd.f32 %v1016, %v1105
      %v1136 = vadd.f32 %v1067, %v1109
      %v1137 = vadd.f32 %v1069, %v1113
      %v1138 = vadd.f32 %v914, %v1085
      %v1139 = vadd.f32 %v916, %v1089
      %v1140 = vadd.f32 %v967, %v1093
      %v1141 = vadd.f32 %v969, %v1097
      %v1142 = vadd.f32 %v1020, %v1101
      %v1143 = vadd.f32 %v1022, %v1105
      %v1144 = vadd.f32 %v1073, %v1109
      %v1145 = vadd.f32 %v1075, %v1113
      %v1146 = vadd.f32 %v918, %v1085
      %v1147 = vadd.f32 %v920, %v1089
      %v1148 = vadd.f32 %v971, %v1093
      %v1149 = vadd.f32 %v973, %v1097
      %v1150 = vadd.f32 %v1024, %v1101
      %v1151 = vadd.f32 %v1026, %v1105
      %v1152 = vadd.f32 %v1077, %v1109
      %v1153 = vadd.f32 %v1079, %v1113
      %vm1154 = vcmp.ge.f32.partialorder %v1122, 0.0
      %vm1155 = vcmp.ge.f32.partialorder %v1123, 0.0
      %vm1156 = vcmp.ge.f32.partialorder %v1124, 0.0
      %vm1157 = vcmp.ge.f32.partialorder %v1125, 0.0
      %vm1158 = vcmp.ge.f32.partialorder %v1126, 0.0
      %vm1159 = vcmp.ge.f32.partialorder %v1127, 0.0
      %vm1160 = vcmp.ge.f32.partialorder %v1128, 0.0
      %vm1161 = vcmp.ge.f32.partialorder %v1129, 0.0
      %vm1162 = vcmp.ge.f32.partialorder %v1130, 0.0
      %vm1163 = vcmp.ge.f32.partialorder %v1131, 0.0
      %vm1164 = vcmp.ge.f32.partialorder %v1132, 0.0
      %vm1165 = vcmp.ge.f32.partialorder %v1133, 0.0
      %vm1166 = vcmp.ge.f32.partialorder %v1134, 0.0
      %vm1167 = vcmp.ge.f32.partialorder %v1135, 0.0
      %vm1168 = vcmp.ge.f32.partialorder %v1136, 0.0
      %vm1169 = vcmp.ge.f32.partialorder %v1137, 0.0
      %vm1170 = vcmp.ge.f32.partialorder %v1138, 0.0
      %vm1171 = vcmp.ge.f32.partialorder %v1139, 0.0
      %vm1172 = vcmp.ge.f32.partialorder %v1140, 0.0
      %vm1173 = vcmp.ge.f32.partialorder %v1141, 0.0
      %vm1174 = vcmp.ge.f32.partialorder %v1142, 0.0
      %vm1175 = vcmp.ge.f32.partialorder %v1143, 0.0
      %vm1176 = vcmp.ge.f32.partialorder %v1144, 0.0
      %vm1177 = vcmp.ge.f32.partialorder %v1145, 0.0
      %vm1178 = vcmp.ge.f32.partialorder %v1146, 0.0
      %vm1179 = vcmp.ge.f32.partialorder %v1147, 0.0
      %vm1180 = vcmp.ge.f32.partialorder %v1148, 0.0
      %vm1181 = vcmp.ge.f32.partialorder %v1149, 0.0
      %vm1182 = vcmp.ge.f32.partialorder %v1150, 0.0
      %vm1183 = vcmp.ge.f32.partialorder %v1151, 0.0
      %vm1184 = vcmp.ge.f32.partialorder %v1152, 0.0
      %vm1185 = vcmp.ge.f32.partialorder %v1153, 0.0
      %v1186 = vmul.f32 %v1122, 0.2
      %v1187 = vmul.f32 %v1123, 0.2
      %v1188 = vmul.f32 %v1124, 0.2
      %v1189 = vmul.f32 %v1125, 0.2
      %v1190 = vmul.f32 %v1126, 0.2
      %v1191 = vmul.f32 %v1127, 0.2
      %v1192 = vmul.f32 %v1128, 0.2
      %v1193 = vmul.f32 %v1129, 0.2
      %v1194 = vmul.f32 %v1130, 0.2
      %v1195 = vmul.f32 %v1131, 0.2
      %v1196 = vmul.f32 %v1132, 0.2
      %v1197 = vmul.f32 %v1133, 0.2
      %v1198 = vmul.f32 %v1134, 0.2
      %v1199 = vmul.f32 %v1135, 0.2
      %v1200 = vmul.f32 %v1136, 0.2
      %v1201 = vmul.f32 %v1137, 0.2
      %v1202 = vmul.f32 %v1138, 0.2
      %v1203 = vmul.f32 %v1139, 0.2
      %v1204 = vmul.f32 %v1140, 0.2
      %v1205 = vmul.f32 %v1141, 0.2
      %v1206 = vmul.f32 %v1142, 0.2
      %v1207 = vmul.f32 %v1143, 0.2
      %v1208 = vmul.f32 %v1144, 0.2
      %v1209 = vmul.f32 %v1145, 0.2
      %v1210 = vmul.f32 %v1146, 0.2
      %v1211 = vmul.f32 %v1147, 0.2
      %v1212 = vmul.f32 %v1148, 0.2
      %v1213 = vmul.f32 %v1149, 0.2
      %v1214 = vmul.f32 %v1150, 0.2
      %v1215 = vmul.f32 %v1151, 0.2
      %v1216 = vmul.f32 %v1152, 0.2
      %v1217 = vmul.f32 %v1153, 0.2
      %v1218 = vsel %vm1154, %v1122, %v1186
      %v1219 = vsel %vm1155, %v1123, %v1187
      %v1220 = vsel %vm1156, %v1124, %v1188
      %v1221 = vsel %vm1157, %v1125, %v1189
      %v1222 = vsel %vm1158, %v1126, %v1190
      %v1223 = vsel %vm1159, %v1127, %v1191
      %v1224 = vsel %vm1160, %v1128, %v1192
      %v1225 = vsel %vm1161, %v1129, %v1193
      %v1226 = vsel %vm1162, %v1130, %v1194
      %v1227 = vsel %vm1163, %v1131, %v1195
      %v1228 = vsel %vm1164, %v1132, %v1196
      %v1229 = vsel %vm1165, %v1133, %v1197
      %v1230 = vsel %vm1166, %v1134, %v1198
      %v1231 = vsel %vm1167, %v1135, %v1199
      %v1232 = vsel %vm1168, %v1136, %v1200
      %v1233 = vsel %vm1169, %v1137, %v1201
      %v1234 = vsel %vm1170, %v1138, %v1202
      %v1235 = vsel %vm1171, %v1139, %v1203
      %v1236 = vsel %vm1172, %v1140, %v1204
      %v1237 = vsel %vm1173, %v1141, %v1205
      %v1238 = vsel %vm1174, %v1142, %v1206
      %v1239 = vsel %vm1175, %v1143, %v1207
      %v1240 = vsel %vm1176, %v1144, %v1208
      %v1241 = vsel %vm1177, %v1145, %v1209
      %v1242 = vsel %vm1178, %v1146, %v1210
      %v1243 = vsel %vm1179, %v1147, %v1211
      %v1244 = vsel %vm1180, %v1148, %v1212
      %v1245 = vsel %vm1181, %v1149, %v1213
      %v1246 = vsel %vm1182, %v1150, %v1214
      %v1247 = vsel %vm1183, %v1151, %v1215
      %v1248 = vsel %vm1184, %v1152, %v1216
      %v1249 = vsel %vm1185, %v1153, %v1217
      %v1250 = vld [vmem:[%s4] sm:$0xff]
      %v1251 = vld [vmem:[%s4 + $0x8] sm:$0xff]
      %v1252 = vld [vmem:[%s4 + $0x10] sm:$0xff]
      %v1253 = vld [vmem:[%s4 + $0x18] sm:$0xff]
      %v1254 = vld [vmem:[%s4 + $0x20] sm:$0xff]
      %v1255 = vld [vmem:[%s4 + $0x28] sm:$0xff]
      %v1256 = vld [vmem:[%s4 + $0x30] sm:$0xff]
      %v1257 = vld [vmem:[%s4 + $0x38] sm:$0xff]
      %v1258 = vld [vmem:[%s4 + $0x40] sm:$0xff]
      %v1259 = vld [vmem:[%s4 + $0x48] sm:$0xff]
      %v1260 = vld [vmem:[%s4 + $0x50] sm:$0xff]
      %v1261 = vld [vmem:[%s4 + $0x58] sm:$0xff]
      %v1262 = vld [vmem:[%s4 + $0x60] sm:$0xff]
      %v1263 = vld [vmem:[%s4 + $0x68] sm:$0xff]
      %v1264 = vld [vmem:[%s4 + $0x70] sm:$0xff]
      %v1265 = vld [vmem:[%s4 + $0x78] sm:$0xff]
      %v1266 = vld [vmem:[%s4 + $0x80] sm:$0xff]
      %v1267 = vld [vmem:[%s4 + $0x88] sm:$0xff]
      %v1268 = vld [vmem:[%s4 + $0x90] sm:$0xff]
      %v1269 = vld [vmem:[%s4 + $0x98] sm:$0xff]
      %v1270 = vld [vmem:[%s4 + $0xa0] sm:$0xff]
      %v1271 = vld [vmem:[%s4 + $0xa8] sm:$0xff]
      %v1272 = vld [vmem:[%s4 + $0xb0] sm:$0xff]
      %v1273 = vld [vmem:[%s4 + $0xb8] sm:$0xff]
      %v1274 = vld [vmem:[%s4 + $0xc0] sm:$0xff]
      %v1275 = vld [vmem:[%s4 + $0xc8] sm:$0xff]
      %v1276 = vld [vmem:[%s4 + $0xd0] sm:$0xff]
      %v1277 = vld [vmem:[%s4 + $0xd8] sm:$0xff]
      %v1278 = vld [vmem:[%s4 + $0xe0] sm:$0xff]
      %v1279 = vld [vmem:[%s4 + $0xe8] sm:$0xff]
      %v1280 = vld [vmem:[%s4 + $0xf0] sm:$0xff]
      %v1281 = vld [vmem:[%s4 + $0xf8] sm:$0xff]
      %v1282 = vld [vmem:[%s4 + $0x100] sm:$0xff]
      %v1283 = vld [vmem:[%s4 + $0x108] sm:$0xff]
      %v1284 = vld [vmem:[%s4 + $0x110] sm:$0xff]
      %v1285 = vld [vmem:[%s4 + $0x118] sm:$0xff]
      %v1286 = vld [vmem:[%s4 + $0x120] sm:$0xff]
      %v1287 = vld [vmem:[%s4 + $0x128] sm:$0xff]
      %v1288 = vld [vmem:[%s4 + $0x130] sm:$0xff]
      %v1289 = vld [vmem:[%s4 + $0x138] sm:$0xff]
      %v1290 = vld [vmem:[%s4 + $0x140] sm:$0xff]
      %v1291 = vld [vmem:[%s4 + $0x148] sm:$0xff]
      %v1292 = vld [vmem:[%s4 + $0x150] sm:$0xff]
      %v1293 = vld [vmem:[%s4 + $0x158] sm:$0xff]
      %v1294 = vld [vmem:[%s4 + $0x160] sm:$0xff]
      %v1295 = vld [vmem:[%s4 + $0x168] sm:$0xff]
      %v1296 = vld [vmem:[%s4 + $0x170] sm:$0xff]
      %v1297 = vld [vmem:[%s4 + $0x178] sm:$0xff]
      %v1298 = vld [vmem:[%s4 + $0x180] sm:$0xff]
      %v1299 = vld [vmem:[%s4 + $0x188] sm:$0xff]
      %v1300 = vld [vmem:[%s4 + $0x190] sm:$0xff]
      %v1301 = vld [vmem:[%s4 + $0x198] sm:$0xff]
      %v1302 = vld [vmem:[%s4 + $0x1a0] sm:$0xff]
      %v1303 = vld [vmem:[%s4 + $0x1a8] sm:$0xff]
      %v1304 = vld [vmem:[%s4 + $0x1b0] sm:$0xff]
      %v1305 = vld [vmem:[%s4 + $0x1b8] sm:$0xff]
      %v1306 = vld [vmem:[%s4 + $0x1c0] sm:$0xff]
      %v1307 = vld [vmem:[%s4 + $0x1c8] sm:$0xff]
      %v1308 = vld [vmem:[%s4 + $0x1d0] sm:$0xff]
      %v1309 = vld [vmem:[%s4 + $0x1d8] sm:$0xff]
      %v1310 = vld [vmem:[%s4 + $0x1e0] sm:$0xff]
      %v1311 = vld [vmem:[%s4 + $0x1e8] sm:$0xff]
      %v1312 = vld [vmem:[%s4 + $0x1f0] sm:$0xff]
      %v1313 = vld [vmem:[%s4 + $0x1f8] sm:$0xff]
      %v1314 = vld [vmem:[%s4 + $0x200] sm:$0xff]
      %v1315 = vld [vmem:[%s4 + $0x208] sm:$0xff]
      %v1316 = vld [vmem:[%s4 + $0x210] sm:$0xff]
      %v1317 = vld [vmem:[%s4 + $0x218] sm:$0xff]
      %v1318 = vld [vmem:[%s4 + $0x220] sm:$0xff]
      %v1319 = vld [vmem:[%s4 + $0x228] sm:$0xff]
      %v1320 = vld [vmem:[%s4 + $0x230] sm:$0xff]
      %v1321 = vld [vmem:[%s4 + $0x238] sm:$0xff]
      %v1322 = vld [vmem:[%s4 + $0x240] sm:$0xff]
      %v1323 = vld [vmem:[%s4 + $0x248] sm:$0xff]
      %v1324 = vld [vmem:[%s4 + $0x250] sm:$0xff]
      %v1325 = vld [vmem:[%s4 + $0x258] sm:$0xff]
      %v1326 = vld [vmem:[%s4 + $0x260] sm:$0xff]
      %v1327 = vld [vmem:[%s4 + $0x268] sm:$0xff]
      %v1328 = vld [vmem:[%s4 + $0x270] sm:$0xff]
      %v1329 = vld [vmem:[%s4 + $0x278] sm:$0xff]
      %v1330 = vld [vmem:[%s4 + $0x280] sm:$0xff]
      %v1331 = vld [vmem:[%s4 + $0x288] sm:$0xff]
      %v1332 = vld [vmem:[%s4 + $0x290] sm:$0xff]
      %v1333 = vld [vmem:[%s4 + $0x298] sm:$0xff]
      %v1334 = vld [vmem:[%s4 + $0x2a0] sm:$0xff]
      %v1335 = vld [vmem:[%s4 + $0x2a8] sm:$0xff]
      %v1336 = vld [vmem:[%s4 + $0x2b0] sm:$0xff]
      %v1337 = vld [vmem:[%s4 + $0x2b8] sm:$0xff]
      %v1338 = vld [vmem:[%s4 + $0x2c0] sm:$0xff]
      %v1339 = vld [vmem:[%s4 + $0x2c8] sm:$0xff]
      %v1340 = vld [vmem:[%s4 + $0x2d0] sm:$0xff]
      %v1341 = vld [vmem:[%s4 + $0x2d8] sm:$0xff]
      %v1342 = vld [vmem:[%s4 + $0x2e0] sm:$0xff]
      %v1343 = vld [vmem:[%s4 + $0x2e8] sm:$0xff]
      %v1344 = vld [vmem:[%s4 + $0x2f0] sm:$0xff]
      %v1345 = vld [vmem:[%s4 + $0x2f8] sm:$0xff]
      %v1346 = vld [vmem:[%s4 + $0x300] sm:$0xff]
      %v1347 = vld [vmem:[%s4 + $0x308] sm:$0xff]
      %v1348 = vld [vmem:[%s4 + $0x310] sm:$0xff]
      %v1349 = vld [vmem:[%s4 + $0x318] sm:$0xff]
      %v1350 = vld [vmem:[%s4 + $0x320] sm:$0xff]
      %v1351 = vld [vmem:[%s4 + $0x328] sm:$0xff]
      %v1352 = vld [vmem:[%s4 + $0x330] sm:$0xff]
      %v1353 = vld [vmem:[%s4 + $0x338] sm:$0xff]
      %v1354 = vld [vmem:[%s4 + $0x340] sm:$0xff]
      %v1355 = vld [vmem:[%s4 + $0x348] sm:$0xff]
      %v1356 = vld [vmem:[%s4 + $0x350] sm:$0xff]
      %v1357 = vld [vmem:[%s4 + $0x358] sm:$0xff]
      %v1358 = vld [vmem:[%s4 + $0x360] sm:$0xff]
      %v1359 = vld [vmem:[%s4 + $0x368] sm:$0xff]
      %v1360 = vld [vmem:[%s4 + $0x370] sm:$0xff]
      %v1361 = vld [vmem:[%s4 + $0x378] sm:$0xff]
      %v1362 = vld [vmem:[%s4 + $0x380] sm:$0xff]
      %v1363 = vld [vmem:[%s4 + $0x388] sm:$0xff]
      %v1364 = vld [vmem:[%s4 + $0x390] sm:$0xff]
      %v1365 = vld [vmem:[%s4 + $0x398] sm:$0xff]
      %v1366 = vld [vmem:[%s4 + $0x3a0] sm:$0xff]
      %v1367 = vld [vmem:[%s4 + $0x3a8] sm:$0xff]
      %v1368 = vld [vmem:[%s4 + $0x3b0] sm:$0xff]
      %v1369 = vld [vmem:[%s4 + $0x3b8] sm:$0xff]
      %v1370 = vld [vmem:[%s4 + $0x3c0] sm:$0xff]
      %v1371 = vld [vmem:[%s4 + $0x3c8] sm:$0xff]
      %v1372 = vld [vmem:[%s4 + $0x3d0] sm:$0xff]
      %v1373 = vld [vmem:[%s4 + $0x3d8] sm:$0xff]
      %v1374 = vld [vmem:[%s4 + $0x3e0] sm:$0xff]
      %v1375 = vld [vmem:[%s4 + $0x3e8] sm:$0xff]
      %v1376 = vld [vmem:[%s4 + $0x3f0] sm:$0xff]
      %v1377 = vld [vmem:[%s4 + $0x3f8] sm:$0xff]
      %v1378 = vld [vmem:[%s5] sm:$0x3]
      %v1379 = vpack.c.bf16 %v1226, %v1218
      %v1380 = vpack.c.bf16 %v1227, %v1219
      %v1381 = vpack.c.bf16 %v1228, %v1220
      %v1382 = vpack.c.bf16 %v1229, %v1221
      %v1383 = vpack.c.bf16 %v1230, %v1222
      %v1384 = vpack.c.bf16 %v1231, %v1223
      %v1385 = vpack.c.bf16 %v1232, %v1224
      %v1386 = vpack.c.bf16 %v1233, %v1225
      %v1387 = vpack.c.bf16 %v1242, %v1234
      %v1388 = vpack.c.bf16 %v1243, %v1235
      %v1389 = vpack.c.bf16 %v1244, %v1236
      %v1390 = vpack.c.bf16 %v1245, %v1237
      %v1391 = vpack.c.bf16 %v1246, %v1238
      %v1392 = vpack.c.bf16 %v1247, %v1239
      %v1393 = vpack.c.bf16 %v1248, %v1240
      %v1394 = vpack.c.bf16 %v1249, %v1241
      %v1396 = vlaneseq
      %v1397 = vshrl.u32 %v1396, 7
      %v1398 = vsub.s32 0, %v1397
      %v1399 = vrot.slane %v1378, %v1398
      %v1400 = vlaneseq
      %v1401 = vshrl.u32 %v1400, 7
      %v1402 = vsub.s32 1, %v1401
      %v1403 = vrot.slane %v1378, %v1402
      %v1534 = vunpack.c.l.b16 %v1250
      %v1535 = vunpack.c.h.b16 %v1250
      %v1536 = vunpack.c.l.b16 %v1251
      %v1537 = vunpack.c.h.b16 %v1251
      %v1538 = vunpack.c.l.b16 %v1252
      %v1539 = vunpack.c.h.b16 %v1252
      %v1540 = vunpack.c.l.b16 %v1253
      %v1541 = vunpack.c.h.b16 %v1253
      %v1542 = vunpack.c.l.b16 %v1254
      %v1543 = vunpack.c.h.b16 %v1254
      %v1544 = vunpack.c.l.b16 %v1255
      %v1545 = vunpack.c.h.b16 %v1255
      %v1546 = vunpack.c.l.b16 %v1256
      %v1547 = vunpack.c.h.b16 %v1256
      %v1548 = vunpack.c.l.b16 %v1257
      %v1549 = vunpack.c.h.b16 %v1257
      %v1550 = vunpack.c.l.b16 %v1258
      %v1551 = vunpack.c.h.b16 %v1258
      %v1552 = vunpack.c.l.b16 %v1259
      %v1553 = vunpack.c.h.b16 %v1259
      %v1554 = vunpack.c.l.b16 %v1260
      %v1555 = vunpack.c.h.b16 %v1260
      %v1556 = vunpack.c.l.b16 %v1261
      %v1557 = vunpack.c.h.b16 %v1261
      %v1558 = vunpack.c.l.b16 %v1262
      %v1559 = vunpack.c.h.b16 %v1262
      %v1560 = vunpack.c.l.b16 %v1263
      %v1561 = vunpack.c.h.b16 %v1263
      %v1562 = vunpack.c.l.b16 %v1264
      %v1563 = vunpack.c.h.b16 %v1264
      %v1564 = vunpack.c.l.b16 %v1265
      %v1565 = vunpack.c.h.b16 %v1265
      %v1566 = vunpack.c.l.b16 %v1266
      %v1567 = vunpack.c.h.b16 %v1266
      %v1568 = vunpack.c.l.b16 %v1267
      %v1569 = vunpack.c.h.b16 %v1267
      %v1570 = vunpack.c.l.b16 %v1268
      %v1571 = vunpack.c.h.b16 %v1268
      %v1572 = vunpack.c.l.b16 %v1269
      %v1573 = vunpack.c.h.b16 %v1269
      %v1574 = vunpack.c.l.b16 %v1270
      %v1575 = vunpack.c.h.b16 %v1270
      %v1576 = vunpack.c.l.b16 %v1271
      %v1577 = vunpack.c.h.b16 %v1271
      %v1578 = vunpack.c.l.b16 %v1272
      %v1579 = vunpack.c.h.b16 %v1272
      %v1580 = vunpack.c.l.b16 %v1273
      %v1581 = vunpack.c.h.b16 %v1273
      %v1582 = vunpack.c.l.b16 %v1274
      %v1583 = vunpack.c.h.b16 %v1274
      %v1584 = vunpack.c.l.b16 %v1275
      %v1585 = vunpack.c.h.b16 %v1275
      %v1586 = vunpack.c.l.b16 %v1276
      %v1587 = vunpack.c.h.b16 %v1276
      %v1588 = vunpack.c.l.b16 %v1277
      %v1589 = vunpack.c.h.b16 %v1277
      %v1590 = vunpack.c.l.b16 %v1278
      %v1591 = vunpack.c.h.b16 %v1278
      %v1592 = vunpack.c.l.b16 %v1279
      %v1593 = vunpack.c.h.b16 %v1279
      %v1594 = vunpack.c.l.b16 %v1280
      %v1595 = vunpack.c.h.b16 %v1280
      %v1596 = vunpack.c.l.b16 %v1281
      %v1597 = vunpack.c.h.b16 %v1281
      %v1598 = vunpack.c.l.b16 %v1282
      %v1599 = vunpack.c.h.b16 %v1282
      %v1600 = vunpack.c.l.b16 %v1283
      %v1601 = vunpack.c.h.b16 %v1283
      %v1602 = vunpack.c.l.b16 %v1284
      %v1603 = vunpack.c.h.b16 %v1284
      %v1604 = vunpack.c.l.b16 %v1285
      %v1605 = vunpack.c.h.b16 %v1285
      %v1606 = vunpack.c.l.b16 %v1286
      %v1607 = vunpack.c.h.b16 %v1286
      %v1608 = vunpack.c.l.b16 %v1287
      %v1609 = vunpack.c.h.b16 %v1287
      %v1610 = vunpack.c.l.b16 %v1288
      %v1611 = vunpack.c.h.b16 %v1288
      %v1612 = vunpack.c.l.b16 %v1289
      %v1613 = vunpack.c.h.b16 %v1289
      %v1614 = vunpack.c.l.b16 %v1290
      %v1615 = vunpack.c.h.b16 %v1290
      %v1616 = vunpack.c.l.b16 %v1291
      %v1617 = vunpack.c.h.b16 %v1291
      %v1618 = vunpack.c.l.b16 %v1292
      %v1619 = vunpack.c.h.b16 %v1292
      %v1620 = vunpack.c.l.b16 %v1293
      %v1621 = vunpack.c.h.b16 %v1293
      %v1622 = vunpack.c.l.b16 %v1294
      %v1623 = vunpack.c.h.b16 %v1294
      %v1624 = vunpack.c.l.b16 %v1295
      %v1625 = vunpack.c.h.b16 %v1295
      %v1626 = vunpack.c.l.b16 %v1296
      %v1627 = vunpack.c.h.b16 %v1296
      %v1628 = vunpack.c.l.b16 %v1297
      %v1629 = vunpack.c.h.b16 %v1297
      %v1630 = vunpack.c.l.b16 %v1298
      %v1631 = vunpack.c.h.b16 %v1298
      %v1632 = vunpack.c.l.b16 %v1299
      %v1633 = vunpack.c.h.b16 %v1299
      %v1634 = vunpack.c.l.b16 %v1300
      %v1635 = vunpack.c.h.b16 %v1300
      %v1636 = vunpack.c.l.b16 %v1301
      %v1637 = vunpack.c.h.b16 %v1301
      %v1638 = vunpack.c.l.b16 %v1302
      %v1639 = vunpack.c.h.b16 %v1302
      %v1640 = vunpack.c.l.b16 %v1303
      %v1641 = vunpack.c.h.b16 %v1303
      %v1642 = vunpack.c.l.b16 %v1304
      %v1643 = vunpack.c.h.b16 %v1304
      %v1644 = vunpack.c.l.b16 %v1305
      %v1645 = vunpack.c.h.b16 %v1305
      %v1646 = vunpack.c.l.b16 %v1306
      %v1647 = vunpack.c.h.b16 %v1306
      %v1648 = vunpack.c.l.b16 %v1307
      %v1649 = vunpack.c.h.b16 %v1307
      %v1650 = vunpack.c.l.b16 %v1308
      %v1651 = vunpack.c.h.b16 %v1308
      %v1652 = vunpack.c.l.b16 %v1309
      %v1653 = vunpack.c.h.b16 %v1309
      %v1654 = vunpack.c.l.b16 %v1310
      %v1655 = vunpack.c.h.b16 %v1310
      %v1656 = vunpack.c.l.b16 %v1311
      %v1657 = vunpack.c.h.b16 %v1311
      %v1658 = vunpack.c.l.b16 %v1312
      %v1659 = vunpack.c.h.b16 %v1312
      %v1660 = vunpack.c.l.b16 %v1313
      %v1661 = vunpack.c.h.b16 %v1313
      %v1662 = vunpack.c.l.b16 %v1314
      %v1663 = vunpack.c.h.b16 %v1314
      %v1664 = vunpack.c.l.b16 %v1315
      %v1665 = vunpack.c.h.b16 %v1315
      %v1666 = vunpack.c.l.b16 %v1316
      %v1667 = vunpack.c.h.b16 %v1316
      %v1668 = vunpack.c.l.b16 %v1317
      %v1669 = vunpack.c.h.b16 %v1317
      %v1670 = vunpack.c.l.b16 %v1318
      %v1671 = vunpack.c.h.b16 %v1318
      %v1672 = vunpack.c.l.b16 %v1319
      %v1673 = vunpack.c.h.b16 %v1319
      %v1674 = vunpack.c.l.b16 %v1320
      %v1675 = vunpack.c.h.b16 %v1320
      %v1676 = vunpack.c.l.b16 %v1321
      %v1677 = vunpack.c.h.b16 %v1321
      %v1678 = vunpack.c.l.b16 %v1322
      %v1679 = vunpack.c.h.b16 %v1322
      %v1680 = vunpack.c.l.b16 %v1323
      %v1681 = vunpack.c.h.b16 %v1323
      %v1682 = vunpack.c.l.b16 %v1324
      %v1683 = vunpack.c.h.b16 %v1324
      %v1684 = vunpack.c.l.b16 %v1325
      %v1685 = vunpack.c.h.b16 %v1325
      %v1686 = vunpack.c.l.b16 %v1326
      %v1687 = vunpack.c.h.b16 %v1326
      %v1688 = vunpack.c.l.b16 %v1327
      %v1689 = vunpack.c.h.b16 %v1327
      %v1690 = vunpack.c.l.b16 %v1328
      %v1691 = vunpack.c.h.b16 %v1328
      %v1692 = vunpack.c.l.b16 %v1329
      %v1693 = vunpack.c.h.b16 %v1329
      %v1694 = vunpack.c.l.b16 %v1330
      %v1695 = vunpack.c.h.b16 %v1330
      %v1696 = vunpack.c.l.b16 %v1331
      %v1697 = vunpack.c.h.b16 %v1331
      %v1698 = vunpack.c.l.b16 %v1332
      %v1699 = vunpack.c.h.b16 %v1332
      %v1700 = vunpack.c.l.b16 %v1333
      %v1701 = vunpack.c.h.b16 %v1333
      %v1702 = vunpack.c.l.b16 %v1334
      %v1703 = vunpack.c.h.b16 %v1334
      %v1704 = vunpack.c.l.b16 %v1335
      %v1705 = vunpack.c.h.b16 %v1335
      %v1706 = vunpack.c.l.b16 %v1336
      %v1707 = vunpack.c.h.b16 %v1336
      %v1708 = vunpack.c.l.b16 %v1337
      %v1709 = vunpack.c.h.b16 %v1337
      %v1710 = vunpack.c.l.b16 %v1338
      %v1711 = vunpack.c.h.b16 %v1338
      %v1712 = vunpack.c.l.b16 %v1339
      %v1713 = vunpack.c.h.b16 %v1339
      %v1714 = vunpack.c.l.b16 %v1340
      %v1715 = vunpack.c.h.b16 %v1340
      %v1716 = vunpack.c.l.b16 %v1341
      %v1717 = vunpack.c.h.b16 %v1341
      %v1718 = vunpack.c.l.b16 %v1342
      %v1719 = vunpack.c.h.b16 %v1342
      %v1720 = vunpack.c.l.b16 %v1343
      %v1721 = vunpack.c.h.b16 %v1343
      %v1722 = vunpack.c.l.b16 %v1344
      %v1723 = vunpack.c.h.b16 %v1344
      %v1724 = vunpack.c.l.b16 %v1345
      %v1725 = vunpack.c.h.b16 %v1345
      %v1726 = vunpack.c.l.b16 %v1346
      %v1727 = vunpack.c.h.b16 %v1346
      %v1728 = vunpack.c.l.b16 %v1347
      %v1729 = vunpack.c.h.b16 %v1347
      %v1730 = vunpack.c.l.b16 %v1348
      %v1731 = vunpack.c.h.b16 %v1348
      %v1732 = vunpack.c.l.b16 %v1349
      %v1733 = vunpack.c.h.b16 %v1349
      %v1734 = vunpack.c.l.b16 %v1350
      %v1735 = vunpack.c.h.b16 %v1350
      %v1736 = vunpack.c.l.b16 %v1351
      %v1737 = vunpack.c.h.b16 %v1351
      %v1738 = vunpack.c.l.b16 %v1352
      %v1739 = vunpack.c.h.b16 %v1352
      %v1740 = vunpack.c.l.b16 %v1353
      %v1741 = vunpack.c.h.b16 %v1353
      %v1742 = vunpack.c.l.b16 %v1354
      %v1743 = vunpack.c.h.b16 %v1354
      %v1744 = vunpack.c.l.b16 %v1355
      %v1745 = vunpack.c.h.b16 %v1355
      %v1746 = vunpack.c.l.b16 %v1356
      %v1747 = vunpack.c.h.b16 %v1356
      %v1748 = vunpack.c.l.b16 %v1357
      %v1749 = vunpack.c.h.b16 %v1357
      %v1750 = vunpack.c.l.b16 %v1358
      %v1751 = vunpack.c.h.b16 %v1358
      %v1752 = vunpack.c.l.b16 %v1359
      %v1753 = vunpack.c.h.b16 %v1359
      %v1754 = vunpack.c.l.b16 %v1360
      %v1755 = vunpack.c.h.b16 %v1360
      %v1756 = vunpack.c.l.b16 %v1361
      %v1757 = vunpack.c.h.b16 %v1361
      %v1758 = vunpack.c.l.b16 %v1362
      %v1759 = vunpack.c.h.b16 %v1362
      %v1760 = vunpack.c.l.b16 %v1363
      %v1761 = vunpack.c.h.b16 %v1363
      %v1762 = vunpack.c.l.b16 %v1364
      %v1763 = vunpack.c.h.b16 %v1364
      %v1764 = vunpack.c.l.b16 %v1365
      %v1765 = vunpack.c.h.b16 %v1365
      %v1766 = vunpack.c.l.b16 %v1366
      %v1767 = vunpack.c.h.b16 %v1366
      %v1768 = vunpack.c.l.b16 %v1367
      %v1769 = vunpack.c.h.b16 %v1367
      %v1770 = vunpack.c.l.b16 %v1368
      %v1771 = vunpack.c.h.b16 %v1368
      %v1772 = vunpack.c.l.b16 %v1369
      %v1773 = vunpack.c.h.b16 %v1369
      %v1774 = vunpack.c.l.b16 %v1370
      %v1775 = vunpack.c.h.b16 %v1370
      %v1776 = vunpack.c.l.b16 %v1371
      %v1777 = vunpack.c.h.b16 %v1371
      %v1778 = vunpack.c.l.b16 %v1372
      %v1779 = vunpack.c.h.b16 %v1372
      %v1780 = vunpack.c.l.b16 %v1373
      %v1781 = vunpack.c.h.b16 %v1373
      %v1782 = vunpack.c.l.b16 %v1374
      %v1783 = vunpack.c.h.b16 %v1374
      %v1784 = vunpack.c.l.b16 %v1375
      %v1785 = vunpack.c.h.b16 %v1375
      %v1786 = vunpack.c.l.b16 %v1376
      %v1787 = vunpack.c.h.b16 %v1376
      %v1788 = vunpack.c.l.b16 %v1377
      %v1789 = vunpack.c.h.b16 %v1377
      %v1790 = vpack.c.b16 %v1536, %v1534
      %v1791 = vpack.c.b16 %v1537, %v1535
      %v1792 = vpack.c.b16 %v1540, %v1538
      %v1793 = vpack.c.b16 %v1541, %v1539
      %v1794 = vpack.c.b16 %v1544, %v1542
      %v1795 = vpack.c.b16 %v1545, %v1543
      %v1796 = vpack.c.b16 %v1548, %v1546
      %v1797 = vpack.c.b16 %v1549, %v1547
      %v1798 = vpack.c.b16 %v1552, %v1550
      %v1799 = vpack.c.b16 %v1553, %v1551
      %v1800 = vpack.c.b16 %v1556, %v1554
      %v1801 = vpack.c.b16 %v1557, %v1555
      %v1802 = vpack.c.b16 %v1560, %v1558
      %v1803 = vpack.c.b16 %v1561, %v1559
      %v1804 = vpack.c.b16 %v1564, %v1562
      %v1805 = vpack.c.b16 %v1565, %v1563
      %v1806 = vpack.c.b16 %v1568, %v1566
      %v1807 = vpack.c.b16 %v1569, %v1567
      %v1808 = vpack.c.b16 %v1572, %v1570
      %v1809 = vpack.c.b16 %v1573, %v1571
      %v1810 = vpack.c.b16 %v1576, %v1574
      %v1811 = vpack.c.b16 %v1577, %v1575
      %v1812 = vpack.c.b16 %v1580, %v1578
      %v1813 = vpack.c.b16 %v1581, %v1579
      %v1814 = vpack.c.b16 %v1584, %v1582
      %v1815 = vpack.c.b16 %v1585, %v1583
      %v1816 = vpack.c.b16 %v1588, %v1586
      %v1817 = vpack.c.b16 %v1589, %v1587
      %v1818 = vpack.c.b16 %v1592, %v1590
      %v1819 = vpack.c.b16 %v1593, %v1591
      %v1820 = vpack.c.b16 %v1596, %v1594
      %v1821 = vpack.c.b16 %v1597, %v1595
      %v1822 = vpack.c.b16 %v1600, %v1598
      %v1823 = vpack.c.b16 %v1601, %v1599
      %v1824 = vpack.c.b16 %v1604, %v1602
      %v1825 = vpack.c.b16 %v1605, %v1603
      %v1826 = vpack.c.b16 %v1608, %v1606
      %v1827 = vpack.c.b16 %v1609, %v1607
      %v1828 = vpack.c.b16 %v1612, %v1610
      %v1829 = vpack.c.b16 %v1613, %v1611
      %v1830 = vpack.c.b16 %v1616, %v1614
      %v1831 = vpack.c.b16 %v1617, %v1615
      %v1832 = vpack.c.b16 %v1620, %v1618
      %v1833 = vpack.c.b16 %v1621, %v1619
      %v1834 = vpack.c.b16 %v1624, %v1622
      %v1835 = vpack.c.b16 %v1625, %v1623
      %v1836 = vpack.c.b16 %v1628, %v1626
      %v1837 = vpack.c.b16 %v1629, %v1627
      %v1838 = vpack.c.b16 %v1632, %v1630
      %v1839 = vpack.c.b16 %v1633, %v1631
      %v1840 = vpack.c.b16 %v1636, %v1634
      %v1841 = vpack.c.b16 %v1637, %v1635
      %v1842 = vpack.c.b16 %v1640, %v1638
      %v1843 = vpack.c.b16 %v1641, %v1639
      %v1844 = vpack.c.b16 %v1644, %v1642
      %v1845 = vpack.c.b16 %v1645, %v1643
      %v1846 = vpack.c.b16 %v1648, %v1646
      %v1847 = vpack.c.b16 %v1649, %v1647
      %v1848 = vpack.c.b16 %v1652, %v1650
      %v1849 = vpack.c.b16 %v1653, %v1651
      %v1850 = vpack.c.b16 %v1656, %v1654
      %v1851 = vpack.c.b16 %v1657, %v1655
      %v1852 = vpack.c.b16 %v1660, %v1658
      %v1853 = vpack.c.b16 %v1661, %v1659
      %v1854 = vpack.c.b16 %v1664, %v1662
      %v1855 = vpack.c.b16 %v1665, %v1663
      %v1856 = vpack.c.b16 %v1668, %v1666
      %v1857 = vpack.c.b16 %v1669, %v1667
      %v1858 = vpack.c.b16 %v1672, %v1670
      %v1859 = vpack.c.b16 %v1673, %v1671
      %v1860 = vpack.c.b16 %v1676, %v1674
      %v1861 = vpack.c.b16 %v1677, %v1675
      %v1862 = vpack.c.b16 %v1680, %v1678
      %v1863 = vpack.c.b16 %v1681, %v1679
      %v1864 = vpack.c.b16 %v1684, %v1682
      %v1865 = vpack.c.b16 %v1685, %v1683
      %v1866 = vpack.c.b16 %v1688, %v1686
      %v1867 = vpack.c.b16 %v1689, %v1687
      %v1868 = vpack.c.b16 %v1692, %v1690
      %v1869 = vpack.c.b16 %v1693, %v1691
      %v1870 = vpack.c.b16 %v1696, %v1694
      %v1871 = vpack.c.b16 %v1697, %v1695
      %v1872 = vpack.c.b16 %v1700, %v1698
      %v1873 = vpack.c.b16 %v1701, %v1699
      %v1874 = vpack.c.b16 %v1704, %v1702
      %v1875 = vpack.c.b16 %v1705, %v1703
      %v1876 = vpack.c.b16 %v1708, %v1706
      %v1877 = vpack.c.b16 %v1709, %v1707
      %v1878 = vpack.c.b16 %v1712, %v1710
      %v1879 = vpack.c.b16 %v1713, %v1711
      %v1880 = vpack.c.b16 %v1716, %v1714
      %v1881 = vpack.c.b16 %v1717, %v1715
      %v1882 = vpack.c.b16 %v1720, %v1718
      %v1883 = vpack.c.b16 %v1721, %v1719
      %v1884 = vpack.c.b16 %v1724, %v1722
      %v1885 = vpack.c.b16 %v1725, %v1723
      %v1886 = vpack.c.b16 %v1728, %v1726
      %v1887 = vpack.c.b16 %v1729, %v1727
      %v1888 = vpack.c.b16 %v1732, %v1730
      %v1889 = vpack.c.b16 %v1733, %v1731
      %v1890 = vpack.c.b16 %v1736, %v1734
      %v1891 = vpack.c.b16 %v1737, %v1735
      %v1892 = vpack.c.b16 %v1740, %v1738
      %v1893 = vpack.c.b16 %v1741, %v1739
      %v1894 = vpack.c.b16 %v1744, %v1742
      %v1895 = vpack.c.b16 %v1745, %v1743
      %v1896 = vpack.c.b16 %v1748, %v1746
      %v1897 = vpack.c.b16 %v1749, %v1747
      %v1898 = vpack.c.b16 %v1752, %v1750
      %v1899 = vpack.c.b16 %v1753, %v1751
      %v1900 = vpack.c.b16 %v1756, %v1754
      %v1901 = vpack.c.b16 %v1757, %v1755
      %v1902 = vpack.c.b16 %v1760, %v1758
      %v1903 = vpack.c.b16 %v1761, %v1759
      %v1904 = vpack.c.b16 %v1764, %v1762
      %v1905 = vpack.c.b16 %v1765, %v1763
      %v1906 = vpack.c.b16 %v1768, %v1766
      %v1907 = vpack.c.b16 %v1769, %v1767
      %v1908 = vpack.c.b16 %v1772, %v1770
      %v1909 = vpack.c.b16 %v1773, %v1771
      %v1910 = vpack.c.b16 %v1776, %v1774
      %v1911 = vpack.c.b16 %v1777, %v1775
      %v1912 = vpack.c.b16 %v1780, %v1778
      %v1913 = vpack.c.b16 %v1781, %v1779
      %v1914 = vpack.c.b16 %v1784, %v1782
      %v1915 = vpack.c.b16 %v1785, %v1783
      %v1916 = vpack.c.b16 %v1788, %v1786
      %v1917 = vpack.c.b16 %v1789, %v1787
      %2046 = vmatprep.subr.bf16.mxu0 %v1791
      %2047 = vmatpush1.bf16.msra.mxu0 %v1790
      %2048 = vmatprep.subr.bf16.mxu0 %v1793
      %2049 = vmatpush1.bf16.msra.mxu0 %v1792
      %2050 = vmatprep.subr.bf16.mxu0 %v1795
      %2051 = vmatpush1.bf16.msra.mxu0 %v1794
      %2052 = vmatprep.subr.bf16.mxu0 %v1797
      %2053 = vmatpush1.bf16.msra.mxu0 %v1796
      %2054 = vmatprep.subr.bf16.mxu0 %v1799
      %2055 = vmatpush1.bf16.msra.mxu0 %v1798
      %2056 = vmatprep.subr.bf16.mxu0 %v1801
      %2057 = vmatpush1.bf16.msra.mxu0 %v1800
      %2058 = vmatprep.subr.bf16.mxu0 %v1803
      %2059 = vmatpush1.bf16.msra.mxu0 %v1802
      %2060 = vmatprep.subr.bf16.mxu0 %v1805
      %2061 = vmatpush1.bf16.msra.mxu0 %v1804
      %2062 = vmatprep.subr.bf16.mxu0 %v1807
      %2063 = vmatpush1.bf16.msra.mxu0 %v1806
      %2064 = vmatprep.subr.bf16.mxu0 %v1809
      %2065 = vmatpush1.bf16.msra.mxu0 %v1808
      %2066 = vmatprep.subr.bf16.mxu0 %v1811
      %2067 = vmatpush1.bf16.msra.mxu0 %v1810
      %2068 = vmatprep.subr.bf16.mxu0 %v1813
      %2069 = vmatpush1.bf16.msra.mxu0 %v1812
      %2070 = vmatprep.subr.bf16.mxu0 %v1815
      %2071 = vmatpush1.bf16.msra.mxu0 %v1814
      %2072 = vmatprep.subr.bf16.mxu0 %v1817
      %2073 = vmatpush1.bf16.msra.mxu0 %v1816
      %2074 = vmatprep.subr.bf16.mxu0 %v1819
      %2075 = vmatpush1.bf16.msra.mxu0 %v1818
      %2076 = vmatprep.subr.bf16.mxu0 %v1821
      %2077 = vmatpush1.bf16.msra.mxu0 %v1820
      %2078 = vmatprep.mubr.bf16.mxu0 %v1380
      %2079 = vmatmul.mubr.bf16.gmra.mrb[0].mxu0 %v1379
      %v2080 = vpop.f32.mrb[0].mxu0
      %v2081 = vadd.f32 %v1399, %v2080
      %v2082 = vpop.f32.mrb[0].mxu0
      %v2083 = vadd.f32 %v1403, %v2082
      %v2084 = vpop.f32.mrb[0].mxu0
      %v2085 = vadd.f32 %v1399, %v2084
      %v2086 = vpop.f32.mrb[0].mxu0
      %v2087 = vadd.f32 %v1403, %v2086
      %2088 = vmatprep.mubr.bf16.mxu0 %v1388
      %2089 = vmatmul.mubr.bf16.gmra.mrb[0].mxu0 %v1387
      %v2090 = vpop.f32.mrb[0].mxu0
      %v2091 = vadd.f32 %v1399, %v2090
      %v2092 = vpop.f32.mrb[0].mxu0
      %v2093 = vadd.f32 %v1403, %v2092
      %v2094 = vpop.f32.mrb[0].mxu0
      %v2095 = vadd.f32 %v1399, %v2094
      %v2096 = vpop.f32.mrb[0].mxu0
      %v2097 = vadd.f32 %v1403, %v2096
      %2098 = vdwg.mxu0
      %2099 = vmatprep.subr.bf16.mxu0 %v1823
      %2100 = vmatpush1.bf16.msra.mxu0 %v1822
      %2101 = vmatprep.subr.bf16.mxu0 %v1825
      %2102 = vmatpush1.bf16.msra.mxu0 %v1824
      %2103 = vmatprep.subr.bf16.mxu0 %v1827
      %2104 = vmatpush1.bf16.msra.mxu0 %v1826
      %2105 = vmatprep.subr.bf16.mxu0 %v1829
      %2106 = vmatpush1.bf16.msra.mxu0 %v1828
      %2107 = vmatprep.subr.bf16.mxu0 %v1831
      %2108 = vmatpush1.bf16.msra.mxu0 %v1830
      %2109 = vmatprep.subr.bf16.mxu0 %v1833
      %2110 = vmatpush1.bf16.msra.mxu0 %v1832
      %2111 = vmatprep.subr.bf16.mxu0 %v1835
      %2112 = vmatpush1.bf16.msra.mxu0 %v1834
      %2113 = vmatprep.subr.bf16.mxu0 %v1837
      %2114 = vmatpush1.bf16.msra.mxu0 %v1836
      %2115 = vmatprep.subr.bf16.mxu0 %v1839
      %2116 = vmatpush1.bf16.msra.mxu0 %v1838
      %2117 = vmatprep.subr.bf16.mxu0 %v1841
      %2118 = vmatpush1.bf16.msra.mxu0 %v1840
      %2119 = vmatprep.subr.bf16.mxu0 %v1843
      %2120 = vmatpush1.bf16.msra.mxu0 %v1842
      %2121 = vmatprep.subr.bf16.mxu0 %v1845
      %2122 = vmatpush1.bf16.msra.mxu0 %v1844
      %2123 = vmatprep.subr.bf16.mxu0 %v1847
      %2124 = vmatpush1.bf16.msra.mxu0 %v1846
      %2125 = vmatprep.subr.bf16.mxu0 %v1849
      %2126 = vmatpush1.bf16.msra.mxu0 %v1848
      %2127 = vmatprep.subr.bf16.mxu0 %v1851
      %2128 = vmatpush1.bf16.msra.mxu0 %v1850
      %2129 = vmatprep.subr.bf16.mxu0 %v1853
      %2130 = vmatpush1.bf16.msra.mxu0 %v1852
      %2131 = vmatprep.mubr.bf16.mxu0 %v1382
      %2132 = vmatmul.mubr.bf16.gmra.mrb[0].mxu0 %v1381
      %v2133 = vpop.f32.mrb[0].mxu0
      %v2134 = vadd.f32 %v2081, %v2133
      %v2135 = vpop.f32.mrb[0].mxu0
      %v2136 = vadd.f32 %v2083, %v2135
      %v2137 = vpop.f32.mrb[0].mxu0
      %v2138 = vadd.f32 %v2085, %v2137
      %v2139 = vpop.f32.mrb[0].mxu0
      %v2140 = vadd.f32 %v2087, %v2139
      %2141 = vmatprep.mubr.bf16.mxu0 %v1390
      %2142 = vmatmul.mubr.bf16.gmra.mrb[0].mxu0 %v1389
      %v2143 = vpop.f32.mrb[0].mxu0
      %v2144 = vadd.f32 %v2091, %v2143
      %v2145 = vpop.f32.mrb[0].mxu0
      %v2146 = vadd.f32 %v2093, %v2145
      %v2147 = vpop.f32.mrb[0].mxu0
      %v2148 = vadd.f32 %v2095, %v2147
      %v2149 = vpop.f32.mrb[0].mxu0
      %v2150 = vadd.f32 %v2097, %v2149
      %2151 = vdwg.mxu0
      %2152 = vmatprep.subr.bf16.mxu0 %v1855
      %2153 = vmatpush1.bf16.msra.mxu0 %v1854
      %2154 = vmatprep.subr.bf16.mxu0 %v1857
      %2155 = vmatpush1.bf16.msra.mxu0 %v1856
      %2156 = vmatprep.subr.bf16.mxu0 %v1859
      %2157 = vmatpush1.bf16.msra.mxu0 %v1858
      %2158 = vmatprep.subr.bf16.mxu0 %v1861
      %2159 = vmatpush1.bf16.msra.mxu0 %v1860
      %2160 = vmatprep.subr.bf16.mxu0 %v1863
      %2161 = vmatpush1.bf16.msra.mxu0 %v1862
      %2162 = vmatprep.subr.bf16.mxu0 %v1865
      %2163 = vmatpush1.bf16.msra.mxu0 %v1864
      %2164 = vmatprep.subr.bf16.mxu0 %v1867
      %2165 = vmatpush1.bf16.msra.mxu0 %v1866
      %2166 = vmatprep.subr.bf16.mxu0 %v1869
      %2167 = vmatpush1.bf16.msra.mxu0 %v1868
      %2168 = vmatprep.subr.bf16.mxu0 %v1871
      %2169 = vmatpush1.bf16.msra.mxu0 %v1870
      %2170 = vmatprep.subr.bf16.mxu0 %v1873
      %2171 = vmatpush1.bf16.msra.mxu0 %v1872
      %2172 = vmatprep.subr.bf16.mxu0 %v1875
      %2173 = vmatpush1.bf16.msra.mxu0 %v1874
      %2174 = vmatprep.subr.bf16.mxu0 %v1877
      %2175 = vmatpush1.bf16.msra.mxu0 %v1876
      %2176 = vmatprep.subr.bf16.mxu0 %v1879
      %2177 = vmatpush1.bf16.msra.mxu0 %v1878
      %2178 = vmatprep.subr.bf16.mxu0 %v1881
      %2179 = vmatpush1.bf16.msra.mxu0 %v1880
      %2180 = vmatprep.subr.bf16.mxu0 %v1883
      %2181 = vmatpush1.bf16.msra.mxu0 %v1882
      %2182 = vmatprep.subr.bf16.mxu0 %v1885
      %2183 = vmatpush1.bf16.msra.mxu0 %v1884
      %2184 = vmatprep.mubr.bf16.mxu0 %v1384
      %2185 = vmatmul.mubr.bf16.gmra.mrb[0].mxu0 %v1383
      %v2186 = vpop.f32.mrb[0].mxu0
      %v2187 = vadd.f32 %v2134, %v2186
      %v2188 = vpop.f32.mrb[0].mxu0
      %v2189 = vadd.f32 %v2136, %v2188
      %v2190 = vpop.f32.mrb[0].mxu0
      %v2191 = vadd.f32 %v2138, %v2190
      %v2192 = vpop.f32.mrb[0].mxu0
      %v2193 = vadd.f32 %v2140, %v2192
      %2194 = vmatprep.mubr.bf16.mxu0 %v1392
      %2195 = vmatmul.mubr.bf16.gmra.mrb[0].mxu0 %v1391
      %v2196 = vpop.f32.mrb[0].mxu0
      %v2197 = vadd.f32 %v2144, %v2196
      %v2198 = vpop.f32.mrb[0].mxu0
      %v2199 = vadd.f32 %v2146, %v2198
      %v2200 = vpop.f32.mrb[0].mxu0
      %v2201 = vadd.f32 %v2148, %v2200
      %v2202 = vpop.f32.mrb[0].mxu0
      %v2203 = vadd.f32 %v2150, %v2202
      %2204 = vdwg.mxu0
      %2205 = vmatprep.subr.bf16.mxu0 %v1887
      %2206 = vmatpush1.bf16.msra.mxu0 %v1886
      %2207 = vmatprep.subr.bf16.mxu0 %v1889
      %2208 = vmatpush1.bf16.msra.mxu0 %v1888
      %2209 = vmatprep.subr.bf16.mxu0 %v1891
      %2210 = vmatpush1.bf16.msra.mxu0 %v1890
      %2211 = vmatprep.subr.bf16.mxu0 %v1893
      %2212 = vmatpush1.bf16.msra.mxu0 %v1892
      %2213 = vmatprep.subr.bf16.mxu0 %v1895
      %2214 = vmatpush1.bf16.msra.mxu0 %v1894
      %2215 = vmatprep.subr.bf16.mxu0 %v1897
      %2216 = vmatpush1.bf16.msra.mxu0 %v1896
      %2217 = vmatprep.subr.bf16.mxu0 %v1899
      %2218 = vmatpush1.bf16.msra.mxu0 %v1898
      %2219 = vmatprep.subr.bf16.mxu0 %v1901
      %2220 = vmatpush1.bf16.msra.mxu0 %v1900
      %2221 = vmatprep.subr.bf16.mxu0 %v1903
      %2222 = vmatpush1.bf16.msra.mxu0 %v1902
      %2223 = vmatprep.subr.bf16.mxu0 %v1905
      %2224 = vmatpush1.bf16.msra.mxu0 %v1904
      %2225 = vmatprep.subr.bf16.mxu0 %v1907
      %2226 = vmatpush1.bf16.msra.mxu0 %v1906
      %2227 = vmatprep.subr.bf16.mxu0 %v1909
      %2228 = vmatpush1.bf16.msra.mxu0 %v1908
      %2229 = vmatprep.subr.bf16.mxu0 %v1911
      %2230 = vmatpush1.bf16.msra.mxu0 %v1910
      %2231 = vmatprep.subr.bf16.mxu0 %v1913
      %2232 = vmatpush1.bf16.msra.mxu0 %v1912
      %2233 = vmatprep.subr.bf16.mxu0 %v1915
      %2234 = vmatpush1.bf16.msra.mxu0 %v1914
      %2235 = vmatprep.subr.bf16.mxu0 %v1917
      %2236 = vmatpush1.bf16.msra.mxu0 %v1916
      %2237 = vmatprep.mubr.bf16.mxu0 %v1386
      %2238 = vmatmul.mubr.bf16.gmra.mrb[0].mxu0 %v1385
      %v2239 = vpop.f32.mrb[0].mxu0
      %v2240 = vadd.f32 %v2187, %v2239
      %v2241 = vpop.f32.mrb[0].mxu0
      %v2242 = vadd.f32 %v2189, %v2241
      %v2243 = vpop.f32.mrb[0].mxu0
      %v2244 = vadd.f32 %v2191, %v2243
      %v2245 = vpop.f32.mrb[0].mxu0
      %v2246 = vadd.f32 %v2193, %v2245
      %2247 = vmatprep.mubr.bf16.mxu0 %v1394
      %2248 = vmatmul.mubr.bf16.gmra.mrb[0].mxu0 %v1393
      %v2249 = vpop.f32.mrb[0].mxu0
      %v2250 = vadd.f32 %v2197, %v2249
      %v2251 = vpop.f32.mrb[0].mxu0
      %v2252 = vadd.f32 %v2199, %v2251
      %v2253 = vpop.f32.mrb[0].mxu0
      %v2254 = vadd.f32 %v2201, %v2253
      %v2255 = vpop.f32.mrb[0].mxu0
      %v2256 = vadd.f32 %v2203, %v2255
      %2257 = vdwg.mxu0
      %vm2258 = vcmp.ge.f32.partialorder %v2240, 0.0
      %vm2259 = vcmp.ge.f32.partialorder %v2242, 0.0
      %vm2260 = vcmp.ge.f32.partialorder %v2244, 0.0
      %vm2261 = vcmp.ge.f32.partialorder %v2246, 0.0
      %vm2262 = vcmp.ge.f32.partialorder %v2250, 0.0
      %vm2263 = vcmp.ge.f32.partialorder %v2252, 0.0
      %vm2264 = vcmp.ge.f32.partialorder %v2254, 0.0
      %vm2265 = vcmp.ge.f32.partialorder %v2256, 0.0
      %v2266 = vmul.f32 %v2240, 0.2
      %v2267 = vmul.f32 %v2242, 0.2
      %v2268 = vmul.f32 %v2244, 0.2
      %v2269 = vmul.f32 %v2246, 0.2
      %v2270 = vmul.f32 %v2250, 0.2
      %v2271 = vmul.f32 %v2252, 0.2
      %v2272 = vmul.f32 %v2254, 0.2
      %v2273 = vmul.f32 %v2256, 0.2
      %v2274 = vsel %vm2258, %v2240, %v2266
      %v2275 = vsel %vm2259, %v2242, %v2267
      %v2276 = vsel %vm2260, %v2244, %v2268
      %v2277 = vsel %vm2261, %v2246, %v2269
      %v2278 = vsel %vm2262, %v2250, %v2270
      %v2279 = vsel %vm2263, %v2252, %v2271
      %v2280 = vsel %vm2264, %v2254, %v2272
      %v2281 = vsel %vm2265, %v2256, %v2273
      %v2282 = vld [vmem:[%s6] sm:$0xf]
      %v2283 = vld [vmem:[%s6 + $0x4] sm:$0xf]
      %v2284 = vld [vmem:[%s6 + $0x8] sm:$0xf]
      %v2285 = vld [vmem:[%s6 + $0xc] sm:$0xf]
      %v2286 = vld [vmem:[%s6 + $0x10] sm:$0xf]
      %v2287 = vld [vmem:[%s6 + $0x14] sm:$0xf]
      %v2288 = vld [vmem:[%s6 + $0x18] sm:$0xf]
      %v2289 = vld [vmem:[%s6 + $0x1c] sm:$0xf]
      %v2290 = vld [vmem:[%s6 + $0x20] sm:$0xf]
      %v2291 = vld [vmem:[%s6 + $0x24] sm:$0xf]
      %v2292 = vld [vmem:[%s6 + $0x28] sm:$0xf]
      %v2293 = vld [vmem:[%s6 + $0x2c] sm:$0xf]
      %v2294 = vld [vmem:[%s6 + $0x30] sm:$0xf]
      %v2295 = vld [vmem:[%s6 + $0x34] sm:$0xf]
      %v2296 = vld [vmem:[%s6 + $0x38] sm:$0xf]
      %v2297 = vld [vmem:[%s6 + $0x3c] sm:$0xf]
      %v2298 = vld [vmem:[%s6 + $0x40] sm:$0xf]
      %v2299 = vld [vmem:[%s6 + $0x44] sm:$0xf]
      %v2300 = vld [vmem:[%s6 + $0x48] sm:$0xf]
      %v2301 = vld [vmem:[%s6 + $0x4c] sm:$0xf]
      %v2302 = vld [vmem:[%s6 + $0x50] sm:$0xf]
      %v2303 = vld [vmem:[%s6 + $0x54] sm:$0xf]
      %v2304 = vld [vmem:[%s6 + $0x58] sm:$0xf]
      %v2305 = vld [vmem:[%s6 + $0x5c] sm:$0xf]
      %v2306 = vld [vmem:[%s6 + $0x60] sm:$0xf]
      %v2307 = vld [vmem:[%s6 + $0x64] sm:$0xf]
      %v2308 = vld [vmem:[%s6 + $0x68] sm:$0xf]
      %v2309 = vld [vmem:[%s6 + $0x6c] sm:$0xf]
      %v2310 = vld [vmem:[%s6 + $0x70] sm:$0xf]
      %v2311 = vld [vmem:[%s6 + $0x74] sm:$0xf]
      %v2312 = vld [vmem:[%s6 + $0x78] sm:$0xf]
      %v2313 = vld [vmem:[%s6 + $0x7c] sm:$0xf]
      %v2314 = vld [vmem:[%s7] sm:$0x1]
      %v2315 = vpack.c.bf16 %v2276, %v2274
      %v2316 = vpack.c.bf16 %v2277, %v2275
      %v2317 = vpack.c.bf16 %v2280, %v2278
      %v2318 = vpack.c.bf16 %v2281, %v2279
      %v2320 = vlaneseq
      %v2321 = vshrl.u32 %v2320, 7
      %v2322 = vsub.s32 0, %v2321
      %v2323 = vrot.slane %v2314, %v2322
      %v2357 = vunpack.c.l.b16 %v2282
      %v2358 = vunpack.c.l.b16 %v2283
      %v2359 = vunpack.c.l.b16 %v2284
      %v2360 = vunpack.c.l.b16 %v2285
      %v2361 = vunpack.c.l.b16 %v2286
      %v2362 = vunpack.c.l.b16 %v2287
      %v2363 = vunpack.c.l.b16 %v2288
      %v2364 = vunpack.c.l.b16 %v2289
      %v2365 = vunpack.c.l.b16 %v2290
      %v2366 = vunpack.c.l.b16 %v2291
      %v2367 = vunpack.c.l.b16 %v2292
      %v2368 = vunpack.c.l.b16 %v2293
      %v2369 = vunpack.c.l.b16 %v2294
      %v2370 = vunpack.c.l.b16 %v2295
      %v2371 = vunpack.c.l.b16 %v2296
      %v2372 = vunpack.c.l.b16 %v2297
      %v2373 = vunpack.c.l.b16 %v2298
      %v2374 = vunpack.c.l.b16 %v2299
      %v2375 = vunpack.c.l.b16 %v2300
      %v2376 = vunpack.c.l.b16 %v2301
      %v2377 = vunpack.c.l.b16 %v2302
      %v2378 = vunpack.c.l.b16 %v2303
      %v2379 = vunpack.c.l.b16 %v2304
      %v2380 = vunpack.c.l.b16 %v2305
      %v2381 = vunpack.c.l.b16 %v2306
      %v2382 = vunpack.c.l.b16 %v2307
      %v2383 = vunpack.c.l.b16 %v2308
      %v2384 = vunpack.c.l.b16 %v2309
      %v2385 = vunpack.c.l.b16 %v2310
      %v2386 = vunpack.c.l.b16 %v2311
      %v2387 = vunpack.c.l.b16 %v2312
      %v2388 = vunpack.c.l.b16 %v2313
      %v2389 = vpack.c.b16 %v2358, %v2357
      %v2390 = vpack.c.b16 %v2360, %v2359
      %v2391 = vpack.c.b16 %v2362, %v2361
      %v2392 = vpack.c.b16 %v2364, %v2363
      %v2393 = vpack.c.b16 %v2366, %v2365
      %v2394 = vpack.c.b16 %v2368, %v2367
      %v2395 = vpack.c.b16 %v2370, %v2369
      %v2396 = vpack.c.b16 %v2372, %v2371
      %v2397 = vpack.c.b16 %v2374, %v2373
      %v2398 = vpack.c.b16 %v2376, %v2375
      %v2399 = vpack.c.b16 %v2378, %v2377
      %v2400 = vpack.c.b16 %v2380, %v2379
      %v2401 = vpack.c.b16 %v2382, %v2381
      %v2402 = vpack.c.b16 %v2384, %v2383
      %v2403 = vpack.c.b16 %v2386, %v2385
      %v2404 = vpack.c.b16 %v2388, %v2387
      %2421 = vmatprep.subr.bf16.mxu0 0
      %2422 = vmatpush1.bf16.msra.mxu0 %v2389
      %2423 = vmatprep.subr.bf16.mxu0 0
      %2424 = vmatpush1.bf16.msra.mxu0 %v2390
      %2425 = vmatprep.subr.bf16.mxu0 0
      %2426 = vmatpush1.bf16.msra.mxu0 %v2391
      %2427 = vmatprep.subr.bf16.mxu0 0
      %2428 = vmatpush1.bf16.msra.mxu0 %v2392
      %2429 = vmatprep.subr.bf16.mxu0 0
      %2430 = vmatpush1.bf16.msra.mxu0 %v2393
      %2431 = vmatprep.subr.bf16.mxu0 0
      %2432 = vmatpush1.bf16.msra.mxu0 %v2394
      %2433 = vmatprep.subr.bf16.mxu0 0
      %2434 = vmatpush1.bf16.msra.mxu0 %v2395
      %2435 = vmatprep.subr.bf16.mxu0 0
      %2436 = vmatpush1.bf16.msra.mxu0 %v2396
      %2437 = vmatprep.subr.bf16.mxu0 0
      %2438 = vmatpush1.bf16.msra.mxu0 %v2397
      %2439 = vmatprep.subr.bf16.mxu0 0
      %2440 = vmatpush1.bf16.msra.mxu0 %v2398
      %2441 = vmatprep.subr.bf16.mxu0 0
      %2442 = vmatpush1.bf16.msra.mxu0 %v2399
      %2443 = vmatprep.subr.bf16.mxu0 0
      %2444 = vmatpush1.bf16.msra.mxu0 %v2400
      %2445 = vmatprep.subr.bf16.mxu0 0
      %2446 = vmatpush1.bf16.msra.mxu0 %v2401
      %2447 = vmatprep.subr.bf16.mxu0 0
      %2448 = vmatpush1.bf16.msra.mxu0 %v2402
      %2449 = vmatprep.subr.bf16.mxu0 0
      %2450 = vmatpush1.bf16.msra.mxu0 %v2403
      %2451 = vmatprep.subr.bf16.mxu0 0
      %2452 = vmatpush1.bf16.msra.mxu0 %v2404
      %2453 = vmatprep.mubr.bf16.mxu0 %v2316
      %2454 = vmatmul.mubr.bf16.gmra.mrb[0].mxu0 %v2315
      %v2455 = vpop.f32.mrb[0].mxu0
      %v2456 = vadd.f32 %v2323, %v2455
      %v2457 = vpop.f32.mrb[0].mxu0
      %v2458 = vpop.f32.mrb[0].mxu0
      %v2459 = vadd.f32 %v2323, %v2458
      %v2460 = vpop.f32.mrb[0].mxu0
      %2461 = vmatprep.mubr.bf16.mxu0 %v2318
      %2462 = vmatmul.mubr.bf16.gmra.mrb[0].mxu0 %v2317
      %v2463 = vpop.f32.mrb[0].mxu0
      %v2464 = vadd.f32 %v2323, %v2463
      %v2465 = vpop.f32.mrb[0].mxu0
      %v2466 = vpop.f32.mrb[0].mxu0
      %v2467 = vadd.f32 %v2323, %v2466
      %v2468 = vpop.f32.mrb[0].mxu0
      %2469 = vdwg.mxu0
      %vm2470 = vcmp.ge.f32.partialorder %v2456, 0.0
      %vm2471 = vcmp.ge.f32.partialorder %v2459, 0.0
      %vm2472 = vcmp.ge.f32.partialorder %v2464, 0.0
      %vm2473 = vcmp.ge.f32.partialorder %v2467, 0.0
      %v2474 = vmul.f32 %v2456, 0.2
      %v2475 = vmul.f32 %v2459, 0.2
      %v2476 = vmul.f32 %v2464, 0.2
      %v2477 = vmul.f32 %v2467, 0.2
      %v2478 = vsel %vm2470, %v2456, %v2474
      %v2479 = vsel %vm2471, %v2459, %v2475
      %v2480 = vsel %vm2472, %v2464, %v2476
      %v2481 = vsel %vm2473, %v2467, %v2477
      %v2482 = vld [vmem:[%s8] sm:$0xf]
      %v2483 = vld [vmem:[%s8 + $0x4] sm:$0xf]
      %v2484 = vld [vmem:[%s8 + $0x8] sm:$0xf]
      %v2485 = vld [vmem:[%s8 + $0xc] sm:$0xf]
      %v2486 = vld [vmem:[%s8 + $0x10] sm:$0xf]
      %v2487 = vld [vmem:[%s8 + $0x14] sm:$0xf]
      %v2488 = vld [vmem:[%s8 + $0x18] sm:$0xf]
      %v2489 = vld [vmem:[%s8 + $0x1c] sm:$0xf]
      %v2490 = vld [vmem:[%s9] sm:$0x1]
      %v2491 = vpack.c.bf16 %v2479, %v2478
      %v2492 = vpack.c.bf16 %v2481, %v2480
      %v2494 = vlaneseq
      %v2495 = vshrl.u32 %v2494, 7
      %v2496 = vsub.s32 0, %v2495
      %v2497 = vrot.slane %v2490, %v2496
      %v2507 = vunpack.c.l.b16 %v2482
      %v2508 = vunpack.c.l.b16 %v2483
      %v2509 = vunpack.c.l.b16 %v2484
      %v2510 = vunpack.c.l.b16 %v2485
      %v2511 = vunpack.c.l.b16 %v2486
      %v2512 = vunpack.c.l.b16 %v2487
      %v2513 = vunpack.c.l.b16 %v2488
      %v2514 = vunpack.c.l.b16 %v2489
      %v2515 = vpack.c.b16 %v2508, %v2507
      %v2516 = vpack.c.b16 %v2510, %v2509
      %v2517 = vpack.c.b16 %v2512, %v2511
      %v2518 = vpack.c.b16 %v2514, %v2513
      %vm2523 = vcmask 523264
      %v2525 = vsel %vm2523, %v2491, 0
      %v2528 = vsel %vm2523, %v2492, 0
      %2530 = vmatprep.subr.bf16.mxu0 0
      %2531 = vmatpush1.bf16.msra.mxu0 %v2515
      %2532 = vmatprep.subr.bf16.mxu0 0
      %2533 = vmatpush1.bf16.msra.mxu0 %v2516
      %2534 = vmatprep.subr.bf16.mxu0 0
      %2535 = vmatpush1.bf16.msra.mxu0 %v2517
      %2536 = vmatprep.subr.bf16.mxu0 0
      %2537 = vmatpush1.bf16.msra.mxu0 %v2518
      %2538 = vmatprep.subr.bf16.mxu0 0
      %2539 = vmatpush1.bf16.msra.mxu0 0
      %2540 = vmatprep.subr.bf16.mxu0 0
      %2541 = vmatpush1.bf16.msra.mxu0 0
      %2542 = vmatprep.subr.bf16.mxu0 0
      %2543 = vmatpush1.bf16.msra.mxu0 0
      %2544 = vmatprep.subr.bf16.mxu0 0
      %2545 = vmatpush1.bf16.msra.mxu0 0
      %2546 = vmatprep.subr.bf16.mxu0 0
      %2547 = vmatpush1.bf16.msra.mxu0 0
      %2548 = vmatprep.subr.bf16.mxu0 0
      %2549 = vmatpush1.bf16.msra.mxu0 0
      %2550 = vmatprep.subr.bf16.mxu0 0
      %2551 = vmatpush1.bf16.msra.mxu0 0
      %2552 = vmatprep.subr.bf16.mxu0 0
      %2553 = vmatpush1.bf16.msra.mxu0 0
      %2554 = vmatprep.subr.bf16.mxu0 0
      %2555 = vmatpush1.bf16.msra.mxu0 0
      %2556 = vmatprep.subr.bf16.mxu0 0
      %2557 = vmatpush1.bf16.msra.mxu0 0
      %2558 = vmatprep.subr.bf16.mxu0 0
      %2559 = vmatpush1.bf16.msra.mxu0 0
      %2560 = vmatprep.subr.bf16.mxu0 0
      %2561 = vmatpush1.bf16.msra.mxu0 0
      %2562 = vmatprep.mubr.bf16.mxu0 0
      %2563 = vmatmul.mubr.bf16.gmra.mrb[0].mxu0 %v2525
      %v2564 = vpop.f32.mrb[0].mxu0
      %v2565 = vadd.f32 %v2497, %v2564
      %v2566 = vpop.f32.mrb[0].mxu0
      %v2567 = vpop.f32.mrb[0].mxu0
      %v2568 = vadd.f32 %v2497, %v2567
      %v2569 = vpop.f32.mrb[0].mxu0
      %2570 = vmatprep.mubr.bf16.mxu0 0
      %2571 = vmatmul.mubr.bf16.gmra.mrb[0].mxu0 %v2528
      %v2572 = vpop.f32.mrb[0].mxu0
      %v2573 = vadd.f32 %v2497, %v2572
      %v2574 = vpop.f32.mrb[0].mxu0
      %v2575 = vpop.f32.mrb[0].mxu0
      %v2576 = vadd.f32 %v2497, %v2575
      %v2577 = vpop.f32.mrb[0].mxu0
      %2578 = vdwg.mxu0
      %2579 = vst [vmem:[%s414] sm:$0xff] %v2565
      %2580 = vst [vmem:[%s414 + $0x8] sm:$0xff] %v2568
      %2581 = vst [vmem:[%s414 + $0x10] sm:$0xff] %v2573
      %2582 = vst [vmem:[%s414 + $0x18] sm:$0xff] %v2576
      %s2583 = smul.u32 4, %s26
      %p2584 = scmp.lt.s32.totalorder %s25, 1
      %s2585 = scalar_select %p2584, %s25, 1
      %p2586 = scmp.lt.s32.totalorder %s2583, 7
      %s2587 = scalar_select %p2586, %s2583, 7
      %s2588 = smul.addr %s2585, 8
      %s2589 = sadd.s32 %s2587, %s2588
      %s2590 = smul.addr %s2589, 8
      %s2591 = scalar_lea.vmem %s10, %s2590
      // Predicated region
      $region61: #{skinning_net_forward.17} parent=59 // pred_check
        %p2592 = pneg %p275
      $region62: #{skinning_net_forward.17} parent=59 // pred_check_branch
        %2594 = sbr.rel (%p2592) target = $region64
      $region63: #{skinning_net_forward.17} parent=59 // pred_region
        %s2595 = smul.u32 4, %s26
      $region64: #{skinning_net_forward.17} parent=59 // pred_fallthru
        _
    $region60: #{skinning_net_forward.17} parent=5 // pred_fallthru
      _
    %p2596 = scmp.le.s32.totalorder 2, %s16
    // Predicated region
    $region65: #{skinning_net_forward.17} parent=5 // pred_check
      %p2597 = pneg %p2596
    $region66: #{skinning_net_forward.17} parent=5 // pred_check_branch
      %2599 = sbr.rel (%p2597) target = $region68
    $region67: #{skinning_net_forward.17} parent=5 // pred_region
      %s2600 = ssub.s32 %s16, 2
      // Predicated region
      $region69: #{skinning_net_forward.17} parent=67 // pred_check
        %p2601 = pneg %p281
      $region70: #{skinning_net_forward.17} parent=67 // pred_check_branch
        %2603 = sbr.rel (%p2601) target = $region72
      $region71: #{skinning_net_forward.17} parent=67 // pred_region
        %s2604 = smul.u32 4, %s28
        %p2605 = scmp.lt.s32.totalorder %s27, 1
        %s2606 = scalar_select %p2605, %s27, 1
        %p2607 = scmp.lt.s32.totalorder %s2604, 7
        %s2608 = scalar_select %p2607, %s2604, 7
        %s2609 = smul.addr %s2606, 8
        %s2610 = sadd.s32 %s2608, %s2609
        %s2611 = smul.addr %s2610, 8
        %s2612 = scalar_lea.vmem %s10, %s2611
      $region72: #{skinning_net_forward.17} parent=67 // pred_fallthru
        _
    $region68: #{skinning_net_forward.17} parent=5 // pred_fallthru
      _
  $region6: #{skinning_net_forward.17} parent=0 // loop_footer
    %s20 = sadd.s32 1, %s16
  $region7: #{skinning_net_forward.17} parent=0 // loop_footer_branch
    %15 = sbr.rel target = $region3
  $region8: #{skinning_net_forward.17} parent=0 // loop_exit
    _

// kernel: skinning_net_forward.23
$region0: #{skinning_net_forward.23}
  #allocation0 [shape = 'u32[]', space=smem, size = 0x4, offset = 0x4, fixed_abs, tag = 'smem constant byte address 0x4 - core index']
  #allocation1 [shape = 'u32[144,128]{1,0:T(1,128)}', space=vmem, size = 0x12000, scoped, tag = 'internal scratch']
  %s0 = inlined_call_operand.vmem [shape: bf16[2,16,256], index: 0, kind: input, shape index: {}]
  %s1 = inlined_call_operand.vmem [shape: bf16[256,128], index: 1, kind: input, shape index: {}]
  %s2 = inlined_call_operand.vmem [shape: bf16[256,128], index: 2, kind: input, shape index: {}]
  %s3 = inlined_call_operand.vmem [shape: f32[1,128], index: 3, kind: input, shape index: {}]
  %s4 = inlined_call_operand.vmem [shape: bf16[2,16,128], index: 4, kind: output, shape index: {0}]
  %s5 = inlined_call_operand.vmem [shape: f32[2,16,128], index: 5, kind: output, shape index: {1}]
  %6 = xla_tuple %s4, %s5
  %s7 = sld [smem:[#allocation0]]
  $region57: #{skinning_net_forward.23} parent=0
    _
  %s9 = ssub.s32 1, %s7
  %s10 = scalar_select 0, %s9, %s7
  loop: start=0, step=1, limit=4
  $region2: #{skinning_net_forward.23} parent=0 // loop_pre_header
    _
  $region3: #{skinning_net_forward.23} parent=0 // loop_header
    %s12 = sphi 0, %s16
    %p13 = scmp.ge.s32.totalorder %s12, 4
    %s19 = sphi 0, %s31
    %s20 = sphi 0, %s27
    %s21 = sphi 0, %s19
    %s22 = sphi 0, %s20
    %s23 = sphi 0, %s21
    %s24 = sphi 0, %s22
    %s36 = sphi 0, %s38
    %s39 = sphi 0, %s36
    %s40 = sphi 0, %s39
    %s56 = sphi 0, %s40
    %s60 = sphi 0, %s60
    %s62 = sphi 0, %s60
    %s63 = sphi 0, %s62
    %s77 = sphi 0, %s63
    %s81 = sphi 0, %s81
    %s83 = sphi 0, %s81
    %s84 = sphi 0, %s83
    %s98 = sphi 0, %s84
    %s102 = sphi 0, %s102
    %s104 = sphi 0, %s102
    %s105 = sphi 0, %s104
    %s119 = sphi 0, %s105
    %s127 = sphi 0, %s129
    %s130 = sphi 0, %s127
    %s131 = sphi 0, %s130
    %s147 = sphi 0, %s131
    %s155 = sphi 0, %s157
    %s158 = sphi 0, %s155
    %s159 = sphi 0, %s158
    %s175 = sphi 0, %s159
  $region4: #{skinning_net_forward.23} parent=0 // loop_header_branch
    %15 = sbr.rel (%p13) target = $region8
  $region5: #{skinning_net_forward.23} parent=0 // loop_body
    %s17 = ssub.s32 %s12, 1
    %s18 = ssub.s32 %s12, 2
    %s25 = sadd.s32 1, %s20
    %p26 = scmp.ge.s32.totalorder %s25, 1
    %s27 = scalar_select %p26, 0, %s25
    %s28 = sadd.s32 1, %s19
    %s29 = scalar_select %p26, %s28, %s19
    %p30 = scmp.ge.s32.totalorder %s29, 2
    %s31 = scalar_select %p30, 0, %s29
    %s32 = ssub.s32 %s19, %s31
    %s33 = ssub.s32 %s20, %s27
    %s34 = sor.u32 %s32, %s33
    %p35 = scmp.eq.s32.totalorder %s34, 0
    %s37 = sadd.s32 %s36, 1
    %s38 = scalar_select %p35, %s36, %s37
    %p41 = pneg %p35
    %p42 = scmp.eq.s32.totalorder %s12, 1
    %p43 = por %p41, %p42
    %p44 = scmp.ne.s32.totalorder %s36, %s39
    %p45 = scmp.eq.s32.totalorder %s12, 0
    %p46 = por %p44, %p45
    %p47 = scmp.ne.s32.totalorder %s36, %s39
    %p48 = scmp.eq.s32.totalorder %s17, 1
    %p49 = por %p47, %p48
    %p50 = scmp.ne.s32.totalorder %s39, %s40
    %p51 = scmp.eq.s32.totalorder %s17, 0
    %p52 = por %p50, %p51
    %p53 = scmp.ne.s32.totalorder %s39, %s40
    %p54 = scmp.eq.s32.totalorder %s18, 1
    %p55 = por %p53, %p54
    %p57 = scmp.ne.s32.totalorder %s40, %s56
    %p58 = scmp.eq.s32.totalorder %s18, 0
    %p59 = por %p57, %p58
    %s61 = sadd.s32 %s60, 1
    %p64 = scmp.eq.s32.totalorder %s12, 1
    %p65 = scmp.ne.s32.totalorder %s60, %s62
    %p66 = scmp.eq.s32.totalorder %s12, 0
    %p67 = por %p65, %p66
    %p68 = scmp.ne.s32.totalorder %s60, %s62
    %p69 = scmp.eq.s32.totalorder %s17, 1
    %p70 = por %p68, %p69
    %p71 = scmp.ne.s32.totalorder %s62, %s63
    %p72 = scmp.eq.s32.totalorder %s17, 0
    %p73 = por %p71, %p72
    %p74 = scmp.ne.s32.totalorder %s62, %s63
    %p75 = scmp.eq.s32.totalorder %s18, 1
    %p76 = por %p74, %p75
    %p78 = scmp.ne.s32.totalorder %s63, %s77
    %p79 = scmp.eq.s32.totalorder %s18, 0
    %p80 = por %p78, %p79
    %s82 = sadd.s32 %s81, 1
    %p85 = scmp.eq.s32.totalorder %s12, 1
    %p86 = scmp.ne.s32.totalorder %s81, %s83
    %p87 = scmp.eq.s32.totalorder %s12, 0
    %p88 = por %p86, %p87
    %p89 = scmp.ne.s32.totalorder %s81, %s83
    %p90 = scmp.eq.s32.totalorder %s17, 1
    %p91 = por %p89, %p90
    %p92 = scmp.ne.s32.totalorder %s83, %s84
    %p93 = scmp.eq.s32.totalorder %s17, 0
    %p94 = por %p92, %p93
    %p95 = scmp.ne.s32.totalorder %s83, %s84
    %p96 = scmp.eq.s32.totalorder %s18, 1
    %p97 = por %p95, %p96
    %p99 = scmp.ne.s32.totalorder %s84, %s98
    %p100 = scmp.eq.s32.totalorder %s18, 0
    %p101 = por %p99, %p100
    %s103 = sadd.s32 %s102, 1
    %p106 = scmp.eq.s32.totalorder %s12, 1
    %p107 = scmp.ne.s32.totalorder %s102, %s104
    %p108 = scmp.eq.s32.totalorder %s12, 0
    %p109 = por %p107, %p108
    %p110 = scmp.ne.s32.totalorder %s102, %s104
    %p111 = scmp.eq.s32.totalorder %s17, 1
    %p112 = por %p110, %p111
    %p113 = scmp.ne.s32.totalorder %s104, %s105
    %p114 = scmp.eq.s32.totalorder %s17, 0
    %p115 = por %p113, %p114
    %p116 = scmp.ne.s32.totalorder %s104, %s105
    %p117 = scmp.eq.s32.totalorder %s18, 1
    %p118 = por %p116, %p117
    %p120 = scmp.ne.s32.totalorder %s105, %s119
    %p121 = scmp.eq.s32.totalorder %s18, 0
    %p122 = por %p120, %p121
    %s123 = ssub.s32 %s19, %s31
    %s124 = ssub.s32 %s20, %s27
    %s125 = sor.u32 %s123, %s124
    %p126 = scmp.eq.s32.totalorder %s125, 0
    %s128 = sadd.s32 %s127, 1
    %s129 = scalar_select %p126, %s127, %s128
    %p132 = pneg %p126
    %p133 = scmp.eq.s32.totalorder %s12, 1
    %p134 = por %p132, %p133
    %p135 = scmp.ne.s32.totalorder %s127, %s130
    %p136 = scmp.eq.s32.totalorder %s12, 0
    %p137 = por %p135, %p136
    %p138 = scmp.ne.s32.totalorder %s127, %s130
    %p139 = scmp.eq.s32.totalorder %s17, 1
    %p140 = por %p138, %p139
    %p141 = scmp.ne.s32.totalorder %s130, %s131
    %p142 = scmp.eq.s32.totalorder %s17, 0
    %p143 = por %p141, %p142
    %p144 = scmp.ne.s32.totalorder %s130, %s131
    %p145 = scmp.eq.s32.totalorder %s18, 1
    %p146 = por %p144, %p145
    %p148 = scmp.ne.s32.totalorder %s131, %s147
    %p149 = scmp.eq.s32.totalorder %s18, 0
    %p150 = por %p148, %p149
    %s151 = ssub.s32 %s19, %s31
    %s152 = ssub.s32 %s20, %s27
    %s153 = sor.u32 %s151, %s152
    %p154 = scmp.eq.s32.totalorder %s153, 0
    %s156 = sadd.s32 %s155, 1
    %s157 = scalar_select %p154, %s155, %s156
    %p160 = pneg %p154
    %p161 = scmp.eq.s32.totalorder %s12, 1
    %p162 = por %p160, %p161
    %p163 = scmp.ne.s32.totalorder %s155, %s158
    %p164 = scmp.eq.s32.totalorder %s12, 0
    %p165 = por %p163, %p164
    %p166 = scmp.ne.s32.totalorder %s155, %s158
    %p167 = scmp.eq.s32.totalorder %s17, 1
    %p168 = por %p166, %p167
    %p169 = scmp.ne.s32.totalorder %s158, %s159
    %p170 = scmp.eq.s32.totalorder %s17, 0
    %p171 = por %p169, %p170
    %p172 = scmp.ne.s32.totalorder %s158, %s159
    %p173 = scmp.eq.s32.totalorder %s18, 1
    %p174 = por %p172, %p173
    %p176 = scmp.ne.s32.totalorder %s159, %s175
    %p177 = scmp.eq.s32.totalorder %s18, 0
    %p178 = por %p176, %p177
    %p179 = scmp.le.s32.totalorder 1, %s12
    %p180 = scmp.lt.s32.totalorder %s12, 3
    %p181 = pnand %p179, %p180
    %p182 = pneg %p181
    // Predicated region
    $region9: #{skinning_net_forward.23} parent=5 // pred_check
      _
    $region10: #{skinning_net_forward.23} parent=5 // pred_check_branch
      %184 = sbr.rel (%p181) target = $region12
    $region11: #{skinning_net_forward.23} parent=5 // pred_region
      %s185 = ssub.s32 %s12, 1
      // Predicated region
      $region13: #{skinning_net_forward.23} parent=11 // pred_check
        %p186 = pneg %p73
      $region14: #{skinning_net_forward.23} parent=11 // pred_check_branch
        %188 = sbr.rel (%p186) target = $region16
      $region15: #{skinning_net_forward.23} parent=11 // pred_region
        _
      $region16: #{skinning_net_forward.23} parent=11 // pred_fallthru
        _
      // Predicated region
      $region17: #{skinning_net_forward.23} parent=11 // pred_check
        %p189 = pneg %p94
      $region18: #{skinning_net_forward.23} parent=11 // pred_check_branch
        %191 = sbr.rel (%p189) target = $region20
      $region19: #{skinning_net_forward.23} parent=11 // pred_region
        _
      $region20: #{skinning_net_forward.23} parent=11 // pred_fallthru
        _
      // Predicated region
      $region21: #{skinning_net_forward.23} parent=11 // pred_check
        %p192 = pneg %p115
      $region22: #{skinning_net_forward.23} parent=11 // pred_check_branch
        %194 = sbr.rel (%p192) target = $region24
      $region23: #{skinning_net_forward.23} parent=11 // pred_region
        _
      $region24: #{skinning_net_forward.23} parent=11 // pred_fallthru
        _
    $region12: #{skinning_net_forward.23} parent=5 // pred_fallthru
      _
    %p195 = scmp.lt.s32.totalorder %s12, 2
    // Predicated region
    $region25: #{skinning_net_forward.23} parent=5 // pred_check
      %p196 = pneg %p195
    $region26: #{skinning_net_forward.23} parent=5 // pred_check_branch
      %198 = sbr.rel (%p196) target = $region28
    $region27: #{skinning_net_forward.23} parent=5 // pred_region
      // Predicated region
      $region29: #{skinning_net_forward.23} parent=27 // pred_check
        %p199 = pneg %p46
      $region30: #{skinning_net_forward.23} parent=27 // pred_check_branch
        %201 = sbr.rel (%p199) target = $region32
      $region31: #{skinning_net_forward.23} parent=27 // pred_region
        %s202 = smul.u32 2, %s20
        %p203 = scmp.lt.s32.totalorder %s19, 1
        %s204 = scalar_select %p203, %s19, 1
        %p205 = scmp.lt.s32.totalorder %s202, 1
        %s206 = scalar_select %p205, %s202, 1
        %s207 = smul.addr %s206, 2
        %s208 = smul.addr %s204, 4
        %s209 = sadd.s32 %s207, %s208
        %s210 = smul.addr %s209, 4
        %s211 = scalar_lea.vmem %s0, %s210
        %s212 = smul.u32 2, %s20
      $region32: #{skinning_net_forward.23} parent=27 // pred_fallthru
        _
    $region28: #{skinning_net_forward.23} parent=5 // pred_fallthru
      _
    %p213 = scmp.le.s32.totalorder 1, %s12
    %p214 = scmp.lt.s32.totalorder %s12, 3
    %p215 = pnand %p213, %p214
    %p216 = pneg %p215
    // Predicated region
    $region33: #{skinning_net_forward.23} parent=5 // pred_check
      _
    $region34: #{skinning_net_forward.23} parent=5 // pred_check_branch
      %218 = sbr.rel (%p215) target = $region36
    $region35: #{skinning_net_forward.23} parent=5 // pred_region
      %s219 = ssub.s32 %s12, 1
      %s220 = smul.u32 2, %s22
      %p221 = scmp.lt.s32.totalorder %s21, 1
      %s222 = scalar_select %p221, %s21, 1
      %p223 = scmp.lt.s32.totalorder %s220, 1
      %s224 = scalar_select %p223, %s220, 1
      %s225 = smul.addr %s224, 2
      %s226 = smul.addr %s222, 4
      %s227 = sadd.s32 %s225, %s226
      %s228 = smul.addr %s227, 4
      %s229 = scalar_lea.vmem %s0, %s228
      %p230 = pneg %p52
      %p231 = pneg %p49
      %p232 = pneg %p73
      %p233 = pneg %p70
      %p234 = pneg %p94
      %p235 = pneg %p91
      %p236 = pneg %p115
      %p237 = pneg %p112
      %p238 = pneg %p143
      %p239 = pneg %p140
      %s240 = smul.u32 2, %s22
      %p241 = scmp.lt.s32.totalorder %s21, 1
      %s242 = scalar_select %p241, %s21, 1
      %p243 = scmp.lt.s32.totalorder %s240, 1
      %s244 = scalar_select %p243, %s240, 1
      %s245 = smul.addr %s242, 2
      %s246 = sadd.s32 %s244, %s245
      %s247 = smul.addr %s246, 4
      %s248 = scalar_lea.vmem %s4, %s247
      %p249 = pneg %p171
      %p250 = pneg %p168
      %s251 = smul.u32 2, %s22
      %p252 = scmp.lt.s32.totalorder %s21, 1
      %s253 = scalar_select %p252, %s21, 1
      %p254 = scmp.lt.s32.totalorder %s251, 1
      %s255 = scalar_select %p254, %s251, 1
      %s256 = smul.addr %s253, 2
      %s257 = sadd.s32 %s255, %s256
      %s258 = smul.addr %s257, 8
      %s259 = scalar_lea.vmem %s5, %s258
      %s260 = smul.u32 2, %s22
      %p261 = scmp.lt.s32.totalorder %s21, 1
      %s262 = scalar_select %p261, %s21, 1
      %p263 = scmp.lt.s32.totalorder %s260, 1
      %s264 = scalar_select %p263, %s260, 1
      %s265 = smul.addr %s264, 2
      %s266 = smul.addr %s262, 4
      %s267 = sadd.s32 %s265, %s266
      %s268 = smul.addr %s267, 4
      %s269 = scalar_lea.vmem %s0, %s268
      %s270 = smul.u32 2, %s22
      %s271 = smul.u32 2, %s22
      %p272 = scmp.lt.s32.totalorder %s21, 1
      %s273 = scalar_select %p272, %s21, 1
      %p274 = scmp.lt.s32.totalorder %s271, 1
      %s275 = scalar_select %p274, %s271, 1
      %s276 = smul.addr %s273, 2
      %s277 = sadd.s32 %s275, %s276
      %s278 = smul.addr %s277, 4
      %s279 = scalar_lea.vmem %s4, %s278
      %s280 = smul.u32 2, %s22
      %s281 = smul.u32 2, %s22
      %p282 = scmp.lt.s32.totalorder %s21, 1
      %s283 = scalar_select %p282, %s21, 1
      %p284 = scmp.lt.s32.totalorder %s281, 1
      %s285 = scalar_select %p284, %s281, 1
      %s286 = smul.addr %s283, 2
      %s287 = sadd.s32 %s285, %s286
      %s288 = smul.addr %s287, 8
      %s289 = scalar_lea.vmem %s5, %s288
      %s290 = smul.u32 2, %s22
      %v292 = vld [vmem:[%s269] sm:$0xff]
      %v293 = vld [vmem:[%s269 + $0x8] sm:$0xff]
      %v294 = vld [vmem:[%s1] sm:$0xf]
      %v295 = vld [vmem:[%s1 + $0x4] sm:$0xf]
      %v296 = vld [vmem:[%s1 + $0x8] sm:$0xf]
      %v297 = vld [vmem:[%s1 + $0xc] sm:$0xf]
      %v298 = vld [vmem:[%s1 + $0x10] sm:$0xf]
      %v299 = vld [vmem:[%s1 + $0x14] sm:$0xf]
      %v300 = vld [vmem:[%s1 + $0x18] sm:$0xf]
      %v301 = vld [vmem:[%s1 + $0x1c] sm:$0xf]
      %v302 = vld [vmem:[%s1 + $0x20] sm:$0xf]
      %v303 = vld [vmem:[%s1 + $0x24] sm:$0xf]
      %v304 = vld [vmem:[%s1 + $0x28] sm:$0xf]
      %v305 = vld [vmem:[%s1 + $0x2c] sm:$0xf]
      %v306 = vld [vmem:[%s1 + $0x30] sm:$0xf]
      %v307 = vld [vmem:[%s1 + $0x34] sm:$0xf]
      %v308 = vld [vmem:[%s1 + $0x38] sm:$0xf]
      %v309 = vld [vmem:[%s1 + $0x3c] sm:$0xf]
      %v310 = vld [vmem:[%s1 + $0x40] sm:$0xf]
      %v311 = vld [vmem:[%s1 + $0x44] sm:$0xf]
      %v312 = vld [vmem:[%s1 + $0x48] sm:$0xf]
      %v313 = vld [vmem:[%s1 + $0x4c] sm:$0xf]
      %v314 = vld [vmem:[%s1 + $0x50] sm:$0xf]
      %v315 = vld [vmem:[%s1 + $0x54] sm:$0xf]
      %v316 = vld [vmem:[%s1 + $0x58] sm:$0xf]
      %v317 = vld [vmem:[%s1 + $0x5c] sm:$0xf]
      %v318 = vld [vmem:[%s1 + $0x60] sm:$0xf]
      %v319 = vld [vmem:[%s1 + $0x64] sm:$0xf]
      %v320 = vld [vmem:[%s1 + $0x68] sm:$0xf]
      %v321 = vld [vmem:[%s1 + $0x6c] sm:$0xf]
      %v322 = vld [vmem:[%s1 + $0x70] sm:$0xf]
      %v323 = vld [vmem:[%s1 + $0x74] sm:$0xf]
      %v324 = vld [vmem:[%s1 + $0x78] sm:$0xf]
      %v325 = vld [vmem:[%s1 + $0x7c] sm:$0xf]
      %v328 = vunpack.c.l.b16 %v292
      %v329 = vunpack.c.h.b16 %v292
      %v330 = vunpack.c.l.b16 %v293
      %v331 = vunpack.c.h.b16 %v293
      %v332 = vpack.c.b16 %v330, %v328
      %v333 = vpack.c.b16 %v331, %v329
      %v368 = vunpack.c.l.b16 %v294
      %v369 = vunpack.c.l.b16 %v295
      %v370 = vunpack.c.l.b16 %v296
      %v371 = vunpack.c.l.b16 %v297
      %v372 = vunpack.c.l.b16 %v298
      %v373 = vunpack.c.l.b16 %v299
      %v374 = vunpack.c.l.b16 %v300
      %v375 = vunpack.c.l.b16 %v301
      %v376 = vunpack.c.l.b16 %v302
      %v377 = vunpack.c.l.b16 %v303
      %v378 = vunpack.c.l.b16 %v304
      %v379 = vunpack.c.l.b16 %v305
      %v380 = vunpack.c.l.b16 %v306
      %v381 = vunpack.c.l.b16 %v307
      %v382 = vunpack.c.l.b16 %v308
      %v383 = vunpack.c.l.b16 %v309
      %v384 = vunpack.c.l.b16 %v310
      %v385 = vunpack.c.l.b16 %v311
      %v386 = vunpack.c.l.b16 %v312
      %v387 = vunpack.c.l.b16 %v313
      %v388 = vunpack.c.l.b16 %v314
      %v389 = vunpack.c.l.b16 %v315
      %v390 = vunpack.c.l.b16 %v316
      %v391 = vunpack.c.l.b16 %v317
      %v392 = vunpack.c.l.b16 %v318
      %v393 = vunpack.c.l.b16 %v319
      %v394 = vunpack.c.l.b16 %v320
      %v395 = vunpack.c.l.b16 %v321
      %v396 = vunpack.c.l.b16 %v322
      %v397 = vunpack.c.l.b16 %v323
      %v398 = vunpack.c.l.b16 %v324
      %v399 = vunpack.c.l.b16 %v325
      %v400 = vpack.c.b16 %v369, %v368
      %v401 = vpack.c.b16 %v371, %v370
      %v402 = vpack.c.b16 %v373, %v372
      %v403 = vpack.c.b16 %v375, %v374
      %v404 = vpack.c.b16 %v377, %v376
      %v405 = vpack.c.b16 %v379, %v378
      %v406 = vpack.c.b16 %v381, %v380
      %v407 = vpack.c.b16 %v383, %v382
      %v408 = vpack.c.b16 %v385, %v384
      %v409 = vpack.c.b16 %v387, %v386
      %v410 = vpack.c.b16 %v389, %v388
      %v411 = vpack.c.b16 %v391, %v390
      %v412 = vpack.c.b16 %v393, %v392
      %v413 = vpack.c.b16 %v395, %v394
      %v414 = vpack.c.b16 %v397, %v396
      %v415 = vpack.c.b16 %v399, %v398
      %432 = vmatprep.subr.bf16.mxu0 0
      %433 = vmatpush1.bf16.msra.mxu0 %v400
      %434 = vmatprep.subr.bf16.mxu0 0
      %435 = vmatpush1.bf16.msra.mxu0 %v401
      %436 = vmatprep.subr.bf16.mxu0 0
      %437 = vmatpush1.bf16.msra.mxu0 %v402
      %438 = vmatprep.subr.bf16.mxu0 0
      %439 = vmatpush1.bf16.msra.mxu0 %v403
      %440 = vmatprep.subr.bf16.mxu0 0
      %441 = vmatpush1.bf16.msra.mxu0 %v404
      %442 = vmatprep.subr.bf16.mxu0 0
      %443 = vmatpush1.bf16.msra.mxu0 %v405
      %444 = vmatprep.subr.bf16.mxu0 0
      %445 = vmatpush1.bf16.msra.mxu0 %v406
      %446 = vmatprep.subr.bf16.mxu0 0
      %447 = vmatpush1.bf16.msra.mxu0 %v407
      %448 = vmatprep.subr.bf16.mxu0 0
      %449 = vmatpush1.bf16.msra.mxu0 %v408
      %450 = vmatprep.subr.bf16.mxu0 0
      %451 = vmatpush1.bf16.msra.mxu0 %v409
      %452 = vmatprep.subr.bf16.mxu0 0
      %453 = vmatpush1.bf16.msra.mxu0 %v410
      %454 = vmatprep.subr.bf16.mxu0 0
      %455 = vmatpush1.bf16.msra.mxu0 %v411
      %456 = vmatprep.subr.bf16.mxu0 0
      %457 = vmatpush1.bf16.msra.mxu0 %v412
      %458 = vmatprep.subr.bf16.mxu0 0
      %459 = vmatpush1.bf16.msra.mxu0 %v413
      %460 = vmatprep.subr.bf16.mxu0 0
      %461 = vmatpush1.bf16.msra.mxu0 %v414
      %462 = vmatprep.subr.bf16.mxu0 0
      %463 = vmatpush1.bf16.msra.mxu0 %v415
      %464 = vmatprep.mubr.bf16.mxu0 %v333
      %465 = vmatmul.mubr.bf16.gmra.mrb[0].mxu0 %v332
      %v466 = vpop.f32.mrb[0].mxu0
      %v467 = vadd.f32 0.0, %v466
      %v468 = vpop.f32.mrb[0].mxu0
      %v469 = vpop.f32.mrb[0].mxu0
      %v470 = vadd.f32 0.0, %v469
      %v471 = vpop.f32.mrb[0].mxu0
      %472 = vdwg.mxu0
      %v473 = vld [vmem:[%s2] sm:$0xf]
      %v474 = vld [vmem:[%s2 + $0x4] sm:$0xf]
      %v475 = vld [vmem:[%s2 + $0x8] sm:$0xf]
      %v476 = vld [vmem:[%s2 + $0xc] sm:$0xf]
      %v477 = vld [vmem:[%s2 + $0x10] sm:$0xf]
      %v478 = vld [vmem:[%s2 + $0x14] sm:$0xf]
      %v479 = vld [vmem:[%s2 + $0x18] sm:$0xf]
      %v480 = vld [vmem:[%s2 + $0x1c] sm:$0xf]
      %v481 = vld [vmem:[%s2 + $0x20] sm:$0xf]
      %v482 = vld [vmem:[%s2 + $0x24] sm:$0xf]
      %v483 = vld [vmem:[%s2 + $0x28] sm:$0xf]
      %v484 = vld [vmem:[%s2 + $0x2c] sm:$0xf]
      %v485 = vld [vmem:[%s2 + $0x30] sm:$0xf]
      %v486 = vld [vmem:[%s2 + $0x34] sm:$0xf]
      %v487 = vld [vmem:[%s2 + $0x38] sm:$0xf]
      %v488 = vld [vmem:[%s2 + $0x3c] sm:$0xf]
      %v489 = vld [vmem:[%s2 + $0x40] sm:$0xf]
      %v490 = vld [vmem:[%s2 + $0x44] sm:$0xf]
      %v491 = vld [vmem:[%s2 + $0x48] sm:$0xf]
      %v492 = vld [vmem:[%s2 + $0x4c] sm:$0xf]
      %v493 = vld [vmem:[%s2 + $0x50] sm:$0xf]
      %v494 = vld [vmem:[%s2 + $0x54] sm:$0xf]
      %v495 = vld [vmem:[%s2 + $0x58] sm:$0xf]
      %v496 = vld [vmem:[%s2 + $0x5c] sm:$0xf]
      %v497 = vld [vmem:[%s2 + $0x60] sm:$0xf]
      %v498 = vld [vmem:[%s2 + $0x64] sm:$0xf]
      %v499 = vld [vmem:[%s2 + $0x68] sm:$0xf]
      %v500 = vld [vmem:[%s2 + $0x6c] sm:$0xf]
      %v501 = vld [vmem:[%s2 + $0x70] sm:$0xf]
      %v502 = vld [vmem:[%s2 + $0x74] sm:$0xf]
      %v503 = vld [vmem:[%s2 + $0x78] sm:$0xf]
      %v504 = vld [vmem:[%s2 + $0x7c] sm:$0xf]
      %v505 = vld [vmem:[%s3] sm:$0x1]
      %v507 = vlaneseq
      %v508 = vshrl.u32 %v507, 7
      %v509 = vsub.s32 0, %v508
      %v510 = vrot.slane %v505, %v509
      %v544 = vunpack.c.l.b16 %v473
      %v545 = vunpack.c.l.b16 %v474
      %v546 = vunpack.c.l.b16 %v475
      %v547 = vunpack.c.l.b16 %v476
      %v548 = vunpack.c.l.b16 %v477
      %v549 = vunpack.c.l.b16 %v478
      %v550 = vunpack.c.l.b16 %v479
      %v551 = vunpack.c.l.b16 %v480
      %v552 = vunpack.c.l.b16 %v481
      %v553 = vunpack.c.l.b16 %v482
      %v554 = vunpack.c.l.b16 %v483
      %v555 = vunpack.c.l.b16 %v484
      %v556 = vunpack.c.l.b16 %v485
      %v557 = vunpack.c.l.b16 %v486
      %v558 = vunpack.c.l.b16 %v487
      %v559 = vunpack.c.l.b16 %v488
      %v560 = vunpack.c.l.b16 %v489
      %v561 = vunpack.c.l.b16 %v490
      %v562 = vunpack.c.l.b16 %v491
      %v563 = vunpack.c.l.b16 %v492
      %v564 = vunpack.c.l.b16 %v493
      %v565 = vunpack.c.l.b16 %v494
      %v566 = vunpack.c.l.b16 %v495
      %v567 = vunpack.c.l.b16 %v496
      %v568 = vunpack.c.l.b16 %v497
      %v569 = vunpack.c.l.b16 %v498
      %v570 = vunpack.c.l.b16 %v499
      %v571 = vunpack.c.l.b16 %v500
      %v572 = vunpack.c.l.b16 %v501
      %v573 = vunpack.c.l.b16 %v502
      %v574 = vunpack.c.l.b16 %v503
      %v575 = vunpack.c.l.b16 %v504
      %v576 = vpack.c.b16 %v545, %v544
      %v577 = vpack.c.b16 %v547, %v546
      %v578 = vpack.c.b16 %v549, %v548
      %v579 = vpack.c.b16 %v551, %v550
      %v580 = vpack.c.b16 %v553, %v552
      %v581 = vpack.c.b16 %v555, %v554
      %v582 = vpack.c.b16 %v557, %v556
      %v583 = vpack.c.b16 %v559, %v558
      %v584 = vpack.c.b16 %v561, %v560
      %v585 = vpack.c.b16 %v563, %v562
      %v586 = vpack.c.b16 %v565, %v564
      %v587 = vpack.c.b16 %v567, %v566
      %v588 = vpack.c.b16 %v569, %v568
      %v589 = vpack.c.b16 %v571, %v570
      %v590 = vpack.c.b16 %v573, %v572
      %v591 = vpack.c.b16 %v575, %v574
      %608 = vmatprep.subr.bf16.mxu0 0
      %609 = vmatpush1.bf16.msra.mxu0 %v576
      %610 = vmatprep.subr.bf16.mxu0 0
      %611 = vmatpush1.bf16.msra.mxu0 %v577
      %612 = vmatprep.subr.bf16.mxu0 0
      %613 = vmatpush1.bf16.msra.mxu0 %v578
      %614 = vmatprep.subr.bf16.mxu0 0
      %615 = vmatpush1.bf16.msra.mxu0 %v579
      %616 = vmatprep.subr.bf16.mxu0 0
      %617 = vmatpush1.bf16.msra.mxu0 %v580
      %618 = vmatprep.subr.bf16.mxu0 0
      %619 = vmatpush1.bf16.msra.mxu0 %v581
      %620 = vmatprep.subr.bf16.mxu0 0
      %621 = vmatpush1.bf16.msra.mxu0 %v582
      %622 = vmatprep.subr.bf16.mxu0 0
      %623 = vmatpush1.bf16.msra.mxu0 %v583
      %624 = vmatprep.subr.bf16.mxu0 0
      %625 = vmatpush1.bf16.msra.mxu0 %v584
      %626 = vmatprep.subr.bf16.mxu0 0
      %627 = vmatpush1.bf16.msra.mxu0 %v585
      %628 = vmatprep.subr.bf16.mxu0 0
      %629 = vmatpush1.bf16.msra.mxu0 %v586
      %630 = vmatprep.subr.bf16.mxu0 0
      %631 = vmatpush1.bf16.msra.mxu0 %v587
      %632 = vmatprep.subr.bf16.mxu0 0
      %633 = vmatpush1.bf16.msra.mxu0 %v588
      %634 = vmatprep.subr.bf16.mxu0 0
      %635 = vmatpush1.bf16.msra.mxu0 %v589
      %636 = vmatprep.subr.bf16.mxu0 0
      %637 = vmatpush1.bf16.msra.mxu0 %v590
      %638 = vmatprep.subr.bf16.mxu0 0
      %639 = vmatpush1.bf16.msra.mxu0 %v591
      %640 = vmatprep.mubr.bf16.mxu0 %v333
      %641 = vmatmul.mubr.bf16.gmra.mrb[0].mxu0 %v332
      %v642 = vpop.f32.mrb[0].mxu0
      %v643 = vadd.f32 %v510, %v642
      %v644 = vpop.f32.mrb[0].mxu0
      %v645 = vpop.f32.mrb[0].mxu0
      %v646 = vadd.f32 %v510, %v645
      %v647 = vpop.f32.mrb[0].mxu0
      %648 = vdwg.mxu0
      %v649 = vpack.c.bf16 %v470, %v467
      %v651 = vunpack.c.l.b16 %v649
      %v652 = vunpack.c.h.b16 %v649
      %v653 = vpack.c.b16 %v651, %v651
      %v654 = vpack.c.b16 %v652, %v652
      %657 = vst [vmem:[%s279] sm:$0xf] %v653
      %658 = vst [vmem:[%s279 + $0x4] sm:$0xf] %v654
      %659 = vst [vmem:[%s289] sm:$0xff] %v643
      %660 = vst [vmem:[%s289 + $0x8] sm:$0xff] %v646
      %s661 = smul.u32 2, %s22
      %p662 = scmp.lt.s32.totalorder %s21, 1
      %s663 = scalar_select %p662, %s21, 1
      %p664 = scmp.lt.s32.totalorder %s661, 1
      %s665 = scalar_select %p664, %s661, 1
      %s666 = smul.addr %s663, 2
      %s667 = sadd.s32 %s665, %s666
      %s668 = smul.addr %s667, 4
      %s669 = scalar_lea.vmem %s4, %s668
      %s670 = smul.u32 2, %s22
      %p671 = scmp.lt.s32.totalorder %s21, 1
      %s672 = scalar_select %p671, %s21, 1
      %p673 = scmp.lt.s32.totalorder %s670, 1
      %s674 = scalar_select %p673, %s670, 1
      %s675 = smul.addr %s672, 2
      %s676 = sadd.s32 %s674, %s675
      %s677 = smul.addr %s676, 8
      %s678 = scalar_lea.vmem %s5, %s677
      // Predicated region
      $region37: #{skinning_net_forward.23} parent=35 // pred_check
        %p679 = pneg %p140
      $region38: #{skinning_net_forward.23} parent=35 // pred_check_branch
        %681 = sbr.rel (%p679) target = $region40
      $region39: #{skinning_net_forward.23} parent=35 // pred_region
        %s682 = smul.u32 2, %s22
      $region40: #{skinning_net_forward.23} parent=35 // pred_fallthru
        _
      // Predicated region
      $region41: #{skinning_net_forward.23} parent=35 // pred_check
        %p683 = pneg %p168
      $region42: #{skinning_net_forward.23} parent=35 // pred_check_branch
        %685 = sbr.rel (%p683) target = $region44
      $region43: #{skinning_net_forward.23} parent=35 // pred_region
        %s686 = smul.u32 2, %s22
      $region44: #{skinning_net_forward.23} parent=35 // pred_fallthru
        _
    $region36: #{skinning_net_forward.23} parent=5 // pred_fallthru
      _
    %p687 = scmp.le.s32.totalorder 2, %s12
    // Predicated region
    $region45: #{skinning_net_forward.23} parent=5 // pred_check
      %p688 = pneg %p687
    $region46: #{skinning_net_forward.23} parent=5 // pred_check_branch
      %690 = sbr.rel (%p688) target = $region48
    $region47: #{skinning_net_forward.23} parent=5 // pred_region
      %s691 = ssub.s32 %s12, 2
      // Predicated region
      $region49: #{skinning_net_forward.23} parent=47 // pred_check
        %p692 = pneg %p146
      $region50: #{skinning_net_forward.23} parent=47 // pred_check_branch
        %694 = sbr.rel (%p692) target = $region52
      $region51: #{skinning_net_forward.23} parent=47 // pred_region
        %s695 = smul.u32 2, %s24
        %p696 = scmp.lt.s32.totalorder %s23, 1
        %s697 = scalar_select %p696, %s23, 1
        %p698 = scmp.lt.s32.totalorder %s695, 1
        %s699 = scalar_select %p698, %s695, 1
        %s700 = smul.addr %s697, 2
        %s701 = sadd.s32 %s699, %s700
        %s702 = smul.addr %s701, 4
        %s703 = scalar_lea.vmem %s4, %s702
      $region52: #{skinning_net_forward.23} parent=47 // pred_fallthru
        _
      // Predicated region
      $region53: #{skinning_net_forward.23} parent=47 // pred_check
        %p704 = pneg %p174
      $region54: #{skinning_net_forward.23} parent=47 // pred_check_branch
        %706 = sbr.rel (%p704) target = $region56
      $region55: #{skinning_net_forward.23} parent=47 // pred_region
        %s707 = smul.u32 2, %s24
        %p708 = scmp.lt.s32.totalorder %s23, 1
        %s709 = scalar_select %p708, %s23, 1
        %p710 = scmp.lt.s32.totalorder %s707, 1
        %s711 = scalar_select %p710, %s707, 1
        %s712 = smul.addr %s709, 2
        %s713 = sadd.s32 %s711, %s712
        %s714 = smul.addr %s713, 8
        %s715 = scalar_lea.vmem %s5, %s714
      $region56: #{skinning_net_forward.23} parent=47 // pred_fallthru
        _
    $region48: #{skinning_net_forward.23} parent=5 // pred_fallthru
      _
  $region6: #{skinning_net_forward.23} parent=0 // loop_footer
    %s16 = sadd.s32 1, %s12
  $region7: #{skinning_net_forward.23} parent=0 // loop_footer_branch
    %11 = sbr.rel target = $region3
  $region8: #{skinning_net_forward.23} parent=0 // loop_exit
    _

// kernel: skinning_net_forward.24
$region0: #{skinning_net_forward.24}
  #allocation0 [shape = 'u32[]', space=smem, size = 0x4, offset = 0x4, fixed_abs, tag = 'smem constant byte address 0x4 - core index']
  #allocation1 [shape = 'u32[144,128]{1,0:T(1,128)}', space=vmem, size = 0x12000, scoped, tag = 'internal scratch']
  %s0 = inlined_call_operand.vmem [shape: bf16[2,16,128], index: 0, kind: input, shape index: {}]
  %s1 = inlined_call_operand.vmem [shape: bf16[128,128], index: 1, kind: input, shape index: {}]
  %s2 = inlined_call_operand.vmem [shape: bf16[128,128], index: 2, kind: input, shape index: {}]
  %s3 = inlined_call_operand.vmem [shape: f32[1,128], index: 3, kind: input, shape index: {}]
  %s4 = inlined_call_operand.vmem [shape: bf16[2,16,128], index: 4, kind: output, shape index: {0}]
  %s5 = inlined_call_operand.vmem [shape: f32[2,16,128], index: 5, kind: output, shape index: {1}]
  %6 = xla_tuple %s4, %s5
  %s7 = sld [smem:[#allocation0]]
  $region57: #{skinning_net_forward.24} parent=0
    _
  %s9 = ssub.s32 1, %s7
  %s10 = scalar_select 0, %s9, %s7
  loop: start=0, step=1, limit=4
  $region2: #{skinning_net_forward.24} parent=0 // loop_pre_header
    _
  $region3: #{skinning_net_forward.24} parent=0 // loop_header
    %s12 = sphi 0, %s16
    %p13 = scmp.ge.s32.totalorder %s12, 4
    %s19 = sphi 0, %s31
    %s20 = sphi 0, %s27
    %s21 = sphi 0, %s19
    %s22 = sphi 0, %s20
    %s23 = sphi 0, %s21
    %s24 = sphi 0, %s22
    %s36 = sphi 0, %s38
    %s39 = sphi 0, %s36
    %s40 = sphi 0, %s39
    %s56 = sphi 0, %s40
    %s60 = sphi 0, %s60
    %s62 = sphi 0, %s60
    %s63 = sphi 0, %s62
    %s77 = sphi 0, %s63
    %s81 = sphi 0, %s81
    %s83 = sphi 0, %s81
    %s84 = sphi 0, %s83
    %s98 = sphi 0, %s84
    %s102 = sphi 0, %s102
    %s104 = sphi 0, %s102
    %s105 = sphi 0, %s104
    %s119 = sphi 0, %s105
    %s127 = sphi 0, %s129
    %s130 = sphi 0, %s127
    %s131 = sphi 0, %s130
    %s147 = sphi 0, %s131
    %s155 = sphi 0, %s157
    %s158 = sphi 0, %s155
    %s159 = sphi 0, %s158
    %s175 = sphi 0, %s159
  $region4: #{skinning_net_forward.24} parent=0 // loop_header_branch
    %15 = sbr.rel (%p13) target = $region8
  $region5: #{skinning_net_forward.24} parent=0 // loop_body
    %s17 = ssub.s32 %s12, 1
    %s18 = ssub.s32 %s12, 2
    %s25 = sadd.s32 1, %s20
    %p26 = scmp.ge.s32.totalorder %s25, 1
    %s27 = scalar_select %p26, 0, %s25
    %s28 = sadd.s32 1, %s19
    %s29 = scalar_select %p26, %s28, %s19
    %p30 = scmp.ge.s32.totalorder %s29, 2
    %s31 = scalar_select %p30, 0, %s29
    %s32 = ssub.s32 %s19, %s31
    %s33 = ssub.s32 %s20, %s27
    %s34 = sor.u32 %s32, %s33
    %p35 = scmp.eq.s32.totalorder %s34, 0
    %s37 = sadd.s32 %s36, 1
    %s38 = scalar_select %p35, %s36, %s37
    %p41 = pneg %p35
    %p42 = scmp.eq.s32.totalorder %s12, 1
    %p43 = por %p41, %p42
    %p44 = scmp.ne.s32.totalorder %s36, %s39
    %p45 = scmp.eq.s32.totalorder %s12, 0
    %p46 = por %p44, %p45
    %p47 = scmp.ne.s32.totalorder %s36, %s39
    %p48 = scmp.eq.s32.totalorder %s17, 1
    %p49 = por %p47, %p48
    %p50 = scmp.ne.s32.totalorder %s39, %s40
    %p51 = scmp.eq.s32.totalorder %s17, 0
    %p52 = por %p50, %p51
    %p53 = scmp.ne.s32.totalorder %s39, %s40
    %p54 = scmp.eq.s32.totalorder %s18, 1
    %p55 = por %p53, %p54
    %p57 = scmp.ne.s32.totalorder %s40, %s56
    %p58 = scmp.eq.s32.totalorder %s18, 0
    %p59 = por %p57, %p58
    %s61 = sadd.s32 %s60, 1
    %p64 = scmp.eq.s32.totalorder %s12, 1
    %p65 = scmp.ne.s32.totalorder %s60, %s62
    %p66 = scmp.eq.s32.totalorder %s12, 0
    %p67 = por %p65, %p66
    %p68 = scmp.ne.s32.totalorder %s60, %s62
    %p69 = scmp.eq.s32.totalorder %s17, 1
    %p70 = por %p68, %p69
    %p71 = scmp.ne.s32.totalorder %s62, %s63
    %p72 = scmp.eq.s32.totalorder %s17, 0
    %p73 = por %p71, %p72
    %p74 = scmp.ne.s32.totalorder %s62, %s63
    %p75 = scmp.eq.s32.totalorder %s18, 1
    %p76 = por %p74, %p75
    %p78 = scmp.ne.s32.totalorder %s63, %s77
    %p79 = scmp.eq.s32.totalorder %s18, 0
    %p80 = por %p78, %p79
    %s82 = sadd.s32 %s81, 1
    %p85 = scmp.eq.s32.totalorder %s12, 1
    %p86 = scmp.ne.s32.totalorder %s81, %s83
    %p87 = scmp.eq.s32.totalorder %s12, 0
    %p88 = por %p86, %p87
    %p89 = scmp.ne.s32.totalorder %s81, %s83
    %p90 = scmp.eq.s32.totalorder %s17, 1
    %p91 = por %p89, %p90
    %p92 = scmp.ne.s32.totalorder %s83, %s84
    %p93 = scmp.eq.s32.totalorder %s17, 0
    %p94 = por %p92, %p93
    %p95 = scmp.ne.s32.totalorder %s83, %s84
    %p96 = scmp.eq.s32.totalorder %s18, 1
    %p97 = por %p95, %p96
    %p99 = scmp.ne.s32.totalorder %s84, %s98
    %p100 = scmp.eq.s32.totalorder %s18, 0
    %p101 = por %p99, %p100
    %s103 = sadd.s32 %s102, 1
    %p106 = scmp.eq.s32.totalorder %s12, 1
    %p107 = scmp.ne.s32.totalorder %s102, %s104
    %p108 = scmp.eq.s32.totalorder %s12, 0
    %p109 = por %p107, %p108
    %p110 = scmp.ne.s32.totalorder %s102, %s104
    %p111 = scmp.eq.s32.totalorder %s17, 1
    %p112 = por %p110, %p111
    %p113 = scmp.ne.s32.totalorder %s104, %s105
    %p114 = scmp.eq.s32.totalorder %s17, 0
    %p115 = por %p113, %p114
    %p116 = scmp.ne.s32.totalorder %s104, %s105
    %p117 = scmp.eq.s32.totalorder %s18, 1
    %p118 = por %p116, %p117
    %p120 = scmp.ne.s32.totalorder %s105, %s119
    %p121 = scmp.eq.s32.totalorder %s18, 0
    %p122 = por %p120, %p121
    %s123 = ssub.s32 %s19, %s31
    %s124 = ssub.s32 %s20, %s27
    %s125 = sor.u32 %s123, %s124
    %p126 = scmp.eq.s32.totalorder %s125, 0
    %s128 = sadd.s32 %s127, 1
    %s129 = scalar_select %p126, %s127, %s128
    %p132 = pneg %p126
    %p133 = scmp.eq.s32.totalorder %s12, 1
    %p134 = por %p132, %p133
    %p135 = scmp.ne.s32.totalorder %s127, %s130
    %p136 = scmp.eq.s32.totalorder %s12, 0
    %p137 = por %p135, %p136
    %p138 = scmp.ne.s32.totalorder %s127, %s130
    %p139 = scmp.eq.s32.totalorder %s17, 1
    %p140 = por %p138, %p139
    %p141 = scmp.ne.s32.totalorder %s130, %s131
    %p142 = scmp.eq.s32.totalorder %s17, 0
    %p143 = por %p141, %p142
    %p144 = scmp.ne.s32.totalorder %s130, %s131
    %p145 = scmp.eq.s32.totalorder %s18, 1
    %p146 = por %p144, %p145
    %p148 = scmp.ne.s32.totalorder %s131, %s147
    %p149 = scmp.eq.s32.totalorder %s18, 0
    %p150 = por %p148, %p149
    %s151 = ssub.s32 %s19, %s31
    %s152 = ssub.s32 %s20, %s27
    %s153 = sor.u32 %s151, %s152
    %p154 = scmp.eq.s32.totalorder %s153, 0
    %s156 = sadd.s32 %s155, 1
    %s157 = scalar_select %p154, %s155, %s156
    %p160 = pneg %p154
    %p161 = scmp.eq.s32.totalorder %s12, 1
    %p162 = por %p160, %p161
    %p163 = scmp.ne.s32.totalorder %s155, %s158
    %p164 = scmp.eq.s32.totalorder %s12, 0
    %p165 = por %p163, %p164
    %p166 = scmp.ne.s32.totalorder %s155, %s158
    %p167 = scmp.eq.s32.totalorder %s17, 1
    %p168 = por %p166, %p167
    %p169 = scmp.ne.s32.totalorder %s158, %s159
    %p170 = scmp.eq.s32.totalorder %s17, 0
    %p171 = por %p169, %p170
    %p172 = scmp.ne.s32.totalorder %s158, %s159
    %p173 = scmp.eq.s32.totalorder %s18, 1
    %p174 = por %p172, %p173
    %p176 = scmp.ne.s32.totalorder %s159, %s175
    %p177 = scmp.eq.s32.totalorder %s18, 0
    %p178 = por %p176, %p177
    %p179 = scmp.le.s32.totalorder 1, %s12
    %p180 = scmp.lt.s32.totalorder %s12, 3
    %p181 = pnand %p179, %p180
    %p182 = pneg %p181
    // Predicated region
    $region9: #{skinning_net_forward.24} parent=5 // pred_check
      _
    $region10: #{skinning_net_forward.24} parent=5 // pred_check_branch
      %184 = sbr.rel (%p181) target = $region12
    $region11: #{skinning_net_forward.24} parent=5 // pred_region
      %s185 = ssub.s32 %s12, 1
      // Predicated region
      $region13: #{skinning_net_forward.24} parent=11 // pred_check
        %p186 = pneg %p73
      $region14: #{skinning_net_forward.24} parent=11 // pred_check_branch
        %188 = sbr.rel (%p186) target = $region16
      $region15: #{skinning_net_forward.24} parent=11 // pred_region
        _
      $region16: #{skinning_net_forward.24} parent=11 // pred_fallthru
        _
      // Predicated region
      $region17: #{skinning_net_forward.24} parent=11 // pred_check
        %p189 = pneg %p94
      $region18: #{skinning_net_forward.24} parent=11 // pred_check_branch
        %191 = sbr.rel (%p189) target = $region20
      $region19: #{skinning_net_forward.24} parent=11 // pred_region
        _
      $region20: #{skinning_net_forward.24} parent=11 // pred_fallthru
        _
      // Predicated region
      $region21: #{skinning_net_forward.24} parent=11 // pred_check
        %p192 = pneg %p115
      $region22: #{skinning_net_forward.24} parent=11 // pred_check_branch
        %194 = sbr.rel (%p192) target = $region24
      $region23: #{skinning_net_forward.24} parent=11 // pred_region
        _
      $region24: #{skinning_net_forward.24} parent=11 // pred_fallthru
        _
    $region12: #{skinning_net_forward.24} parent=5 // pred_fallthru
      _
    %p195 = scmp.lt.s32.totalorder %s12, 2
    // Predicated region
    $region25: #{skinning_net_forward.24} parent=5 // pred_check
      %p196 = pneg %p195
    $region26: #{skinning_net_forward.24} parent=5 // pred_check_branch
      %198 = sbr.rel (%p196) target = $region28
    $region27: #{skinning_net_forward.24} parent=5 // pred_region
      // Predicated region
      $region29: #{skinning_net_forward.24} parent=27 // pred_check
        %p199 = pneg %p46
      $region30: #{skinning_net_forward.24} parent=27 // pred_check_branch
        %201 = sbr.rel (%p199) target = $region32
      $region31: #{skinning_net_forward.24} parent=27 // pred_region
        %s202 = smul.u32 2, %s20
        %p203 = scmp.lt.s32.totalorder %s19, 1
        %s204 = scalar_select %p203, %s19, 1
        %p205 = scmp.lt.s32.totalorder %s202, 1
        %s206 = scalar_select %p205, %s202, 1
        %s207 = smul.addr %s204, 2
        %s208 = sadd.s32 %s206, %s207
        %s209 = smul.addr %s208, 4
        %s210 = scalar_lea.vmem %s0, %s209
        %s211 = smul.u32 2, %s20
      $region32: #{skinning_net_forward.24} parent=27 // pred_fallthru
        _
    $region28: #{skinning_net_forward.24} parent=5 // pred_fallthru
      _
    %p212 = scmp.le.s32.totalorder 1, %s12
    %p213 = scmp.lt.s32.totalorder %s12, 3
    %p214 = pnand %p212, %p213
    %p215 = pneg %p214
    // Predicated region
    $region33: #{skinning_net_forward.24} parent=5 // pred_check
      _
    $region34: #{skinning_net_forward.24} parent=5 // pred_check_branch
      %217 = sbr.rel (%p214) target = $region36
    $region35: #{skinning_net_forward.24} parent=5 // pred_region
      %s218 = ssub.s32 %s12, 1
      %s219 = smul.u32 2, %s22
      %p220 = scmp.lt.s32.totalorder %s21, 1
      %s221 = scalar_select %p220, %s21, 1
      %p222 = scmp.lt.s32.totalorder %s219, 1
      %s223 = scalar_select %p222, %s219, 1
      %s224 = smul.addr %s221, 2
      %s225 = sadd.s32 %s223, %s224
      %s226 = smul.addr %s225, 4
      %s227 = scalar_lea.vmem %s0, %s226
      %p228 = pneg %p52
      %p229 = pneg %p49
      %p230 = pneg %p73
      %p231 = pneg %p70
      %p232 = pneg %p94
      %p233 = pneg %p91
      %p234 = pneg %p115
      %p235 = pneg %p112
      %p236 = pneg %p143
      %p237 = pneg %p140
      %s238 = smul.u32 2, %s22
      %p239 = scmp.lt.s32.totalorder %s21, 1
      %s240 = scalar_select %p239, %s21, 1
      %p241 = scmp.lt.s32.totalorder %s238, 1
      %s242 = scalar_select %p241, %s238, 1
      %s243 = smul.addr %s240, 2
      %s244 = sadd.s32 %s242, %s243
      %s245 = smul.addr %s244, 4
      %s246 = scalar_lea.vmem %s4, %s245
      %p247 = pneg %p171
      %p248 = pneg %p168
      %s249 = smul.u32 2, %s22
      %p250 = scmp.lt.s32.totalorder %s21, 1
      %s251 = scalar_select %p250, %s21, 1
      %p252 = scmp.lt.s32.totalorder %s249, 1
      %s253 = scalar_select %p252, %s249, 1
      %s254 = smul.addr %s251, 2
      %s255 = sadd.s32 %s253, %s254
      %s256 = smul.addr %s255, 8
      %s257 = scalar_lea.vmem %s5, %s256
      %s258 = smul.u32 2, %s22
      %p259 = scmp.lt.s32.totalorder %s21, 1
      %s260 = scalar_select %p259, %s21, 1
      %p261 = scmp.lt.s32.totalorder %s258, 1
      %s262 = scalar_select %p261, %s258, 1
      %s263 = smul.addr %s260, 2
      %s264 = sadd.s32 %s262, %s263
      %s265 = smul.addr %s264, 4
      %s266 = scalar_lea.vmem %s0, %s265
      %s267 = smul.u32 2, %s22
      %s268 = smul.u32 2, %s22
      %p269 = scmp.lt.s32.totalorder %s21, 1
      %s270 = scalar_select %p269, %s21, 1
      %p271 = scmp.lt.s32.totalorder %s268, 1
      %s272 = scalar_select %p271, %s268, 1
      %s273 = smul.addr %s270, 2
      %s274 = sadd.s32 %s272, %s273
      %s275 = smul.addr %s274, 4
      %s276 = scalar_lea.vmem %s4, %s275
      %s277 = smul.u32 2, %s22
      %s278 = smul.u32 2, %s22
      %p279 = scmp.lt.s32.totalorder %s21, 1
      %s280 = scalar_select %p279, %s21, 1
      %p281 = scmp.lt.s32.totalorder %s278, 1
      %s282 = scalar_select %p281, %s278, 1
      %s283 = smul.addr %s280, 2
      %s284 = sadd.s32 %s282, %s283
      %s285 = smul.addr %s284, 8
      %s286 = scalar_lea.vmem %s5, %s285
      %s287 = smul.u32 2, %s22
      %v289 = vld [vmem:[%s266] sm:$0xf]
      %v290 = vld [vmem:[%s266 + $0x4] sm:$0xf]
      %v291 = vld [vmem:[%s1] sm:$0xf]
      %v292 = vld [vmem:[%s1 + $0x4] sm:$0xf]
      %v293 = vld [vmem:[%s1 + $0x8] sm:$0xf]
      %v294 = vld [vmem:[%s1 + $0xc] sm:$0xf]
      %v295 = vld [vmem:[%s1 + $0x10] sm:$0xf]
      %v296 = vld [vmem:[%s1 + $0x14] sm:$0xf]
      %v297 = vld [vmem:[%s1 + $0x18] sm:$0xf]
      %v298 = vld [vmem:[%s1 + $0x1c] sm:$0xf]
      %v299 = vld [vmem:[%s1 + $0x20] sm:$0xf]
      %v300 = vld [vmem:[%s1 + $0x24] sm:$0xf]
      %v301 = vld [vmem:[%s1 + $0x28] sm:$0xf]
      %v302 = vld [vmem:[%s1 + $0x2c] sm:$0xf]
      %v303 = vld [vmem:[%s1 + $0x30] sm:$0xf]
      %v304 = vld [vmem:[%s1 + $0x34] sm:$0xf]
      %v305 = vld [vmem:[%s1 + $0x38] sm:$0xf]
      %v306 = vld [vmem:[%s1 + $0x3c] sm:$0xf]
      %v309 = vunpack.c.l.b16 %v289
      %v310 = vunpack.c.l.b16 %v290
      %v311 = vpack.c.b16 %v310, %v309
      %v329 = vunpack.c.l.b16 %v291
      %v330 = vunpack.c.l.b16 %v292
      %v331 = vunpack.c.l.b16 %v293
      %v332 = vunpack.c.l.b16 %v294
      %v333 = vunpack.c.l.b16 %v295
      %v334 = vunpack.c.l.b16 %v296
      %v335 = vunpack.c.l.b16 %v297
      %v336 = vunpack.c.l.b16 %v298
      %v337 = vunpack.c.l.b16 %v299
      %v338 = vunpack.c.l.b16 %v300
      %v339 = vunpack.c.l.b16 %v301
      %v340 = vunpack.c.l.b16 %v302
      %v341 = vunpack.c.l.b16 %v303
      %v342 = vunpack.c.l.b16 %v304
      %v343 = vunpack.c.l.b16 %v305
      %v344 = vunpack.c.l.b16 %v306
      %v345 = vpack.c.b16 %v330, %v329
      %v346 = vpack.c.b16 %v332, %v331
      %v347 = vpack.c.b16 %v334, %v333
      %v348 = vpack.c.b16 %v336, %v335
      %v349 = vpack.c.b16 %v338, %v337
      %v350 = vpack.c.b16 %v340, %v339
      %v351 = vpack.c.b16 %v342, %v341
      %v352 = vpack.c.b16 %v344, %v343
      %361 = vmatprep.subr.bf16.mxu0 0
      %362 = vmatpush1.bf16.msra.mxu0 %v345
      %363 = vmatprep.subr.bf16.mxu0 0
      %364 = vmatpush1.bf16.msra.mxu0 %v346
      %365 = vmatprep.subr.bf16.mxu0 0
      %366 = vmatpush1.bf16.msra.mxu0 %v347
      %367 = vmatprep.subr.bf16.mxu0 0
      %368 = vmatpush1.bf16.msra.mxu0 %v348
      %369 = vmatprep.subr.bf16.mxu0 0
      %370 = vmatpush1.bf16.msra.mxu0 %v349
      %371 = vmatprep.subr.bf16.mxu0 0
      %372 = vmatpush1.bf16.msra.mxu0 %v350
      %373 = vmatprep.subr.bf16.mxu0 0
      %374 = vmatpush1.bf16.msra.mxu0 %v351
      %375 = vmatprep.subr.bf16.mxu0 0
      %376 = vmatpush1.bf16.msra.mxu0 %v352
      %377 = vmatprep.subr.bf16.mxu0 0
      %378 = vmatpush1.bf16.msra.mxu0 0
      %379 = vmatprep.subr.bf16.mxu0 0
      %380 = vmatpush1.bf16.msra.mxu0 0
      %381 = vmatprep.subr.bf16.mxu0 0
      %382 = vmatpush1.bf16.msra.mxu0 0
      %383 = vmatprep.subr.bf16.mxu0 0
      %384 = vmatpush1.bf16.msra.mxu0 0
      %385 = vmatprep.subr.bf16.mxu0 0
      %386 = vmatpush1.bf16.msra.mxu0 0
      %387 = vmatprep.subr.bf16.mxu0 0
      %388 = vmatpush1.bf16.msra.mxu0 0
      %389 = vmatprep.subr.bf16.mxu0 0
      %390 = vmatpush1.bf16.msra.mxu0 0
      %391 = vmatprep.subr.bf16.mxu0 0
      %392 = vmatpush1.bf16.msra.mxu0 0
      %393 = vmatprep.mubr.bf16.mxu0 0
      %394 = vmatmul.mubr.bf16.gmra.mrb[0].mxu0 %v311
      %v395 = vpop.f32.mrb[0].mxu0
      %v396 = vadd.f32 0.0, %v395
      %v397 = vpop.f32.mrb[0].mxu0
      %v398 = vpop.f32.mrb[0].mxu0
      %v399 = vadd.f32 0.0, %v398
      %v400 = vpop.f32.mrb[0].mxu0
      %401 = vdwg.mxu0
      %v402 = vld [vmem:[%s2] sm:$0xf]
      %v403 = vld [vmem:[%s2 + $0x4] sm:$0xf]
      %v404 = vld [vmem:[%s2 + $0x8] sm:$0xf]
      %v405 = vld [vmem:[%s2 + $0xc] sm:$0xf]
      %v406 = vld [vmem:[%s2 + $0x10] sm:$0xf]
      %v407 = vld [vmem:[%s2 + $0x14] sm:$0xf]
      %v408 = vld [vmem:[%s2 + $0x18] sm:$0xf]
      %v409 = vld [vmem:[%s2 + $0x1c] sm:$0xf]
      %v410 = vld [vmem:[%s2 + $0x20] sm:$0xf]
      %v411 = vld [vmem:[%s2 + $0x24] sm:$0xf]
      %v412 = vld [vmem:[%s2 + $0x28] sm:$0xf]
      %v413 = vld [vmem:[%s2 + $0x2c] sm:$0xf]
      %v414 = vld [vmem:[%s2 + $0x30] sm:$0xf]
      %v415 = vld [vmem:[%s2 + $0x34] sm:$0xf]
      %v416 = vld [vmem:[%s2 + $0x38] sm:$0xf]
      %v417 = vld [vmem:[%s2 + $0x3c] sm:$0xf]
      %v418 = vld [vmem:[%s3] sm:$0x1]
      %v420 = vlaneseq
      %v421 = vshrl.u32 %v420, 7
      %v422 = vsub.s32 0, %v421
      %v423 = vrot.slane %v418, %v422
      %v441 = vunpack.c.l.b16 %v402
      %v442 = vunpack.c.l.b16 %v403
      %v443 = vunpack.c.l.b16 %v404
      %v444 = vunpack.c.l.b16 %v405
      %v445 = vunpack.c.l.b16 %v406
      %v446 = vunpack.c.l.b16 %v407
      %v447 = vunpack.c.l.b16 %v408
      %v448 = vunpack.c.l.b16 %v409
      %v449 = vunpack.c.l.b16 %v410
      %v450 = vunpack.c.l.b16 %v411
      %v451 = vunpack.c.l.b16 %v412
      %v452 = vunpack.c.l.b16 %v413
      %v453 = vunpack.c.l.b16 %v414
      %v454 = vunpack.c.l.b16 %v415
      %v455 = vunpack.c.l.b16 %v416
      %v456 = vunpack.c.l.b16 %v417
      %v457 = vpack.c.b16 %v442, %v441
      %v458 = vpack.c.b16 %v444, %v443
      %v459 = vpack.c.b16 %v446, %v445
      %v460 = vpack.c.b16 %v448, %v447
      %v461 = vpack.c.b16 %v450, %v449
      %v462 = vpack.c.b16 %v452, %v451
      %v463 = vpack.c.b16 %v454, %v453
      %v464 = vpack.c.b16 %v456, %v455
      %473 = vmatprep.subr.bf16.mxu0 0
      %474 = vmatpush1.bf16.msra.mxu0 %v457
      %475 = vmatprep.subr.bf16.mxu0 0
      %476 = vmatpush1.bf16.msra.mxu0 %v458
      %477 = vmatprep.subr.bf16.mxu0 0
      %478 = vmatpush1.bf16.msra.mxu0 %v459
      %479 = vmatprep.subr.bf16.mxu0 0
      %480 = vmatpush1.bf16.msra.mxu0 %v460
      %481 = vmatprep.subr.bf16.mxu0 0
      %482 = vmatpush1.bf16.msra.mxu0 %v461
      %483 = vmatprep.subr.bf16.mxu0 0
      %484 = vmatpush1.bf16.msra.mxu0 %v462
      %485 = vmatprep.subr.bf16.mxu0 0
      %486 = vmatpush1.bf16.msra.mxu0 %v463
      %487 = vmatprep.subr.bf16.mxu0 0
      %488 = vmatpush1.bf16.msra.mxu0 %v464
      %489 = vmatprep.subr.bf16.mxu0 0
      %490 = vmatpush1.bf16.msra.mxu0 0
      %491 = vmatprep.subr.bf16.mxu0 0
      %492 = vmatpush1.bf16.msra.mxu0 0
      %493 = vmatprep.subr.bf16.mxu0 0
      %494 = vmatpush1.bf16.msra.mxu0 0
      %495 = vmatprep.subr.bf16.mxu0 0
      %496 = vmatpush1.bf16.msra.mxu0 0
      %497 = vmatprep.subr.bf16.mxu0 0
      %498 = vmatpush1.bf16.msra.mxu0 0
      %499 = vmatprep.subr.bf16.mxu0 0
      %500 = vmatpush1.bf16.msra.mxu0 0
      %501 = vmatprep.subr.bf16.mxu0 0
      %502 = vmatpush1.bf16.msra.mxu0 0
      %503 = vmatprep.subr.bf16.mxu0 0
      %504 = vmatpush1.bf16.msra.mxu0 0
      %505 = vmatprep.mubr.bf16.mxu0 0
      %506 = vmatmul.mubr.bf16.gmra.mrb[0].mxu0 %v311
      %v507 = vpop.f32.mrb[0].mxu0
      %v508 = vadd.f32 %v423, %v507
      %v509 = vpop.f32.mrb[0].mxu0
      %v510 = vpop.f32.mrb[0].mxu0
      %v511 = vadd.f32 %v423, %v510
      %v512 = vpop.f32.mrb[0].mxu0
      %513 = vdwg.mxu0
      %v514 = vpack.c.bf16 %v399, %v396
      %v516 = vunpack.c.l.b16 %v514
      %v517 = vunpack.c.h.b16 %v514
      %v518 = vpack.c.b16 %v516, %v516
      %v519 = vpack.c.b16 %v517, %v517
      %522 = vst [vmem:[%s276] sm:$0xf] %v518
      %523 = vst [vmem:[%s276 + $0x4] sm:$0xf] %v519
      %524 = vst [vmem:[%s286] sm:$0xff] %v508
      %525 = vst [vmem:[%s286 + $0x8] sm:$0xff] %v511
      %s526 = smul.u32 2, %s22
      %p527 = scmp.lt.s32.totalorder %s21, 1
      %s528 = scalar_select %p527, %s21, 1
      %p529 = scmp.lt.s32.totalorder %s526, 1
      %s530 = scalar_select %p529, %s526, 1
      %s531 = smul.addr %s528, 2
      %s532 = sadd.s32 %s530, %s531
      %s533 = smul.addr %s532, 4
      %s534 = scalar_lea.vmem %s4, %s533
      %s535 = smul.u32 2, %s22
      %p536 = scmp.lt.s32.totalorder %s21, 1
      %s537 = scalar_select %p536, %s21, 1
      %p538 = scmp.lt.s32.totalorder %s535, 1
      %s539 = scalar_select %p538, %s535, 1
      %s540 = smul.addr %s537, 2
      %s541 = sadd.s32 %s539, %s540
      %s542 = smul.addr %s541, 8
      %s543 = scalar_lea.vmem %s5, %s542
      // Predicated region
      $region37: #{skinning_net_forward.24} parent=35 // pred_check
        %p544 = pneg %p140
      $region38: #{skinning_net_forward.24} parent=35 // pred_check_branch
        %546 = sbr.rel (%p544) target = $region40
      $region39: #{skinning_net_forward.24} parent=35 // pred_region
        %s547 = smul.u32 2, %s22
      $region40: #{skinning_net_forward.24} parent=35 // pred_fallthru
        _
      // Predicated region
      $region41: #{skinning_net_forward.24} parent=35 // pred_check
        %p548 = pneg %p168
      $region42: #{skinning_net_forward.24} parent=35 // pred_check_branch
        %550 = sbr.rel (%p548) target = $region44
      $region43: #{skinning_net_forward.24} parent=35 // pred_region
        %s551 = smul.u32 2, %s22
      $region44: #{skinning_net_forward.24} parent=35 // pred_fallthru
        _
    $region36: #{skinning_net_forward.24} parent=5 // pred_fallthru
      _
    %p552 = scmp.le.s32.totalorder 2, %s12
    // Predicated region
    $region45: #{skinning_net_forward.24} parent=5 // pred_check
      %p553 = pneg %p552
    $region46: #{skinning_net_forward.24} parent=5 // pred_check_branch
      %555 = sbr.rel (%p553) target = $region48
    $region47: #{skinning_net_forward.24} parent=5 // pred_region
      %s556 = ssub.s32 %s12, 2
      // Predicated region
      $region49: #{skinning_net_forward.24} parent=47 // pred_check
        %p557 = pneg %p146
      $region50: #{skinning_net_forward.24} parent=47 // pred_check_branch
        %559 = sbr.rel (%p557) target = $region52
      $region51: #{skinning_net_forward.24} parent=47 // pred_region
        %s560 = smul.u32 2, %s24
        %p561 = scmp.lt.s32.totalorder %s23, 1
        %s562 = scalar_select %p561, %s23, 1
        %p563 = scmp.lt.s32.totalorder %s560, 1
        %s564 = scalar_select %p563, %s560, 1
        %s565 = smul.addr %s562, 2
        %s566 = sadd.s32 %s564, %s565
        %s567 = smul.addr %s566, 4
        %s568 = scalar_lea.vmem %s4, %s567
      $region52: #{skinning_net_forward.24} parent=47 // pred_fallthru
        _
      // Predicated region
      $region53: #{skinning_net_forward.24} parent=47 // pred_check
        %p569 = pneg %p174
      $region54: #{skinning_net_forward.24} parent=47 // pred_check_branch
        %571 = sbr.rel (%p569) target = $region56
      $region55: #{skinning_net_forward.24} parent=47 // pred_region
        %s572 = smul.u32 2, %s24
        %p573 = scmp.lt.s32.totalorder %s23, 1
        %s574 = scalar_select %p573, %s23, 1
        %p575 = scmp.lt.s32.totalorder %s572, 1
        %s576 = scalar_select %p575, %s572, 1
        %s577 = smul.addr %s574, 2
        %s578 = sadd.s32 %s576, %s577
        %s579 = smul.addr %s578, 8
        %s580 = scalar_lea.vmem %s5, %s579
      $region56: #{skinning_net_forward.24} parent=47 // pred_fallthru
        _
    $region48: #{skinning_net_forward.24} parent=5 // pred_fallthru
      _
  $region6: #{skinning_net_forward.24} parent=0 // loop_footer
    %s16 = sadd.s32 1, %s12
  $region7: #{skinning_net_forward.24} parent=0 // loop_footer_branch
    %11 = sbr.rel target = $region3
  $region8: #{skinning_net_forward.24} parent=0 // loop_exit
    _

// kernel: skinning_net_forward.25
$region0: #{skinning_net_forward.25}
  #allocation0 [shape = 'u32[]', space=smem, size = 0x4, offset = 0x4, fixed_abs, tag = 'smem constant byte address 0x4 - core index']
  #allocation1 [shape = 'u32[144,128]{1,0:T(1,128)}', space=vmem, size = 0x12000, scoped, tag = 'internal scratch']
  %s0 = inlined_call_operand.vmem [shape: bf16[2,16,448], index: 0, kind: input, shape index: {}]
  %s1 = inlined_call_operand.vmem [shape: bf16[448,512], index: 1, kind: input, shape index: {}]
  %s2 = inlined_call_operand.vmem [shape: f32[1,512], index: 2, kind: input, shape index: {}]
  %s3 = inlined_call_operand.vmem [shape: bf16[512,256], index: 3, kind: input, shape index: {}]
  %s4 = inlined_call_operand.vmem [shape: f32[1,256], index: 4, kind: input, shape index: {}]
  %s5 = inlined_call_operand.vmem [shape: bf16[256,128], index: 5, kind: input, shape index: {}]
  %s6 = inlined_call_operand.vmem [shape: f32[1,128], index: 6, kind: input, shape index: {}]
  %s7 = inlined_call_operand.vmem [shape: f32[2,16,128], index: 7, kind: output, shape index: {}]
  %s8 = sld [smem:[#allocation0]]
  $region61: #{skinning_net_forward.25} parent=0
    _
  %s10 = ssub.s32 1, %s8
  %s11 = scalar_select 0, %s10, %s8
  loop: start=0, step=1, limit=4
  $region2: #{skinning_net_forward.25} parent=0 // loop_pre_header
    _
  $region3: #{skinning_net_forward.25} parent=0 // loop_header
    %s13 = sphi 0, %s17
    %p14 = scmp.ge.s32.totalorder %s13, 4
    %s20 = sphi 0, %s32
    %s21 = sphi 0, %s28
    %s22 = sphi 0, %s20
    %s23 = sphi 0, %s21
    %s24 = sphi 0, %s22
    %s25 = sphi 0, %s23
    %s37 = sphi 0, %s39
    %s40 = sphi 0, %s37
    %s41 = sphi 0, %s40
    %s57 = sphi 0, %s41
    %s61 = sphi 0, %s61
    %s63 = sphi 0, %s61
    %s64 = sphi 0, %s63
    %s78 = sphi 0, %s64
    %s82 = sphi 0, %s82
    %s84 = sphi 0, %s82
    %s85 = sphi 0, %s84
    %s99 = sphi 0, %s85
    %s103 = sphi 0, %s103
    %s105 = sphi 0, %s103
    %s106 = sphi 0, %s105
    %s120 = sphi 0, %s106
    %s124 = sphi 0, %s124
    %s126 = sphi 0, %s124
    %s127 = sphi 0, %s126
    %s141 = sphi 0, %s127
    %s145 = sphi 0, %s145
    %s147 = sphi 0, %s145
    %s148 = sphi 0, %s147
    %s162 = sphi 0, %s148
    %s166 = sphi 0, %s166
    %s168 = sphi 0, %s166
    %s169 = sphi 0, %s168
    %s183 = sphi 0, %s169
    %s191 = sphi 0, %s193
    %s194 = sphi 0, %s191
    %s195 = sphi 0, %s194
    %s211 = sphi 0, %s195
  $region4: #{skinning_net_forward.25} parent=0 // loop_header_branch
    %16 = sbr.rel (%p14) target = $region8
  $region5: #{skinning_net_forward.25} parent=0 // loop_body
    %s18 = ssub.s32 %s13, 1
    %s19 = ssub.s32 %s13, 2
    %s26 = sadd.s32 1, %s21
    %p27 = scmp.ge.s32.totalorder %s26, 1
    %s28 = scalar_select %p27, 0, %s26
    %s29 = sadd.s32 1, %s20
    %s30 = scalar_select %p27, %s29, %s20
    %p31 = scmp.ge.s32.totalorder %s30, 2
    %s32 = scalar_select %p31, 0, %s30
    %s33 = ssub.s32 %s20, %s32
    %s34 = ssub.s32 %s21, %s28
    %s35 = sor.u32 %s33, %s34
    %p36 = scmp.eq.s32.totalorder %s35, 0
    %s38 = sadd.s32 %s37, 1
    %s39 = scalar_select %p36, %s37, %s38
    %p42 = pneg %p36
    %p43 = scmp.eq.s32.totalorder %s13, 1
    %p44 = por %p42, %p43
    %p45 = scmp.ne.s32.totalorder %s37, %s40
    %p46 = scmp.eq.s32.totalorder %s13, 0
    %p47 = por %p45, %p46
    %p48 = scmp.ne.s32.totalorder %s37, %s40
    %p49 = scmp.eq.s32.totalorder %s18, 1
    %p50 = por %p48, %p49
    %p51 = scmp.ne.s32.totalorder %s40, %s41
    %p52 = scmp.eq.s32.totalorder %s18, 0
    %p53 = por %p51, %p52
    %p54 = scmp.ne.s32.totalorder %s40, %s41
    %p55 = scmp.eq.s32.totalorder %s19, 1
    %p56 = por %p54, %p55
    %p58 = scmp.ne.s32.totalorder %s41, %s57
    %p59 = scmp.eq.s32.totalorder %s19, 0
    %p60 = por %p58, %p59
    %s62 = sadd.s32 %s61, 1
    %p65 = scmp.eq.s32.totalorder %s13, 1
    %p66 = scmp.ne.s32.totalorder %s61, %s63
    %p67 = scmp.eq.s32.totalorder %s13, 0
    %p68 = por %p66, %p67
    %p69 = scmp.ne.s32.totalorder %s61, %s63
    %p70 = scmp.eq.s32.totalorder %s18, 1
    %p71 = por %p69, %p70
    %p72 = scmp.ne.s32.totalorder %s63, %s64
    %p73 = scmp.eq.s32.totalorder %s18, 0
    %p74 = por %p72, %p73
    %p75 = scmp.ne.s32.totalorder %s63, %s64
    %p76 = scmp.eq.s32.totalorder %s19, 1
    %p77 = por %p75, %p76
    %p79 = scmp.ne.s32.totalorder %s64, %s78
    %p80 = scmp.eq.s32.totalorder %s19, 0
    %p81 = por %p79, %p80
    %s83 = sadd.s32 %s82, 1
    %p86 = scmp.eq.s32.totalorder %s13, 1
    %p87 = scmp.ne.s32.totalorder %s82, %s84
    %p88 = scmp.eq.s32.totalorder %s13, 0
    %p89 = por %p87, %p88
    %p90 = scmp.ne.s32.totalorder %s82, %s84
    %p91 = scmp.eq.s32.totalorder %s18, 1
    %p92 = por %p90, %p91
    %p93 = scmp.ne.s32.totalorder %s84, %s85
    %p94 = scmp.eq.s32.totalorder %s18, 0
    %p95 = por %p93, %p94
    %p96 = scmp.ne.s32.totalorder %s84, %s85
    %p97 = scmp.eq.s32.totalorder %s19, 1
    %p98 = por %p96, %p97
    %p100 = scmp.ne.s32.totalorder %s85, %s99
    %p101 = scmp.eq.s32.totalorder %s19, 0
    %p102 = por %p100, %p101
    %s104 = sadd.s32 %s103, 1
    %p107 = scmp.eq.s32.totalorder %s13, 1
    %p108 = scmp.ne.s32.totalorder %s103, %s105
    %p109 = scmp.eq.s32.totalorder %s13, 0
    %p110 = por %p108, %p109
    %p111 = scmp.ne.s32.totalorder %s103, %s105
    %p112 = scmp.eq.s32.totalorder %s18, 1
    %p113 = por %p111, %p112
    %p114 = scmp.ne.s32.totalorder %s105, %s106
    %p115 = scmp.eq.s32.totalorder %s18, 0
    %p116 = por %p114, %p115
    %p117 = scmp.ne.s32.totalorder %s105, %s106
    %p118 = scmp.eq.s32.totalorder %s19, 1
    %p119 = por %p117, %p118
    %p121 = scmp.ne.s32.totalorder %s106, %s120
    %p122 = scmp.eq.s32.totalorder %s19, 0
    %p123 = por %p121, %p122
    %s125 = sadd.s32 %s124, 1
    %p128 = scmp.eq.s32.totalorder %s13, 1
    %p129 = scmp.ne.s32.totalorder %s124, %s126
    %p130 = scmp.eq.s32.totalorder %s13, 0
    %p131 = por %p129, %p130
    %p132 = scmp.ne.s32.totalorder %s124, %s126
    %p133 = scmp.eq.s32.totalorder %s18, 1
    %p134 = por %p132, %p133
    %p135 = scmp.ne.s32.totalorder %s126, %s127
    %p136 = scmp.eq.s32.totalorder %s18, 0
    %p137 = por %p135, %p136
    %p138 = scmp.ne.s32.totalorder %s126, %s127
    %p139 = scmp.eq.s32.totalorder %s19, 1
    %p140 = por %p138, %p139
    %p142 = scmp.ne.s32.totalorder %s127, %s141
    %p143 = scmp.eq.s32.totalorder %s19, 0
    %p144 = por %p142, %p143
    %s146 = sadd.s32 %s145, 1
    %p149 = scmp.eq.s32.totalorder %s13, 1
    %p150 = scmp.ne.s32.totalorder %s145, %s147
    %p151 = scmp.eq.s32.totalorder %s13, 0
    %p152 = por %p150, %p151
    %p153 = scmp.ne.s32.totalorder %s145, %s147
    %p154 = scmp.eq.s32.totalorder %s18, 1
    %p155 = por %p153, %p154
    %p156 = scmp.ne.s32.totalorder %s147, %s148
    %p157 = scmp.eq.s32.totalorder %s18, 0
    %p158 = por %p156, %p157
    %p159 = scmp.ne.s32.totalorder %s147, %s148
    %p160 = scmp.eq.s32.totalorder %s19, 1
    %p161 = por %p159, %p160
    %p163 = scmp.ne.s32.totalorder %s148, %s162
    %p164 = scmp.eq.s32.totalorder %s19, 0
    %p165 = por %p163, %p164
    %s167 = sadd.s32 %s166, 1
    %p170 = scmp.eq.s32.totalorder %s13, 1
    %p171 = scmp.ne.s32.totalorder %s166, %s168
    %p172 = scmp.eq.s32.totalorder %s13, 0
    %p173 = por %p171, %p172
    %p174 = scmp.ne.s32.totalorder %s166, %s168
    %p175 = scmp.eq.s32.totalorder %s18, 1
    %p176 = por %p174, %p175
    %p177 = scmp.ne.s32.totalorder %s168, %s169
    %p178 = scmp.eq.s32.totalorder %s18, 0
    %p179 = por %p177, %p178
    %p180 = scmp.ne.s32.totalorder %s168, %s169
    %p181 = scmp.eq.s32.totalorder %s19, 1
    %p182 = por %p180, %p181
    %p184 = scmp.ne.s32.totalorder %s169, %s183
    %p185 = scmp.eq.s32.totalorder %s19, 0
    %p186 = por %p184, %p185
    %s187 = ssub.s32 %s20, %s32
    %s188 = ssub.s32 %s21, %s28
    %s189 = sor.u32 %s187, %s188
    %p190 = scmp.eq.s32.totalorder %s189, 0
    %s192 = sadd.s32 %s191, 1
    %s193 = scalar_select %p190, %s191, %s192
    %p196 = pneg %p190
    %p197 = scmp.eq.s32.totalorder %s13, 1
    %p198 = por %p196, %p197
    %p199 = scmp.ne.s32.totalorder %s191, %s194
    %p200 = scmp.eq.s32.totalorder %s13, 0
    %p201 = por %p199, %p200
    %p202 = scmp.ne.s32.totalorder %s191, %s194
    %p203 = scmp.eq.s32.totalorder %s18, 1
    %p204 = por %p202, %p203
    %p205 = scmp.ne.s32.totalorder %s194, %s195
    %p206 = scmp.eq.s32.totalorder %s18, 0
    %p207 = por %p205, %p206
    %p208 = scmp.ne.s32.totalorder %s194, %s195
    %p209 = scmp.eq.s32.totalorder %s19, 1
    %p210 = por %p208, %p209
    %p212 = scmp.ne.s32.totalorder %s195, %s211
    %p213 = scmp.eq.s32.totalorder %s19, 0
    %p214 = por %p212, %p213
    %p215 = scmp.le.s32.totalorder 1, %s13
    %p216 = scmp.lt.s32.totalorder %s13, 3
    %p217 = pnand %p215, %p216
    %p218 = pneg %p217
    // Predicated region
    $region9: #{skinning_net_forward.25} parent=5 // pred_check
      _
    $region10: #{skinning_net_forward.25} parent=5 // pred_check_branch
      %220 = sbr.rel (%p217) target = $region12
    $region11: #{skinning_net_forward.25} parent=5 // pred_region
      %s221 = ssub.s32 %s13, 1
      // Predicated region
      $region13: #{skinning_net_forward.25} parent=11 // pred_check
        %p222 = pneg %p74
      $region14: #{skinning_net_forward.25} parent=11 // pred_check_branch
        %224 = sbr.rel (%p222) target = $region16
      $region15: #{skinning_net_forward.25} parent=11 // pred_region
        _
      $region16: #{skinning_net_forward.25} parent=11 // pred_fallthru
        _
      // Predicated region
      $region17: #{skinning_net_forward.25} parent=11 // pred_check
        %p225 = pneg %p95
      $region18: #{skinning_net_forward.25} parent=11 // pred_check_branch
        %227 = sbr.rel (%p225) target = $region20
      $region19: #{skinning_net_forward.25} parent=11 // pred_region
        _
      $region20: #{skinning_net_forward.25} parent=11 // pred_fallthru
        _
      // Predicated region
      $region21: #{skinning_net_forward.25} parent=11 // pred_check
        %p228 = pneg %p116
      $region22: #{skinning_net_forward.25} parent=11 // pred_check_branch
        %230 = sbr.rel (%p228) target = $region24
      $region23: #{skinning_net_forward.25} parent=11 // pred_region
        _
      $region24: #{skinning_net_forward.25} parent=11 // pred_fallthru
        _
      // Predicated region
      $region25: #{skinning_net_forward.25} parent=11 // pred_check
        %p231 = pneg %p137
      $region26: #{skinning_net_forward.25} parent=11 // pred_check_branch
        %233 = sbr.rel (%p231) target = $region28
      $region27: #{skinning_net_forward.25} parent=11 // pred_region
        _
      $region28: #{skinning_net_forward.25} parent=11 // pred_fallthru
        _
      // Predicated region
      $region29: #{skinning_net_forward.25} parent=11 // pred_check
        %p234 = pneg %p158
      $region30: #{skinning_net_forward.25} parent=11 // pred_check_branch
        %236 = sbr.rel (%p234) target = $region32
      $region31: #{skinning_net_forward.25} parent=11 // pred_region
        _
      $region32: #{skinning_net_forward.25} parent=11 // pred_fallthru
        _
      // Predicated region
      $region33: #{skinning_net_forward.25} parent=11 // pred_check
        %p237 = pneg %p179
      $region34: #{skinning_net_forward.25} parent=11 // pred_check_branch
        %239 = sbr.rel (%p237) target = $region36
      $region35: #{skinning_net_forward.25} parent=11 // pred_region
        _
      $region36: #{skinning_net_forward.25} parent=11 // pred_fallthru
        _
    $region12: #{skinning_net_forward.25} parent=5 // pred_fallthru
      _
    %p240 = scmp.lt.s32.totalorder %s13, 2
    // Predicated region
    $region37: #{skinning_net_forward.25} parent=5 // pred_check
      %p241 = pneg %p240
    $region38: #{skinning_net_forward.25} parent=5 // pred_check_branch
      %243 = sbr.rel (%p241) target = $region40
    $region39: #{skinning_net_forward.25} parent=5 // pred_region
      // Predicated region
      $region41: #{skinning_net_forward.25} parent=39 // pred_check
        %p244 = pneg %p47
      $region42: #{skinning_net_forward.25} parent=39 // pred_check_branch
        %246 = sbr.rel (%p244) target = $region44
      $region43: #{skinning_net_forward.25} parent=39 // pred_region
        %s247 = smul.u32 2, %s21
        %p248 = scmp.lt.s32.totalorder %s20, 1
        %s249 = scalar_select %p248, %s20, 1
        %p250 = scmp.lt.s32.totalorder %s247, 1
        %s251 = scalar_select %p250, %s247, 1
        %s252 = smul.addr %s251, 4
        %s253 = smul.addr %s249, 8
        %s254 = sadd.s32 %s252, %s253
        %s255 = smul.addr %s254, 4
        %s256 = scalar_lea.vmem %s0, %s255
        %s257 = smul.u32 2, %s21
      $region44: #{skinning_net_forward.25} parent=39 // pred_fallthru
        _
    $region40: #{skinning_net_forward.25} parent=5 // pred_fallthru
      _
    %p258 = scmp.le.s32.totalorder 1, %s13
    %p259 = scmp.lt.s32.totalorder %s13, 3
    %p260 = pnand %p258, %p259
    %p261 = pneg %p260
    // Predicated region
    $region45: #{skinning_net_forward.25} parent=5 // pred_check
      _
    $region46: #{skinning_net_forward.25} parent=5 // pred_check_branch
      %263 = sbr.rel (%p260) target = $region48
    $region47: #{skinning_net_forward.25} parent=5 // pred_region
      %s264 = ssub.s32 %s13, 1
      %s265 = smul.u32 2, %s23
      %p266 = scmp.lt.s32.totalorder %s22, 1
      %s267 = scalar_select %p266, %s22, 1
      %p268 = scmp.lt.s32.totalorder %s265, 1
      %s269 = scalar_select %p268, %s265, 1
      %s270 = smul.addr %s269, 4
      %s271 = smul.addr %s267, 8
      %s272 = sadd.s32 %s270, %s271
      %s273 = smul.addr %s272, 4
      %s274 = scalar_lea.vmem %s0, %s273
      %p275 = pneg %p53
      %p276 = pneg %p50
      %p277 = pneg %p74
      %p278 = pneg %p71
      %p279 = pneg %p95
      %p280 = pneg %p92
      %p281 = pneg %p116
      %p282 = pneg %p113
      %p283 = pneg %p137
      %p284 = pneg %p134
      %p285 = pneg %p158
      %p286 = pneg %p155
      %p287 = pneg %p179
      %p288 = pneg %p176
      %p289 = pneg %p207
      %p290 = pneg %p204
      %s291 = smul.u32 2, %s23
      %p292 = scmp.lt.s32.totalorder %s22, 1
      %s293 = scalar_select %p292, %s22, 1
      %p294 = scmp.lt.s32.totalorder %s291, 1
      %s295 = scalar_select %p294, %s291, 1
      %s296 = smul.addr %s293, 2
      %s297 = sadd.s32 %s295, %s296
      %s298 = smul.addr %s297, 8
      %s299 = scalar_lea.vmem %s7, %s298
      %s300 = smul.u32 2, %s23
      %p301 = scmp.lt.s32.totalorder %s22, 1
      %s302 = scalar_select %p301, %s22, 1
      %p303 = scmp.lt.s32.totalorder %s300, 1
      %s304 = scalar_select %p303, %s300, 1
      %s305 = smul.addr %s304, 4
      %s306 = smul.addr %s302, 8
      %s307 = sadd.s32 %s305, %s306
      %s308 = smul.addr %s307, 4
      %s309 = scalar_lea.vmem %s0, %s308
      %s310 = smul.u32 2, %s23
      %s311 = smul.u32 2, %s23
      %p312 = scmp.lt.s32.totalorder %s22, 1
      %s313 = scalar_select %p312, %s22, 1
      %p314 = scmp.lt.s32.totalorder %s311, 1
      %s315 = scalar_select %p314, %s311, 1
      %s316 = smul.addr %s313, 2
      %s317 = sadd.s32 %s315, %s316
      %s318 = smul.addr %s317, 8
      %s319 = scalar_lea.vmem %s7, %s318
      %s320 = smul.u32 2, %s23
      %v322 = vld [vmem:[%s309] sm:$0xff]
      %v323 = vld [vmem:[%s309 + $0x8] sm:$0xff]
      %v324 = vld [vmem:[%s309 + $0x10] sm:$0xff]
      %v325 = vld [vmem:[%s309 + $0x18] sm:$0xff]
      %v326 = vld [vmem:[%s1] sm:$0xff]
      %v327 = vld [vmem:[%s1 + $0x8] sm:$0xff]
      %v328 = vld [vmem:[%s1 + $0x10] sm:$0xff]
      %v329 = vld [vmem:[%s1 + $0x18] sm:$0xff]
      %v330 = vld [vmem:[%s1 + $0x20] sm:$0xff]
      %v331 = vld [vmem:[%s1 + $0x28] sm:$0xff]
      %v332 = vld [vmem:[%s1 + $0x30] sm:$0xff]
      %v333 = vld [vmem:[%s1 + $0x38] sm:$0xff]
      %v334 = vld [vmem:[%s1 + $0x40] sm:$0xff]
      %v335 = vld [vmem:[%s1 + $0x48] sm:$0xff]
      %v336 = vld [vmem:[%s1 + $0x50] sm:$0xff]
      %v337 = vld [vmem:[%s1 + $0x58] sm:$0xff]
      %v338 = vld [vmem:[%s1 + $0x60] sm:$0xff]
      %v339 = vld [vmem:[%s1 + $0x68] sm:$0xff]
      %v340 = vld [vmem:[%s1 + $0x70] sm:$0xff]
      %v341 = vld [vmem:[%s1 + $0x78] sm:$0xff]
      %v342 = vld [vmem:[%s1 + $0x80] sm:$0xff]
      %v343 = vld [vmem:[%s1 + $0x88] sm:$0xff]
      %v344 = vld [vmem:[%s1 + $0x90] sm:$0xff]
      %v345 = vld [vmem:[%s1 + $0x98] sm:$0xff]
      %v346 = vld [vmem:[%s1 + $0xa0] sm:$0xff]
      %v347 = vld [vmem:[%s1 + $0xa8] sm:$0xff]
      %v348 = vld [vmem:[%s1 + $0xb0] sm:$0xff]
      %v349 = vld [vmem:[%s1 + $0xb8] sm:$0xff]
      %v350 = vld [vmem:[%s1 + $0xc0] sm:$0xff]
      %v351 = vld [vmem:[%s1 + $0xc8] sm:$0xff]
      %v352 = vld [vmem:[%s1 + $0xd0] sm:$0xff]
      %v353 = vld [vmem:[%s1 + $0xd8] sm:$0xff]
      %v354 = vld [vmem:[%s1 + $0xe0] sm:$0xff]
      %v355 = vld [vmem:[%s1 + $0xe8] sm:$0xff]
      %v356 = vld [vmem:[%s1 + $0xf0] sm:$0xff]
      %v357 = vld [vmem:[%s1 + $0xf8] sm:$0xff]
      %v358 = vld [vmem:[%s1 + $0x100] sm:$0xff]
      %v359 = vld [vmem:[%s1 + $0x108] sm:$0xff]
      %v360 = vld [vmem:[%s1 + $0x110] sm:$0xff]
      %v361 = vld [vmem:[%s1 + $0x118] sm:$0xff]
      %v362 = vld [vmem:[%s1 + $0x120] sm:$0xff]
      %v363 = vld [vmem:[%s1 + $0x128] sm:$0xff]
      %v364 = vld [vmem:[%s1 + $0x130] sm:$0xff]
      %v365 = vld [vmem:[%s1 + $0x138] sm:$0xff]
      %v366 = vld [vmem:[%s1 + $0x140] sm:$0xff]
      %v367 = vld [vmem:[%s1 + $0x148] sm:$0xff]
      %v368 = vld [vmem:[%s1 + $0x150] sm:$0xff]
      %v369 = vld [vmem:[%s1 + $0x158] sm:$0xff]
      %v370 = vld [vmem:[%s1 + $0x160] sm:$0xff]
      %v371 = vld [vmem:[%s1 + $0x168] sm:$0xff]
      %v372 = vld [vmem:[%s1 + $0x170] sm:$0xff]
      %v373 = vld [vmem:[%s1 + $0x178] sm:$0xff]
      %v374 = vld [vmem:[%s1 + $0x180] sm:$0xff]
      %v375 = vld [vmem:[%s1 + $0x188] sm:$0xff]
      %v376 = vld [vmem:[%s1 + $0x190] sm:$0xff]
      %v377 = vld [vmem:[%s1 + $0x198] sm:$0xff]
      %v378 = vld [vmem:[%s1 + $0x1a0] sm:$0xff]
      %v379 = vld [vmem:[%s1 + $0x1a8] sm:$0xff]
      %v380 = vld [vmem:[%s1 + $0x1b0] sm:$0xff]
      %v381 = vld [vmem:[%s1 + $0x1b8] sm:$0xff]
      %v382 = vld [vmem:[%s1 + $0x1c0] sm:$0xff]
      %v383 = vld [vmem:[%s1 + $0x1c8] sm:$0xff]
      %v384 = vld [vmem:[%s1 + $0x1d0] sm:$0xff]
      %v385 = vld [vmem:[%s1 + $0x1d8] sm:$0xff]
      %v386 = vld [vmem:[%s1 + $0x1e0] sm:$0xff]
      %v387 = vld [vmem:[%s1 + $0x1e8] sm:$0xff]
      %v388 = vld [vmem:[%s1 + $0x1f0] sm:$0xff]
      %v389 = vld [vmem:[%s1 + $0x1f8] sm:$0xff]
      %v390 = vld [vmem:[%s1 + $0x200] sm:$0xff]
      %v391 = vld [vmem:[%s1 + $0x208] sm:$0xff]
      %v392 = vld [vmem:[%s1 + $0x210] sm:$0xff]
      %v393 = vld [vmem:[%s1 + $0x218] sm:$0xff]
      %v394 = vld [vmem:[%s1 + $0x220] sm:$0xff]
      %v395 = vld [vmem:[%s1 + $0x228] sm:$0xff]
      %v396 = vld [vmem:[%s1 + $0x230] sm:$0xff]
      %v397 = vld [vmem:[%s1 + $0x238] sm:$0xff]
      %v398 = vld [vmem:[%s1 + $0x240] sm:$0xff]
      %v399 = vld [vmem:[%s1 + $0x248] sm:$0xff]
      %v400 = vld [vmem:[%s1 + $0x250] sm:$0xff]
      %v401 = vld [vmem:[%s1 + $0x258] sm:$0xff]
      %v402 = vld [vmem:[%s1 + $0x260] sm:$0xff]
      %v403 = vld [vmem:[%s1 + $0x268] sm:$0xff]
      %v404 = vld [vmem:[%s1 + $0x270] sm:$0xff]
      %v405 = vld [vmem:[%s1 + $0x278] sm:$0xff]
      %v406 = vld [vmem:[%s1 + $0x280] sm:$0xff]
      %v407 = vld [vmem:[%s1 + $0x288] sm:$0xff]
      %v408 = vld [vmem:[%s1 + $0x290] sm:$0xff]
      %v409 = vld [vmem:[%s1 + $0x298] sm:$0xff]
      %v410 = vld [vmem:[%s1 + $0x2a0] sm:$0xff]
      %v411 = vld [vmem:[%s1 + $0x2a8] sm:$0xff]
      %v412 = vld [vmem:[%s1 + $0x2b0] sm:$0xff]
      %v413 = vld [vmem:[%s1 + $0x2b8] sm:$0xff]
      %v414 = vld [vmem:[%s1 + $0x2c0] sm:$0xff]
      %v415 = vld [vmem:[%s1 + $0x2c8] sm:$0xff]
      %v416 = vld [vmem:[%s1 + $0x2d0] sm:$0xff]
      %v417 = vld [vmem:[%s1 + $0x2d8] sm:$0xff]
      %v418 = vld [vmem:[%s1 + $0x2e0] sm:$0xff]
      %v419 = vld [vmem:[%s1 + $0x2e8] sm:$0xff]
      %v420 = vld [vmem:[%s1 + $0x2f0] sm:$0xff]
      %v421 = vld [vmem:[%s1 + $0x2f8] sm:$0xff]
      %v422 = vld [vmem:[%s1 + $0x300] sm:$0xff]
      %v423 = vld [vmem:[%s1 + $0x308] sm:$0xff]
      %v424 = vld [vmem:[%s1 + $0x310] sm:$0xff]
      %v425 = vld [vmem:[%s1 + $0x318] sm:$0xff]
      %v426 = vld [vmem:[%s1 + $0x320] sm:$0xff]
      %v427 = vld [vmem:[%s1 + $0x328] sm:$0xff]
      %v428 = vld [vmem:[%s1 + $0x330] sm:$0xff]
      %v429 = vld [vmem:[%s1 + $0x338] sm:$0xff]
      %v430 = vld [vmem:[%s1 + $0x340] sm:$0xff]
      %v431 = vld [vmem:[%s1 + $0x348] sm:$0xff]
      %v432 = vld [vmem:[%s1 + $0x350] sm:$0xff]
      %v433 = vld [vmem:[%s1 + $0x358] sm:$0xff]
      %v434 = vld [vmem:[%s1 + $0x360] sm:$0xff]
      %v435 = vld [vmem:[%s1 + $0x368] sm:$0xff]
      %v436 = vld [vmem:[%s1 + $0x370] sm:$0xff]
      %v437 = vld [vmem:[%s1 + $0x378] sm:$0xff]
      %v438 = vld [vmem:[%s2] sm:$0xf]
      %v440 = vlaneseq
      %v441 = vshrl.u32 %v440, 7
      %v442 = vsub.s32 0, %v441
      %v443 = vrot.slane %v438, %v442
      %v444 = vlaneseq
      %v445 = vshrl.u32 %v444, 7
      %v446 = vsub.s32 1, %v445
      %v447 = vrot.slane %v438, %v446
      %v448 = vlaneseq
      %v449 = vshrl.u32 %v448, 7
      %v450 = vsub.s32 2, %v449
      %v451 = vrot.slane %v438, %v450
      %v452 = vlaneseq
      %v453 = vshrl.u32 %v452, 7
      %v454 = vsub.s32 3, %v453
      %v455 = vrot.slane %v438, %v454
      %v464 = vunpack.c.l.b16 %v322
      %v465 = vunpack.c.h.b16 %v322
      %v466 = vunpack.c.l.b16 %v323
      %v467 = vunpack.c.h.b16 %v323
      %v468 = vunpack.c.l.b16 %v324
      %v469 = vunpack.c.h.b16 %v324
      %v470 = vunpack.c.l.b16 %v325
      %v471 = vunpack.c.h.b16 %v325
      %v472 = vpack.c.b16 %v468, %v464
      %v473 = vpack.c.b16 %v469, %v465
      %v474 = vpack.c.b16 %v470, %v466
      %v475 = vpack.c.b16 %v471, %v467
      %v591 = vunpack.c.l.b16 %v326
      %v592 = vunpack.c.h.b16 %v326
      %v593 = vunpack.c.l.b16 %v327
      %v594 = vunpack.c.h.b16 %v327
      %v595 = vunpack.c.l.b16 %v328
      %v596 = vunpack.c.h.b16 %v328
      %v597 = vunpack.c.l.b16 %v329
      %v598 = vunpack.c.h.b16 %v329
      %v599 = vunpack.c.l.b16 %v330
      %v600 = vunpack.c.h.b16 %v330
      %v601 = vunpack.c.l.b16 %v331
      %v602 = vunpack.c.h.b16 %v331
      %v603 = vunpack.c.l.b16 %v332
      %v604 = vunpack.c.h.b16 %v332
      %v605 = vunpack.c.l.b16 %v333
      %v606 = vunpack.c.h.b16 %v333
      %v607 = vunpack.c.l.b16 %v334
      %v608 = vunpack.c.h.b16 %v334
      %v609 = vunpack.c.l.b16 %v335
      %v610 = vunpack.c.h.b16 %v335
      %v611 = vunpack.c.l.b16 %v336
      %v612 = vunpack.c.h.b16 %v336
      %v613 = vunpack.c.l.b16 %v337
      %v614 = vunpack.c.h.b16 %v337
      %v615 = vunpack.c.l.b16 %v338
      %v616 = vunpack.c.h.b16 %v338
      %v617 = vunpack.c.l.b16 %v339
      %v618 = vunpack.c.h.b16 %v339
      %v619 = vunpack.c.l.b16 %v340
      %v620 = vunpack.c.h.b16 %v340
      %v621 = vunpack.c.l.b16 %v341
      %v622 = vunpack.c.h.b16 %v341
      %v623 = vunpack.c.l.b16 %v342
      %v624 = vunpack.c.h.b16 %v342
      %v625 = vunpack.c.l.b16 %v343
      %v626 = vunpack.c.h.b16 %v343
      %v627 = vunpack.c.l.b16 %v344
      %v628 = vunpack.c.h.b16 %v344
      %v629 = vunpack.c.l.b16 %v345
      %v630 = vunpack.c.h.b16 %v345
      %v631 = vunpack.c.l.b16 %v346
      %v632 = vunpack.c.h.b16 %v346
      %v633 = vunpack.c.l.b16 %v347
      %v634 = vunpack.c.h.b16 %v347
      %v635 = vunpack.c.l.b16 %v348
      %v636 = vunpack.c.h.b16 %v348
      %v637 = vunpack.c.l.b16 %v349
      %v638 = vunpack.c.h.b16 %v349
      %v639 = vunpack.c.l.b16 %v350
      %v640 = vunpack.c.h.b16 %v350
      %v641 = vunpack.c.l.b16 %v351
      %v642 = vunpack.c.h.b16 %v351
      %v643 = vunpack.c.l.b16 %v352
      %v644 = vunpack.c.h.b16 %v352
      %v645 = vunpack.c.l.b16 %v353
      %v646 = vunpack.c.h.b16 %v353
      %v647 = vunpack.c.l.b16 %v354
      %v648 = vunpack.c.h.b16 %v354
      %v649 = vunpack.c.l.b16 %v355
      %v650 = vunpack.c.h.b16 %v355
      %v651 = vunpack.c.l.b16 %v356
      %v652 = vunpack.c.h.b16 %v356
      %v653 = vunpack.c.l.b16 %v357
      %v654 = vunpack.c.h.b16 %v357
      %v655 = vunpack.c.l.b16 %v358
      %v656 = vunpack.c.h.b16 %v358
      %v657 = vunpack.c.l.b16 %v359
      %v658 = vunpack.c.h.b16 %v359
      %v659 = vunpack.c.l.b16 %v360
      %v660 = vunpack.c.h.b16 %v360
      %v661 = vunpack.c.l.b16 %v361
      %v662 = vunpack.c.h.b16 %v361
      %v663 = vunpack.c.l.b16 %v362
      %v664 = vunpack.c.h.b16 %v362
      %v665 = vunpack.c.l.b16 %v363
      %v666 = vunpack.c.h.b16 %v363
      %v667 = vunpack.c.l.b16 %v364
      %v668 = vunpack.c.h.b16 %v364
      %v669 = vunpack.c.l.b16 %v365
      %v670 = vunpack.c.h.b16 %v365
      %v671 = vunpack.c.l.b16 %v366
      %v672 = vunpack.c.h.b16 %v366
      %v673 = vunpack.c.l.b16 %v367
      %v674 = vunpack.c.h.b16 %v367
      %v675 = vunpack.c.l.b16 %v368
      %v676 = vunpack.c.h.b16 %v368
      %v677 = vunpack.c.l.b16 %v369
      %v678 = vunpack.c.h.b16 %v369
      %v679 = vunpack.c.l.b16 %v370
      %v680 = vunpack.c.h.b16 %v370
      %v681 = vunpack.c.l.b16 %v371
      %v682 = vunpack.c.h.b16 %v371
      %v683 = vunpack.c.l.b16 %v372
      %v684 = vunpack.c.h.b16 %v372
      %v685 = vunpack.c.l.b16 %v373
      %v686 = vunpack.c.h.b16 %v373
      %v687 = vunpack.c.l.b16 %v374
      %v688 = vunpack.c.h.b16 %v374
      %v689 = vunpack.c.l.b16 %v375
      %v690 = vunpack.c.h.b16 %v375
      %v691 = vunpack.c.l.b16 %v376
      %v692 = vunpack.c.h.b16 %v376
      %v693 = vunpack.c.l.b16 %v377
      %v694 = vunpack.c.h.b16 %v377
      %v695 = vunpack.c.l.b16 %v378
      %v696 = vunpack.c.h.b16 %v378
      %v697 = vunpack.c.l.b16 %v379
      %v698 = vunpack.c.h.b16 %v379
      %v699 = vunpack.c.l.b16 %v380
      %v700 = vunpack.c.h.b16 %v380
      %v701 = vunpack.c.l.b16 %v381
      %v702 = vunpack.c.h.b16 %v381
      %v703 = vunpack.c.l.b16 %v382
      %v704 = vunpack.c.h.b16 %v382
      %v705 = vunpack.c.l.b16 %v383
      %v706 = vunpack.c.h.b16 %v383
      %v707 = vunpack.c.l.b16 %v384
      %v708 = vunpack.c.h.b16 %v384
      %v709 = vunpack.c.l.b16 %v385
      %v710 = vunpack.c.h.b16 %v385
      %v711 = vunpack.c.l.b16 %v386
      %v712 = vunpack.c.h.b16 %v386
      %v713 = vunpack.c.l.b16 %v387
      %v714 = vunpack.c.h.b16 %v387
      %v715 = vunpack.c.l.b16 %v388
      %v716 = vunpack.c.h.b16 %v388
      %v717 = vunpack.c.l.b16 %v389
      %v718 = vunpack.c.h.b16 %v389
      %v719 = vunpack.c.l.b16 %v390
      %v720 = vunpack.c.h.b16 %v390
      %v721 = vunpack.c.l.b16 %v391
      %v722 = vunpack.c.h.b16 %v391
      %v723 = vunpack.c.l.b16 %v392
      %v724 = vunpack.c.h.b16 %v392
      %v725 = vunpack.c.l.b16 %v393
      %v726 = vunpack.c.h.b16 %v393
      %v727 = vunpack.c.l.b16 %v394
      %v728 = vunpack.c.h.b16 %v394
      %v729 = vunpack.c.l.b16 %v395
      %v730 = vunpack.c.h.b16 %v395
      %v731 = vunpack.c.l.b16 %v396
      %v732 = vunpack.c.h.b16 %v396
      %v733 = vunpack.c.l.b16 %v397
      %v734 = vunpack.c.h.b16 %v397
      %v735 = vunpack.c.l.b16 %v398
      %v736 = vunpack.c.h.b16 %v398
      %v737 = vunpack.c.l.b16 %v399
      %v738 = vunpack.c.h.b16 %v399
      %v739 = vunpack.c.l.b16 %v400
      %v740 = vunpack.c.h.b16 %v400
      %v741 = vunpack.c.l.b16 %v401
      %v742 = vunpack.c.h.b16 %v401
      %v743 = vunpack.c.l.b16 %v402
      %v744 = vunpack.c.h.b16 %v402
      %v745 = vunpack.c.l.b16 %v403
      %v746 = vunpack.c.h.b16 %v403
      %v747 = vunpack.c.l.b16 %v404
      %v748 = vunpack.c.h.b16 %v404
      %v749 = vunpack.c.l.b16 %v405
      %v750 = vunpack.c.h.b16 %v405
      %v751 = vunpack.c.l.b16 %v406
      %v752 = vunpack.c.h.b16 %v406
      %v753 = vunpack.c.l.b16 %v407
      %v754 = vunpack.c.h.b16 %v407
      %v755 = vunpack.c.l.b16 %v408
      %v756 = vunpack.c.h.b16 %v408
      %v757 = vunpack.c.l.b16 %v409
      %v758 = vunpack.c.h.b16 %v409
      %v759 = vunpack.c.l.b16 %v410
      %v760 = vunpack.c.h.b16 %v410
      %v761 = vunpack.c.l.b16 %v411
      %v762 = vunpack.c.h.b16 %v411
      %v763 = vunpack.c.l.b16 %v412
      %v764 = vunpack.c.h.b16 %v412
      %v765 = vunpack.c.l.b16 %v413
      %v766 = vunpack.c.h.b16 %v413
      %v767 = vunpack.c.l.b16 %v414
      %v768 = vunpack.c.h.b16 %v414
      %v769 = vunpack.c.l.b16 %v415
      %v770 = vunpack.c.h.b16 %v415
      %v771 = vunpack.c.l.b16 %v416
      %v772 = vunpack.c.h.b16 %v416
      %v773 = vunpack.c.l.b16 %v417
      %v774 = vunpack.c.h.b16 %v417
      %v775 = vunpack.c.l.b16 %v418
      %v776 = vunpack.c.h.b16 %v418
      %v777 = vunpack.c.l.b16 %v419
      %v778 = vunpack.c.h.b16 %v419
      %v779 = vunpack.c.l.b16 %v420
      %v780 = vunpack.c.h.b16 %v420
      %v781 = vunpack.c.l.b16 %v421
      %v782 = vunpack.c.h.b16 %v421
      %v783 = vunpack.c.l.b16 %v422
      %v784 = vunpack.c.h.b16 %v422
      %v785 = vunpack.c.l.b16 %v423
      %v786 = vunpack.c.h.b16 %v423
      %v787 = vunpack.c.l.b16 %v424
      %v788 = vunpack.c.h.b16 %v424
      %v789 = vunpack.c.l.b16 %v425
      %v790 = vunpack.c.h.b16 %v425
      %v791 = vunpack.c.l.b16 %v426
      %v792 = vunpack.c.h.b16 %v426
      %v793 = vunpack.c.l.b16 %v427
      %v794 = vunpack.c.h.b16 %v427
      %v795 = vunpack.c.l.b16 %v428
      %v796 = vunpack.c.h.b16 %v428
      %v797 = vunpack.c.l.b16 %v429
      %v798 = vunpack.c.h.b16 %v429
      %v799 = vunpack.c.l.b16 %v430
      %v800 = vunpack.c.h.b16 %v430
      %v801 = vunpack.c.l.b16 %v431
      %v802 = vunpack.c.h.b16 %v431
      %v803 = vunpack.c.l.b16 %v432
      %v804 = vunpack.c.h.b16 %v432
      %v805 = vunpack.c.l.b16 %v433
      %v806 = vunpack.c.h.b16 %v433
      %v807 = vunpack.c.l.b16 %v434
      %v808 = vunpack.c.h.b16 %v434
      %v809 = vunpack.c.l.b16 %v435
      %v810 = vunpack.c.h.b16 %v435
      %v811 = vunpack.c.l.b16 %v436
      %v812 = vunpack.c.h.b16 %v436
      %v813 = vunpack.c.l.b16 %v437
      %v814 = vunpack.c.h.b16 %v437
      %v815 = vpack.c.b16 %v595, %v591
      %v816 = vpack.c.b16 %v596, %v592
      %v817 = vpack.c.b16 %v597, %v593
      %v818 = vpack.c.b16 %v598, %v594
      %v819 = vpack.c.b16 %v603, %v599
      %v820 = vpack.c.b16 %v604, %v600
      %v821 = vpack.c.b16 %v605, %v601
      %v822 = vpack.c.b16 %v606, %v602
      %v823 = vpack.c.b16 %v611, %v607
      %v824 = vpack.c.b16 %v612, %v608
      %v825 = vpack.c.b16 %v613, %v609
      %v826 = vpack.c.b16 %v614, %v610
      %v827 = vpack.c.b16 %v619, %v615
      %v828 = vpack.c.b16 %v620, %v616
      %v829 = vpack.c.b16 %v621, %v617
      %v830 = vpack.c.b16 %v622, %v618
      %v831 = vpack.c.b16 %v627, %v623
      %v832 = vpack.c.b16 %v628, %v624
      %v833 = vpack.c.b16 %v629, %v625
      %v834 = vpack.c.b16 %v630, %v626
      %v835 = vpack.c.b16 %v635, %v631
      %v836 = vpack.c.b16 %v636, %v632
      %v837 = vpack.c.b16 %v637, %v633
      %v838 = vpack.c.b16 %v638, %v634
      %v839 = vpack.c.b16 %v643, %v639
      %v840 = vpack.c.b16 %v644, %v640
      %v841 = vpack.c.b16 %v645, %v641
      %v842 = vpack.c.b16 %v646, %v642
      %v843 = vpack.c.b16 %v651, %v647
      %v844 = vpack.c.b16 %v652, %v648
      %v845 = vpack.c.b16 %v653, %v649
      %v846 = vpack.c.b16 %v654, %v650
      %v847 = vpack.c.b16 %v659, %v655
      %v848 = vpack.c.b16 %v660, %v656
      %v849 = vpack.c.b16 %v661, %v657
      %v850 = vpack.c.b16 %v662, %v658
      %v851 = vpack.c.b16 %v667, %v663
      %v852 = vpack.c.b16 %v668, %v664
      %v853 = vpack.c.b16 %v669, %v665
      %v854 = vpack.c.b16 %v670, %v666
      %v855 = vpack.c.b16 %v675, %v671
      %v856 = vpack.c.b16 %v676, %v672
      %v857 = vpack.c.b16 %v677, %v673
      %v858 = vpack.c.b16 %v678, %v674
      %v859 = vpack.c.b16 %v683, %v679
      %v860 = vpack.c.b16 %v684, %v680
      %v861 = vpack.c.b16 %v685, %v681
      %v862 = vpack.c.b16 %v686, %v682
      %v863 = vpack.c.b16 %v691, %v687
      %v864 = vpack.c.b16 %v692, %v688
      %v865 = vpack.c.b16 %v693, %v689
      %v866 = vpack.c.b16 %v694, %v690
      %v867 = vpack.c.b16 %v699, %v695
      %v868 = vpack.c.b16 %v700, %v696
      %v869 = vpack.c.b16 %v701, %v697
      %v870 = vpack.c.b16 %v702, %v698
      %v871 = vpack.c.b16 %v707, %v703
      %v872 = vpack.c.b16 %v708, %v704
      %v873 = vpack.c.b16 %v709, %v705
      %v874 = vpack.c.b16 %v710, %v706
      %v875 = vpack.c.b16 %v715, %v711
      %v876 = vpack.c.b16 %v716, %v712
      %v877 = vpack.c.b16 %v717, %v713
      %v878 = vpack.c.b16 %v718, %v714
      %v879 = vpack.c.b16 %v723, %v719
      %v880 = vpack.c.b16 %v724, %v720
      %v881 = vpack.c.b16 %v725, %v721
      %v882 = vpack.c.b16 %v726, %v722
      %v883 = vpack.c.b16 %v731, %v727
      %v884 = vpack.c.b16 %v732, %v728
      %v885 = vpack.c.b16 %v733, %v729
      %v886 = vpack.c.b16 %v734, %v730
      %v887 = vpack.c.b16 %v739, %v735
      %v888 = vpack.c.b16 %v740, %v736
      %v889 = vpack.c.b16 %v741, %v737
      %v890 = vpack.c.b16 %v742, %v738
      %v891 = vpack.c.b16 %v747, %v743
      %v892 = vpack.c.b16 %v748, %v744
      %v893 = vpack.c.b16 %v749, %v745
      %v894 = vpack.c.b16 %v750, %v746
      %v895 = vpack.c.b16 %v755, %v751
      %v896 = vpack.c.b16 %v756, %v752
      %v897 = vpack.c.b16 %v757, %v753
      %v898 = vpack.c.b16 %v758, %v754
      %v899 = vpack.c.b16 %v763, %v759
      %v900 = vpack.c.b16 %v764, %v760
      %v901 = vpack.c.b16 %v765, %v761
      %v902 = vpack.c.b16 %v766, %v762
      %v903 = vpack.c.b16 %v771, %v767
      %v904 = vpack.c.b16 %v772, %v768
      %v905 = vpack.c.b16 %v773, %v769
      %v906 = vpack.c.b16 %v774, %v770
      %v907 = vpack.c.b16 %v779, %v775
      %v908 = vpack.c.b16 %v780, %v776
      %v909 = vpack.c.b16 %v781, %v777
      %v910 = vpack.c.b16 %v782, %v778
      %v911 = vpack.c.b16 %v787, %v783
      %v912 = vpack.c.b16 %v788, %v784
      %v913 = vpack.c.b16 %v789, %v785
      %v914 = vpack.c.b16 %v790, %v786
      %v915 = vpack.c.b16 %v795, %v791
      %v916 = vpack.c.b16 %v796, %v792
      %v917 = vpack.c.b16 %v797, %v793
      %v918 = vpack.c.b16 %v798, %v794
      %v919 = vpack.c.b16 %v803, %v799
      %v920 = vpack.c.b16 %v804, %v800
      %v921 = vpack.c.b16 %v805, %v801
      %v922 = vpack.c.b16 %v806, %v802
      %v923 = vpack.c.b16 %v811, %v807
      %v924 = vpack.c.b16 %v812, %v808
      %v925 = vpack.c.b16 %v813, %v809
      %v926 = vpack.c.b16 %v814, %v810
      %vm1039 = vcmask 523264
      %v1041 = vsel %vm1039, %v475, 0
      %1043 = vmatprep.subr.bf16.mxu0 %v816
      %1044 = vmatpush1.bf16.msra.mxu0 %v815
      %1045 = vmatprep.subr.bf16.mxu0 %v820
      %1046 = vmatpush1.bf16.msra.mxu0 %v819
      %1047 = vmatprep.subr.bf16.mxu0 %v824
      %1048 = vmatpush1.bf16.msra.mxu0 %v823
      %1049 = vmatprep.subr.bf16.mxu0 %v828
      %1050 = vmatpush1.bf16.msra.mxu0 %v827
      %1051 = vmatprep.subr.bf16.mxu0 %v832
      %1052 = vmatpush1.bf16.msra.mxu0 %v831
      %1053 = vmatprep.subr.bf16.mxu0 %v836
      %1054 = vmatpush1.bf16.msra.mxu0 %v835
      %1055 = vmatprep.subr.bf16.mxu0 %v840
      %1056 = vmatpush1.bf16.msra.mxu0 %v839
      %1057 = vmatprep.subr.bf16.mxu0 %v844
      %1058 = vmatpush1.bf16.msra.mxu0 %v843
      %1059 = vmatprep.subr.bf16.mxu0 %v848
      %1060 = vmatpush1.bf16.msra.mxu0 %v847
      %1061 = vmatprep.subr.bf16.mxu0 %v852
      %1062 = vmatpush1.bf16.msra.mxu0 %v851
      %1063 = vmatprep.subr.bf16.mxu0 %v856
      %1064 = vmatpush1.bf16.msra.mxu0 %v855
      %1065 = vmatprep.subr.bf16.mxu0 %v860
      %1066 = vmatpush1.bf16.msra.mxu0 %v859
      %1067 = vmatprep.subr.bf16.mxu0 %v864
      %1068 = vmatpush1.bf16.msra.mxu0 %v863
      %1069 = vmatprep.subr.bf16.mxu0 %v868
      %1070 = vmatpush1.bf16.msra.mxu0 %v867
      %1071 = vmatprep.subr.bf16.mxu0 %v872
      %1072 = vmatpush1.bf16.msra.mxu0 %v871
      %1073 = vmatprep.subr.bf16.mxu0 %v876
      %1074 = vmatpush1.bf16.msra.mxu0 %v875
      %1075 = vmatprep.mubr.bf16.mxu0 %v473
      %1076 = vmatmul.mubr.bf16.gmra.mrb[0].mxu0 %v472
      %v1077 = vpop.f32.mrb[0].mxu0
      %v1078 = vadd.f32 %v443, %v1077
      %v1079 = vpop.f32.mrb[0].mxu0
      %v1080 = vadd.f32 %v447, %v1079
      %v1081 = vpop.f32.mrb[0].mxu0
      %v1082 = vadd.f32 %v443, %v1081
      %v1083 = vpop.f32.mrb[0].mxu0
      %v1084 = vadd.f32 %v447, %v1083
      %1085 = vdwg.mxu0
      %1086 = vmatprep.subr.bf16.mxu0 %v880
      %1087 = vmatpush1.bf16.msra.mxu0 %v879
      %1088 = vmatprep.subr.bf16.mxu0 %v884
      %1089 = vmatpush1.bf16.msra.mxu0 %v883
      %1090 = vmatprep.subr.bf16.mxu0 %v888
      %1091 = vmatpush1.bf16.msra.mxu0 %v887
      %1092 = vmatprep.subr.bf16.mxu0 %v892
      %1093 = vmatpush1.bf16.msra.mxu0 %v891
      %1094 = vmatprep.subr.bf16.mxu0 %v896
      %1095 = vmatpush1.bf16.msra.mxu0 %v895
      %1096 = vmatprep.subr.bf16.mxu0 %v900
      %1097 = vmatpush1.bf16.msra.mxu0 %v899
      %1098 = vmatprep.subr.bf16.mxu0 %v904
      %1099 = vmatpush1.bf16.msra.mxu0 %v903
      %1100 = vmatprep.subr.bf16.mxu0 %v908
      %1101 = vmatpush1.bf16.msra.mxu0 %v907
      %1102 = vmatprep.subr.bf16.mxu0 %v912
      %1103 = vmatpush1.bf16.msra.mxu0 %v911
      %1104 = vmatprep.subr.bf16.mxu0 %v916
      %1105 = vmatpush1.bf16.msra.mxu0 %v915
      %1106 = vmatprep.subr.bf16.mxu0 %v920
      %1107 = vmatpush1.bf16.msra.mxu0 %v919
      %1108 = vmatprep.subr.bf16.mxu0 %v924
      %1109 = vmatpush1.bf16.msra.mxu0 %v923
      %1110 = vmatprep.subr.bf16.mxu0 0
      %1111 = vmatpush1.bf16.msra.mxu0 0
      %1112 = vmatprep.subr.bf16.mxu0 0
      %1113 = vmatpush1.bf16.msra.mxu0 0
      %1114 = vmatprep.subr.bf16.mxu0 0
      %1115 = vmatpush1.bf16.msra.mxu0 0
      %1116 = vmatprep.subr.bf16.mxu0 0
      %1117 = vmatpush1.bf16.msra.mxu0 0
      %1118 = vmatprep.mubr.bf16.mxu0 %v1041
      %1119 = vmatmul.mubr.bf16.gmra.mrb[0].mxu0 %v474
      %v1120 = vpop.f32.mrb[0].mxu0
      %v1121 = vadd.f32 %v1078, %v1120
      %v1122 = vpop.f32.mrb[0].mxu0
      %v1123 = vadd.f32 %v1080, %v1122
      %v1124 = vpop.f32.mrb[0].mxu0
      %v1125 = vadd.f32 %v1082, %v1124
      %v1126 = vpop.f32.mrb[0].mxu0
      %v1127 = vadd.f32 %v1084, %v1126
      %1128 = vdwg.mxu0
      %1129 = vmatprep.subr.bf16.mxu0 %v818
      %1130 = vmatpush1.bf16.msra.mxu0 %v817
      %1131 = vmatprep.subr.bf16.mxu0 %v822
      %1132 = vmatpush1.bf16.msra.mxu0 %v821
      %1133 = vmatprep.subr.bf16.mxu0 %v826
      %1134 = vmatpush1.bf16.msra.mxu0 %v825
      %1135 = vmatprep.subr.bf16.mxu0 %v830
      %1136 = vmatpush1.bf16.msra.mxu0 %v829
      %1137 = vmatprep.subr.bf16.mxu0 %v834
      %1138 = vmatpush1.bf16.msra.mxu0 %v833
      %1139 = vmatprep.subr.bf16.mxu0 %v838
      %1140 = vmatpush1.bf16.msra.mxu0 %v837
      %1141 = vmatprep.subr.bf16.mxu0 %v842
      %1142 = vmatpush1.bf16.msra.mxu0 %v841
      %1143 = vmatprep.subr.bf16.mxu0 %v846
      %1144 = vmatpush1.bf16.msra.mxu0 %v845
      %1145 = vmatprep.subr.bf16.mxu0 %v850
      %1146 = vmatpush1.bf16.msra.mxu0 %v849
      %1147 = vmatprep.subr.bf16.mxu0 %v854
      %1148 = vmatpush1.bf16.msra.mxu0 %v853
      %1149 = vmatprep.subr.bf16.mxu0 %v858
      %1150 = vmatpush1.bf16.msra.mxu0 %v857
      %1151 = vmatprep.subr.bf16.mxu0 %v862
      %1152 = vmatpush1.bf16.msra.mxu0 %v861
      %1153 = vmatprep.subr.bf16.mxu0 %v866
      %1154 = vmatpush1.bf16.msra.mxu0 %v865
      %1155 = vmatprep.subr.bf16.mxu0 %v870
      %1156 = vmatpush1.bf16.msra.mxu0 %v869
      %1157 = vmatprep.subr.bf16.mxu0 %v874
      %1158 = vmatpush1.bf16.msra.mxu0 %v873
      %1159 = vmatprep.subr.bf16.mxu0 %v878
      %1160 = vmatpush1.bf16.msra.mxu0 %v877
      %1161 = vmatprep.mubr.bf16.mxu0 %v473
      %1162 = vmatmul.mubr.bf16.gmra.mrb[0].mxu0 %v472
      %v1163 = vpop.f32.mrb[0].mxu0
      %v1164 = vadd.f32 %v451, %v1163
      %v1165 = vpop.f32.mrb[0].mxu0
      %v1166 = vadd.f32 %v455, %v1165
      %v1167 = vpop.f32.mrb[0].mxu0
      %v1168 = vadd.f32 %v451, %v1167
      %v1169 = vpop.f32.mrb[0].mxu0
      %v1170 = vadd.f32 %v455, %v1169
      %1171 = vdwg.mxu0
      %1172 = vmatprep.subr.bf16.mxu0 %v882
      %1173 = vmatpush1.bf16.msra.mxu0 %v881
      %1174 = vmatprep.subr.bf16.mxu0 %v886
      %1175 = vmatpush1.bf16.msra.mxu0 %v885
      %1176 = vmatprep.subr.bf16.mxu0 %v890
      %1177 = vmatpush1.bf16.msra.mxu0 %v889
      %1178 = vmatprep.subr.bf16.mxu0 %v894
      %1179 = vmatpush1.bf16.msra.mxu0 %v893
      %1180 = vmatprep.subr.bf16.mxu0 %v898
      %1181 = vmatpush1.bf16.msra.mxu0 %v897
      %1182 = vmatprep.subr.bf16.mxu0 %v902
      %1183 = vmatpush1.bf16.msra.mxu0 %v901
      %1184 = vmatprep.subr.bf16.mxu0 %v906
      %1185 = vmatpush1.bf16.msra.mxu0 %v905
      %1186 = vmatprep.subr.bf16.mxu0 %v910
      %1187 = vmatpush1.bf16.msra.mxu0 %v909
      %1188 = vmatprep.subr.bf16.mxu0 %v914
      %1189 = vmatpush1.bf16.msra.mxu0 %v913
      %1190 = vmatprep.subr.bf16.mxu0 %v918
      %1191 = vmatpush1.bf16.msra.mxu0 %v917
      %1192 = vmatprep.subr.bf16.mxu0 %v922
      %1193 = vmatpush1.bf16.msra.mxu0 %v921
      %1194 = vmatprep.subr.bf16.mxu0 %v926
      %1195 = vmatpush1.bf16.msra.mxu0 %v925
      %1196 = vmatprep.subr.bf16.mxu0 0
      %1197 = vmatpush1.bf16.msra.mxu0 0
      %1198 = vmatprep.subr.bf16.mxu0 0
      %1199 = vmatpush1.bf16.msra.mxu0 0
      %1200 = vmatprep.subr.bf16.mxu0 0
      %1201 = vmatpush1.bf16.msra.mxu0 0
      %1202 = vmatprep.subr.bf16.mxu0 0
      %1203 = vmatpush1.bf16.msra.mxu0 0
      %1204 = vmatprep.mubr.bf16.mxu0 %v1041
      %1205 = vmatmul.mubr.bf16.gmra.mrb[0].mxu0 %v474
      %v1206 = vpop.f32.mrb[0].mxu0
      %v1207 = vadd.f32 %v1164, %v1206
      %v1208 = vpop.f32.mrb[0].mxu0
      %v1209 = vadd.f32 %v1166, %v1208
      %v1210 = vpop.f32.mrb[0].mxu0
      %v1211 = vadd.f32 %v1168, %v1210
      %v1212 = vpop.f32.mrb[0].mxu0
      %v1213 = vadd.f32 %v1170, %v1212
      %1214 = vdwg.mxu0
      %vm1215 = vcmp.ge.f32.partialorder %v1121, 0.0
      %vm1216 = vcmp.ge.f32.partialorder %v1123, 0.0
      %vm1217 = vcmp.ge.f32.partialorder %v1207, 0.0
      %vm1218 = vcmp.ge.f32.partialorder %v1209, 0.0
      %vm1219 = vcmp.ge.f32.partialorder %v1125, 0.0
      %vm1220 = vcmp.ge.f32.partialorder %v1127, 0.0
      %vm1221 = vcmp.ge.f32.partialorder %v1211, 0.0
      %vm1222 = vcmp.ge.f32.partialorder %v1213, 0.0
      %v1223 = vmul.f32 %v1121, 0.2
      %v1224 = vmul.f32 %v1123, 0.2
      %v1225 = vmul.f32 %v1207, 0.2
      %v1226 = vmul.f32 %v1209, 0.2
      %v1227 = vmul.f32 %v1125, 0.2
      %v1228 = vmul.f32 %v1127, 0.2
      %v1229 = vmul.f32 %v1211, 0.2
      %v1230 = vmul.f32 %v1213, 0.2
      %v1231 = vsel %vm1215, %v1121, %v1223
      %v1232 = vsel %vm1216, %v1123, %v1224
      %v1233 = vsel %vm1217, %v1207, %v1225
      %v1234 = vsel %vm1218, %v1209, %v1226
      %v1235 = vsel %vm1219, %v1125, %v1227
      %v1236 = vsel %vm1220, %v1127, %v1228
      %v1237 = vsel %vm1221, %v1211, %v1229
      %v1238 = vsel %vm1222, %v1213, %v1230
      %v1239 = vld [vmem:[%s3] sm:$0xff]
      %v1240 = vld [vmem:[%s3 + $0x8] sm:$0xff]
      %v1241 = vld [vmem:[%s3 + $0x10] sm:$0xff]
      %v1242 = vld [vmem:[%s3 + $0x18] sm:$0xff]
      %v1243 = vld [vmem:[%s3 + $0x20] sm:$0xff]
      %v1244 = vld [vmem:[%s3 + $0x28] sm:$0xff]
      %v1245 = vld [vmem:[%s3 + $0x30] sm:$0xff]
      %v1246 = vld [vmem:[%s3 + $0x38] sm:$0xff]
      %v1247 = vld [vmem:[%s3 + $0x40] sm:$0xff]
      %v1248 = vld [vmem:[%s3 + $0x48] sm:$0xff]
      %v1249 = vld [vmem:[%s3 + $0x50] sm:$0xff]
      %v1250 = vld [vmem:[%s3 + $0x58] sm:$0xff]
      %v1251 = vld [vmem:[%s3 + $0x60] sm:$0xff]
      %v1252 = vld [vmem:[%s3 + $0x68] sm:$0xff]
      %v1253 = vld [vmem:[%s3 + $0x70] sm:$0xff]
      %v1254 = vld [vmem:[%s3 + $0x78] sm:$0xff]
      %v1255 = vld [vmem:[%s3 + $0x80] sm:$0xff]
      %v1256 = vld [vmem:[%s3 + $0x88] sm:$0xff]
      %v1257 = vld [vmem:[%s3 + $0x90] sm:$0xff]
      %v1258 = vld [vmem:[%s3 + $0x98] sm:$0xff]
      %v1259 = vld [vmem:[%s3 + $0xa0] sm:$0xff]
      %v1260 = vld [vmem:[%s3 + $0xa8] sm:$0xff]
      %v1261 = vld [vmem:[%s3 + $0xb0] sm:$0xff]
      %v1262 = vld [vmem:[%s3 + $0xb8] sm:$0xff]
      %v1263 = vld [vmem:[%s3 + $0xc0] sm:$0xff]
      %v1264 = vld [vmem:[%s3 + $0xc8] sm:$0xff]
      %v1265 = vld [vmem:[%s3 + $0xd0] sm:$0xff]
      %v1266 = vld [vmem:[%s3 + $0xd8] sm:$0xff]
      %v1267 = vld [vmem:[%s3 + $0xe0] sm:$0xff]
      %v1268 = vld [vmem:[%s3 + $0xe8] sm:$0xff]
      %v1269 = vld [vmem:[%s3 + $0xf0] sm:$0xff]
      %v1270 = vld [vmem:[%s3 + $0xf8] sm:$0xff]
      %v1271 = vld [vmem:[%s3 + $0x100] sm:$0xff]
      %v1272 = vld [vmem:[%s3 + $0x108] sm:$0xff]
      %v1273 = vld [vmem:[%s3 + $0x110] sm:$0xff]
      %v1274 = vld [vmem:[%s3 + $0x118] sm:$0xff]
      %v1275 = vld [vmem:[%s3 + $0x120] sm:$0xff]
      %v1276 = vld [vmem:[%s3 + $0x128] sm:$0xff]
      %v1277 = vld [vmem:[%s3 + $0x130] sm:$0xff]
      %v1278 = vld [vmem:[%s3 + $0x138] sm:$0xff]
      %v1279 = vld [vmem:[%s3 + $0x140] sm:$0xff]
      %v1280 = vld [vmem:[%s3 + $0x148] sm:$0xff]
      %v1281 = vld [vmem:[%s3 + $0x150] sm:$0xff]
      %v1282 = vld [vmem:[%s3 + $0x158] sm:$0xff]
      %v1283 = vld [vmem:[%s3 + $0x160] sm:$0xff]
      %v1284 = vld [vmem:[%s3 + $0x168] sm:$0xff]
      %v1285 = vld [vmem:[%s3 + $0x170] sm:$0xff]
      %v1286 = vld [vmem:[%s3 + $0x178] sm:$0xff]
      %v1287 = vld [vmem:[%s3 + $0x180] sm:$0xff]
      %v1288 = vld [vmem:[%s3 + $0x188] sm:$0xff]
      %v1289 = vld [vmem:[%s3 + $0x190] sm:$0xff]
      %v1290 = vld [vmem:[%s3 + $0x198] sm:$0xff]
      %v1291 = vld [vmem:[%s3 + $0x1a0] sm:$0xff]
      %v1292 = vld [vmem:[%s3 + $0x1a8] sm:$0xff]
      %v1293 = vld [vmem:[%s3 + $0x1b0] sm:$0xff]
      %v1294 = vld [vmem:[%s3 + $0x1b8] sm:$0xff]
      %v1295 = vld [vmem:[%s3 + $0x1c0] sm:$0xff]
      %v1296 = vld [vmem:[%s3 + $0x1c8] sm:$0xff]
      %v1297 = vld [vmem:[%s3 + $0x1d0] sm:$0xff]
      %v1298 = vld [vmem:[%s3 + $0x1d8] sm:$0xff]
      %v1299 = vld [vmem:[%s3 + $0x1e0] sm:$0xff]
      %v1300 = vld [vmem:[%s3 + $0x1e8] sm:$0xff]
      %v1301 = vld [vmem:[%s3 + $0x1f0] sm:$0xff]
      %v1302 = vld [vmem:[%s3 + $0x1f8] sm:$0xff]
      %v1303 = vld [vmem:[%s4] sm:$0x3]
      %v1304 = vpack.c.bf16 %v1235, %v1231
      %v1305 = vpack.c.bf16 %v1236, %v1232
      %v1306 = vpack.c.bf16 %v1237, %v1233
      %v1307 = vpack.c.bf16 %v1238, %v1234
      %v1309 = vlaneseq
      %v1310 = vshrl.u32 %v1309, 7
      %v1311 = vsub.s32 0, %v1310
      %v1312 = vrot.slane %v1303, %v1311
      %v1313 = vlaneseq
      %v1314 = vshrl.u32 %v1313, 7
      %v1315 = vsub.s32 1, %v1314
      %v1316 = vrot.slane %v1303, %v1315
      %v1383 = vunpack.c.l.b16 %v1239
      %v1384 = vunpack.c.h.b16 %v1239
      %v1385 = vunpack.c.l.b16 %v1240
      %v1386 = vunpack.c.h.b16 %v1240
      %v1387 = vunpack.c.l.b16 %v1241
      %v1388 = vunpack.c.h.b16 %v1241
      %v1389 = vunpack.c.l.b16 %v1242
      %v1390 = vunpack.c.h.b16 %v1242
      %v1391 = vunpack.c.l.b16 %v1243
      %v1392 = vunpack.c.h.b16 %v1243
      %v1393 = vunpack.c.l.b16 %v1244
      %v1394 = vunpack.c.h.b16 %v1244
      %v1395 = vunpack.c.l.b16 %v1245
      %v1396 = vunpack.c.h.b16 %v1245
      %v1397 = vunpack.c.l.b16 %v1246
      %v1398 = vunpack.c.h.b16 %v1246
      %v1399 = vunpack.c.l.b16 %v1247
      %v1400 = vunpack.c.h.b16 %v1247
      %v1401 = vunpack.c.l.b16 %v1248
      %v1402 = vunpack.c.h.b16 %v1248
      %v1403 = vunpack.c.l.b16 %v1249
      %v1404 = vunpack.c.h.b16 %v1249
      %v1405 = vunpack.c.l.b16 %v1250
      %v1406 = vunpack.c.h.b16 %v1250
      %v1407 = vunpack.c.l.b16 %v1251
      %v1408 = vunpack.c.h.b16 %v1251
      %v1409 = vunpack.c.l.b16 %v1252
      %v1410 = vunpack.c.h.b16 %v1252
      %v1411 = vunpack.c.l.b16 %v1253
      %v1412 = vunpack.c.h.b16 %v1253
      %v1413 = vunpack.c.l.b16 %v1254
      %v1414 = vunpack.c.h.b16 %v1254
      %v1415 = vunpack.c.l.b16 %v1255
      %v1416 = vunpack.c.h.b16 %v1255
      %v1417 = vunpack.c.l.b16 %v1256
      %v1418 = vunpack.c.h.b16 %v1256
      %v1419 = vunpack.c.l.b16 %v1257
      %v1420 = vunpack.c.h.b16 %v1257
      %v1421 = vunpack.c.l.b16 %v1258
      %v1422 = vunpack.c.h.b16 %v1258
      %v1423 = vunpack.c.l.b16 %v1259
      %v1424 = vunpack.c.h.b16 %v1259
      %v1425 = vunpack.c.l.b16 %v1260
      %v1426 = vunpack.c.h.b16 %v1260
      %v1427 = vunpack.c.l.b16 %v1261
      %v1428 = vunpack.c.h.b16 %v1261
      %v1429 = vunpack.c.l.b16 %v1262
      %v1430 = vunpack.c.h.b16 %v1262
      %v1431 = vunpack.c.l.b16 %v1263
      %v1432 = vunpack.c.h.b16 %v1263
      %v1433 = vunpack.c.l.b16 %v1264
      %v1434 = vunpack.c.h.b16 %v1264
      %v1435 = vunpack.c.l.b16 %v1265
      %v1436 = vunpack.c.h.b16 %v1265
      %v1437 = vunpack.c.l.b16 %v1266
      %v1438 = vunpack.c.h.b16 %v1266
      %v1439 = vunpack.c.l.b16 %v1267
      %v1440 = vunpack.c.h.b16 %v1267
      %v1441 = vunpack.c.l.b16 %v1268
      %v1442 = vunpack.c.h.b16 %v1268
      %v1443 = vunpack.c.l.b16 %v1269
      %v1444 = vunpack.c.h.b16 %v1269
      %v1445 = vunpack.c.l.b16 %v1270
      %v1446 = vunpack.c.h.b16 %v1270
      %v1447 = vunpack.c.l.b16 %v1271
      %v1448 = vunpack.c.h.b16 %v1271
      %v1449 = vunpack.c.l.b16 %v1272
      %v1450 = vunpack.c.h.b16 %v1272
      %v1451 = vunpack.c.l.b16 %v1273
      %v1452 = vunpack.c.h.b16 %v1273
      %v1453 = vunpack.c.l.b16 %v1274
      %v1454 = vunpack.c.h.b16 %v1274
      %v1455 = vunpack.c.l.b16 %v1275
      %v1456 = vunpack.c.h.b16 %v1275
      %v1457 = vunpack.c.l.b16 %v1276
      %v1458 = vunpack.c.h.b16 %v1276
      %v1459 = vunpack.c.l.b16 %v1277
      %v1460 = vunpack.c.h.b16 %v1277
      %v1461 = vunpack.c.l.b16 %v1278
      %v1462 = vunpack.c.h.b16 %v1278
      %v1463 = vunpack.c.l.b16 %v1279
      %v1464 = vunpack.c.h.b16 %v1279
      %v1465 = vunpack.c.l.b16 %v1280
      %v1466 = vunpack.c.h.b16 %v1280
      %v1467 = vunpack.c.l.b16 %v1281
      %v1468 = vunpack.c.h.b16 %v1281
      %v1469 = vunpack.c.l.b16 %v1282
      %v1470 = vunpack.c.h.b16 %v1282
      %v1471 = vunpack.c.l.b16 %v1283
      %v1472 = vunpack.c.h.b16 %v1283
      %v1473 = vunpack.c.l.b16 %v1284
      %v1474 = vunpack.c.h.b16 %v1284
      %v1475 = vunpack.c.l.b16 %v1285
      %v1476 = vunpack.c.h.b16 %v1285
      %v1477 = vunpack.c.l.b16 %v1286
      %v1478 = vunpack.c.h.b16 %v1286
      %v1479 = vunpack.c.l.b16 %v1287
      %v1480 = vunpack.c.h.b16 %v1287
      %v1481 = vunpack.c.l.b16 %v1288
      %v1482 = vunpack.c.h.b16 %v1288
      %v1483 = vunpack.c.l.b16 %v1289
      %v1484 = vunpack.c.h.b16 %v1289
      %v1485 = vunpack.c.l.b16 %v1290
      %v1486 = vunpack.c.h.b16 %v1290
      %v1487 = vunpack.c.l.b16 %v1291
      %v1488 = vunpack.c.h.b16 %v1291
      %v1489 = vunpack.c.l.b16 %v1292
      %v1490 = vunpack.c.h.b16 %v1292
      %v1491 = vunpack.c.l.b16 %v1293
      %v1492 = vunpack.c.h.b16 %v1293
      %v1493 = vunpack.c.l.b16 %v1294
      %v1494 = vunpack.c.h.b16 %v1294
      %v1495 = vunpack.c.l.b16 %v1295
      %v1496 = vunpack.c.h.b16 %v1295
      %v1497 = vunpack.c.l.b16 %v1296
      %v1498 = vunpack.c.h.b16 %v1296
      %v1499 = vunpack.c.l.b16 %v1297
      %v1500 = vunpack.c.h.b16 %v1297
      %v1501 = vunpack.c.l.b16 %v1298
      %v1502 = vunpack.c.h.b16 %v1298
      %v1503 = vunpack.c.l.b16 %v1299
      %v1504 = vunpack.c.h.b16 %v1299
      %v1505 = vunpack.c.l.b16 %v1300
      %v1506 = vunpack.c.h.b16 %v1300
      %v1507 = vunpack.c.l.b16 %v1301
      %v1508 = vunpack.c.h.b16 %v1301
      %v1509 = vunpack.c.l.b16 %v1302
      %v1510 = vunpack.c.h.b16 %v1302
      %v1511 = vpack.c.b16 %v1385, %v1383
      %v1512 = vpack.c.b16 %v1386, %v1384
      %v1513 = vpack.c.b16 %v1389, %v1387
      %v1514 = vpack.c.b16 %v1390, %v1388
      %v1515 = vpack.c.b16 %v1393, %v1391
      %v1516 = vpack.c.b16 %v1394, %v1392
      %v1517 = vpack.c.b16 %v1397, %v1395
      %v1518 = vpack.c.b16 %v1398, %v1396
      %v1519 = vpack.c.b16 %v1401, %v1399
      %v1520 = vpack.c.b16 %v1402, %v1400
      %v1521 = vpack.c.b16 %v1405, %v1403
      %v1522 = vpack.c.b16 %v1406, %v1404
      %v1523 = vpack.c.b16 %v1409, %v1407
      %v1524 = vpack.c.b16 %v1410, %v1408
      %v1525 = vpack.c.b16 %v1413, %v1411
      %v1526 = vpack.c.b16 %v1414, %v1412
      %v1527 = vpack.c.b16 %v1417, %v1415
      %v1528 = vpack.c.b16 %v1418, %v1416
      %v1529 = vpack.c.b16 %v1421, %v1419
      %v1530 = vpack.c.b16 %v1422, %v1420
      %v1531 = vpack.c.b16 %v1425, %v1423
      %v1532 = vpack.c.b16 %v1426, %v1424
      %v1533 = vpack.c.b16 %v1429, %v1427
      %v1534 = vpack.c.b16 %v1430, %v1428
      %v1535 = vpack.c.b16 %v1433, %v1431
      %v1536 = vpack.c.b16 %v1434, %v1432
      %v1537 = vpack.c.b16 %v1437, %v1435
      %v1538 = vpack.c.b16 %v1438, %v1436
      %v1539 = vpack.c.b16 %v1441, %v1439
      %v1540 = vpack.c.b16 %v1442, %v1440
      %v1541 = vpack.c.b16 %v1445, %v1443
      %v1542 = vpack.c.b16 %v1446, %v1444
      %v1543 = vpack.c.b16 %v1449, %v1447
      %v1544 = vpack.c.b16 %v1450, %v1448
      %v1545 = vpack.c.b16 %v1453, %v1451
      %v1546 = vpack.c.b16 %v1454, %v1452
      %v1547 = vpack.c.b16 %v1457, %v1455
      %v1548 = vpack.c.b16 %v1458, %v1456
      %v1549 = vpack.c.b16 %v1461, %v1459
      %v1550 = vpack.c.b16 %v1462, %v1460
      %v1551 = vpack.c.b16 %v1465, %v1463
      %v1552 = vpack.c.b16 %v1466, %v1464
      %v1553 = vpack.c.b16 %v1469, %v1467
      %v1554 = vpack.c.b16 %v1470, %v1468
      %v1555 = vpack.c.b16 %v1473, %v1471
      %v1556 = vpack.c.b16 %v1474, %v1472
      %v1557 = vpack.c.b16 %v1477, %v1475
      %v1558 = vpack.c.b16 %v1478, %v1476
      %v1559 = vpack.c.b16 %v1481, %v1479
      %v1560 = vpack.c.b16 %v1482, %v1480
      %v1561 = vpack.c.b16 %v1485, %v1483
      %v1562 = vpack.c.b16 %v1486, %v1484
      %v1563 = vpack.c.b16 %v1489, %v1487
      %v1564 = vpack.c.b16 %v1490, %v1488
      %v1565 = vpack.c.b16 %v1493, %v1491
      %v1566 = vpack.c.b16 %v1494, %v1492
      %v1567 = vpack.c.b16 %v1497, %v1495
      %v1568 = vpack.c.b16 %v1498, %v1496
      %v1569 = vpack.c.b16 %v1501, %v1499
      %v1570 = vpack.c.b16 %v1502, %v1500
      %v1571 = vpack.c.b16 %v1505, %v1503
      %v1572 = vpack.c.b16 %v1506, %v1504
      %v1573 = vpack.c.b16 %v1509, %v1507
      %v1574 = vpack.c.b16 %v1510, %v1508
      %1639 = vmatprep.subr.bf16.mxu0 %v1512
      %1640 = vmatpush1.bf16.msra.mxu0 %v1511
      %1641 = vmatprep.subr.bf16.mxu0 %v1514
      %1642 = vmatpush1.bf16.msra.mxu0 %v1513
      %1643 = vmatprep.subr.bf16.mxu0 %v1516
      %1644 = vmatpush1.bf16.msra.mxu0 %v1515
      %1645 = vmatprep.subr.bf16.mxu0 %v1518
      %1646 = vmatpush1.bf16.msra.mxu0 %v1517
      %1647 = vmatprep.subr.bf16.mxu0 %v1520
      %1648 = vmatpush1.bf16.msra.mxu0 %v1519
      %1649 = vmatprep.subr.bf16.mxu0 %v1522
      %1650 = vmatpush1.bf16.msra.mxu0 %v1521
      %1651 = vmatprep.subr.bf16.mxu0 %v1524
      %1652 = vmatpush1.bf16.msra.mxu0 %v1523
      %1653 = vmatprep.subr.bf16.mxu0 %v1526
      %1654 = vmatpush1.bf16.msra.mxu0 %v1525
      %1655 = vmatprep.subr.bf16.mxu0 %v1528
      %1656 = vmatpush1.bf16.msra.mxu0 %v1527
      %1657 = vmatprep.subr.bf16.mxu0 %v1530
      %1658 = vmatpush1.bf16.msra.mxu0 %v1529
      %1659 = vmatprep.subr.bf16.mxu0 %v1532
      %1660 = vmatpush1.bf16.msra.mxu0 %v1531
      %1661 = vmatprep.subr.bf16.mxu0 %v1534
      %1662 = vmatpush1.bf16.msra.mxu0 %v1533
      %1663 = vmatprep.subr.bf16.mxu0 %v1536
      %1664 = vmatpush1.bf16.msra.mxu0 %v1535
      %1665 = vmatprep.subr.bf16.mxu0 %v1538
      %1666 = vmatpush1.bf16.msra.mxu0 %v1537
      %1667 = vmatprep.subr.bf16.mxu0 %v1540
      %1668 = vmatpush1.bf16.msra.mxu0 %v1539
      %1669 = vmatprep.subr.bf16.mxu0 %v1542
      %1670 = vmatpush1.bf16.msra.mxu0 %v1541
      %1671 = vmatprep.mubr.bf16.mxu0 %v1305
      %1672 = vmatmul.mubr.bf16.gmra.mrb[0].mxu0 %v1304
      %v1673 = vpop.f32.mrb[0].mxu0
      %v1674 = vadd.f32 %v1312, %v1673
      %v1675 = vpop.f32.mrb[0].mxu0
      %v1676 = vadd.f32 %v1316, %v1675
      %v1677 = vpop.f32.mrb[0].mxu0
      %v1678 = vadd.f32 %v1312, %v1677
      %v1679 = vpop.f32.mrb[0].mxu0
      %v1680 = vadd.f32 %v1316, %v1679
      %1681 = vdwg.mxu0
      %1682 = vmatprep.subr.bf16.mxu0 %v1544
      %1683 = vmatpush1.bf16.msra.mxu0 %v1543
      %1684 = vmatprep.subr.bf16.mxu0 %v1546
      %1685 = vmatpush1.bf16.msra.mxu0 %v1545
      %1686 = vmatprep.subr.bf16.mxu0 %v1548
      %1687 = vmatpush1.bf16.msra.mxu0 %v1547
      %1688 = vmatprep.subr.bf16.mxu0 %v1550
      %1689 = vmatpush1.bf16.msra.mxu0 %v1549
      %1690 = vmatprep.subr.bf16.mxu0 %v1552
      %1691 = vmatpush1.bf16.msra.mxu0 %v1551
      %1692 = vmatprep.subr.bf16.mxu0 %v1554
      %1693 = vmatpush1.bf16.msra.mxu0 %v1553
      %1694 = vmatprep.subr.bf16.mxu0 %v1556
      %1695 = vmatpush1.bf16.msra.mxu0 %v1555
      %1696 = vmatprep.subr.bf16.mxu0 %v1558
      %1697 = vmatpush1.bf16.msra.mxu0 %v1557
      %1698 = vmatprep.subr.bf16.mxu0 %v1560
      %1699 = vmatpush1.bf16.msra.mxu0 %v1559
      %1700 = vmatprep.subr.bf16.mxu0 %v1562
      %1701 = vmatpush1.bf16.msra.mxu0 %v1561
      %1702 = vmatprep.subr.bf16.mxu0 %v1564
      %1703 = vmatpush1.bf16.msra.mxu0 %v1563
      %1704 = vmatprep.subr.bf16.mxu0 %v1566
      %1705 = vmatpush1.bf16.msra.mxu0 %v1565
      %1706 = vmatprep.subr.bf16.mxu0 %v1568
      %1707 = vmatpush1.bf16.msra.mxu0 %v1567
      %1708 = vmatprep.subr.bf16.mxu0 %v1570
      %1709 = vmatpush1.bf16.msra.mxu0 %v1569
      %1710 = vmatprep.subr.bf16.mxu0 %v1572
      %1711 = vmatpush1.bf16.msra.mxu0 %v1571
      %1712 = vmatprep.subr.bf16.mxu0 %v1574
      %1713 = vmatpush1.bf16.msra.mxu0 %v1573
      %1714 = vmatprep.mubr.bf16.mxu0 %v1307
      %1715 = vmatmul.mubr.bf16.gmra.mrb[0].mxu0 %v1306
      %v1716 = vpop.f32.mrb[0].mxu0
      %v1717 = vadd.f32 %v1674, %v1716
      %v1718 = vpop.f32.mrb[0].mxu0
      %v1719 = vadd.f32 %v1676, %v1718
      %v1720 = vpop.f32.mrb[0].mxu0
      %v1721 = vadd.f32 %v1678, %v1720
      %v1722 = vpop.f32.mrb[0].mxu0
      %v1723 = vadd.f32 %v1680, %v1722
      %1724 = vdwg.mxu0
      %vm1725 = vcmp.ge.f32.partialorder %v1717, 0.0
      %vm1726 = vcmp.ge.f32.partialorder %v1719, 0.0
      %vm1727 = vcmp.ge.f32.partialorder %v1721, 0.0
      %vm1728 = vcmp.ge.f32.partialorder %v1723, 0.0
      %v1729 = vmul.f32 %v1717, 0.2
      %v1730 = vmul.f32 %v1719, 0.2
      %v1731 = vmul.f32 %v1721, 0.2
      %v1732 = vmul.f32 %v1723, 0.2
      %v1733 = vsel %vm1725, %v1717, %v1729
      %v1734 = vsel %vm1726, %v1719, %v1730
      %v1735 = vsel %vm1727, %v1721, %v1731
      %v1736 = vsel %vm1728, %v1723, %v1732
      %v1737 = vld [vmem:[%s5] sm:$0xf]
      %v1738 = vld [vmem:[%s5 + $0x4] sm:$0xf]
      %v1739 = vld [vmem:[%s5 + $0x8] sm:$0xf]
      %v1740 = vld [vmem:[%s5 + $0xc] sm:$0xf]
      %v1741 = vld [vmem:[%s5 + $0x10] sm:$0xf]
      %v1742 = vld [vmem:[%s5 + $0x14] sm:$0xf]
      %v1743 = vld [vmem:[%s5 + $0x18] sm:$0xf]
      %v1744 = vld [vmem:[%s5 + $0x1c] sm:$0xf]
      %v1745 = vld [vmem:[%s5 + $0x20] sm:$0xf]
      %v1746 = vld [vmem:[%s5 + $0x24] sm:$0xf]
      %v1747 = vld [vmem:[%s5 + $0x28] sm:$0xf]
      %v1748 = vld [vmem:[%s5 + $0x2c] sm:$0xf]
      %v1749 = vld [vmem:[%s5 + $0x30] sm:$0xf]
      %v1750 = vld [vmem:[%s5 + $0x34] sm:$0xf]
      %v1751 = vld [vmem:[%s5 + $0x38] sm:$0xf]
      %v1752 = vld [vmem:[%s5 + $0x3c] sm:$0xf]
      %v1753 = vld [vmem:[%s5 + $0x40] sm:$0xf]
      %v1754 = vld [vmem:[%s5 + $0x44] sm:$0xf]
      %v1755 = vld [vmem:[%s5 + $0x48] sm:$0xf]
      %v1756 = vld [vmem:[%s5 + $0x4c] sm:$0xf]
      %v1757 = vld [vmem:[%s5 + $0x50] sm:$0xf]
      %v1758 = vld [vmem:[%s5 + $0x54] sm:$0xf]
      %v1759 = vld [vmem:[%s5 + $0x58] sm:$0xf]
      %v1760 = vld [vmem:[%s5 + $0x5c] sm:$0xf]
      %v1761 = vld [vmem:[%s5 + $0x60] sm:$0xf]
      %v1762 = vld [vmem:[%s5 + $0x64] sm:$0xf]
      %v1763 = vld [vmem:[%s5 + $0x68] sm:$0xf]
      %v1764 = vld [vmem:[%s5 + $0x6c] sm:$0xf]
      %v1765 = vld [vmem:[%s5 + $0x70] sm:$0xf]
      %v1766 = vld [vmem:[%s5 + $0x74] sm:$0xf]
      %v1767 = vld [vmem:[%s5 + $0x78] sm:$0xf]
      %v1768 = vld [vmem:[%s5 + $0x7c] sm:$0xf]
      %v1769 = vld [vmem:[%s6] sm:$0x1]
      %v1770 = vpack.c.bf16 %v1735, %v1733
      %v1771 = vpack.c.bf16 %v1736, %v1734
      %v1773 = vlaneseq
      %v1774 = vshrl.u32 %v1773, 7
      %v1775 = vsub.s32 0, %v1774
      %v1776 = vrot.slane %v1769, %v1775
      %v1810 = vunpack.c.l.b16 %v1737
      %v1811 = vunpack.c.l.b16 %v1738
      %v1812 = vunpack.c.l.b16 %v1739
      %v1813 = vunpack.c.l.b16 %v1740
      %v1814 = vunpack.c.l.b16 %v1741
      %v1815 = vunpack.c.l.b16 %v1742
      %v1816 = vunpack.c.l.b16 %v1743
      %v1817 = vunpack.c.l.b16 %v1744
      %v1818 = vunpack.c.l.b16 %v1745
      %v1819 = vunpack.c.l.b16 %v1746
      %v1820 = vunpack.c.l.b16 %v1747
      %v1821 = vunpack.c.l.b16 %v1748
      %v1822 = vunpack.c.l.b16 %v1749
      %v1823 = vunpack.c.l.b16 %v1750
      %v1824 = vunpack.c.l.b16 %v1751
      %v1825 = vunpack.c.l.b16 %v1752
      %v1826 = vunpack.c.l.b16 %v1753
      %v1827 = vunpack.c.l.b16 %v1754
      %v1828 = vunpack.c.l.b16 %v1755
      %v1829 = vunpack.c.l.b16 %v1756
      %v1830 = vunpack.c.l.b16 %v1757
      %v1831 = vunpack.c.l.b16 %v1758
      %v1832 = vunpack.c.l.b16 %v1759
      %v1833 = vunpack.c.l.b16 %v1760
      %v1834 = vunpack.c.l.b16 %v1761
      %v1835 = vunpack.c.l.b16 %v1762
      %v1836 = vunpack.c.l.b16 %v1763
      %v1837 = vunpack.c.l.b16 %v1764
      %v1838 = vunpack.c.l.b16 %v1765
      %v1839 = vunpack.c.l.b16 %v1766
      %v1840 = vunpack.c.l.b16 %v1767
      %v1841 = vunpack.c.l.b16 %v1768
      %v1842 = vpack.c.b16 %v1811, %v1810
      %v1843 = vpack.c.b16 %v1813, %v1812
      %v1844 = vpack.c.b16 %v1815, %v1814
      %v1845 = vpack.c.b16 %v1817, %v1816
      %v1846 = vpack.c.b16 %v1819, %v1818
      %v1847 = vpack.c.b16 %v1821, %v1820
      %v1848 = vpack.c.b16 %v1823, %v1822
      %v1849 = vpack.c.b16 %v1825, %v1824
      %v1850 = vpack.c.b16 %v1827, %v1826
      %v1851 = vpack.c.b16 %v1829, %v1828
      %v1852 = vpack.c.b16 %v1831, %v1830
      %v1853 = vpack.c.b16 %v1833, %v1832
      %v1854 = vpack.c.b16 %v1835, %v1834
      %v1855 = vpack.c.b16 %v1837, %v1836
      %v1856 = vpack.c.b16 %v1839, %v1838
      %v1857 = vpack.c.b16 %v1841, %v1840
      %1874 = vmatprep.subr.bf16.mxu0 0
      %1875 = vmatpush1.bf16.msra.mxu0 %v1842
      %1876 = vmatprep.subr.bf16.mxu0 0
      %1877 = vmatpush1.bf16.msra.mxu0 %v1843
      %1878 = vmatprep.subr.bf16.mxu0 0
      %1879 = vmatpush1.bf16.msra.mxu0 %v1844
      %1880 = vmatprep.subr.bf16.mxu0 0
      %1881 = vmatpush1.bf16.msra.mxu0 %v1845
      %1882 = vmatprep.subr.bf16.mxu0 0
      %1883 = vmatpush1.bf16.msra.mxu0 %v1846
      %1884 = vmatprep.subr.bf16.mxu0 0
      %1885 = vmatpush1.bf16.msra.mxu0 %v1847
      %1886 = vmatprep.subr.bf16.mxu0 0
      %1887 = vmatpush1.bf16.msra.mxu0 %v1848
      %1888 = vmatprep.subr.bf16.mxu0 0
      %1889 = vmatpush1.bf16.msra.mxu0 %v1849
      %1890 = vmatprep.subr.bf16.mxu0 0
      %1891 = vmatpush1.bf16.msra.mxu0 %v1850
      %1892 = vmatprep.subr.bf16.mxu0 0
      %1893 = vmatpush1.bf16.msra.mxu0 %v1851
      %1894 = vmatprep.subr.bf16.mxu0 0
      %1895 = vmatpush1.bf16.msra.mxu0 %v1852
      %1896 = vmatprep.subr.bf16.mxu0 0
      %1897 = vmatpush1.bf16.msra.mxu0 %v1853
      %1898 = vmatprep.subr.bf16.mxu0 0
      %1899 = vmatpush1.bf16.msra.mxu0 %v1854
      %1900 = vmatprep.subr.bf16.mxu0 0
      %1901 = vmatpush1.bf16.msra.mxu0 %v1855
      %1902 = vmatprep.subr.bf16.mxu0 0
      %1903 = vmatpush1.bf16.msra.mxu0 %v1856
      %1904 = vmatprep.subr.bf16.mxu0 0
      %1905 = vmatpush1.bf16.msra.mxu0 %v1857
      %1906 = vmatprep.mubr.bf16.mxu0 %v1771
      %1907 = vmatmul.mubr.bf16.gmra.mrb[0].mxu0 %v1770
      %v1908 = vpop.f32.mrb[0].mxu0
      %v1909 = vadd.f32 %v1776, %v1908
      %v1910 = vpop.f32.mrb[0].mxu0
      %v1911 = vpop.f32.mrb[0].mxu0
      %v1912 = vadd.f32 %v1776, %v1911
      %v1913 = vpop.f32.mrb[0].mxu0
      %1914 = vdwg.mxu0
      %1915 = vst [vmem:[%s319] sm:$0xff] %v1909
      %1916 = vst [vmem:[%s319 + $0x8] sm:$0xff] %v1912
      %s1917 = smul.u32 2, %s23
      %p1918 = scmp.lt.s32.totalorder %s22, 1
      %s1919 = scalar_select %p1918, %s22, 1
      %p1920 = scmp.lt.s32.totalorder %s1917, 1
      %s1921 = scalar_select %p1920, %s1917, 1
      %s1922 = smul.addr %s1919, 2
      %s1923 = sadd.s32 %s1921, %s1922
      %s1924 = smul.addr %s1923, 8
      %s1925 = scalar_lea.vmem %s7, %s1924
      // Predicated region
      $region49: #{skinning_net_forward.25} parent=47 // pred_check
        %p1926 = pneg %p204
      $region50: #{skinning_net_forward.25} parent=47 // pred_check_branch
        %1928 = sbr.rel (%p1926) target = $region52
      $region51: #{skinning_net_forward.25} parent=47 // pred_region
        %s1929 = smul.u32 2, %s23
      $region52: #{skinning_net_forward.25} parent=47 // pred_fallthru
        _
    $region48: #{skinning_net_forward.25} parent=5 // pred_fallthru
      _
    %p1930 = scmp.le.s32.totalorder 2, %s13
    // Predicated region
    $region53: #{skinning_net_forward.25} parent=5 // pred_check
      %p1931 = pneg %p1930
    $region54: #{skinning_net_forward.25} parent=5 // pred_check_branch
      %1933 = sbr.rel (%p1931) target = $region56
    $region55: #{skinning_net_forward.25} parent=5 // pred_region
      %s1934 = ssub.s32 %s13, 2
      // Predicated region
      $region57: #{skinning_net_forward.25} parent=55 // pred_check
        %p1935 = pneg %p210
      $region58: #{skinning_net_forward.25} parent=55 // pred_check_branch
        %1937 = sbr.rel (%p1935) target = $region60
      $region59: #{skinning_net_forward.25} parent=55 // pred_region
        %s1938 = smul.u32 2, %s25
        %p1939 = scmp.lt.s32.totalorder %s24, 1
        %s1940 = scalar_select %p1939, %s24, 1
        %p1941 = scmp.lt.s32.totalorder %s1938, 1
        %s1942 = scalar_select %p1941, %s1938, 1
        %s1943 = smul.addr %s1940, 2
        %s1944 = sadd.s32 %s1942, %s1943
        %s1945 = smul.addr %s1944, 8
        %s1946 = scalar_lea.vmem %s7, %s1945
      $region60: #{skinning_net_forward.25} parent=55 // pred_fallthru
        _
    $region56: #{skinning_net_forward.25} parent=5 // pred_fallthru
      _
  $region6: #{skinning_net_forward.25} parent=0 // loop_footer
    %s17 = sadd.s32 1, %s13
  $region7: #{skinning_net_forward.25} parent=0 // loop_footer_branch
    %12 = sbr.rel target = $region3
  $region8: #{skinning_net_forward.25} parent=0 // loop_exit
    _

</llo_original>
